<compile_context>
chip_gen: v6e
topology: v6e:2x2x1
jax: 0.10.0
libtpu: 0.0.40
codegen_flags: <defaults>
</compile_context>

<pallas_src>
import functools

import jax
import jax.numpy as jnp
import numpy as np
from jax.experimental import pallas as pl
from jax.experimental.pallas import tpu as pltpu

_VMEM_LIMIT = 48 * 1024 * 1024   # explicit (v5e default is 16 MiB); < v7x 64 MiB
_EPS = 1e-5
_SLOPE = 0.01


def _round_up(x, m):
    return ((x + m - 1) // m) * m


def _pick_tm(r):
    for t in (1024, 512, 256, 128, 64, 32, 16, 8):
        if r % t == 0:
            return t
    return r


# ----------------------------------------------------------------------------
# Pass 1: tap-accumulated matmul (bf16 MXU, f32 acc) + bias [+ tanh]
#         [+ per-batch-element BN sum / sum^2 stats, masked to valid rows]
# ----------------------------------------------------------------------------
def _p1_kernel(z_ref, w_ref, b_ref, mask_ref, y_ref, *stats_refs,
               groups, taps, offs, m_pad, with_stats, act):
    # z_ref:    (1, R_pad, K)           bf16  activation (s2d / padded, row-flat)
    # w_ref:    (groups*taps, K, Cout)  bf16  tap weight matrices (resident)
    # b_ref:    (1, Cout)               f32   bias
    # mask_ref: (m_pad, 1)              f32   1.0 on rows that are real outputs
    # y_ref:    (1, groups, m_pad, Cout)      pre-BN activation (bf16 / f32)
    # stats_refs[0]: (1, 2, Cout)       f32   per-batch [sum; sum^2]
    bias = b_ref[...]
    if with_stats:
        mask = mask_ref[...]
        s1 = jnp.zeros_like(bias)
        s2 = jnp.zeros_like(bias)
    for g in range(groups):
        acc = jnp.zeros((m_pad, bias.shape[-1]), jnp.float32)
        for t in range(taps):
            off = offs[g][t]                       # static row shift of the tap
            acc = acc + jnp.dot(z_ref[0, off:off + m_pad, :],
                                w_ref[g * taps + t],
                                preferred_element_type=jnp.float32)
        acc = acc + bias
        if act == "tanh":
            acc = jnp.tanh(acc)
        y_ref[0, g, :, :] = acc.astype(y_ref.dtype)
        if with_stats:
            yv = acc * mask                        # exclude pitch/pad garbage rows
            s1 = s1 + jnp.sum(yv, axis=0, keepdims=True)
            s2 = s2 + jnp.sum(yv * yv, axis=0, keepdims=True)
    if with_stats:
        # single (2, Cout) store; block is per-n so no cross-step accumulation
        stats_refs[0][0, :, :] = jnp.concatenate([s1, s2], axis=0)


def _pass1(z_flat, w, b, mask, *, groups, offs, m_pad, with_stats, act,
           out_dtype):
    n, r_pad, k = z_flat.shape
    gt, _, cout = w.shape
    taps = len(offs[0])
    assert gt == groups * taps
    kern = functools.partial(_p1_kernel, groups=groups, taps=taps, offs=offs,
                             m_pad=m_pad, with_stats=with_stats, act=act)
    in_specs = [
        pl.BlockSpec((1, r_pad, k), lambda i: (i, 0, 0)),
        pl.BlockSpec((gt, k, cout), lambda i: (0, 0, 0)),   # resident weights
        pl.BlockSpec((1, cout), lambda i: (0, 0)),
        pl.BlockSpec((m_pad, 1), lambda i: (0, 0)),
    ]
    y_shape = jax.ShapeDtypeStruct((n, groups, m_pad, cout), out_dtype)
    y_spec = pl.BlockSpec((1, groups, m_pad, cout), lambda i: (i, 0, 0, 0))
    if with_stats:
        out_shape = (y_shape, jax.ShapeDtypeStruct((n, 2, cout), jnp.float32))
        out_specs = (y_spec, pl.BlockSpec((1, 2, cout), lambda i: (i, 0, 0)))
    else:
        out_shape = y_shape
        out_specs = y_spec
    out = pl.pallas_call(
        kern,
        grid=(n,),
        in_specs=in_specs,
        out_specs=out_specs,
        out_shape=out_shape,
        compiler_params=pltpu.CompilerParams(
            dimension_semantics=("parallel",),          # megacore-shardable
            vmem_limit_bytes=_VMEM_LIMIT),
    )(z_flat, w, b, mask)
    if with_stats:
        return out[0], out[1]
    return out, None


# ----------------------------------------------------------------------------
# Pass 2: BN affine (scale/shift computed from raw stats in-kernel) + LeakyReLU
# ----------------------------------------------------------------------------
def _bn_act_kernel(y_ref, st_ref, g_ref, bt_ref, o_ref, *, inv_count, slope, eps):
    mean = st_ref[0:1, :] * inv_count
    var = jnp.maximum(st_ref[1:2, :] * inv_count - mean * mean, 0.0)
    scale = g_ref[...] * jax.lax.rsqrt(var + eps)
    shift = bt_ref[...] - mean * scale
    y = y_ref[...].astype(jnp.float32) * scale + shift
    o_ref[...] = jnp.where(y >= 0.0, y, slope * y).astype(o_ref.dtype)


def _bn_act_pass(y2d, stats, gamma, beta, count):
    r, cout = y2d.shape
    # Lane-dense relabel: Cout=64 -> 128-wide rows (unmasked stores).
    factor = 1
    if cout < 128 and 128 % cout == 0 and r % (128 // cout) == 0:
        factor = 128 // cout
    cw = cout * factor
    rr = r // factor
    y2d = y2d.reshape(rr, cw)
    st = jnp.tile(stats, (1, factor))
    g = jnp.tile(gamma.reshape(1, -1), (1, factor))
    bt = jnp.tile(beta.reshape(1, -1), (1, factor))
    tm = _pick_tm(rr)
    out = pl.pallas_call(
        functools.partial(_bn_act_kernel, inv_count=1.0 / float(count),
                          slope=_SLOPE, eps=_EPS),
        grid=(rr // tm,),
        in_specs=[pl.BlockSpec((tm, cw), lambda i: (i, 0)),
                  pl.BlockSpec((2, cw), lambda i: (0, 0)),
                  pl.BlockSpec((1, cw), lambda i: (0, 0)),
                  pl.BlockSpec((1, cw), lambda i: (0, 0))],
        out_specs=pl.BlockSpec((tm, cw), lambda i: (i, 0)),
        out_shape=jax.ShapeDtypeStruct((rr, cw), jnp.bfloat16),
        compiler_params=pltpu.CompilerParams(
            dimension_semantics=("parallel",),
            vmem_limit_bytes=_VMEM_LIMIT),
    )(y2d, st, g, bt)
    return out.reshape(r, cout)


# ----------------------------------------------------------------------------
# XLA-side glue (pure data movement, ~1x activation bytes, no im2col blowup)
# ----------------------------------------------------------------------------
def _make_row_mask(m_pad, m_valid, pitch, w_valid):
    r = np.arange(m_pad)
    m = ((r < m_valid) & ((r % pitch) < w_valid)).astype(np.float32)
    return jnp.asarray(m.reshape(m_pad, 1))


def _pad_rows_to(z, r_pad):
    n, r, k = z.shape
    if r_pad > r:
        z = jnp.pad(z, ((0, 0), (0, r_pad - r), (0, 0)))
    return z


def _space_to_depth_pad(x):
    """pad=1 then 2x2 space-to-depth; returns row-flat (N, Hp*Wp, 4C)."""
    n, h, w, c = x.shape
    xp = jnp.pad(x, ((0, 0), (1, 1), (1, 1), (0, 0)))
    hp, wp = (h + 2) // 2, (w + 2) // 2
    z = xp.reshape(n, hp, 2, wp, 2, c)
    z = jnp.transpose(z, (0, 1, 3, 2, 4, 5)).reshape(n, hp * wp, 4 * c)
    return z, hp, wp


def _interleave(y2, n, h, w, wq, cout):
    # y2: (N, 4, M_pad, Cout), parity p = 2*di + dj, row r = i*wq + j (j < w).
    subs = y2[:, :, :h * wq, :].reshape(n, 4, h, wq, cout)[:, :, :, :w, :]
    subs = subs.reshape(n, 2, 2, h, w, cout)
    return jnp.transpose(subs, (0, 3, 1, 4, 2, 5)).reshape(n, 2 * h, 2 * w, cout)


# ----------------------------------------------------------------------------
# Layers
# ----------------------------------------------------------------------------
def _conv_block(x, w4, b, gamma, beta):
    """Conv2d(k=4, s=2, p=1) + BatchNorm (batch stats) + LeakyReLU."""
    n, h, wd, _ = x.shape
    ho, wo = h // 2, wd // 2
    z, hp, wp = _space_to_depth_pad(x)                 # (N, Hp*Wp, 4C)
    m_valid = ho * wp
    m_pad = _round_up(m_valid, 16)
    r_pad = _round_up(wp + 1 + m_pad, 8)
    z = _pad_rows_to(z, r_pad)
    offs = ((0, 1, wp, wp + 1),)                       # taps (u, v) of 2x2 conv
    mask = _make_row_mask(m_pad, m_valid, wp, wo)
    cout = w4.shape[-1]
    y, stats = _pass1(z, w4, b, mask, groups=1, offs=offs, m_pad=m_pad,
                      with_stats=True, act=None, out_dtype=jnp.bfloat16)
    stats_sum = jnp.sum(stats, axis=0)                 # tiny XLA reduce over N
    count = n * ho * wo
    y2 = _bn_act_pass(y.reshape(n * m_pad, cout), stats_sum, gamma, beta, count)
    y2 = y2.reshape(n, m_pad, cout)[:, :ho * wp, :]
    return y2.reshape(n, ho, wp, cout)[:, :, :wo, :]   # (N, Ho, Wo, Cout) bf16


def _deconv_prep(x):
    n, h, wd, c = x.shape
    wq = wd + 2
    xp = jnp.pad(x, ((0, 0), (1, 1), (1, 1), (0, 0))).reshape(n, (h + 2) * wq, c)
    m_valid = h * wq
    m_pad = _round_up(m_valid, 16)
    r_pad = _round_up(2 * wq + 2 + m_pad, 8)
    xp = _pad_rows_to(xp, r_pad)
    offs = tuple(tuple((di + u) * wq + (dj + v) for u in (0, 1) for v in (0, 1))
                 for di in (0, 1) for dj in (0, 1))
    mask = _make_row_mask(m_pad, m_valid, wq, wd)
    return xp, offs, mask, m_pad, wq, h, wd, n


def _deconv_block(x, w16, b, gamma, beta):
    """ConvTranspose2d(k=4, s=2, p=1) + BatchNorm + LeakyReLU (parity sub-convs)."""
    xp, offs, mask, m_pad, wq, h, wd, n = _deconv_prep(x)
    cout = w16.shape[-1]
    y, stats = _pass1(xp, w16, b, mask, groups=4, offs=offs, m_pad=m_pad,
                      with_stats=True, act=None, out_dtype=jnp.bfloat16)
    stats_sum = jnp.sum(stats, axis=0)
    count = n * 4 * h * wd
    y2 = _bn_act_pass(y.reshape(n * 4 * m_pad, cout), stats_sum, gamma, beta,
                      count)
    y2 = y2.reshape(n, 4, m_pad, cout)
    return _interleave(y2, n, h, wd, wq, cout)         # (N, 2H, 2W, Cout) bf16


def _deconv_final(x, w16, b):
    """ConvTranspose2d(k=4, s=2, p=1) + tanh (no BN)."""
    xp, offs, mask, m_pad, wq, h, wd, n = _deconv_prep(x)
    cout = w16.shape[-1]
    y, _ = _pass1(xp, w16, b, mask, groups=4, offs=offs, m_pad=m_pad,
                  with_stats=False, act="tanh", out_dtype=jnp.float32)
    return _interleave(y, n, h, wd, wq, cout)           # (N, 2H, 2W, Cout) f32


def generator_forward(x_nchw, pk):
    x = jnp.transpose(x_nchw, (0, 2, 3, 1)).astype(jnp.bfloat16)   # NCHW -> NHWC
    h = _conv_block(x, pk["wm1"], pk["b1"], pk["g1"], pk["bt1"])
    h = _conv_block(h, pk["wm2"], pk["b2"], pk["g2"], pk["bt2"])
    h = _deconv_block(h, pk["wm3"], pk["b3"], pk["g3"], pk["bt3"])
    h = _deconv_final(h, pk["wm4"], pk["b4"])
    return jnp.transpose(h, (0, 3, 1, 2)).astype(jnp.float32)      # -> NCHW


# ----------------------------------------------------------------------------
# One-time weight packing (outside jit): tap-ordered bf16 matrices for the MXU
# ----------------------------------------------------------------------------
def _pack_conv_weight(w_oihw):
    # Conv2d(k=4,s=2,p=1) == 2x2 stride-1 conv over s2d input with Cin'=4*Cin.
    cout, cin = w_oihw.shape[0], w_oihw.shape[1]
    mats = []
    for u in (0, 1):
        for v in (0, 1):
            sub = w_oihw[:, :, (2 * u, 2 * u + 1), :][:, :, :, (2 * v, 2 * v + 1)]
            sub = jnp.transpose(sub, (2, 3, 1, 0)).reshape(4 * cin, cout)
            mats.append(sub)                           # rows ordered (rp, cp, cin)
    return jnp.stack(mats, axis=0).astype(jnp.bfloat16)    # (4, 4*Cin, Cout)


def _pack_deconv_weight(wt):
    # ConvTranspose2d weight (Cin, Cout, 4, 4); parity (di,dj), tap (u,v):
    # kernel element (3-di-2u, 3-dj-2v).
    mats = []
    for di in (0, 1):
        for dj in (0, 1):
            for u in (0, 1):
                for v in (0, 1):
                    mats.append(wt[:, :, 3 - di - 2 * u, 3 - dj - 2 * v])
    return jnp.stack(mats, axis=0).astype(jnp.bfloat16)    # (16, Cin, Cout)


def prepare_params(p):
    return dict(
        wm1=_pack_conv_weight(p["W1"]), b1=p["b1"].reshape(1, -1),
        g1=p["g1"], bt1=p["bt1"],
        wm2=_pack_conv_weight(p["W2"]), b2=p["b2"].reshape(1, -1),
        g2=p["g2"], bt2=p["bt2"],
        wm3=_pack_deconv_weight(p["W3"]), b3=p["b3"].reshape(1, -1),
        g3=p["g3"], bt3=p["bt3"],
        wm4=_pack_deconv_weight(p["W4"]), b4=p["b4"].reshape(1, -1),
    )


# ----------------------------------------------------------------------------
# Pure-JAX reference (direct definition, NCHW) for a correctness sanity check
# ----------------------------------------------------------------------------
def _conv2d_ref(x, w, b, stride=2, pad=1):
    cout, cin, k, _ = w.shape
    n, _, h, wd = x.shape
    xp = jnp.pad(x, ((0, 0), (0, 0), (pad, pad), (pad, pad)))
    ho = (h + 2 * pad - k) // stride + 1
    wo = (wd + 2 * pad - k) // stride + 1
    out = jnp.zeros((n, cout, ho, wo), jnp.float32)
    for kh in range(k):
        for kw in range(k):
            patch = xp[:, :, kh:kh + stride * (ho - 1) + 1:stride,
                       kw:kw + stride * (wo - 1) + 1:stride]
            out = out + jnp.einsum("ncij,oc->noij", patch, w[:, :, kh, kw])
    return out + b[None, :, None, None]


def _convT2d_ref(x, w, b, stride=2, pad=1):
    n, cin, h, wd = x.shape
    cout, k = w.shape[1], w.shape[2]
    ho = (h - 1) * stride - 2 * pad + k
    wo = (wd - 1) * stride - 2 * pad + k
    full = jnp.zeros((n, cout, ho + 2 * pad, wo + 2 * pad), jnp.float32)
    for kh in range(k):
        for kw in range(k):
            contrib = jnp.einsum("ncij,co->noij", x, w[:, :, kh, kw])
            full = full.at[:, :, kh:kh + stride * (h - 1) + 1:stride,
                           kw:kw + stride * (wd - 1) + 1:stride].add(contrib)
    return full[:, :, pad:pad + ho, pad:pad + wo] + b[None, :, None, None]


def _bn_ref(x, g, bt, eps=1e-5):
    m = x.mean(axis=(0, 2, 3), keepdims=True)
    v = jnp.square(x - m).mean(axis=(0, 2, 3), keepdims=True)
    return (x - m) / jnp.sqrt(v + eps) * g[None, :, None, None] \
        + bt[None, :, None, None]


def _lrelu(x):
    return jnp.where(x >= 0, x, 0.01 * x)


def _ref_forward(x, p):
    h = _lrelu(_bn_ref(_conv2d_ref(x, p["W1"], p["b1"]), p["g1"], p["bt1"]))
    h = _lrelu(_bn_ref(_conv2d_ref(h, p["W2"], p["b2"]), p["g2"], p["bt2"]))
    h = _lrelu(_bn_ref(_convT2d_ref(h, p["W3"], p["b3"]), p["g3"], p["bt3"]))
    h = jnp.tanh(_convT2d_ref(h, p["W4"], p["b4"]))
    return h


# ----------------------------------------------------------------------------
def make_params(key, in_ch):
    ks = jax.random.split(key, 16)
    f32 = jnp.float32

    def w(k, shape, fan):
        return (jax.random.normal(k, shape, f32) / np.sqrt(fan)).astype(f32)

    return dict(
        # nn.Conv2d(in_ch, 64, 4, 2, 1): weight (64, in_ch, 4, 4)
        W1=w(ks[0], (64, in_ch, 4, 4), in_ch * 16),
        b1=0.01 * jax.random.normal(ks[1], (64,), f32),
        g1=1.0 + 0.05 * jax.random.normal(ks[2], (64,), f32),
        bt1=0.05 * jax.random.normal(ks[3], (64,), f32),
        # nn.Conv2d(64, 128, 4, 2, 1)
        W2=w(ks[4], (128, 64, 4, 4), 64 * 16),
        b2=0.01 * jax.random.normal(ks[5], (128,), f32),
        g2=1.0 + 0.05 * jax.random.normal(ks[6], (128,), f32),
        bt2=0.05 * jax.random.normal(ks[7], (128,), f32),
        # nn.ConvTranspose2d(128, 64, 4, 2, 1): weight (128, 64, 4, 4)
        W3=w(ks[8], (128, 64, 4, 4), 128 * 4),
        b3=0.01 * jax.random.normal(ks[9], (64,), f32),
        g3=1.0 + 0.05 * jax.random.normal(ks[10], (64,), f32),
        bt3=0.05 * jax.random.normal(ks[11], (64,), f32),
        # nn.ConvTranspose2d(64, in_ch, 4, 2, 1): weight (64, in_ch, 4, 4)
        W4=w(ks[12], (64, in_ch, 4, 4), 64 * 4),
        b4=0.01 * jax.random.normal(ks[13], (in_ch,), f32),
    )


if __name__ == "__main__":
    in_ch = 3
    key = jax.random.PRNGKey(0)
    kx, kp = jax.random.split(key)
    x = jax.random.normal(kx, (2, in_ch, 16, 16), jnp.float32)
    params = make_params(kp, in_ch)
    packed = prepare_params(params)        # weight packing once, outside jit

    fwd = jax.jit(generator_forward)
    out = jax.block_until_ready(fwd(x, packed))

    assert out.shape == (2, in_ch, 16, 16), out.shape
    assert out.dtype == jnp.float32
    assert bool(jnp.all(jnp.isfinite(out)))

    ref = jax.jit(_ref_forward)(x, params)
    # bf16 MXU inputs, bf16 intermediate activations, f32 accumulation/stats.
    np.testing.assert_allclose(np.asarray(out), np.asarray(ref),
                               rtol=5e-2, atol=5e-2)

    print("KERNEL_OK")
</pallas_src>

<mosaic_0001>
module attributes {stable_mosaic.version = 11 : i64} {
  func.func @_p1_kernel(%arg0: i32, %arg1: memref<1x96x12xbf16, #tpu.memory_space<vmem>>, %arg2: memref<4x12x64xbf16, #tpu.memory_space<vmem>>, %arg3: memref<1x64xf32, #tpu.memory_space<vmem>>, %arg4: memref<80x1xf32, #tpu.memory_space<vmem>>, %arg5: memref<1x1x80x64xbf16, #tpu.memory_space<vmem>>, %arg6: memref<1x2x64xf32, #tpu.memory_space<vmem>>) attributes {dimension_semantics = [#tpu.dimension_semantics<parallel>], iteration_bounds = array<i64: 2>, scalar_prefetch = 0 : i64, scratch_operands = 0 : i64, tpu.core_type = #tpu.core_type<tc>, window_params = [{transform_indices = @transform_0, window_bounds = array<i64: 1, 96, 12>}, {pipeline_mode = #tpu.pipeline_mode<synchronous>, transform_indices = @transform_1, window_bounds = array<i64: 4, 12, 64>}, {pipeline_mode = #tpu.pipeline_mode<synchronous>, transform_indices = @transform_2, window_bounds = array<i64: 1, 64>}, {pipeline_mode = #tpu.pipeline_mode<synchronous>, transform_indices = @transform_3, window_bounds = array<i64: 80, 1>}, {transform_indices = @transform_4, window_bounds = array<i64: 1, 1, 80, 64>}, {transform_indices = @transform_5, window_bounds = array<i64: 1, 2, 64>}]} {
    %c0 = arith.constant 0 : index
    %c0_0 = arith.constant 0 : index
    %0 = vector.load %arg3[%c0, %c0_0] : memref<1x64xf32, #tpu.memory_space<vmem>>, vector<1x64xf32>
    %c0_1 = arith.constant 0 : index
    %c0_2 = arith.constant 0 : index
    %1 = vector.load %arg4[%c0_1, %c0_2] : memref<80x1xf32, #tpu.memory_space<vmem>>, vector<80x1xf32>
    %cst = arith.constant 0.000000e+00 : f32
    %2 = vector.broadcast %cst : f32 to vector<1x64xf32>
    %cst_3 = arith.constant 0.000000e+00 : f32
    %3 = vector.broadcast %cst_3 : f32 to vector<1x64xf32>
    %cst_4 = arith.constant 0.000000e+00 : f32
    %4 = vector.broadcast %cst_4 : f32 to vector<80x64xf32>
    %c0_5 = arith.constant 0 : index
    %c0_6 = arith.constant 0 : index
    %c0_7 = arith.constant 0 : index
    %5 = vector.load %arg1[%c0_5, %c0_6, %c0_7] : memref<1x96x12xbf16, #tpu.memory_space<vmem>>, vector<1x80x12xbf16>
    %6 = vector.shape_cast %5 : vector<1x80x12xbf16> to vector<80x12xbf16>
    %c0_8 = arith.constant 0 : index
    %c0_9 = arith.constant 0 : index
    %c0_10 = arith.constant 0 : index
    %7 = vector.load %arg2[%c0_8, %c0_9, %c0_10] : memref<4x12x64xbf16, #tpu.memory_space<vmem>>, vector<1x12x64xbf16>
    %8 = vector.shape_cast %7 : vector<1x12x64xbf16> to vector<12x64xbf16>
    %cst_11 = arith.constant dense<0.000000e+00> : vector<80x64xf32>
    %9 = tpu.matmul %6, %8, %cst_11 {dimension_numbers = #tpu.dot_dimension_numbers<[1], [0], [0], [1], [0, 0, 1, 1], [], []>} : vector<80x12xbf16>, vector<12x64xbf16>, vector<80x64xf32> -> vector<80x64xf32>
    %10 = arith.addf %4, %9 : vector<80x64xf32>
    %c0_12 = arith.constant 0 : index
    %c1 = arith.constant 1 : index
    %c0_13 = arith.constant 0 : index
    %11 = vector.load %arg1[%c0_12, %c1, %c0_13] : memref<1x96x12xbf16, #tpu.memory_space<vmem>>, vector<1x80x12xbf16>
    %12 = vector.shape_cast %11 : vector<1x80x12xbf16> to vector<80x12xbf16>
    %c1_14 = arith.constant 1 : index
    %c0_15 = arith.constant 0 : index
    %c0_16 = arith.constant 0 : index
    %13 = vector.load %arg2[%c1_14, %c0_15, %c0_16] : memref<4x12x64xbf16, #tpu.memory_space<vmem>>, vector<1x12x64xbf16>
    %14 = vector.shape_cast %13 : vector<1x12x64xbf16> to vector<12x64xbf16>
    %cst_17 = arith.constant dense<0.000000e+00> : vector<80x64xf32>
    %15 = tpu.matmul %12, %14, %cst_17 {dimension_numbers = #tpu.dot_dimension_numbers<[1], [0], [0], [1], [0, 0, 1, 1], [], []>} : vector<80x12xbf16>, vector<12x64xbf16>, vector<80x64xf32> -> vector<80x64xf32>
    %16 = arith.addf %10, %15 : vector<80x64xf32>
    %c0_18 = arith.constant 0 : index
    %c9 = arith.constant 9 : index
    %c0_19 = arith.constant 0 : index
    %17 = vector.load %arg1[%c0_18, %c9, %c0_19] : memref<1x96x12xbf16, #tpu.memory_space<vmem>>, vector<1x80x12xbf16>
    %18 = vector.shape_cast %17 : vector<1x80x12xbf16> to vector<80x12xbf16>
    %c2 = arith.constant 2 : index
    %c0_20 = arith.constant 0 : index
    %c0_21 = arith.constant 0 : index
    %19 = vector.load %arg2[%c2, %c0_20, %c0_21] : memref<4x12x64xbf16, #tpu.memory_space<vmem>>, vector<1x12x64xbf16>
    %20 = vector.shape_cast %19 : vector<1x12x64xbf16> to vector<12x64xbf16>
    %cst_22 = arith.constant dense<0.000000e+00> : vector<80x64xf32>
    %21 = tpu.matmul %18, %20, %cst_22 {dimension_numbers = #tpu.dot_dimension_numbers<[1], [0], [0], [1], [0, 0, 1, 1], [], []>} : vector<80x12xbf16>, vector<12x64xbf16>, vector<80x64xf32> -> vector<80x64xf32>
    %22 = arith.addf %16, %21 : vector<80x64xf32>
    %c0_23 = arith.constant 0 : index
    %c10 = arith.constant 10 : index
    %c0_24 = arith.constant 0 : index
    %23 = vector.load %arg1[%c0_23, %c10, %c0_24] : memref<1x96x12xbf16, #tpu.memory_space<vmem>>, vector<1x80x12xbf16>
    %24 = vector.shape_cast %23 : vector<1x80x12xbf16> to vector<80x12xbf16>
    %c3 = arith.constant 3 : index
    %c0_25 = arith.constant 0 : index
    %c0_26 = arith.constant 0 : index
    %25 = vector.load %arg2[%c3, %c0_25, %c0_26] : memref<4x12x64xbf16, #tpu.memory_space<vmem>>, vector<1x12x64xbf16>
    %26 = vector.shape_cast %25 : vector<1x12x64xbf16> to vector<12x64xbf16>
    %cst_27 = arith.constant dense<0.000000e+00> : vector<80x64xf32>
    %27 = tpu.matmul %24, %26, %cst_27 {dimension_numbers = #tpu.dot_dimension_numbers<[1], [0], [0], [1], [0, 0, 1, 1], [], []>} : vector<80x12xbf16>, vector<12x64xbf16>, vector<80x64xf32> -> vector<80x64xf32>
    %28 = arith.addf %22, %27 : vector<80x64xf32>
    %29 = vector.broadcast %0 : vector<1x64xf32> to vector<80x64xf32>
    %30 = arith.addf %28, %29 : vector<80x64xf32>
    %31 = arith.truncf %30 : vector<80x64xf32> to vector<80x64xbf16>
    %c0_28 = arith.constant 0 : index
    %c0_29 = arith.constant 0 : index
    %c0_30 = arith.constant 0 : index
    %c0_31 = arith.constant 0 : index
    %32 = vector.load %arg5[%c0_28, %c0_29, %c0_30, %c0_31] : memref<1x1x80x64xbf16, #tpu.memory_space<vmem>>, vector<1x1x80x64xbf16>
    %33 = vector.shape_cast %32 : vector<1x1x80x64xbf16> to vector<80x64xbf16>
    %34 = vector.shape_cast %31 : vector<80x64xbf16> to vector<1x1x80x64xbf16>
    tpu.vector_store %arg5[%c0_28, %c0_29, %c0_30, %c0_31], %34 {strides = array<i32>} : memref<1x1x80x64xbf16, #tpu.memory_space<vmem>>, vector<1x1x80x64xbf16>,
    %35 = vector.broadcast %1 : vector<80x1xf32> to vector<80x64xf32>
    %36 = arith.mulf %30, %35 : vector<80x64xf32>
    %cst_32 = arith.constant dense<0.000000e+00> : vector<64xf32>
    %37 = vector.multi_reduction <add>, %36, %cst_32 [0] : vector<80x64xf32> to vector<64xf32>
    %38 = vector.shape_cast %37 : vector<64xf32> to vector<1x64xf32>
    %39 = arith.addf %2, %38 : vector<1x64xf32>
    %40 = arith.mulf %36, %36 : vector<80x64xf32>
    %cst_33 = arith.constant dense<0.000000e+00> : vector<64xf32>
    %41 = vector.multi_reduction <add>, %40, %cst_33 [0] : vector<80x64xf32> to vector<64xf32>
    %42 = vector.shape_cast %41 : vector<64xf32> to vector<1x64xf32>
    %43 = arith.addf %3, %42 : vector<1x64xf32>
    %44 = tpu.concatenate %39, %43 in 0 : vector<1x64xf32>, vector<1x64xf32> -> vector<2x64xf32>
    %c0_34 = arith.constant 0 : index
    %c0_35 = arith.constant 0 : index
    %c0_36 = arith.constant 0 : index
    %45 = vector.load %arg6[%c0_34, %c0_35, %c0_36] : memref<1x2x64xf32, #tpu.memory_space<vmem>>, vector<1x2x64xf32>
    %46 = vector.shape_cast %45 : vector<1x2x64xf32> to vector<2x64xf32>
    %47 = vector.shape_cast %44 : vector<2x64xf32> to vector<1x2x64xf32>
    tpu.vector_store %arg6[%c0_34, %c0_35, %c0_36], %47 {strides = array<i32>} : memref<1x2x64xf32, #tpu.memory_space<vmem>>, vector<1x2x64xf32>,
    return
  }
  func.func @transform_0(%arg0: i32) -> (i32, i32, i32) {
    %c0_i32 = arith.constant 0 : i32
    %c0_i32_0 = arith.constant 0 : i32
    %c0_i32_1 = arith.constant 0 : i32
    return %arg0, %c0_i32, %c0_i32_0 : i32, i32, i32
  }
  func.func @transform_1(%arg0: i32) -> (i32, i32, i32) {
    %c0_i32 = arith.constant 0 : i32
    %c0_i32_0 = arith.constant 0 : i32
    %c0_i32_1 = arith.constant 0 : i32
    %c0_i32_2 = arith.constant 0 : i32
    return %c0_i32, %c0_i32_0, %c0_i32_1 : i32, i32, i32
  }
  func.func @transform_2(%arg0: i32) -> (i32, i32) {
    %c0_i32 = arith.constant 0 : i32
    %c0_i32_0 = arith.constant 0 : i32
    %c0_i32_1 = arith.constant 0 : i32
    return %c0_i32, %c0_i32_0 : i32, i32
  }
  func.func @transform_3(%arg0: i32) -> (i32, i32) {
    %c0_i32 = arith.constant 0 : i32
    %c0_i32_0 = arith.constant 0 : i32
    %c0_i32_1 = arith.constant 0 : i32
    return %c0_i32, %c0_i32_0 : i32, i32
  }
  func.func @transform_4(%arg0: i32) -> (i32, i32, i32, i32) {
    %c0_i32 = arith.constant 0 : i32
    %c0_i32_0 = arith.constant 0 : i32
    %c0_i32_1 = arith.constant 0 : i32
    %c0_i32_2 = arith.constant 0 : i32
    return %arg0, %c0_i32, %c0_i32_0, %c0_i32_1 : i32, i32, i32, i32
  }
  func.func @transform_5(%arg0: i32) -> (i32, i32, i32) {
    %c0_i32 = arith.constant 0 : i32
    %c0_i32_0 = arith.constant 0 : i32
    %c0_i32_1 = arith.constant 0 : i32
    return %arg0, %c0_i32, %c0_i32_0 : i32, i32, i32
  }
}

module attributes {stable_mosaic.version = 11 : i64} {
  func.func @_bn_act_kernel(%arg0: i32, %arg1: memref<16x128xbf16, #tpu.memory_space<vmem>>, %arg2: memref<2x128xf32, #tpu.memory_space<vmem>>, %arg3: memref<1x128xf32, #tpu.memory_space<vmem>>, %arg4: memref<1x128xf32, #tpu.memory_space<vmem>>, %arg5: memref<16x128xbf16, #tpu.memory_space<vmem>>) attributes {dimension_semantics = [#tpu.dimension_semantics<parallel>], iteration_bounds = array<i64: 5>, scalar_prefetch = 0 : i64, scratch_operands = 0 : i64, tpu.core_type = #tpu.core_type<tc>, window_params = [{transform_indices = @transform_0, window_bounds = array<i64: 16, 128>}, {pipeline_mode = #tpu.pipeline_mode<synchronous>, transform_indices = @transform_1, window_bounds = array<i64: 2, 128>}, {pipeline_mode = #tpu.pipeline_mode<synchronous>, transform_indices = @transform_2, window_bounds = array<i64: 1, 128>}, {pipeline_mode = #tpu.pipeline_mode<synchronous>, transform_indices = @transform_3, window_bounds = array<i64: 1, 128>}, {transform_indices = @transform_4, window_bounds = array<i64: 16, 128>}]} {
    %c0 = arith.constant 0 : index
    %c0_0 = arith.constant 0 : index
    %0 = vector.load %arg2[%c0, %c0_0] : memref<2x128xf32, #tpu.memory_space<vmem>>, vector<1x128xf32>
    %cst = arith.constant 7.812500e-03 : f32
    %1 = vector.broadcast %cst : f32 to vector<1x128xf32>
    %2 = arith.mulf %0, %1 : vector<1x128xf32>
    %c1 = arith.constant 1 : index
    %c0_1 = arith.constant 0 : index
    %3 = vector.load %arg2[%c1, %c0_1] : memref<2x128xf32, #tpu.memory_space<vmem>>, vector<1x128xf32>
    %cst_2 = arith.constant 7.812500e-03 : f32
    %4 = vector.broadcast %cst_2 : f32 to vector<1x128xf32>
    %5 = arith.mulf %3, %4 : vector<1x128xf32>
    %6 = arith.mulf %2, %2 : vector<1x128xf32>
    %7 = arith.subf %5, %6 : vector<1x128xf32>
    %cst_3 = arith.constant 0.000000e+00 : f32
    %8 = vector.broadcast %cst_3 : f32 to vector<1x128xf32>
    %9 = arith.maximumf %7, %8 : vector<1x128xf32>
    %c0_4 = arith.constant 0 : index
    %c0_5 = arith.constant 0 : index
    %10 = vector.load %arg3[%c0_4, %c0_5] : memref<1x128xf32, #tpu.memory_space<vmem>>, vector<1x128xf32>
    %cst_6 = arith.constant 9.99999974E-6 : f32
    %11 = vector.broadcast %cst_6 : f32 to vector<1x128xf32>
    %12 = arith.addf %9, %11 : vector<1x128xf32>
    %13 = math.rsqrt %12 : vector<1x128xf32>
    %14 = arith.mulf %10, %13 : vector<1x128xf32>
    %c0_7 = arith.constant 0 : index
    %c0_8 = arith.constant 0 : index
    %15 = vector.load %arg4[%c0_7, %c0_8] : memref<1x128xf32, #tpu.memory_space<vmem>>, vector<1x128xf32>
    %16 = arith.mulf %2, %14 : vector<1x128xf32>
    %17 = arith.subf %15, %16 : vector<1x128xf32>
    %c0_9 = arith.constant 0 : index
    %c0_10 = arith.constant 0 : index
    %18 = vector.load %arg1[%c0_9, %c0_10] : memref<16x128xbf16, #tpu.memory_space<vmem>>, vector<16x128xbf16>
    %19 = arith.extf %18 : vector<16x128xbf16> to vector<16x128xf32>
    %20 = vector.broadcast %14 : vector<1x128xf32> to vector<16x128xf32>
    %21 = arith.mulf %19, %20 : vector<16x128xf32>
    %22 = vector.broadcast %17 : vector<1x128xf32> to vector<16x128xf32>
    %23 = arith.addf %21, %22 : vector<16x128xf32>
    %cst_11 = arith.constant 0.000000e+00 : f32
    %24 = vector.broadcast %cst_11 : f32 to vector<16x128xf32>
    %25 = arith.cmpf oge, %23, %24 : vector<16x128xf32>
    %cst_12 = arith.constant 0.00999999977 : f32
    %26 = vector.broadcast %cst_12 : f32 to vector<16x128xf32>
    %27 = arith.mulf %26, %23 : vector<16x128xf32>
    %28 = arith.select %25, %23, %27 : vector<16x128xi1>, vector<16x128xf32>
    %29 = arith.truncf %28 : vector<16x128xf32> to vector<16x128xbf16>
    %c0_13 = arith.constant 0 : index
    %c0_14 = arith.constant 0 : index
    %30 = vector.load %arg5[%c0_13, %c0_14] : memref<16x128xbf16, #tpu.memory_space<vmem>>, vector<16x128xbf16>
    tpu.vector_store %arg5[%c0_13, %c0_14], %29 {strides = array<i32>} : memref<16x128xbf16, #tpu.memory_space<vmem>>, vector<16x128xbf16>,
    return
  }
  func.func @transform_0(%arg0: i32) -> (i32, i32) {
    %c0_i32 = arith.constant 0 : i32
    %c0_i32_0 = arith.constant 0 : i32
    return %arg0, %c0_i32 : i32, i32
  }
  func.func @transform_1(%arg0: i32) -> (i32, i32) {
    %c0_i32 = arith.constant 0 : i32
    %c0_i32_0 = arith.constant 0 : i32
    %c0_i32_1 = arith.constant 0 : i32
    return %c0_i32, %c0_i32_0 : i32, i32
  }
  func.func @transform_2(%arg0: i32) -> (i32, i32) {
    %c0_i32 = arith.constant 0 : i32
    %c0_i32_0 = arith.constant 0 : i32
    %c0_i32_1 = arith.constant 0 : i32
    return %c0_i32, %c0_i32_0 : i32, i32
  }
  func.func @transform_3(%arg0: i32) -> (i32, i32) {
    %c0_i32 = arith.constant 0 : i32
    %c0_i32_0 = arith.constant 0 : i32
    %c0_i32_1 = arith.constant 0 : i32
    return %c0_i32, %c0_i32_0 : i32, i32
  }
  func.func @transform_4(%arg0: i32) -> (i32, i32) {
    %c0_i32 = arith.constant 0 : i32
    %c0_i32_0 = arith.constant 0 : i32
    return %arg0, %c0_i32 : i32, i32
  }
}

module attributes {stable_mosaic.version = 11 : i64} {
  func.func @_p1_kernel(%arg0: i32, %arg1: memref<1x40x256xbf16, #tpu.memory_space<vmem>>, %arg2: memref<4x256x128xbf16, #tpu.memory_space<vmem>>, %arg3: memref<1x128xf32, #tpu.memory_space<vmem>>, %arg4: memref<32x1xf32, #tpu.memory_space<vmem>>, %arg5: memref<1x1x32x128xbf16, #tpu.memory_space<vmem>>, %arg6: memref<1x2x128xf32, #tpu.memory_space<vmem>>) attributes {dimension_semantics = [#tpu.dimension_semantics<parallel>], iteration_bounds = array<i64: 2>, scalar_prefetch = 0 : i64, scratch_operands = 0 : i64, tpu.core_type = #tpu.core_type<tc>, window_params = [{transform_indices = @transform_0, window_bounds = array<i64: 1, 40, 256>}, {pipeline_mode = #tpu.pipeline_mode<synchronous>, transform_indices = @transform_1, window_bounds = array<i64: 4, 256, 128>}, {pipeline_mode = #tpu.pipeline_mode<synchronous>, transform_indices = @transform_2, window_bounds = array<i64: 1, 128>}, {pipeline_mode = #tpu.pipeline_mode<synchronous>, transform_indices = @transform_3, window_bounds = array<i64: 32, 1>}, {transform_indices = @transform_4, window_bounds = array<i64: 1, 1, 32, 128>}, {transform_indices = @transform_5, window_bounds = array<i64: 1, 2, 128>}]} {
    %c0 = arith.constant 0 : index
    %c0_0 = arith.constant 0 : index
    %0 = vector.load %arg3[%c0, %c0_0] : memref<1x128xf32, #tpu.memory_space<vmem>>, vector<1x128xf32>
    %c0_1 = arith.constant 0 : index
    %c0_2 = arith.constant 0 : index
    %1 = vector.load %arg4[%c0_1, %c0_2] : memref<32x1xf32, #tpu.memory_space<vmem>>, vector<32x1xf32>
    %cst = arith.constant 0.000000e+00 : f32
    %2 = vector.broadcast %cst : f32 to vector<1x128xf32>
    %cst_3 = arith.constant 0.000000e+00 : f32
    %3 = vector.broadcast %cst_3 : f32 to vector<1x128xf32>
    %cst_4 = arith.constant 0.000000e+00 : f32
    %4 = vector.broadcast %cst_4 : f32 to vector<32x128xf32>
    %c0_5 = arith.constant 0 : index
    %c0_6 = arith.constant 0 : index
    %c0_7 = arith.constant 0 : index
    %5 = vector.load %arg1[%c0_5, %c0_6, %c0_7] : memref<1x40x256xbf16, #tpu.memory_space<vmem>>, vector<1x32x256xbf16>
    %6 = vector.shape_cast %5 : vector<1x32x256xbf16> to vector<32x256xbf16>
    %c0_8 = arith.constant 0 : index
    %c0_9 = arith.constant 0 : index
    %c0_10 = arith.constant 0 : index
    %7 = vector.load %arg2[%c0_8, %c0_9, %c0_10] : memref<4x256x128xbf16, #tpu.memory_space<vmem>>, vector<1x256x128xbf16>
    %8 = vector.shape_cast %7 : vector<1x256x128xbf16> to vector<256x128xbf16>
    %cst_11 = arith.constant dense<0.000000e+00> : vector<32x128xf32>
    %9 = tpu.matmul %6, %8, %cst_11 {dimension_numbers = #tpu.dot_dimension_numbers<[1], [0], [0], [1], [0, 0, 1, 1], [], []>} : vector<32x256xbf16>, vector<256x128xbf16>, vector<32x128xf32> -> vector<32x128xf32>
    %10 = arith.addf %4, %9 : vector<32x128xf32>
    %c0_12 = arith.constant 0 : index
    %c1 = arith.constant 1 : index
    %c0_13 = arith.constant 0 : index
    %11 = vector.load %arg1[%c0_12, %c1, %c0_13] : memref<1x40x256xbf16, #tpu.memory_space<vmem>>, vector<1x32x256xbf16>
    %12 = vector.shape_cast %11 : vector<1x32x256xbf16> to vector<32x256xbf16>
    %c1_14 = arith.constant 1 : index
    %c0_15 = arith.constant 0 : index
    %c0_16 = arith.constant 0 : index
    %13 = vector.load %arg2[%c1_14, %c0_15, %c0_16] : memref<4x256x128xbf16, #tpu.memory_space<vmem>>, vector<1x256x128xbf16>
    %14 = vector.shape_cast %13 : vector<1x256x128xbf16> to vector<256x128xbf16>
    %cst_17 = arith.constant dense<0.000000e+00> : vector<32x128xf32>
    %15 = tpu.matmul %12, %14, %cst_17 {dimension_numbers = #tpu.dot_dimension_numbers<[1], [0], [0], [1], [0, 0, 1, 1], [], []>} : vector<32x256xbf16>, vector<256x128xbf16>, vector<32x128xf32> -> vector<32x128xf32>
    %16 = arith.addf %10, %15 : vector<32x128xf32>
    %c0_18 = arith.constant 0 : index
    %c5 = arith.constant 5 : index
    %c0_19 = arith.constant 0 : index
    %17 = vector.load %arg1[%c0_18, %c5, %c0_19] : memref<1x40x256xbf16, #tpu.memory_space<vmem>>, vector<1x32x256xbf16>
    %18 = vector.shape_cast %17 : vector<1x32x256xbf16> to vector<32x256xbf16>
    %c2 = arith.constant 2 : index
    %c0_20 = arith.constant 0 : index
    %c0_21 = arith.constant 0 : index
    %19 = vector.load %arg2[%c2, %c0_20, %c0_21] : memref<4x256x128xbf16, #tpu.memory_space<vmem>>, vector<1x256x128xbf16>
    %20 = vector.shape_cast %19 : vector<1x256x128xbf16> to vector<256x128xbf16>
    %cst_22 = arith.constant dense<0.000000e+00> : vector<32x128xf32>
    %21 = tpu.matmul %18, %20, %cst_22 {dimension_numbers = #tpu.dot_dimension_numbers<[1], [0], [0], [1], [0, 0, 1, 1], [], []>} : vector<32x256xbf16>, vector<256x128xbf16>, vector<32x128xf32> -> vector<32x128xf32>
    %22 = arith.addf %16, %21 : vector<32x128xf32>
    %c0_23 = arith.constant 0 : index
    %c6 = arith.constant 6 : index
    %c0_24 = arith.constant 0 : index
    %23 = vector.load %arg1[%c0_23, %c6, %c0_24] : memref<1x40x256xbf16, #tpu.memory_space<vmem>>, vector<1x32x256xbf16>
    %24 = vector.shape_cast %23 : vector<1x32x256xbf16> to vector<32x256xbf16>
    %c3 = arith.constant 3 : index
    %c0_25 = arith.constant 0 : index
    %c0_26 = arith.constant 0 : index
    %25 = vector.load %arg2[%c3, %c0_25, %c0_26] : memref<4x256x128xbf16, #tpu.memory_space<vmem>>, vector<1x256x128xbf16>
    %26 = vector.shape_cast %25 : vector<1x256x128xbf16> to vector<256x128xbf16>
    %cst_27 = arith.constant dense<0.000000e+00> : vector<32x128xf32>
    %27 = tpu.matmul %24, %26, %cst_27 {dimension_numbers = #tpu.dot_dimension_numbers<[1], [0], [0], [1], [0, 0, 1, 1], [], []>} : vector<32x256xbf16>, vector<256x128xbf16>, vector<32x128xf32> -> vector<32x128xf32>
    %28 = arith.addf %22, %27 : vector<32x128xf32>
    %29 = vector.broadcast %0 : vector<1x128xf32> to vector<32x128xf32>
    %30 = arith.addf %28, %29 : vector<32x128xf32>
    %31 = arith.truncf %30 : vector<32x128xf32> to vector<32x128xbf16>
    %c0_28 = arith.constant 0 : index
    %c0_29 = arith.constant 0 : index
    %c0_30 = arith.constant 0 : index
    %c0_31 = arith.constant 0 : index
    %32 = vector.load %arg5[%c0_28, %c0_29, %c0_30, %c0_31] : memref<1x1x32x128xbf16, #tpu.memory_space<vmem>>, vector<1x1x32x128xbf16>
    %33 = vector.shape_cast %32 : vector<1x1x32x128xbf16> to vector<32x128xbf16>
    %34 = vector.shape_cast %31 : vector<32x128xbf16> to vector<1x1x32x128xbf16>
    tpu.vector_store %arg5[%c0_28, %c0_29, %c0_30, %c0_31], %34 {strides = array<i32>} : memref<1x1x32x128xbf16, #tpu.memory_space<vmem>>, vector<1x1x32x128xbf16>,
    %35 = vector.broadcast %1 : vector<32x1xf32> to vector<32x128xf32>
    %36 = arith.mulf %30, %35 : vector<32x128xf32>
    %cst_32 = arith.constant dense<0.000000e+00> : vector<128xf32>
    %37 = vector.multi_reduction <add>, %36, %cst_32 [0] : vector<32x128xf32> to vector<128xf32>
    %38 = vector.shape_cast %37 : vector<128xf32> to vector<1x128xf32>
    %39 = arith.addf %2, %38 : vector<1x128xf32>
    %40 = arith.mulf %36, %36 : vector<32x128xf32>
    %cst_33 = arith.constant dense<0.000000e+00> : vector<128xf32>
    %41 = vector.multi_reduction <add>, %40, %cst_33 [0] : vector<32x128xf32> to vector<128xf32>
    %42 = vector.shape_cast %41 : vector<128xf32> to vector<1x128xf32>
    %43 = arith.addf %3, %42 : vector<1x128xf32>
    %44 = tpu.concatenate %39, %43 in 0 : vector<1x128xf32>, vector<1x128xf32> -> vector<2x128xf32>
    %c0_34 = arith.constant 0 : index
    %c0_35 = arith.constant 0 : index
    %c0_36 = arith.constant 0 : index
    %45 = vector.load %arg6[%c0_34, %c0_35, %c0_36] : memref<1x2x128xf32, #tpu.memory_space<vmem>>, vector<1x2x128xf32>
    %46 = vector.shape_cast %45 : vector<1x2x128xf32> to vector<2x128xf32>
    %47 = vector.shape_cast %44 : vector<2x128xf32> to vector<1x2x128xf32>
    tpu.vector_store %arg6[%c0_34, %c0_35, %c0_36], %47 {strides = array<i32>} : memref<1x2x128xf32, #tpu.memory_space<vmem>>, vector<1x2x128xf32>,
    return
  }
  func.func @transform_0(%arg0: i32) -> (i32, i32, i32) {
    %c0_i32 = arith.constant 0 : i32
    %c0_i32_0 = arith.constant 0 : i32
    %c0_i32_1 = arith.constant 0 : i32
    return %arg0, %c0_i32, %c0_i32_0 : i32, i32, i32
  }
  func.func @transform_1(%arg0: i32) -> (i32, i32, i32) {
    %c0_i32 = arith.constant 0 : i32
    %c0_i32_0 = arith.constant 0 : i32
    %c0_i32_1 = arith.constant 0 : i32
    %c0_i32_2 = arith.constant 0 : i32
    return %c0_i32, %c0_i32_0, %c0_i32_1 : i32, i32, i32
  }
  func.func @transform_2(%arg0: i32) -> (i32, i32) {
    %c0_i32 = arith.constant 0 : i32
    %c0_i32_0 = arith.constant 0 : i32
    %c0_i32_1 = arith.constant 0 : i32
    return %c0_i32, %c0_i32_0 : i32, i32
  }
  func.func @transform_3(%arg0: i32) -> (i32, i32) {
    %c0_i32 = arith.constant 0 : i32
    %c0_i32_0 = arith.constant 0 : i32
    %c0_i32_1 = arith.constant 0 : i32
    return %c0_i32, %c0_i32_0 : i32, i32
  }
  func.func @transform_4(%arg0: i32) -> (i32, i32, i32, i32) {
    %c0_i32 = arith.constant 0 : i32
    %c0_i32_0 = arith.constant 0 : i32
    %c0_i32_1 = arith.constant 0 : i32
    %c0_i32_2 = arith.constant 0 : i32
    return %arg0, %c0_i32, %c0_i32_0, %c0_i32_1 : i32, i32, i32, i32
  }
  func.func @transform_5(%arg0: i32) -> (i32, i32, i32) {
    %c0_i32 = arith.constant 0 : i32
    %c0_i32_0 = arith.constant 0 : i32
    %c0_i32_1 = arith.constant 0 : i32
    return %arg0, %c0_i32, %c0_i32_0 : i32, i32, i32
  }
}

module attributes {stable_mosaic.version = 11 : i64} {
  func.func @_bn_act_kernel(%arg0: i32, %arg1: memref<64x128xbf16, #tpu.memory_space<vmem>>, %arg2: memref<2x128xf32, #tpu.memory_space<vmem>>, %arg3: memref<1x128xf32, #tpu.memory_space<vmem>>, %arg4: memref<1x128xf32, #tpu.memory_space<vmem>>, %arg5: memref<64x128xbf16, #tpu.memory_space<vmem>>) attributes {dimension_semantics = [#tpu.dimension_semantics<parallel>], iteration_bounds = array<i64: 1>, scalar_prefetch = 0 : i64, scratch_operands = 0 : i64, tpu.core_type = #tpu.core_type<tc>, window_params = [{transform_indices = @transform_0, window_bounds = array<i64: 64, 128>}, {pipeline_mode = #tpu.pipeline_mode<synchronous>, transform_indices = @transform_1, window_bounds = array<i64: 2, 128>}, {pipeline_mode = #tpu.pipeline_mode<synchronous>, transform_indices = @transform_2, window_bounds = array<i64: 1, 128>}, {pipeline_mode = #tpu.pipeline_mode<synchronous>, transform_indices = @transform_3, window_bounds = array<i64: 1, 128>}, {transform_indices = @transform_4, window_bounds = array<i64: 64, 128>}]} {
    %c0 = arith.constant 0 : index
    %c0_0 = arith.constant 0 : index
    %0 = vector.load %arg2[%c0, %c0_0] : memref<2x128xf32, #tpu.memory_space<vmem>>, vector<1x128xf32>
    %cst = arith.constant 3.125000e-02 : f32
    %1 = vector.broadcast %cst : f32 to vector<1x128xf32>
    %2 = arith.mulf %0, %1 : vector<1x128xf32>
    %c1 = arith.constant 1 : index
    %c0_1 = arith.constant 0 : index
    %3 = vector.load %arg2[%c1, %c0_1] : memref<2x128xf32, #tpu.memory_space<vmem>>, vector<1x128xf32>
    %cst_2 = arith.constant 3.125000e-02 : f32
    %4 = vector.broadcast %cst_2 : f32 to vector<1x128xf32>
    %5 = arith.mulf %3, %4 : vector<1x128xf32>
    %6 = arith.mulf %2, %2 : vector<1x128xf32>
    %7 = arith.subf %5, %6 : vector<1x128xf32>
    %cst_3 = arith.constant 0.000000e+00 : f32
    %8 = vector.broadcast %cst_3 : f32 to vector<1x128xf32>
    %9 = arith.maximumf %7, %8 : vector<1x128xf32>
    %c0_4 = arith.constant 0 : index
    %c0_5 = arith.constant 0 : index
    %10 = vector.load %arg3[%c0_4, %c0_5] : memref<1x128xf32, #tpu.memory_space<vmem>>, vector<1x128xf32>
    %cst_6 = arith.constant 9.99999974E-6 : f32
    %11 = vector.broadcast %cst_6 : f32 to vector<1x128xf32>
    %12 = arith.addf %9, %11 : vector<1x128xf32>
    %13 = math.rsqrt %12 : vector<1x128xf32>
    %14 = arith.mulf %10, %13 : vector<1x128xf32>
    %c0_7 = arith.constant 0 : index
    %c0_8 = arith.constant 0 : index
    %15 = vector.load %arg4[%c0_7, %c0_8] : memref<1x128xf32, #tpu.memory_space<vmem>>, vector<1x128xf32>
    %16 = arith.mulf %2, %14 : vector<1x128xf32>
    %17 = arith.subf %15, %16 : vector<1x128xf32>
    %c0_9 = arith.constant 0 : index
    %c0_10 = arith.constant 0 : index
    %18 = vector.load %arg1[%c0_9, %c0_10] : memref<64x128xbf16, #tpu.memory_space<vmem>>, vector<64x128xbf16>
    %19 = arith.extf %18 : vector<64x128xbf16> to vector<64x128xf32>
    %20 = vector.broadcast %14 : vector<1x128xf32> to vector<64x128xf32>
    %21 = arith.mulf %19, %20 : vector<64x128xf32>
    %22 = vector.broadcast %17 : vector<1x128xf32> to vector<64x128xf32>
    %23 = arith.addf %21, %22 : vector<64x128xf32>
    %cst_11 = arith.constant 0.000000e+00 : f32
    %24 = vector.broadcast %cst_11 : f32 to vector<64x128xf32>
    %25 = arith.cmpf oge, %23, %24 : vector<64x128xf32>
    %cst_12 = arith.constant 0.00999999977 : f32
    %26 = vector.broadcast %cst_12 : f32 to vector<64x128xf32>
    %27 = arith.mulf %26, %23 : vector<64x128xf32>
    %28 = arith.select %25, %23, %27 : vector<64x128xi1>, vector<64x128xf32>
    %29 = arith.truncf %28 : vector<64x128xf32> to vector<64x128xbf16>
    %c0_13 = arith.constant 0 : index
    %c0_14 = arith.constant 0 : index
    %30 = vector.load %arg5[%c0_13, %c0_14] : memref<64x128xbf16, #tpu.memory_space<vmem>>, vector<64x128xbf16>
    tpu.vector_store %arg5[%c0_13, %c0_14], %29 {strides = array<i32>} : memref<64x128xbf16, #tpu.memory_space<vmem>>, vector<64x128xbf16>,
    return
  }
  func.func @transform_0(%arg0: i32) -> (i32, i32) {
    %c0_i32 = arith.constant 0 : i32
    %c0_i32_0 = arith.constant 0 : i32
    return %arg0, %c0_i32 : i32, i32
  }
  func.func @transform_1(%arg0: i32) -> (i32, i32) {
    %c0_i32 = arith.constant 0 : i32
    %c0_i32_0 = arith.constant 0 : i32
    %c0_i32_1 = arith.constant 0 : i32
    return %c0_i32, %c0_i32_0 : i32, i32
  }
  func.func @transform_2(%arg0: i32) -> (i32, i32) {
    %c0_i32 = arith.constant 0 : i32
    %c0_i32_0 = arith.constant 0 : i32
    %c0_i32_1 = arith.constant 0 : i32
    return %c0_i32, %c0_i32_0 : i32, i32
  }
  func.func @transform_3(%arg0: i32) -> (i32, i32) {
    %c0_i32 = arith.constant 0 : i32
    %c0_i32_0 = arith.constant 0 : i32
    %c0_i32_1 = arith.constant 0 : i32
    return %c0_i32, %c0_i32_0 : i32, i32
  }
  func.func @transform_4(%arg0: i32) -> (i32, i32) {
    %c0_i32 = arith.constant 0 : i32
    %c0_i32_0 = arith.constant 0 : i32
    return %arg0, %c0_i32 : i32, i32
  }
}

module attributes {stable_mosaic.version = 11 : i64} {
  func.func @_p1_kernel(%arg0: i32, %arg1: memref<1x48x128xbf16, #tpu.memory_space<vmem>>, %arg2: memref<16x128x64xbf16, #tpu.memory_space<vmem>>, %arg3: memref<1x64xf32, #tpu.memory_space<vmem>>, %arg4: memref<32x1xf32, #tpu.memory_space<vmem>>, %arg5: memref<1x4x32x64xbf16, #tpu.memory_space<vmem>>, %arg6: memref<1x2x64xf32, #tpu.memory_space<vmem>>) attributes {dimension_semantics = [#tpu.dimension_semantics<parallel>], iteration_bounds = array<i64: 2>, scalar_prefetch = 0 : i64, scratch_operands = 0 : i64, tpu.core_type = #tpu.core_type<tc>, window_params = [{transform_indices = @transform_0, window_bounds = array<i64: 1, 48, 128>}, {pipeline_mode = #tpu.pipeline_mode<synchronous>, transform_indices = @transform_1, window_bounds = array<i64: 16, 128, 64>}, {pipeline_mode = #tpu.pipeline_mode<synchronous>, transform_indices = @transform_2, window_bounds = array<i64: 1, 64>}, {pipeline_mode = #tpu.pipeline_mode<synchronous>, transform_indices = @transform_3, window_bounds = array<i64: 32, 1>}, {transform_indices = @transform_4, window_bounds = array<i64: 1, 4, 32, 64>}, {transform_indices = @transform_5, window_bounds = array<i64: 1, 2, 64>}]} {
    %c0 = arith.constant 0 : index
    %c0_0 = arith.constant 0 : index
    %0 = vector.load %arg3[%c0, %c0_0] : memref<1x64xf32, #tpu.memory_space<vmem>>, vector<1x64xf32>
    %c0_1 = arith.constant 0 : index
    %c0_2 = arith.constant 0 : index
    %1 = vector.load %arg4[%c0_1, %c0_2] : memref<32x1xf32, #tpu.memory_space<vmem>>, vector<32x1xf32>
    %cst = arith.constant 0.000000e+00 : f32
    %2 = vector.broadcast %cst : f32 to vector<1x64xf32>
    %cst_3 = arith.constant 0.000000e+00 : f32
    %3 = vector.broadcast %cst_3 : f32 to vector<1x64xf32>
    %cst_4 = arith.constant 0.000000e+00 : f32
    %4 = vector.broadcast %cst_4 : f32 to vector<32x64xf32>
    %c0_5 = arith.constant 0 : index
    %c0_6 = arith.constant 0 : index
    %c0_7 = arith.constant 0 : index
    %5 = vector.load %arg1[%c0_5, %c0_6, %c0_7] : memref<1x48x128xbf16, #tpu.memory_space<vmem>>, vector<1x32x128xbf16>
    %6 = vector.shape_cast %5 : vector<1x32x128xbf16> to vector<32x128xbf16>
    %c0_8 = arith.constant 0 : index
    %c0_9 = arith.constant 0 : index
    %c0_10 = arith.constant 0 : index
    %7 = vector.load %arg2[%c0_8, %c0_9, %c0_10] : memref<16x128x64xbf16, #tpu.memory_space<vmem>>, vector<1x128x64xbf16>
    %8 = vector.shape_cast %7 : vector<1x128x64xbf16> to vector<128x64xbf16>
    %cst_11 = arith.constant dense<0.000000e+00> : vector<32x64xf32>
    %9 = tpu.matmul %6, %8, %cst_11 {dimension_numbers = #tpu.dot_dimension_numbers<[1], [0], [0], [1], [0, 0, 1, 1], [], []>} : vector<32x128xbf16>, vector<128x64xbf16>, vector<32x64xf32> -> vector<32x64xf32>
    %10 = arith.addf %4, %9 : vector<32x64xf32>
    %c0_12 = arith.constant 0 : index
    %c1 = arith.constant 1 : index
    %c0_13 = arith.constant 0 : index
    %11 = vector.load %arg1[%c0_12, %c1, %c0_13] : memref<1x48x128xbf16, #tpu.memory_space<vmem>>, vector<1x32x128xbf16>
    %12 = vector.shape_cast %11 : vector<1x32x128xbf16> to vector<32x128xbf16>
    %c1_14 = arith.constant 1 : index
    %c0_15 = arith.constant 0 : index
    %c0_16 = arith.constant 0 : index
    %13 = vector.load %arg2[%c1_14, %c0_15, %c0_16] : memref<16x128x64xbf16, #tpu.memory_space<vmem>>, vector<1x128x64xbf16>
    %14 = vector.shape_cast %13 : vector<1x128x64xbf16> to vector<128x64xbf16>
    %cst_17 = arith.constant dense<0.000000e+00> : vector<32x64xf32>
    %15 = tpu.matmul %12, %14, %cst_17 {dimension_numbers = #tpu.dot_dimension_numbers<[1], [0], [0], [1], [0, 0, 1, 1], [], []>} : vector<32x128xbf16>, vector<128x64xbf16>, vector<32x64xf32> -> vector<32x64xf32>
    %16 = arith.addf %10, %15 : vector<32x64xf32>
    %c0_18 = arith.constant 0 : index
    %c6 = arith.constant 6 : index
    %c0_19 = arith.constant 0 : index
    %17 = vector.load %arg1[%c0_18, %c6, %c0_19] : memref<1x48x128xbf16, #tpu.memory_space<vmem>>, vector<1x32x128xbf16>
    %18 = vector.shape_cast %17 : vector<1x32x128xbf16> to vector<32x128xbf16>
    %c2 = arith.constant 2 : index
    %c0_20 = arith.constant 0 : index
    %c0_21 = arith.constant 0 : index
    %19 = vector.load %arg2[%c2, %c0_20, %c0_21] : memref<16x128x64xbf16, #tpu.memory_space<vmem>>, vector<1x128x64xbf16>
    %20 = vector.shape_cast %19 : vector<1x128x64xbf16> to vector<128x64xbf16>
    %cst_22 = arith.constant dense<0.000000e+00> : vector<32x64xf32>
    %21 = tpu.matmul %18, %20, %cst_22 {dimension_numbers = #tpu.dot_dimension_numbers<[1], [0], [0], [1], [0, 0, 1, 1], [], []>} : vector<32x128xbf16>, vector<128x64xbf16>, vector<32x64xf32> -> vector<32x64xf32>
    %22 = arith.addf %16, %21 : vector<32x64xf32>
    %c0_23 = arith.constant 0 : index
    %c7 = arith.constant 7 : index
    %c0_24 = arith.constant 0 : index
    %23 = vector.load %arg1[%c0_23, %c7, %c0_24] : memref<1x48x128xbf16, #tpu.memory_space<vmem>>, vector<1x32x128xbf16>
    %24 = vector.shape_cast %23 : vector<1x32x128xbf16> to vector<32x128xbf16>
    %c3 = arith.constant 3 : index
    %c0_25 = arith.constant 0 : index
    %c0_26 = arith.constant 0 : index
    %25 = vector.load %arg2[%c3, %c0_25, %c0_26] : memref<16x128x64xbf16, #tpu.memory_space<vmem>>, vector<1x128x64xbf16>
    %26 = vector.shape_cast %25 : vector<1x128x64xbf16> to vector<128x64xbf16>
    %cst_27 = arith.constant dense<0.000000e+00> : vector<32x64xf32>
    %27 = tpu.matmul %24, %26, %cst_27 {dimension_numbers = #tpu.dot_dimension_numbers<[1], [0], [0], [1], [0, 0, 1, 1], [], []>} : vector<32x128xbf16>, vector<128x64xbf16>, vector<32x64xf32> -> vector<32x64xf32>
    %28 = arith.addf %22, %27 : vector<32x64xf32>
    %29 = vector.broadcast %0 : vector<1x64xf32> to vector<32x64xf32>
    %30 = arith.addf %28, %29 : vector<32x64xf32>
    %31 = arith.truncf %30 : vector<32x64xf32> to vector<32x64xbf16>
    %c0_28 = arith.constant 0 : index
    %c0_29 = arith.constant 0 : index
    %c0_30 = arith.constant 0 : index
    %c0_31 = arith.constant 0 : index
    %32 = vector.load %arg5[%c0_28, %c0_29, %c0_30, %c0_31] : memref<1x4x32x64xbf16, #tpu.memory_space<vmem>>, vector<1x1x32x64xbf16>
    %33 = vector.shape_cast %32 : vector<1x1x32x64xbf16> to vector<32x64xbf16>
    %34 = vector.shape_cast %31 : vector<32x64xbf16> to vector<1x1x32x64xbf16>
    tpu.vector_store %arg5[%c0_28, %c0_29, %c0_30, %c0_31], %34 {strides = array<i32>} : memref<1x4x32x64xbf16, #tpu.memory_space<vmem>>, vector<1x1x32x64xbf16>,
    %35 = vector.broadcast %1 : vector<32x1xf32> to vector<32x64xf32>
    %36 = arith.mulf %30, %35 : vector<32x64xf32>
    %cst_32 = arith.constant dense<0.000000e+00> : vector<64xf32>
    %37 = vector.multi_reduction <add>, %36, %cst_32 [0] : vector<32x64xf32> to vector<64xf32>
    %38 = vector.shape_cast %37 : vector<64xf32> to vector<1x64xf32>
    %39 = arith.addf %2, %38 : vector<1x64xf32>
    %40 = arith.mulf %36, %36 : vector<32x64xf32>
    %cst_33 = arith.constant dense<0.000000e+00> : vector<64xf32>
    %41 = vector.multi_reduction <add>, %40, %cst_33 [0] : vector<32x64xf32> to vector<64xf32>
    %42 = vector.shape_cast %41 : vector<64xf32> to vector<1x64xf32>
    %43 = arith.addf %3, %42 : vector<1x64xf32>
    %cst_34 = arith.constant 0.000000e+00 : f32
    %44 = vector.broadcast %cst_34 : f32 to vector<32x64xf32>
    %c0_35 = arith.constant 0 : index
    %c1_36 = arith.constant 1 : index
    %c0_37 = arith.constant 0 : index
    %45 = vector.load %arg1[%c0_35, %c1_36, %c0_37] : memref<1x48x128xbf16, #tpu.memory_space<vmem>>, vector<1x32x128xbf16>
    %46 = vector.shape_cast %45 : vector<1x32x128xbf16> to vector<32x128xbf16>
    %c4 = arith.constant 4 : index
    %c0_38 = arith.constant 0 : index
    %c0_39 = arith.constant 0 : index
    %47 = vector.load %arg2[%c4, %c0_38, %c0_39] : memref<16x128x64xbf16, #tpu.memory_space<vmem>>, vector<1x128x64xbf16>
    %48 = vector.shape_cast %47 : vector<1x128x64xbf16> to vector<128x64xbf16>
    %cst_40 = arith.constant dense<0.000000e+00> : vector<32x64xf32>
    %49 = tpu.matmul %46, %48, %cst_40 {dimension_numbers = #tpu.dot_dimension_numbers<[1], [0], [0], [1], [0, 0, 1, 1], [], []>} : vector<32x128xbf16>, vector<128x64xbf16>, vector<32x64xf32> -> vector<32x64xf32>
    %50 = arith.addf %44, %49 : vector<32x64xf32>
    %c0_41 = arith.constant 0 : index
    %c2_42 = arith.constant 2 : index
    %c0_43 = arith.constant 0 : index
    %51 = vector.load %arg1[%c0_41, %c2_42, %c0_43] : memref<1x48x128xbf16, #tpu.memory_space<vmem>>, vector<1x32x128xbf16>
    %52 = vector.shape_cast %51 : vector<1x32x128xbf16> to vector<32x128xbf16>
    %c5 = arith.constant 5 : index
    %c0_44 = arith.constant 0 : index
    %c0_45 = arith.constant 0 : index
    %53 = vector.load %arg2[%c5, %c0_44, %c0_45] : memref<16x128x64xbf16, #tpu.memory_space<vmem>>, vector<1x128x64xbf16>
    %54 = vector.shape_cast %53 : vector<1x128x64xbf16> to vector<128x64xbf16>
    %cst_46 = arith.constant dense<0.000000e+00> : vector<32x64xf32>
    %55 = tpu.matmul %52, %54, %cst_46 {dimension_numbers = #tpu.dot_dimension_numbers<[1], [0], [0], [1], [0, 0, 1, 1], [], []>} : vector<32x128xbf16>, vector<128x64xbf16>, vector<32x64xf32> -> vector<32x64xf32>
    %56 = arith.addf %50, %55 : vector<32x64xf32>
    %c0_47 = arith.constant 0 : index
    %c7_48 = arith.constant 7 : index
    %c0_49 = arith.constant 0 : index
    %57 = vector.load %arg1[%c0_47, %c7_48, %c0_49] : memref<1x48x128xbf16, #tpu.memory_space<vmem>>, vector<1x32x128xbf16>
    %58 = vector.shape_cast %57 : vector<1x32x128xbf16> to vector<32x128xbf16>
    %c6_50 = arith.constant 6 : index
    %c0_51 = arith.constant 0 : index
    %c0_52 = arith.constant 0 : index
    %59 = vector.load %arg2[%c6_50, %c0_51, %c0_52] : memref<16x128x64xbf16, #tpu.memory_space<vmem>>, vector<1x128x64xbf16>
    %60 = vector.shape_cast %59 : vector<1x128x64xbf16> to vector<128x64xbf16>
    %cst_53 = arith.constant dense<0.000000e+00> : vector<32x64xf32>
    %61 = tpu.matmul %58, %60, %cst_53 {dimension_numbers = #tpu.dot_dimension_numbers<[1], [0], [0], [1], [0, 0, 1, 1], [], []>} : vector<32x128xbf16>, vector<128x64xbf16>, vector<32x64xf32> -> vector<32x64xf32>
    %62 = arith.addf %56, %61 : vector<32x64xf32>
    %c0_54 = arith.constant 0 : index
    %c8 = arith.constant 8 : index
    %c0_55 = arith.constant 0 : index
    %63 = vector.load %arg1[%c0_54, %c8, %c0_55] : memref<1x48x128xbf16, #tpu.memory_space<vmem>>, vector<1x32x128xbf16>
    %64 = vector.shape_cast %63 : vector<1x32x128xbf16> to vector<32x128xbf16>
    %c7_56 = arith.constant 7 : index
    %c0_57 = arith.constant 0 : index
    %c0_58 = arith.constant 0 : index
    %65 = vector.load %arg2[%c7_56, %c0_57, %c0_58] : memref<16x128x64xbf16, #tpu.memory_space<vmem>>, vector<1x128x64xbf16>
    %66 = vector.shape_cast %65 : vector<1x128x64xbf16> to vector<128x64xbf16>
    %cst_59 = arith.constant dense<0.000000e+00> : vector<32x64xf32>
    %67 = tpu.matmul %64, %66, %cst_59 {dimension_numbers = #tpu.dot_dimension_numbers<[1], [0], [0], [1], [0, 0, 1, 1], [], []>} : vector<32x128xbf16>, vector<128x64xbf16>, vector<32x64xf32> -> vector<32x64xf32>
    %68 = arith.addf %62, %67 : vector<32x64xf32>
    %69 = vector.broadcast %0 : vector<1x64xf32> to vector<32x64xf32>
    %70 = arith.addf %68, %69 : vector<32x64xf32>
    %71 = arith.truncf %70 : vector<32x64xf32> to vector<32x64xbf16>
    %c0_60 = arith.constant 0 : index
    %c1_61 = arith.constant 1 : index
    %c0_62 = arith.constant 0 : index
    %c0_63 = arith.constant 0 : index
    %72 = vector.load %arg5[%c0_60, %c1_61, %c0_62, %c0_63] : memref<1x4x32x64xbf16, #tpu.memory_space<vmem>>, vector<1x1x32x64xbf16>
    %73 = vector.shape_cast %72 : vector<1x1x32x64xbf16> to vector<32x64xbf16>
    %74 = vector.shape_cast %71 : vector<32x64xbf16> to vector<1x1x32x64xbf16>
    tpu.vector_store %arg5[%c0_60, %c1_61, %c0_62, %c0_63], %74 {strides = array<i32>} : memref<1x4x32x64xbf16, #tpu.memory_space<vmem>>, vector<1x1x32x64xbf16>,
    %75 = vector.broadcast %1 : vector<32x1xf32> to vector<32x64xf32>
    %76 = arith.mulf %70, %75 : vector<32x64xf32>
    %cst_64 = arith.constant dense<0.000000e+00> : vector<64xf32>
    %77 = vector.multi_reduction <add>, %76, %cst_64 [0] : vector<32x64xf32> to vector<64xf32>
    %78 = vector.shape_cast %77 : vector<64xf32> to vector<1x64xf32>
    %79 = arith.addf %39, %78 : vector<1x64xf32>
    %80 = arith.mulf %76, %76 : vector<32x64xf32>
    %cst_65 = arith.constant dense<0.000000e+00> : vector<64xf32>
    %81 = vector.multi_reduction <add>, %80, %cst_65 [0] : vector<32x64xf32> to vector<64xf32>
    %82 = vector.shape_cast %81 : vector<64xf32> to vector<1x64xf32>
    %83 = arith.addf %43, %82 : vector<1x64xf32>
    %cst_66 = arith.constant 0.000000e+00 : f32
    %84 = vector.broadcast %cst_66 : f32 to vector<32x64xf32>
    %c0_67 = arith.constant 0 : index
    %c6_68 = arith.constant 6 : index
    %c0_69 = arith.constant 0 : index
    %85 = vector.load %arg1[%c0_67, %c6_68, %c0_69] : memref<1x48x128xbf16, #tpu.memory_space<vmem>>, vector<1x32x128xbf16>
    %86 = vector.shape_cast %85 : vector<1x32x128xbf16> to vector<32x128xbf16>
    %c8_70 = arith.constant 8 : index
    %c0_71 = arith.constant 0 : index
    %c0_72 = arith.constant 0 : index
    %87 = vector.load %arg2[%c8_70, %c0_71, %c0_72] : memref<16x128x64xbf16, #tpu.memory_space<vmem>>, vector<1x128x64xbf16>
    %88 = vector.shape_cast %87 : vector<1x128x64xbf16> to vector<128x64xbf16>
    %cst_73 = arith.constant dense<0.000000e+00> : vector<32x64xf32>
    %89 = tpu.matmul %86, %88, %cst_73 {dimension_numbers = #tpu.dot_dimension_numbers<[1], [0], [0], [1], [0, 0, 1, 1], [], []>} : vector<32x128xbf16>, vector<128x64xbf16>, vector<32x64xf32> -> vector<32x64xf32>
    %90 = arith.addf %84, %89 : vector<32x64xf32>
    %c0_74 = arith.constant 0 : index
    %c7_75 = arith.constant 7 : index
    %c0_76 = arith.constant 0 : index
    %91 = vector.load %arg1[%c0_74, %c7_75, %c0_76] : memref<1x48x128xbf16, #tpu.memory_space<vmem>>, vector<1x32x128xbf16>
    %92 = vector.shape_cast %91 : vector<1x32x128xbf16> to vector<32x128xbf16>
    %c9 = arith.constant 9 : index
    %c0_77 = arith.constant 0 : index
    %c0_78 = arith.constant 0 : index
    %93 = vector.load %arg2[%c9, %c0_77, %c0_78] : memref<16x128x64xbf16, #tpu.memory_space<vmem>>, vector<1x128x64xbf16>
    %94 = vector.shape_cast %93 : vector<1x128x64xbf16> to vector<128x64xbf16>
    %cst_79 = arith.constant dense<0.000000e+00> : vector<32x64xf32>
    %95 = tpu.matmul %92, %94, %cst_79 {dimension_numbers = #tpu.dot_dimension_numbers<[1], [0], [0], [1], [0, 0, 1, 1], [], []>} : vector<32x128xbf16>, vector<128x64xbf16>, vector<32x64xf32> -> vector<32x64xf32>
    %96 = arith.addf %90, %95 : vector<32x64xf32>
    %c0_80 = arith.constant 0 : index
    %c12 = arith.constant 12 : index
    %c0_81 = arith.constant 0 : index
    %97 = vector.load %arg1[%c0_80, %c12, %c0_81] : memref<1x48x128xbf16, #tpu.memory_space<vmem>>, vector<1x32x128xbf16>
    %98 = vector.shape_cast %97 : vector<1x32x128xbf16> to vector<32x128xbf16>
    %c10 = arith.constant 10 : index
    %c0_82 = arith.constant 0 : index
    %c0_83 = arith.constant 0 : index
    %99 = vector.load %arg2[%c10, %c0_82, %c0_83] : memref<16x128x64xbf16, #tpu.memory_space<vmem>>, vector<1x128x64xbf16>
    %100 = vector.shape_cast %99 : vector<1x128x64xbf16> to vector<128x64xbf16>
    %cst_84 = arith.constant dense<0.000000e+00> : vector<32x64xf32>
    %101 = tpu.matmul %98, %100, %cst_84 {dimension_numbers = #tpu.dot_dimension_numbers<[1], [0], [0], [1], [0, 0, 1, 1], [], []>} : vector<32x128xbf16>, vector<128x64xbf16>, vector<32x64xf32> -> vector<32x64xf32>
    %102 = arith.addf %96, %101 : vector<32x64xf32>
    %c0_85 = arith.constant 0 : index
    %c13 = arith.constant 13 : index
    %c0_86 = arith.constant 0 : index
    %103 = vector.load %arg1[%c0_85, %c13, %c0_86] : memref<1x48x128xbf16, #tpu.memory_space<vmem>>, vector<1x32x128xbf16>
    %104 = vector.shape_cast %103 : vector<1x32x128xbf16> to vector<32x128xbf16>
    %c11 = arith.constant 11 : index
    %c0_87 = arith.constant 0 : index
    %c0_88 = arith.constant 0 : index
    %105 = vector.load %arg2[%c11, %c0_87, %c0_88] : memref<16x128x64xbf16, #tpu.memory_space<vmem>>, vector<1x128x64xbf16>
    %106 = vector.shape_cast %105 : vector<1x128x64xbf16> to vector<128x64xbf16>
    %cst_89 = arith.constant dense<0.000000e+00> : vector<32x64xf32>
    %107 = tpu.matmul %104, %106, %cst_89 {dimension_numbers = #tpu.dot_dimension_numbers<[1], [0], [0], [1], [0, 0, 1, 1], [], []>} : vector<32x128xbf16>, vector<128x64xbf16>, vector<32x64xf32> -> vector<32x64xf32>
    %108 = arith.addf %102, %107 : vector<32x64xf32>
    %109 = vector.broadcast %0 : vector<1x64xf32> to vector<32x64xf32>
    %110 = arith.addf %108, %109 : vector<32x64xf32>
    %111 = arith.truncf %110 : vector<32x64xf32> to vector<32x64xbf16>
    %c0_90 = arith.constant 0 : index
    %c2_91 = arith.constant 2 : index
    %c0_92 = arith.constant 0 : index
    %c0_93 = arith.constant 0 : index
    %112 = vector.load %arg5[%c0_90, %c2_91, %c0_92, %c0_93] : memref<1x4x32x64xbf16, #tpu.memory_space<vmem>>, vector<1x1x32x64xbf16>
    %113 = vector.shape_cast %112 : vector<1x1x32x64xbf16> to vector<32x64xbf16>
    %114 = vector.shape_cast %111 : vector<32x64xbf16> to vector<1x1x32x64xbf16>
    tpu.vector_store %arg5[%c0_90, %c2_91, %c0_92, %c0_93], %114 {strides = array<i32>} : memref<1x4x32x64xbf16, #tpu.memory_space<vmem>>, vector<1x1x32x64xbf16>,
    %115 = vector.broadcast %1 : vector<32x1xf32> to vector<32x64xf32>
    %116 = arith.mulf %110, %115 : vector<32x64xf32>
    %cst_94 = arith.constant dense<0.000000e+00> : vector<64xf32>
    %117 = vector.multi_reduction <add>, %116, %cst_94 [0] : vector<32x64xf32> to vector<64xf32>
    %118 = vector.shape_cast %117 : vector<64xf32> to vector<1x64xf32>
    %119 = arith.addf %79, %118 : vector<1x64xf32>
    %120 = arith.mulf %116, %116 : vector<32x64xf32>
    %cst_95 = arith.constant dense<0.000000e+00> : vector<64xf32>
    %121 = vector.multi_reduction <add>, %120, %cst_95 [0] : vector<32x64xf32> to vector<64xf32>
    %122 = vector.shape_cast %121 : vector<64xf32> to vector<1x64xf32>
    %123 = arith.addf %83, %122 : vector<1x64xf32>
    %cst_96 = arith.constant 0.000000e+00 : f32
    %124 = vector.broadcast %cst_96 : f32 to vector<32x64xf32>
    %c0_97 = arith.constant 0 : index
    %c7_98 = arith.constant 7 : index
    %c0_99 = arith.constant 0 : index
    %125 = vector.load %arg1[%c0_97, %c7_98, %c0_99] : memref<1x48x128xbf16, #tpu.memory_space<vmem>>, vector<1x32x128xbf16>
    %126 = vector.shape_cast %125 : vector<1x32x128xbf16> to vector<32x128xbf16>
    %c12_100 = arith.constant 12 : index
    %c0_101 = arith.constant 0 : index
    %c0_102 = arith.constant 0 : index
    %127 = vector.load %arg2[%c12_100, %c0_101, %c0_102] : memref<16x128x64xbf16, #tpu.memory_space<vmem>>, vector<1x128x64xbf16>
    %128 = vector.shape_cast %127 : vector<1x128x64xbf16> to vector<128x64xbf16>
    %cst_103 = arith.constant dense<0.000000e+00> : vector<32x64xf32>
    %129 = tpu.matmul %126, %128, %cst_103 {dimension_numbers = #tpu.dot_dimension_numbers<[1], [0], [0], [1], [0, 0, 1, 1], [], []>} : vector<32x128xbf16>, vector<128x64xbf16>, vector<32x64xf32> -> vector<32x64xf32>
    %130 = arith.addf %124, %129 : vector<32x64xf32>
    %c0_104 = arith.constant 0 : index
    %c8_105 = arith.constant 8 : index
    %c0_106 = arith.constant 0 : index
    %131 = vector.load %arg1[%c0_104, %c8_105, %c0_106] : memref<1x48x128xbf16, #tpu.memory_space<vmem>>, vector<1x32x128xbf16>
    %132 = vector.shape_cast %131 : vector<1x32x128xbf16> to vector<32x128xbf16>
    %c13_107 = arith.constant 13 : index
    %c0_108 = arith.constant 0 : index
    %c0_109 = arith.constant 0 : index
    %133 = vector.load %arg2[%c13_107, %c0_108, %c0_109] : memref<16x128x64xbf16, #tpu.memory_space<vmem>>, vector<1x128x64xbf16>
    %134 = vector.shape_cast %133 : vector<1x128x64xbf16> to vector<128x64xbf16>
    %cst_110 = arith.constant dense<0.000000e+00> : vector<32x64xf32>
    %135 = tpu.matmul %132, %134, %cst_110 {dimension_numbers = #tpu.dot_dimension_numbers<[1], [0], [0], [1], [0, 0, 1, 1], [], []>} : vector<32x128xbf16>, vector<128x64xbf16>, vector<32x64xf32> -> vector<32x64xf32>
    %136 = arith.addf %130, %135 : vector<32x64xf32>
    %c0_111 = arith.constant 0 : index
    %c13_112 = arith.constant 13 : index
    %c0_113 = arith.constant 0 : index
    %137 = vector.load %arg1[%c0_111, %c13_112, %c0_113] : memref<1x48x128xbf16, #tpu.memory_space<vmem>>, vector<1x32x128xbf16>
    %138 = vector.shape_cast %137 : vector<1x32x128xbf16> to vector<32x128xbf16>
    %c14 = arith.constant 14 : index
    %c0_114 = arith.constant 0 : index
    %c0_115 = arith.constant 0 : index
    %139 = vector.load %arg2[%c14, %c0_114, %c0_115] : memref<16x128x64xbf16, #tpu.memory_space<vmem>>, vector<1x128x64xbf16>
    %140 = vector.shape_cast %139 : vector<1x128x64xbf16> to vector<128x64xbf16>
    %cst_116 = arith.constant dense<0.000000e+00> : vector<32x64xf32>
    %141 = tpu.matmul %138, %140, %cst_116 {dimension_numbers = #tpu.dot_dimension_numbers<[1], [0], [0], [1], [0, 0, 1, 1], [], []>} : vector<32x128xbf16>, vector<128x64xbf16>, vector<32x64xf32> -> vector<32x64xf32>
    %142 = arith.addf %136, %141 : vector<32x64xf32>
    %c0_117 = arith.constant 0 : index
    %c14_118 = arith.constant 14 : index
    %c0_119 = arith.constant 0 : index
    %143 = vector.load %arg1[%c0_117, %c14_118, %c0_119] : memref<1x48x128xbf16, #tpu.memory_space<vmem>>, vector<1x32x128xbf16>
    %144 = vector.shape_cast %143 : vector<1x32x128xbf16> to vector<32x128xbf16>
    %c15 = arith.constant 15 : index
    %c0_120 = arith.constant 0 : index
    %c0_121 = arith.constant 0 : index
    %145 = vector.load %arg2[%c15, %c0_120, %c0_121] : memref<16x128x64xbf16, #tpu.memory_space<vmem>>, vector<1x128x64xbf16>
    %146 = vector.shape_cast %145 : vector<1x128x64xbf16> to vector<128x64xbf16>
    %cst_122 = arith.constant dense<0.000000e+00> : vector<32x64xf32>
    %147 = tpu.matmul %144, %146, %cst_122 {dimension_numbers = #tpu.dot_dimension_numbers<[1], [0], [0], [1], [0, 0, 1, 1], [], []>} : vector<32x128xbf16>, vector<128x64xbf16>, vector<32x64xf32> -> vector<32x64xf32>
    %148 = arith.addf %142, %147 : vector<32x64xf32>
    %149 = vector.broadcast %0 : vector<1x64xf32> to vector<32x64xf32>
    %150 = arith.addf %148, %149 : vector<32x64xf32>
    %151 = arith.truncf %150 : vector<32x64xf32> to vector<32x64xbf16>
    %c0_123 = arith.constant 0 : index
    %c3_124 = arith.constant 3 : index
    %c0_125 = arith.constant 0 : index
    %c0_126 = arith.constant 0 : index
    %152 = vector.load %arg5[%c0_123, %c3_124, %c0_125, %c0_126] : memref<1x4x32x64xbf16, #tpu.memory_space<vmem>>, vector<1x1x32x64xbf16>
    %153 = vector.shape_cast %152 : vector<1x1x32x64xbf16> to vector<32x64xbf16>
    %154 = vector.shape_cast %151 : vector<32x64xbf16> to vector<1x1x32x64xbf16>
    tpu.vector_store %arg5[%c0_123, %c3_124, %c0_125, %c0_126], %154 {strides = array<i32>} : memref<1x4x32x64xbf16, #tpu.memory_space<vmem>>, vector<1x1x32x64xbf16>,
    %155 = vector.broadcast %1 : vector<32x1xf32> to vector<32x64xf32>
    %156 = arith.mulf %150, %155 : vector<32x64xf32>
    %cst_127 = arith.constant dense<0.000000e+00> : vector<64xf32>
    %157 = vector.multi_reduction <add>, %156, %cst_127 [0] : vector<32x64xf32> to vector<64xf32>
    %158 = vector.shape_cast %157 : vector<64xf32> to vector<1x64xf32>
    %159 = arith.addf %119, %158 : vector<1x64xf32>
    %160 = arith.mulf %156, %156 : vector<32x64xf32>
    %cst_128 = arith.constant dense<0.000000e+00> : vector<64xf32>
    %161 = vector.multi_reduction <add>, %160, %cst_128 [0] : vector<32x64xf32> to vector<64xf32>
    %162 = vector.shape_cast %161 : vector<64xf32> to vector<1x64xf32>
    %163 = arith.addf %123, %162 : vector<1x64xf32>
    %164 = tpu.concatenate %159, %163 in 0 : vector<1x64xf32>, vector<1x64xf32> -> vector<2x64xf32>
    %c0_129 = arith.constant 0 : index
    %c0_130 = arith.constant 0 : index
    %c0_131 = arith.constant 0 : index
    %165 = vector.load %arg6[%c0_129, %c0_130, %c0_131] : memref<1x2x64xf32, #tpu.memory_space<vmem>>, vector<1x2x64xf32>
    %166 = vector.shape_cast %165 : vector<1x2x64xf32> to vector<2x64xf32>
    %167 = vector.shape_cast %164 : vector<2x64xf32> to vector<1x2x64xf32>
    tpu.vector_store %arg6[%c0_129, %c0_130, %c0_131], %167 {strides = array<i32>} : memref<1x2x64xf32, #tpu.memory_space<vmem>>, vector<1x2x64xf32>,
    return
  }
  func.func @transform_0(%arg0: i32) -> (i32, i32, i32) {
    %c0_i32 = arith.constant 0 : i32
    %c0_i32_0 = arith.constant 0 : i32
    %c0_i32_1 = arith.constant 0 : i32
    return %arg0, %c0_i32, %c0_i32_0 : i32, i32, i32
  }
  func.func @transform_1(%arg0: i32) -> (i32, i32, i32) {
    %c0_i32 = arith.constant 0 : i32
    %c0_i32_0 = arith.constant 0 : i32
    %c0_i32_1 = arith.constant 0 : i32
    %c0_i32_2 = arith.constant 0 : i32
    return %c0_i32, %c0_i32_0, %c0_i32_1 : i32, i32, i32
  }
  func.func @transform_2(%arg0: i32) -> (i32, i32) {
    %c0_i32 = arith.constant 0 : i32
    %c0_i32_0 = arith.constant 0 : i32
    %c0_i32_1 = arith.constant 0 : i32
    return %c0_i32, %c0_i32_0 : i32, i32
  }
  func.func @transform_3(%arg0: i32) -> (i32, i32) {
    %c0_i32 = arith.constant 0 : i32
    %c0_i32_0 = arith.constant 0 : i32
    %c0_i32_1 = arith.constant 0 : i32
    return %c0_i32, %c0_i32_0 : i32, i32
  }
  func.func @transform_4(%arg0: i32) -> (i32, i32, i32, i32) {
    %c0_i32 = arith.constant 0 : i32
    %c0_i32_0 = arith.constant 0 : i32
    %c0_i32_1 = arith.constant 0 : i32
    %c0_i32_2 = arith.constant 0 : i32
    return %arg0, %c0_i32, %c0_i32_0, %c0_i32_1 : i32, i32, i32, i32
  }
  func.func @transform_5(%arg0: i32) -> (i32, i32, i32) {
    %c0_i32 = arith.constant 0 : i32
    %c0_i32_0 = arith.constant 0 : i32
    %c0_i32_1 = arith.constant 0 : i32
    return %arg0, %c0_i32, %c0_i32_0 : i32, i32, i32
  }
}

module attributes {stable_mosaic.version = 11 : i64} {
  func.func @_bn_act_kernel(%arg0: i32, %arg1: memref<128x128xbf16, #tpu.memory_space<vmem>>, %arg2: memref<2x128xf32, #tpu.memory_space<vmem>>, %arg3: memref<1x128xf32, #tpu.memory_space<vmem>>, %arg4: memref<1x128xf32, #tpu.memory_space<vmem>>, %arg5: memref<128x128xbf16, #tpu.memory_space<vmem>>) attributes {dimension_semantics = [#tpu.dimension_semantics<parallel>], iteration_bounds = array<i64: 1>, scalar_prefetch = 0 : i64, scratch_operands = 0 : i64, tpu.core_type = #tpu.core_type<tc>, window_params = [{transform_indices = @transform_0, window_bounds = array<i64: 128, 128>}, {pipeline_mode = #tpu.pipeline_mode<synchronous>, transform_indices = @transform_1, window_bounds = array<i64: 2, 128>}, {pipeline_mode = #tpu.pipeline_mode<synchronous>, transform_indices = @transform_2, window_bounds = array<i64: 1, 128>}, {pipeline_mode = #tpu.pipeline_mode<synchronous>, transform_indices = @transform_3, window_bounds = array<i64: 1, 128>}, {transform_indices = @transform_4, window_bounds = array<i64: 128, 128>}]} {
    %c0 = arith.constant 0 : index
    %c0_0 = arith.constant 0 : index
    %0 = vector.load %arg2[%c0, %c0_0] : memref<2x128xf32, #tpu.memory_space<vmem>>, vector<1x128xf32>
    %cst = arith.constant 7.812500e-03 : f32
    %1 = vector.broadcast %cst : f32 to vector<1x128xf32>
    %2 = arith.mulf %0, %1 : vector<1x128xf32>
    %c1 = arith.constant 1 : index
    %c0_1 = arith.constant 0 : index
    %3 = vector.load %arg2[%c1, %c0_1] : memref<2x128xf32, #tpu.memory_space<vmem>>, vector<1x128xf32>
    %cst_2 = arith.constant 7.812500e-03 : f32
    %4 = vector.broadcast %cst_2 : f32 to vector<1x128xf32>
    %5 = arith.mulf %3, %4 : vector<1x128xf32>
    %6 = arith.mulf %2, %2 : vector<1x128xf32>
    %7 = arith.subf %5, %6 : vector<1x128xf32>
    %cst_3 = arith.constant 0.000000e+00 : f32
    %8 = vector.broadcast %cst_3 : f32 to vector<1x128xf32>
    %9 = arith.maximumf %7, %8 : vector<1x128xf32>
    %c0_4 = arith.constant 0 : index
    %c0_5 = arith.constant 0 : index
    %10 = vector.load %arg3[%c0_4, %c0_5] : memref<1x128xf32, #tpu.memory_space<vmem>>, vector<1x128xf32>
    %cst_6 = arith.constant 9.99999974E-6 : f32
    %11 = vector.broadcast %cst_6 : f32 to vector<1x128xf32>
    %12 = arith.addf %9, %11 : vector<1x128xf32>
    %13 = math.rsqrt %12 : vector<1x128xf32>
    %14 = arith.mulf %10, %13 : vector<1x128xf32>
    %c0_7 = arith.constant 0 : index
    %c0_8 = arith.constant 0 : index
    %15 = vector.load %arg4[%c0_7, %c0_8] : memref<1x128xf32, #tpu.memory_space<vmem>>, vector<1x128xf32>
    %16 = arith.mulf %2, %14 : vector<1x128xf32>
    %17 = arith.subf %15, %16 : vector<1x128xf32>
    %c0_9 = arith.constant 0 : index
    %c0_10 = arith.constant 0 : index
    %18 = vector.load %arg1[%c0_9, %c0_10] : memref<128x128xbf16, #tpu.memory_space<vmem>>, vector<128x128xbf16>
    %19 = arith.extf %18 : vector<128x128xbf16> to vector<128x128xf32>
    %20 = vector.broadcast %14 : vector<1x128xf32> to vector<128x128xf32>
    %21 = arith.mulf %19, %20 : vector<128x128xf32>
    %22 = vector.broadcast %17 : vector<1x128xf32> to vector<128x128xf32>
    %23 = arith.addf %21, %22 : vector<128x128xf32>
    %cst_11 = arith.constant 0.000000e+00 : f32
    %24 = vector.broadcast %cst_11 : f32 to vector<128x128xf32>
    %25 = arith.cmpf oge, %23, %24 : vector<128x128xf32>
    %cst_12 = arith.constant 0.00999999977 : f32
    %26 = vector.broadcast %cst_12 : f32 to vector<128x128xf32>
    %27 = arith.mulf %26, %23 : vector<128x128xf32>
    %28 = arith.select %25, %23, %27 : vector<128x128xi1>, vector<128x128xf32>
    %29 = arith.truncf %28 : vector<128x128xf32> to vector<128x128xbf16>
    %c0_13 = arith.constant 0 : index
    %c0_14 = arith.constant 0 : index
    %30 = vector.load %arg5[%c0_13, %c0_14] : memref<128x128xbf16, #tpu.memory_space<vmem>>, vector<128x128xbf16>
    tpu.vector_store %arg5[%c0_13, %c0_14], %29 {strides = array<i32>} : memref<128x128xbf16, #tpu.memory_space<vmem>>, vector<128x128xbf16>,
    return
  }
  func.func @transform_0(%arg0: i32) -> (i32, i32) {
    %c0_i32 = arith.constant 0 : i32
    %c0_i32_0 = arith.constant 0 : i32
    return %arg0, %c0_i32 : i32, i32
  }
  func.func @transform_1(%arg0: i32) -> (i32, i32) {
    %c0_i32 = arith.constant 0 : i32
    %c0_i32_0 = arith.constant 0 : i32
    %c0_i32_1 = arith.constant 0 : i32
    return %c0_i32, %c0_i32_0 : i32, i32
  }
  func.func @transform_2(%arg0: i32) -> (i32, i32) {
    %c0_i32 = arith.constant 0 : i32
    %c0_i32_0 = arith.constant 0 : i32
    %c0_i32_1 = arith.constant 0 : i32
    return %c0_i32, %c0_i32_0 : i32, i32
  }
  func.func @transform_3(%arg0: i32) -> (i32, i32) {
    %c0_i32 = arith.constant 0 : i32
    %c0_i32_0 = arith.constant 0 : i32
    %c0_i32_1 = arith.constant 0 : i32
    return %c0_i32, %c0_i32_0 : i32, i32
  }
  func.func @transform_4(%arg0: i32) -> (i32, i32) {
    %c0_i32 = arith.constant 0 : i32
    %c0_i32_0 = arith.constant 0 : i32
    return %arg0, %c0_i32 : i32, i32
  }
}

module attributes {stable_mosaic.version = 11 : i64} {
  func.func @_p1_kernel(%arg0: i32, %arg1: memref<1x104x64xbf16, #tpu.memory_space<vmem>>, %arg2: memref<16x64x3xbf16, #tpu.memory_space<vmem>>, %arg3: memref<1x3xf32, #tpu.memory_space<vmem>>, %arg4: memref<80x1xf32, #tpu.memory_space<vmem>>, %arg5: memref<1x4x80x3xf32, #tpu.memory_space<vmem>>) attributes {dimension_semantics = [#tpu.dimension_semantics<parallel>], iteration_bounds = array<i64: 2>, scalar_prefetch = 0 : i64, scratch_operands = 0 : i64, tpu.core_type = #tpu.core_type<tc>, window_params = [{transform_indices = @transform_0, window_bounds = array<i64: 1, 104, 64>}, {pipeline_mode = #tpu.pipeline_mode<synchronous>, transform_indices = @transform_1, window_bounds = array<i64: 16, 64, 3>}, {pipeline_mode = #tpu.pipeline_mode<synchronous>, transform_indices = @transform_2, window_bounds = array<i64: 1, 3>}, {pipeline_mode = #tpu.pipeline_mode<synchronous>, transform_indices = @transform_3, window_bounds = array<i64: 80, 1>}, {transform_indices = @transform_4, window_bounds = array<i64: 1, 4, 80, 3>}]} {
    %c0 = arith.constant 0 : index
    %c0_0 = arith.constant 0 : index
    %0 = vector.load %arg3[%c0, %c0_0] : memref<1x3xf32, #tpu.memory_space<vmem>>, vector<1x3xf32>
    %cst = arith.constant 0.000000e+00 : f32
    %1 = vector.broadcast %cst : f32 to vector<80x3xf32>
    %c0_1 = arith.constant 0 : index
    %c0_2 = arith.constant 0 : index
    %c0_3 = arith.constant 0 : index
    %2 = vector.load %arg1[%c0_1, %c0_2, %c0_3] : memref<1x104x64xbf16, #tpu.memory_space<vmem>>, vector<1x80x64xbf16>
    %3 = vector.shape_cast %2 : vector<1x80x64xbf16> to vector<80x64xbf16>
    %c0_4 = arith.constant 0 : index
    %c0_5 = arith.constant 0 : index
    %c0_6 = arith.constant 0 : index
    %4 = vector.load %arg2[%c0_4, %c0_5, %c0_6] : memref<16x64x3xbf16, #tpu.memory_space<vmem>>, vector<1x64x3xbf16>
    %5 = vector.shape_cast %4 : vector<1x64x3xbf16> to vector<64x3xbf16>
    %cst_7 = arith.constant dense<0.000000e+00> : vector<80x3xf32>
    %6 = tpu.matmul %3, %5, %cst_7 {dimension_numbers = #tpu.dot_dimension_numbers<[1], [0], [0], [1], [0, 0, 1, 1], [], []>} : vector<80x64xbf16>, vector<64x3xbf16>, vector<80x3xf32> -> vector<80x3xf32>
    %7 = arith.addf %1, %6 : vector<80x3xf32>
    %c0_8 = arith.constant 0 : index
    %c1 = arith.constant 1 : index
    %c0_9 = arith.constant 0 : index
    %8 = vector.load %arg1[%c0_8, %c1, %c0_9] : memref<1x104x64xbf16, #tpu.memory_space<vmem>>, vector<1x80x64xbf16>
    %9 = vector.shape_cast %8 : vector<1x80x64xbf16> to vector<80x64xbf16>
    %c1_10 = arith.constant 1 : index
    %c0_11 = arith.constant 0 : index
    %c0_12 = arith.constant 0 : index
    %10 = vector.load %arg2[%c1_10, %c0_11, %c0_12] : memref<16x64x3xbf16, #tpu.memory_space<vmem>>, vector<1x64x3xbf16>
    %11 = vector.shape_cast %10 : vector<1x64x3xbf16> to vector<64x3xbf16>
    %cst_13 = arith.constant dense<0.000000e+00> : vector<80x3xf32>
    %12 = tpu.matmul %9, %11, %cst_13 {dimension_numbers = #tpu.dot_dimension_numbers<[1], [0], [0], [1], [0, 0, 1, 1], [], []>} : vector<80x64xbf16>, vector<64x3xbf16>, vector<80x3xf32> -> vector<80x3xf32>
    %13 = arith.addf %7, %12 : vector<80x3xf32>
    %c0_14 = arith.constant 0 : index
    %c10 = arith.constant 10 : index
    %c0_15 = arith.constant 0 : index
    %14 = vector.load %arg1[%c0_14, %c10, %c0_15] : memref<1x104x64xbf16, #tpu.memory_space<vmem>>, vector<1x80x64xbf16>
    %15 = vector.shape_cast %14 : vector<1x80x64xbf16> to vector<80x64xbf16>
    %c2 = arith.constant 2 : index
    %c0_16 = arith.constant 0 : index
    %c0_17 = arith.constant 0 : index
    %16 = vector.load %arg2[%c2, %c0_16, %c0_17] : memref<16x64x3xbf16, #tpu.memory_space<vmem>>, vector<1x64x3xbf16>
    %17 = vector.shape_cast %16 : vector<1x64x3xbf16> to vector<64x3xbf16>
    %cst_18 = arith.constant dense<0.000000e+00> : vector<80x3xf32>
    %18 = tpu.matmul %15, %17, %cst_18 {dimension_numbers = #tpu.dot_dimension_numbers<[1], [0], [0], [1], [0, 0, 1, 1], [], []>} : vector<80x64xbf16>, vector<64x3xbf16>, vector<80x3xf32> -> vector<80x3xf32>
    %19 = arith.addf %13, %18 : vector<80x3xf32>
    %c0_19 = arith.constant 0 : index
    %c11 = arith.constant 11 : index
    %c0_20 = arith.constant 0 : index
    %20 = vector.load %arg1[%c0_19, %c11, %c0_20] : memref<1x104x64xbf16, #tpu.memory_space<vmem>>, vector<1x80x64xbf16>
    %21 = vector.shape_cast %20 : vector<1x80x64xbf16> to vector<80x64xbf16>
    %c3 = arith.constant 3 : index
    %c0_21 = arith.constant 0 : index
    %c0_22 = arith.constant 0 : index
    %22 = vector.load %arg2[%c3, %c0_21, %c0_22] : memref<16x64x3xbf16, #tpu.memory_space<vmem>>, vector<1x64x3xbf16>
    %23 = vector.shape_cast %22 : vector<1x64x3xbf16> to vector<64x3xbf16>
    %cst_23 = arith.constant dense<0.000000e+00> : vector<80x3xf32>
    %24 = tpu.matmul %21, %23, %cst_23 {dimension_numbers = #tpu.dot_dimension_numbers<[1], [0], [0], [1], [0, 0, 1, 1], [], []>} : vector<80x64xbf16>, vector<64x3xbf16>, vector<80x3xf32> -> vector<80x3xf32>
    %25 = arith.addf %19, %24 : vector<80x3xf32>
    %26 = vector.broadcast %0 : vector<1x3xf32> to vector<80x3xf32>
    %27 = arith.addf %25, %26 : vector<80x3xf32>
    %28 = math.tanh %27 : vector<80x3xf32>
    %c0_24 = arith.constant 0 : index
    %c0_25 = arith.constant 0 : index
    %c0_26 = arith.constant 0 : index
    %c0_27 = arith.constant 0 : index
    %29 = vector.load %arg5[%c0_24, %c0_25, %c0_26, %c0_27] : memref<1x4x80x3xf32, #tpu.memory_space<vmem>>, vector<1x1x80x3xf32>
    %30 = vector.shape_cast %29 : vector<1x1x80x3xf32> to vector<80x3xf32>
    %31 = vector.shape_cast %28 : vector<80x3xf32> to vector<1x1x80x3xf32>
    tpu.vector_store %arg5[%c0_24, %c0_25, %c0_26, %c0_27], %31 {strides = array<i32>} : memref<1x4x80x3xf32, #tpu.memory_space<vmem>>, vector<1x1x80x3xf32>,
    %cst_28 = arith.constant 0.000000e+00 : f32
    %32 = vector.broadcast %cst_28 : f32 to vector<80x3xf32>
    %c0_29 = arith.constant 0 : index
    %c1_30 = arith.constant 1 : index
    %c0_31 = arith.constant 0 : index
    %33 = vector.load %arg1[%c0_29, %c1_30, %c0_31] : memref<1x104x64xbf16, #tpu.memory_space<vmem>>, vector<1x80x64xbf16>
    %34 = vector.shape_cast %33 : vector<1x80x64xbf16> to vector<80x64xbf16>
    %c4 = arith.constant 4 : index
    %c0_32 = arith.constant 0 : index
    %c0_33 = arith.constant 0 : index
    %35 = vector.load %arg2[%c4, %c0_32, %c0_33] : memref<16x64x3xbf16, #tpu.memory_space<vmem>>, vector<1x64x3xbf16>
    %36 = vector.shape_cast %35 : vector<1x64x3xbf16> to vector<64x3xbf16>
    %cst_34 = arith.constant dense<0.000000e+00> : vector<80x3xf32>
    %37 = tpu.matmul %34, %36, %cst_34 {dimension_numbers = #tpu.dot_dimension_numbers<[1], [0], [0], [1], [0, 0, 1, 1], [], []>} : vector<80x64xbf16>, vector<64x3xbf16>, vector<80x3xf32> -> vector<80x3xf32>
    %38 = arith.addf %32, %37 : vector<80x3xf32>
    %c0_35 = arith.constant 0 : index
    %c2_36 = arith.constant 2 : index
    %c0_37 = arith.constant 0 : index
    %39 = vector.load %arg1[%c0_35, %c2_36, %c0_37] : memref<1x104x64xbf16, #tpu.memory_space<vmem>>, vector<1x80x64xbf16>
    %40 = vector.shape_cast %39 : vector<1x80x64xbf16> to vector<80x64xbf16>
    %c5 = arith.constant 5 : index
    %c0_38 = arith.constant 0 : index
    %c0_39 = arith.constant 0 : index
    %41 = vector.load %arg2[%c5, %c0_38, %c0_39] : memref<16x64x3xbf16, #tpu.memory_space<vmem>>, vector<1x64x3xbf16>
    %42 = vector.shape_cast %41 : vector<1x64x3xbf16> to vector<64x3xbf16>
    %cst_40 = arith.constant dense<0.000000e+00> : vector<80x3xf32>
    %43 = tpu.matmul %40, %42, %cst_40 {dimension_numbers = #tpu.dot_dimension_numbers<[1], [0], [0], [1], [0, 0, 1, 1], [], []>} : vector<80x64xbf16>, vector<64x3xbf16>, vector<80x3xf32> -> vector<80x3xf32>
    %44 = arith.addf %38, %43 : vector<80x3xf32>
    %c0_41 = arith.constant 0 : index
    %c11_42 = arith.constant 11 : index
    %c0_43 = arith.constant 0 : index
    %45 = vector.load %arg1[%c0_41, %c11_42, %c0_43] : memref<1x104x64xbf16, #tpu.memory_space<vmem>>, vector<1x80x64xbf16>
    %46 = vector.shape_cast %45 : vector<1x80x64xbf16> to vector<80x64xbf16>
    %c6 = arith.constant 6 : index
    %c0_44 = arith.constant 0 : index
    %c0_45 = arith.constant 0 : index
    %47 = vector.load %arg2[%c6, %c0_44, %c0_45] : memref<16x64x3xbf16, #tpu.memory_space<vmem>>, vector<1x64x3xbf16>
    %48 = vector.shape_cast %47 : vector<1x64x3xbf16> to vector<64x3xbf16>
    %cst_46 = arith.constant dense<0.000000e+00> : vector<80x3xf32>
    %49 = tpu.matmul %46, %48, %cst_46 {dimension_numbers = #tpu.dot_dimension_numbers<[1], [0], [0], [1], [0, 0, 1, 1], [], []>} : vector<80x64xbf16>, vector<64x3xbf16>, vector<80x3xf32> -> vector<80x3xf32>
    %50 = arith.addf %44, %49 : vector<80x3xf32>
    %c0_47 = arith.constant 0 : index
    %c12 = arith.constant 12 : index
    %c0_48 = arith.constant 0 : index
    %51 = vector.load %arg1[%c0_47, %c12, %c0_48] : memref<1x104x64xbf16, #tpu.memory_space<vmem>>, vector<1x80x64xbf16>
    %52 = vector.shape_cast %51 : vector<1x80x64xbf16> to vector<80x64xbf16>
    %c7 = arith.constant 7 : index
    %c0_49 = arith.constant 0 : index
    %c0_50 = arith.constant 0 : index
    %53 = vector.load %arg2[%c7, %c0_49, %c0_50] : memref<16x64x3xbf16, #tpu.memory_space<vmem>>, vector<1x64x3xbf16>
    %54 = vector.shape_cast %53 : vector<1x64x3xbf16> to vector<64x3xbf16>
    %cst_51 = arith.constant dense<0.000000e+00> : vector<80x3xf32>
    %55 = tpu.matmul %52, %54, %cst_51 {dimension_numbers = #tpu.dot_dimension_numbers<[1], [0], [0], [1], [0, 0, 1, 1], [], []>} : vector<80x64xbf16>, vector<64x3xbf16>, vector<80x3xf32> -> vector<80x3xf32>
    %56 = arith.addf %50, %55 : vector<80x3xf32>
    %57 = vector.broadcast %0 : vector<1x3xf32> to vector<80x3xf32>
    %58 = arith.addf %56, %57 : vector<80x3xf32>
    %59 = math.tanh %58 : vector<80x3xf32>
    %c0_52 = arith.constant 0 : index
    %c1_53 = arith.constant 1 : index
    %c0_54 = arith.constant 0 : index
    %c0_55 = arith.constant 0 : index
    %60 = vector.load %arg5[%c0_52, %c1_53, %c0_54, %c0_55] : memref<1x4x80x3xf32, #tpu.memory_space<vmem>>, vector<1x1x80x3xf32>
    %61 = vector.shape_cast %60 : vector<1x1x80x3xf32> to vector<80x3xf32>
    %62 = vector.shape_cast %59 : vector<80x3xf32> to vector<1x1x80x3xf32>
    tpu.vector_store %arg5[%c0_52, %c1_53, %c0_54, %c0_55], %62 {strides = array<i32>} : memref<1x4x80x3xf32, #tpu.memory_space<vmem>>, vector<1x1x80x3xf32>,
    %cst_56 = arith.constant 0.000000e+00 : f32
    %63 = vector.broadcast %cst_56 : f32 to vector<80x3xf32>
    %c0_57 = arith.constant 0 : index
    %c10_58 = arith.constant 10 : index
    %c0_59 = arith.constant 0 : index
    %64 = vector.load %arg1[%c0_57, %c10_58, %c0_59] : memref<1x104x64xbf16, #tpu.memory_space<vmem>>, vector<1x80x64xbf16>
    %65 = vector.shape_cast %64 : vector<1x80x64xbf16> to vector<80x64xbf16>
    %c8 = arith.constant 8 : index
    %c0_60 = arith.constant 0 : index
    %c0_61 = arith.constant 0 : index
    %66 = vector.load %arg2[%c8, %c0_60, %c0_61] : memref<16x64x3xbf16, #tpu.memory_space<vmem>>, vector<1x64x3xbf16>
    %67 = vector.shape_cast %66 : vector<1x64x3xbf16> to vector<64x3xbf16>
    %cst_62 = arith.constant dense<0.000000e+00> : vector<80x3xf32>
    %68 = tpu.matmul %65, %67, %cst_62 {dimension_numbers = #tpu.dot_dimension_numbers<[1], [0], [0], [1], [0, 0, 1, 1], [], []>} : vector<80x64xbf16>, vector<64x3xbf16>, vector<80x3xf32> -> vector<80x3xf32>
    %69 = arith.addf %63, %68 : vector<80x3xf32>
    %c0_63 = arith.constant 0 : index
    %c11_64 = arith.constant 11 : index
    %c0_65 = arith.constant 0 : index
    %70 = vector.load %arg1[%c0_63, %c11_64, %c0_65] : memref<1x104x64xbf16, #tpu.memory_space<vmem>>, vector<1x80x64xbf16>
    %71 = vector.shape_cast %70 : vector<1x80x64xbf16> to vector<80x64xbf16>
    %c9 = arith.constant 9 : index
    %c0_66 = arith.constant 0 : index
    %c0_67 = arith.constant 0 : index
    %72 = vector.load %arg2[%c9, %c0_66, %c0_67] : memref<16x64x3xbf16, #tpu.memory_space<vmem>>, vector<1x64x3xbf16>
    %73 = vector.shape_cast %72 : vector<1x64x3xbf16> to vector<64x3xbf16>
    %cst_68 = arith.constant dense<0.000000e+00> : vector<80x3xf32>
    %74 = tpu.matmul %71, %73, %cst_68 {dimension_numbers = #tpu.dot_dimension_numbers<[1], [0], [0], [1], [0, 0, 1, 1], [], []>} : vector<80x64xbf16>, vector<64x3xbf16>, vector<80x3xf32> -> vector<80x3xf32>
    %75 = arith.addf %69, %74 : vector<80x3xf32>
    %c0_69 = arith.constant 0 : index
    %c20 = arith.constant 20 : index
    %c0_70 = arith.constant 0 : index
    %76 = vector.load %arg1[%c0_69, %c20, %c0_70] : memref<1x104x64xbf16, #tpu.memory_space<vmem>>, vector<1x80x64xbf16>
    %77 = vector.shape_cast %76 : vector<1x80x64xbf16> to vector<80x64xbf16>
    %c10_71 = arith.constant 10 : index
    %c0_72 = arith.constant 0 : index
    %c0_73 = arith.constant 0 : index
    %78 = vector.load %arg2[%c10_71, %c0_72, %c0_73] : memref<16x64x3xbf16, #tpu.memory_space<vmem>>, vector<1x64x3xbf16>
    %79 = vector.shape_cast %78 : vector<1x64x3xbf16> to vector<64x3xbf16>
    %cst_74 = arith.constant dense<0.000000e+00> : vector<80x3xf32>
    %80 = tpu.matmul %77, %79, %cst_74 {dimension_numbers = #tpu.dot_dimension_numbers<[1], [0], [0], [1], [0, 0, 1, 1], [], []>} : vector<80x64xbf16>, vector<64x3xbf16>, vector<80x3xf32> -> vector<80x3xf32>
    %81 = arith.addf %75, %80 : vector<80x3xf32>
    %c0_75 = arith.constant 0 : index
    %c21 = arith.constant 21 : index
    %c0_76 = arith.constant 0 : index
    %82 = vector.load %arg1[%c0_75, %c21, %c0_76] : memref<1x104x64xbf16, #tpu.memory_space<vmem>>, vector<1x80x64xbf16>
    %83 = vector.shape_cast %82 : vector<1x80x64xbf16> to vector<80x64xbf16>
    %c11_77 = arith.constant 11 : index
    %c0_78 = arith.constant 0 : index
    %c0_79 = arith.constant 0 : index
    %84 = vector.load %arg2[%c11_77, %c0_78, %c0_79] : memref<16x64x3xbf16, #tpu.memory_space<vmem>>, vector<1x64x3xbf16>
    %85 = vector.shape_cast %84 : vector<1x64x3xbf16> to vector<64x3xbf16>
    %cst_80 = arith.constant dense<0.000000e+00> : vector<80x3xf32>
    %86 = tpu.matmul %83, %85, %cst_80 {dimension_numbers = #tpu.dot_dimension_numbers<[1], [0], [0], [1], [0, 0, 1, 1], [], []>} : vector<80x64xbf16>, vector<64x3xbf16>, vector<80x3xf32> -> vector<80x3xf32>
    %87 = arith.addf %81, %86 : vector<80x3xf32>
    %88 = vector.broadcast %0 : vector<1x3xf32> to vector<80x3xf32>
    %89 = arith.addf %87, %88 : vector<80x3xf32>
    %90 = math.tanh %89 : vector<80x3xf32>
    %c0_81 = arith.constant 0 : index
    %c2_82 = arith.constant 2 : index
    %c0_83 = arith.constant 0 : index
    %c0_84 = arith.constant 0 : index
    %91 = vector.load %arg5[%c0_81, %c2_82, %c0_83, %c0_84] : memref<1x4x80x3xf32, #tpu.memory_space<vmem>>, vector<1x1x80x3xf32>
    %92 = vector.shape_cast %91 : vector<1x1x80x3xf32> to vector<80x3xf32>
    %93 = vector.shape_cast %90 : vector<80x3xf32> to vector<1x1x80x3xf32>
    tpu.vector_store %arg5[%c0_81, %c2_82, %c0_83, %c0_84], %93 {strides = array<i32>} : memref<1x4x80x3xf32, #tpu.memory_space<vmem>>, vector<1x1x80x3xf32>,
    %cst_85 = arith.constant 0.000000e+00 : f32
    %94 = vector.broadcast %cst_85 : f32 to vector<80x3xf32>
    %c0_86 = arith.constant 0 : index
    %c11_87 = arith.constant 11 : index
    %c0_88 = arith.constant 0 : index
    %95 = vector.load %arg1[%c0_86, %c11_87, %c0_88] : memref<1x104x64xbf16, #tpu.memory_space<vmem>>, vector<1x80x64xbf16>
    %96 = vector.shape_cast %95 : vector<1x80x64xbf16> to vector<80x64xbf16>
    %c12_89 = arith.constant 12 : index
    %c0_90 = arith.constant 0 : index
    %c0_91 = arith.constant 0 : index
    %97 = vector.load %arg2[%c12_89, %c0_90, %c0_91] : memref<16x64x3xbf16, #tpu.memory_space<vmem>>, vector<1x64x3xbf16>
    %98 = vector.shape_cast %97 : vector<1x64x3xbf16> to vector<64x3xbf16>
    %cst_92 = arith.constant dense<0.000000e+00> : vector<80x3xf32>
    %99 = tpu.matmul %96, %98, %cst_92 {dimension_numbers = #tpu.dot_dimension_numbers<[1], [0], [0], [1], [0, 0, 1, 1], [], []>} : vector<80x64xbf16>, vector<64x3xbf16>, vector<80x3xf32> -> vector<80x3xf32>
    %100 = arith.addf %94, %99 : vector<80x3xf32>
    %c0_93 = arith.constant 0 : index
    %c12_94 = arith.constant 12 : index
    %c0_95 = arith.constant 0 : index
    %101 = vector.load %arg1[%c0_93, %c12_94, %c0_95] : memref<1x104x64xbf16, #tpu.memory_space<vmem>>, vector<1x80x64xbf16>
    %102 = vector.shape_cast %101 : vector<1x80x64xbf16> to vector<80x64xbf16>
    %c13 = arith.constant 13 : index
    %c0_96 = arith.constant 0 : index
    %c0_97 = arith.constant 0 : index
    %103 = vector.load %arg2[%c13, %c0_96, %c0_97] : memref<16x64x3xbf16, #tpu.memory_space<vmem>>, vector<1x64x3xbf16>
    %104 = vector.shape_cast %103 : vector<1x64x3xbf16> to vector<64x3xbf16>
    %cst_98 = arith.constant dense<0.000000e+00> : vector<80x3xf32>
    %105 = tpu.matmul %102, %104, %cst_98 {dimension_numbers = #tpu.dot_dimension_numbers<[1], [0], [0], [1], [0, 0, 1, 1], [], []>} : vector<80x64xbf16>, vector<64x3xbf16>, vector<80x3xf32> -> vector<80x3xf32>
    %106 = arith.addf %100, %105 : vector<80x3xf32>
    %c0_99 = arith.constant 0 : index
    %c21_100 = arith.constant 21 : index
    %c0_101 = arith.constant 0 : index
    %107 = vector.load %arg1[%c0_99, %c21_100, %c0_101] : memref<1x104x64xbf16, #tpu.memory_space<vmem>>, vector<1x80x64xbf16>
    %108 = vector.shape_cast %107 : vector<1x80x64xbf16> to vector<80x64xbf16>
    %c14 = arith.constant 14 : index
    %c0_102 = arith.constant 0 : index
    %c0_103 = arith.constant 0 : index
    %109 = vector.load %arg2[%c14, %c0_102, %c0_103] : memref<16x64x3xbf16, #tpu.memory_space<vmem>>, vector<1x64x3xbf16>
    %110 = vector.shape_cast %109 : vector<1x64x3xbf16> to vector<64x3xbf16>
    %cst_104 = arith.constant dense<0.000000e+00> : vector<80x3xf32>
    %111 = tpu.matmul %108, %110, %cst_104 {dimension_numbers = #tpu.dot_dimension_numbers<[1], [0], [0], [1], [0, 0, 1, 1], [], []>} : vector<80x64xbf16>, vector<64x3xbf16>, vector<80x3xf32> -> vector<80x3xf32>
    %112 = arith.addf %106, %111 : vector<80x3xf32>
    %c0_105 = arith.constant 0 : index
    %c22 = arith.constant 22 : index
    %c0_106 = arith.constant 0 : index
    %113 = vector.load %arg1[%c0_105, %c22, %c0_106] : memref<1x104x64xbf16, #tpu.memory_space<vmem>>, vector<1x80x64xbf16>
    %114 = vector.shape_cast %113 : vector<1x80x64xbf16> to vector<80x64xbf16>
    %c15 = arith.constant 15 : index
    %c0_107 = arith.constant 0 : index
    %c0_108 = arith.constant 0 : index
    %115 = vector.load %arg2[%c15, %c0_107, %c0_108] : memref<16x64x3xbf16, #tpu.memory_space<vmem>>, vector<1x64x3xbf16>
    %116 = vector.shape_cast %115 : vector<1x64x3xbf16> to vector<64x3xbf16>
    %cst_109 = arith.constant dense<0.000000e+00> : vector<80x3xf32>
    %117 = tpu.matmul %114, %116, %cst_109 {dimension_numbers = #tpu.dot_dimension_numbers<[1], [0], [0], [1], [0, 0, 1, 1], [], []>} : vector<80x64xbf16>, vector<64x3xbf16>, vector<80x3xf32> -> vector<80x3xf32>
    %118 = arith.addf %112, %117 : vector<80x3xf32>
    %119 = vector.broadcast %0 : vector<1x3xf32> to vector<80x3xf32>
    %120 = arith.addf %118, %119 : vector<80x3xf32>
    %121 = math.tanh %120 : vector<80x3xf32>
    %c0_110 = arith.constant 0 : index
    %c3_111 = arith.constant 3 : index
    %c0_112 = arith.constant 0 : index
    %c0_113 = arith.constant 0 : index
    %122 = vector.load %arg5[%c0_110, %c3_111, %c0_112, %c0_113] : memref<1x4x80x3xf32, #tpu.memory_space<vmem>>, vector<1x1x80x3xf32>
    %123 = vector.shape_cast %122 : vector<1x1x80x3xf32> to vector<80x3xf32>
    %124 = vector.shape_cast %121 : vector<80x3xf32> to vector<1x1x80x3xf32>
    tpu.vector_store %arg5[%c0_110, %c3_111, %c0_112, %c0_113], %124 {strides = array<i32>} : memref<1x4x80x3xf32, #tpu.memory_space<vmem>>, vector<1x1x80x3xf32>,
    return
  }
  func.func @transform_0(%arg0: i32) -> (i32, i32, i32) {
    %c0_i32 = arith.constant 0 : i32
    %c0_i32_0 = arith.constant 0 : i32
    %c0_i32_1 = arith.constant 0 : i32
    return %arg0, %c0_i32, %c0_i32_0 : i32, i32, i32
  }
  func.func @transform_1(%arg0: i32) -> (i32, i32, i32) {
    %c0_i32 = arith.constant 0 : i32
    %c0_i32_0 = arith.constant 0 : i32
    %c0_i32_1 = arith.constant 0 : i32
    %c0_i32_2 = arith.constant 0 : i32
    return %c0_i32, %c0_i32_0, %c0_i32_1 : i32, i32, i32
  }
  func.func @transform_2(%arg0: i32) -> (i32, i32) {
    %c0_i32 = arith.constant 0 : i32
    %c0_i32_0 = arith.constant 0 : i32
    %c0_i32_1 = arith.constant 0 : i32
    return %c0_i32, %c0_i32_0 : i32, i32
  }
  func.func @transform_3(%arg0: i32) -> (i32, i32) {
    %c0_i32 = arith.constant 0 : i32
    %c0_i32_0 = arith.constant 0 : i32
    %c0_i32_1 = arith.constant 0 : i32
    return %c0_i32, %c0_i32_0 : i32, i32
  }
  func.func @transform_4(%arg0: i32) -> (i32, i32, i32, i32) {
    %c0_i32 = arith.constant 0 : i32
    %c0_i32_0 = arith.constant 0 : i32
    %c0_i32_1 = arith.constant 0 : i32
    %c0_i32_2 = arith.constant 0 : i32
    return %arg0, %c0_i32, %c0_i32_0, %c0_i32_1 : i32, i32, i32, i32
  }
}

</mosaic_0001>

<llo_original>
// kernel: tile.30
$region0: #{tile.30}
  %s0 = inlined_call_operand.vmem [shape: f32[2,2,64], index: 0, kind: input, shape index: {}]
  %s1 = inlined_call_operand.vmem [shape: f32[2,128], index: 1, kind: output, shape index: {}]
  $region1: #{tile.30} parent=0
    #allocation0 [shape = 'u8[4096]{0}', space=vmem, size = 0x1000, scoped, tag = 'scoped mem for output reshape']
    #allocation1 [shape = 'u8[8192]{0}', space=vmem, size = 0x2000, scoped, tag = 'scoped mem for input reshape']
    %s3 = sshll.u32 1, 2
    %s4 = ssub.s32 %s3, 1
    %s5 = scalar_lea.vmem %s0, 2
    %v6 = vld [vmem:[%s5] sm:%s4]
    %s7 = scalar_lea.vmem [#allocation1], 8
    %8 = vst [vmem:[%s7] sm:%s4] %v6
    %v9 = vld [vmem:[%s0] sm:%s4]
    %10 = vst [vmem:[#allocation1] sm:%s4] %v9
    %s11 = smov 3
    %v12 = vld [vmem:[#allocation1] ss:$8 sm:%s11]
    %vm13 = vcmask 523264
    %14 = vst.msk [vmem:[#allocation0] sm:$0x3] %vm13, %v12
    %s15 = scalar_lea.vmem [#allocation1], 1
    %s16 = smov 3
    %v17 = vld [vmem:[%s15] ss:$8 sm:%s16]
    %18 = vrot.lane.b32.xlu0 %v17, 64
    %v19 = vpop.permute.xlu0 %18
    %vm20 = vcmask 1048064
    %21 = vst.msk [vmem:[#allocation0] sm:$0x3] %vm20, %v19
    %s23 = sshll.u32 1, 2
    %s24 = ssub.s32 %s23, 1
    %v26 = vld [vmem:[#allocation0] sm:%s24]
    %s27 = sshll.u32 1, 2
    %s28 = ssub.s32 %s27, 1
    %29 = vst [vmem:[%s1] sm:%s28] %v26

// kernel: generator_forward.8
$region0: #{generator_forward.8}
  #allocation0 [shape = 'u32[]', space=smem, size = 0x4, offset = 0x4, fixed_abs, tag = 'smem constant byte address 0x4 - core index']
  #allocation1 [shape = 'u32[144,128]{1,0:T(1,128)}', space=vmem, size = 0x12000, scoped, tag = 'internal scratch']
  %s0 = inlined_call_operand.vmem [shape: bf16[80,128], index: 0, kind: input, shape index: {}]
  %s1 = inlined_call_operand.vmem [shape: f32[2,128], index: 1, kind: input, shape index: {}]
  %s2 = inlined_call_operand.vmem [shape: f32[1,128], index: 2, kind: input, shape index: {}]
  %s3 = inlined_call_operand.vmem [shape: f32[1,128], index: 3, kind: input, shape index: {}]
  %s4 = inlined_call_operand.vmem [shape: bf16[80,128], index: 4, kind: output, shape index: {}]
  %s5 = sld [smem:[#allocation0]]
  $region49: #{generator_forward.8} parent=0
    _
  %s7 = ssub.s32 1, %s5
  %s8 = scalar_select 0, %s7, %s5
  loop: start=0, step=1, limit=7
  $region2: #{generator_forward.8} parent=0 // loop_pre_header
    _
  $region3: #{generator_forward.8} parent=0 // loop_header
    %s10 = sphi 0, %s14
    %p11 = scmp.ge.s32.totalorder %s10, 7
    %s20 = sphi 0, %s22
    %s23 = sphi 0, %s20
    %s24 = sphi 0, %s23
    %s40 = sphi 0, %s24
    %s44 = sphi 0, %s44
    %s46 = sphi 0, %s44
    %s47 = sphi 0, %s46
    %s61 = sphi 0, %s47
    %s65 = sphi 0, %s65
    %s67 = sphi 0, %s65
    %s68 = sphi 0, %s67
    %s82 = sphi 0, %s68
    %s86 = sphi 0, %s86
    %s88 = sphi 0, %s86
    %s89 = sphi 0, %s88
    %s103 = sphi 0, %s89
    %s109 = sphi 0, %s111
    %s112 = sphi 0, %s109
    %s113 = sphi 0, %s112
    %s129 = sphi 0, %s113
  $region4: #{generator_forward.8} parent=0 // loop_header_branch
    %13 = sbr.rel (%p11) target = $region8
  $region5: #{generator_forward.8} parent=0 // loop_body
    %s15 = ssub.s32 %s10, 1
    %s16 = ssub.s32 %s10, 2
    %s17 = sadd.s32 %s10, 1
    %s18 = ssub.s32 %s10, %s17
    %p19 = scmp.eq.s32.totalorder %s18, 0
    %s21 = sadd.s32 %s20, 1
    %s22 = scalar_select %p19, %s20, %s21
    %p25 = pneg %p19
    %p26 = scmp.eq.s32.totalorder %s10, 4
    %p27 = por %p25, %p26
    %p28 = scmp.ne.s32.totalorder %s20, %s23
    %p29 = scmp.eq.s32.totalorder %s10, 0
    %p30 = por %p28, %p29
    %p31 = scmp.ne.s32.totalorder %s20, %s23
    %p32 = scmp.eq.s32.totalorder %s15, 4
    %p33 = por %p31, %p32
    %p34 = scmp.ne.s32.totalorder %s23, %s24
    %p35 = scmp.eq.s32.totalorder %s15, 0
    %p36 = por %p34, %p35
    %p37 = scmp.ne.s32.totalorder %s23, %s24
    %p38 = scmp.eq.s32.totalorder %s16, 4
    %p39 = por %p37, %p38
    %p41 = scmp.ne.s32.totalorder %s24, %s40
    %p42 = scmp.eq.s32.totalorder %s16, 0
    %p43 = por %p41, %p42
    %s45 = sadd.s32 %s44, 1
    %p48 = scmp.eq.s32.totalorder %s10, 4
    %p49 = scmp.ne.s32.totalorder %s44, %s46
    %p50 = scmp.eq.s32.totalorder %s10, 0
    %p51 = por %p49, %p50
    %p52 = scmp.ne.s32.totalorder %s44, %s46
    %p53 = scmp.eq.s32.totalorder %s15, 4
    %p54 = por %p52, %p53
    %p55 = scmp.ne.s32.totalorder %s46, %s47
    %p56 = scmp.eq.s32.totalorder %s15, 0
    %p57 = por %p55, %p56
    %p58 = scmp.ne.s32.totalorder %s46, %s47
    %p59 = scmp.eq.s32.totalorder %s16, 4
    %p60 = por %p58, %p59
    %p62 = scmp.ne.s32.totalorder %s47, %s61
    %p63 = scmp.eq.s32.totalorder %s16, 0
    %p64 = por %p62, %p63
    %s66 = sadd.s32 %s65, 1
    %p69 = scmp.eq.s32.totalorder %s10, 4
    %p70 = scmp.ne.s32.totalorder %s65, %s67
    %p71 = scmp.eq.s32.totalorder %s10, 0
    %p72 = por %p70, %p71
    %p73 = scmp.ne.s32.totalorder %s65, %s67
    %p74 = scmp.eq.s32.totalorder %s15, 4
    %p75 = por %p73, %p74
    %p76 = scmp.ne.s32.totalorder %s67, %s68
    %p77 = scmp.eq.s32.totalorder %s15, 0
    %p78 = por %p76, %p77
    %p79 = scmp.ne.s32.totalorder %s67, %s68
    %p80 = scmp.eq.s32.totalorder %s16, 4
    %p81 = por %p79, %p80
    %p83 = scmp.ne.s32.totalorder %s68, %s82
    %p84 = scmp.eq.s32.totalorder %s16, 0
    %p85 = por %p83, %p84
    %s87 = sadd.s32 %s86, 1
    %p90 = scmp.eq.s32.totalorder %s10, 4
    %p91 = scmp.ne.s32.totalorder %s86, %s88
    %p92 = scmp.eq.s32.totalorder %s10, 0
    %p93 = por %p91, %p92
    %p94 = scmp.ne.s32.totalorder %s86, %s88
    %p95 = scmp.eq.s32.totalorder %s15, 4
    %p96 = por %p94, %p95
    %p97 = scmp.ne.s32.totalorder %s88, %s89
    %p98 = scmp.eq.s32.totalorder %s15, 0
    %p99 = por %p97, %p98
    %p100 = scmp.ne.s32.totalorder %s88, %s89
    %p101 = scmp.eq.s32.totalorder %s16, 4
    %p102 = por %p100, %p101
    %p104 = scmp.ne.s32.totalorder %s89, %s103
    %p105 = scmp.eq.s32.totalorder %s16, 0
    %p106 = por %p104, %p105
    %s107 = ssub.s32 %s10, %s17
    %p108 = scmp.eq.s32.totalorder %s107, 0
    %s110 = sadd.s32 %s109, 1
    %s111 = scalar_select %p108, %s109, %s110
    %p114 = pneg %p108
    %p115 = scmp.eq.s32.totalorder %s10, 4
    %p116 = por %p114, %p115
    %p117 = scmp.ne.s32.totalorder %s109, %s112
    %p118 = scmp.eq.s32.totalorder %s10, 0
    %p119 = por %p117, %p118
    %p120 = scmp.ne.s32.totalorder %s109, %s112
    %p121 = scmp.eq.s32.totalorder %s15, 4
    %p122 = por %p120, %p121
    %p123 = scmp.ne.s32.totalorder %s112, %s113
    %p124 = scmp.eq.s32.totalorder %s15, 0
    %p125 = por %p123, %p124
    %p126 = scmp.ne.s32.totalorder %s112, %s113
    %p127 = scmp.eq.s32.totalorder %s16, 4
    %p128 = por %p126, %p127
    %p130 = scmp.ne.s32.totalorder %s113, %s129
    %p131 = scmp.eq.s32.totalorder %s16, 0
    %p132 = por %p130, %p131
    %p133 = scmp.le.s32.totalorder 1, %s10
    %p134 = scmp.lt.s32.totalorder %s10, 6
    %p135 = pnand %p133, %p134
    %p136 = pneg %p135
    // Predicated region
    $region9: #{generator_forward.8} parent=5 // pred_check
      _
    $region10: #{generator_forward.8} parent=5 // pred_check_branch
      %138 = sbr.rel (%p135) target = $region12
    $region11: #{generator_forward.8} parent=5 // pred_region
      %s139 = ssub.s32 %s10, 1
      // Predicated region
      $region13: #{generator_forward.8} parent=11 // pred_check
        %p140 = pneg %p57
      $region14: #{generator_forward.8} parent=11 // pred_check_branch
        %142 = sbr.rel (%p140) target = $region16
      $region15: #{generator_forward.8} parent=11 // pred_region
        _
      $region16: #{generator_forward.8} parent=11 // pred_fallthru
        _
      // Predicated region
      $region17: #{generator_forward.8} parent=11 // pred_check
        %p143 = pneg %p78
      $region18: #{generator_forward.8} parent=11 // pred_check_branch
        %145 = sbr.rel (%p143) target = $region20
      $region19: #{generator_forward.8} parent=11 // pred_region
        _
      $region20: #{generator_forward.8} parent=11 // pred_fallthru
        _
      // Predicated region
      $region21: #{generator_forward.8} parent=11 // pred_check
        %p146 = pneg %p99
      $region22: #{generator_forward.8} parent=11 // pred_check_branch
        %148 = sbr.rel (%p146) target = $region24
      $region23: #{generator_forward.8} parent=11 // pred_region
        _
      $region24: #{generator_forward.8} parent=11 // pred_fallthru
        _
    $region12: #{generator_forward.8} parent=5 // pred_fallthru
      _
    %p149 = scmp.lt.s32.totalorder %s10, 5
    // Predicated region
    $region25: #{generator_forward.8} parent=5 // pred_check
      %p150 = pneg %p149
    $region26: #{generator_forward.8} parent=5 // pred_check_branch
      %152 = sbr.rel (%p150) target = $region28
    $region27: #{generator_forward.8} parent=5 // pred_region
      // Predicated region
      $region29: #{generator_forward.8} parent=27 // pred_check
        %p153 = pneg %p30
      $region30: #{generator_forward.8} parent=27 // pred_check_branch
        %155 = sbr.rel (%p153) target = $region32
      $region31: #{generator_forward.8} parent=27 // pred_region
        %s156 = smul.u32 2, %s10
        %p157 = scmp.lt.s32.totalorder %s156, 9
        %s158 = scalar_select %p157, %s156, 9
        %s159 = smul.addr %s158, 4
        %s160 = scalar_lea.vmem %s0, %s159
        %s161 = smul.u32 2, %s10
      $region32: #{generator_forward.8} parent=27 // pred_fallthru
        _
    $region28: #{generator_forward.8} parent=5 // pred_fallthru
      _
    %p162 = scmp.le.s32.totalorder 1, %s10
    %p163 = scmp.lt.s32.totalorder %s10, 6
    %p164 = pnand %p162, %p163
    %p165 = pneg %p164
    // Predicated region
    $region33: #{generator_forward.8} parent=5 // pred_check
      _
    $region34: #{generator_forward.8} parent=5 // pred_check_branch
      %167 = sbr.rel (%p164) target = $region36
    $region35: #{generator_forward.8} parent=5 // pred_region
      %s168 = ssub.s32 %s10, 1
      %s169 = smul.u32 2, %s15
      %p170 = scmp.lt.s32.totalorder %s169, 9
      %s171 = scalar_select %p170, %s169, 9
      %s172 = smul.addr %s171, 4
      %s173 = scalar_lea.vmem %s0, %s172
      %p174 = pneg %p36
      %p175 = pneg %p33
      %p176 = pneg %p57
      %p177 = pneg %p54
      %p178 = pneg %p78
      %p179 = pneg %p75
      %p180 = pneg %p99
      %p181 = pneg %p96
      %p182 = pneg %p125
      %p183 = pneg %p122
      %s184 = smul.u32 2, %s15
      %p185 = scmp.lt.s32.totalorder %s184, 9
      %s186 = scalar_select %p185, %s184, 9
      %s187 = smul.addr %s186, 4
      %s188 = scalar_lea.vmem %s4, %s187
      %s189 = smul.u32 2, %s15
      %p190 = scmp.lt.s32.totalorder %s189, 9
      %s191 = scalar_select %p190, %s189, 9
      %s192 = smul.addr %s191, 4
      %s193 = scalar_lea.vmem %s0, %s192
      %s194 = smul.u32 2, %s15
      %s195 = smul.u32 2, %s15
      %p196 = scmp.lt.s32.totalorder %s195, 9
      %s197 = scalar_select %p196, %s195, 9
      %s198 = smul.addr %s197, 4
      %s199 = scalar_lea.vmem %s4, %s198
      %s200 = smul.u32 2, %s15
      %v201 = vld [vmem:[%s1] sm:$0x1]
      %v202 = vmul.f32 %v201, 0.0078125
      %v203 = vld [vmem:[%s1 + $0x1] sm:$0x1]
      %v204 = vmul.f32 %v203, 0.0078125
      %v205 = vmul.f32 %v202, %v202
      %v206 = vsub.f32 %v204, %v205
      %v207 = vmax.f32 %v206, 0.0
      %v208 = vld [vmem:[%s2] sm:$0x1]
      %v209 = vadd.f32 %v207, 1e-05
      %v210 = vrsqrt.pop %v209
      %v211 = vmul.f32 %v208, %v210
      %v212 = vld [vmem:[%s3] sm:$0x1]
      %v213 = vmul.f32 %v202, %v211
      %v214 = vsub.f32 %v212, %v213
      %v215 = vld [vmem:[%s193] sm:$0xf]
      %v216 = vld [vmem:[%s193 + $0x4] sm:$0xf]
      %v217 = vunpack.c.l.bf16 %v215
      %v218 = vunpack.c.l.bf16 %v216
      %v220 = vlaneseq
      %v221 = vshrl.u32 %v220, 7
      %v222 = vsub.s32 0, %v221
      %v223 = vrot.slane %v211, %v222
      %v225 = vmul.f32 %v217, %v223
      %v226 = vmul.f32 %v218, %v223
      %v228 = vlaneseq
      %v229 = vshrl.u32 %v228, 7
      %v230 = vsub.s32 0, %v229
      %v231 = vrot.slane %v214, %v230
      %v233 = vadd.f32 %v225, %v231
      %v234 = vadd.f32 %v226, %v231
      %vm235 = vcmp.ge.f32.partialorder %v233, 0.0
      %vm236 = vcmp.ge.f32.partialorder %v234, 0.0
      %v237 = vmul.f32 %v233, 0.01
      %v238 = vmul.f32 %v234, 0.01
      %v239 = vsel %vm235, %v233, %v237
      %v240 = vsel %vm236, %v234, %v238
      %v241 = vpack.c.bf16 %v240, %v239
      %v243 = vunpack.c.l.b16 %v241
      %v244 = vunpack.c.h.b16 %v241
      %v245 = vpack.c.b16 %v243, %v243
      %v246 = vpack.c.b16 %v244, %v244
      %249 = vst [vmem:[%s199] sm:$0xf] %v245
      %250 = vst [vmem:[%s199 + $0x4] sm:$0xf] %v246
      %s251 = smul.u32 2, %s15
      %p252 = scmp.lt.s32.totalorder %s251, 9
      %s253 = scalar_select %p252, %s251, 9
      %s254 = smul.addr %s253, 4
      %s255 = scalar_lea.vmem %s4, %s254
      // Predicated region
      $region37: #{generator_forward.8} parent=35 // pred_check
        %p256 = pneg %p122
      $region38: #{generator_forward.8} parent=35 // pred_check_branch
        %258 = sbr.rel (%p256) target = $region40
      $region39: #{generator_forward.8} parent=35 // pred_region
        %s259 = smul.u32 2, %s15
      $region40: #{generator_forward.8} parent=35 // pred_fallthru
        _
    $region36: #{generator_forward.8} parent=5 // pred_fallthru
      _
    %p260 = scmp.le.s32.totalorder 2, %s10
    // Predicated region
    $region41: #{generator_forward.8} parent=5 // pred_check
      %p261 = pneg %p260
    $region42: #{generator_forward.8} parent=5 // pred_check_branch
      %263 = sbr.rel (%p261) target = $region44
    $region43: #{generator_forward.8} parent=5 // pred_region
      %s264 = ssub.s32 %s10, 2
      // Predicated region
      $region45: #{generator_forward.8} parent=43 // pred_check
        %p265 = pneg %p128
      $region46: #{generator_forward.8} parent=43 // pred_check_branch
        %267 = sbr.rel (%p265) target = $region48
      $region47: #{generator_forward.8} parent=43 // pred_region
        %s268 = smul.u32 2, %s16
        %p269 = scmp.lt.s32.totalorder %s268, 9
        %s270 = scalar_select %p269, %s268, 9
        %s271 = smul.addr %s270, 4
        %s272 = scalar_lea.vmem %s4, %s271
      $region48: #{generator_forward.8} parent=43 // pred_fallthru
        _
    $region44: #{generator_forward.8} parent=5 // pred_fallthru
      _
  $region6: #{generator_forward.8} parent=0 // loop_footer
    %s14 = sadd.s32 1, %s10
  $region7: #{generator_forward.8} parent=0 // loop_footer_branch
    %9 = sbr.rel target = $region3
  $region8: #{generator_forward.8} parent=0 // loop_exit
    _

// kernel: generator_forward.7
$region0: #{generator_forward.7}
  #allocation0 [shape = 'u32[]', space=smem, size = 0x4, offset = 0x4, fixed_abs, tag = 'smem constant byte address 0x4 - core index']
  #allocation1 [shape = 'u32[144,128]{1,0:T(1,128)}', space=vmem, size = 0x12000, scoped, tag = 'internal scratch']
  %s0 = inlined_call_operand.vmem [shape: bf16[2,96,12], index: 0, kind: input, shape index: {}]
  %s1 = inlined_call_operand.vmem [shape: bf16[4,12,64], index: 1, kind: input, shape index: {}]
  %s2 = inlined_call_operand.vmem [shape: f32[1,64], index: 2, kind: input, shape index: {}]
  %s3 = inlined_call_operand.vmem [shape: f32[80,1], index: 3, kind: input, shape index: {}]
  %s4 = inlined_call_operand.vmem [shape: bf16[2,1,80,64], index: 4, kind: output, shape index: {0}]
  %s5 = inlined_call_operand.vmem [shape: f32[2,2,64], index: 5, kind: output, shape index: {1}]
  %6 = xla_tuple %s4, %s5
  %s7 = sld [smem:[#allocation0]]
  $region57: #{generator_forward.7} parent=0
    _
  %s9 = ssub.s32 1, %s7
  %s10 = scalar_select 0, %s9, %s7
  loop: start=0, step=1, limit=4
  $region2: #{generator_forward.7} parent=0 // loop_pre_header
    _
  $region3: #{generator_forward.7} parent=0 // loop_header
    %s12 = sphi 0, %s16
    %p13 = scmp.ge.s32.totalorder %s12, 4
    %s22 = sphi 0, %s24
    %s25 = sphi 0, %s22
    %s26 = sphi 0, %s25
    %s42 = sphi 0, %s26
    %s46 = sphi 0, %s46
    %s48 = sphi 0, %s46
    %s49 = sphi 0, %s48
    %s63 = sphi 0, %s49
    %s67 = sphi 0, %s67
    %s69 = sphi 0, %s67
    %s70 = sphi 0, %s69
    %s84 = sphi 0, %s70
    %s88 = sphi 0, %s88
    %s90 = sphi 0, %s88
    %s91 = sphi 0, %s90
    %s105 = sphi 0, %s91
    %s111 = sphi 0, %s113
    %s114 = sphi 0, %s111
    %s115 = sphi 0, %s114
    %s131 = sphi 0, %s115
    %s137 = sphi 0, %s139
    %s140 = sphi 0, %s137
    %s141 = sphi 0, %s140
    %s157 = sphi 0, %s141
  $region4: #{generator_forward.7} parent=0 // loop_header_branch
    %15 = sbr.rel (%p13) target = $region8
  $region5: #{generator_forward.7} parent=0 // loop_body
    %s17 = ssub.s32 %s12, 1
    %s18 = ssub.s32 %s12, 2
    %s19 = sadd.s32 %s12, 1
    %s20 = ssub.s32 %s12, %s19
    %p21 = scmp.eq.s32.totalorder %s20, 0
    %s23 = sadd.s32 %s22, 1
    %s24 = scalar_select %p21, %s22, %s23
    %p27 = pneg %p21
    %p28 = scmp.eq.s32.totalorder %s12, 1
    %p29 = por %p27, %p28
    %p30 = scmp.ne.s32.totalorder %s22, %s25
    %p31 = scmp.eq.s32.totalorder %s12, 0
    %p32 = por %p30, %p31
    %p33 = scmp.ne.s32.totalorder %s22, %s25
    %p34 = scmp.eq.s32.totalorder %s17, 1
    %p35 = por %p33, %p34
    %p36 = scmp.ne.s32.totalorder %s25, %s26
    %p37 = scmp.eq.s32.totalorder %s17, 0
    %p38 = por %p36, %p37
    %p39 = scmp.ne.s32.totalorder %s25, %s26
    %p40 = scmp.eq.s32.totalorder %s18, 1
    %p41 = por %p39, %p40
    %p43 = scmp.ne.s32.totalorder %s26, %s42
    %p44 = scmp.eq.s32.totalorder %s18, 0
    %p45 = por %p43, %p44
    %s47 = sadd.s32 %s46, 1
    %p50 = scmp.eq.s32.totalorder %s12, 1
    %p51 = scmp.ne.s32.totalorder %s46, %s48
    %p52 = scmp.eq.s32.totalorder %s12, 0
    %p53 = por %p51, %p52
    %p54 = scmp.ne.s32.totalorder %s46, %s48
    %p55 = scmp.eq.s32.totalorder %s17, 1
    %p56 = por %p54, %p55
    %p57 = scmp.ne.s32.totalorder %s48, %s49
    %p58 = scmp.eq.s32.totalorder %s17, 0
    %p59 = por %p57, %p58
    %p60 = scmp.ne.s32.totalorder %s48, %s49
    %p61 = scmp.eq.s32.totalorder %s18, 1
    %p62 = por %p60, %p61
    %p64 = scmp.ne.s32.totalorder %s49, %s63
    %p65 = scmp.eq.s32.totalorder %s18, 0
    %p66 = por %p64, %p65
    %s68 = sadd.s32 %s67, 1
    %p71 = scmp.eq.s32.totalorder %s12, 1
    %p72 = scmp.ne.s32.totalorder %s67, %s69
    %p73 = scmp.eq.s32.totalorder %s12, 0
    %p74 = por %p72, %p73
    %p75 = scmp.ne.s32.totalorder %s67, %s69
    %p76 = scmp.eq.s32.totalorder %s17, 1
    %p77 = por %p75, %p76
    %p78 = scmp.ne.s32.totalorder %s69, %s70
    %p79 = scmp.eq.s32.totalorder %s17, 0
    %p80 = por %p78, %p79
    %p81 = scmp.ne.s32.totalorder %s69, %s70
    %p82 = scmp.eq.s32.totalorder %s18, 1
    %p83 = por %p81, %p82
    %p85 = scmp.ne.s32.totalorder %s70, %s84
    %p86 = scmp.eq.s32.totalorder %s18, 0
    %p87 = por %p85, %p86
    %s89 = sadd.s32 %s88, 1
    %p92 = scmp.eq.s32.totalorder %s12, 1
    %p93 = scmp.ne.s32.totalorder %s88, %s90
    %p94 = scmp.eq.s32.totalorder %s12, 0
    %p95 = por %p93, %p94
    %p96 = scmp.ne.s32.totalorder %s88, %s90
    %p97 = scmp.eq.s32.totalorder %s17, 1
    %p98 = por %p96, %p97
    %p99 = scmp.ne.s32.totalorder %s90, %s91
    %p100 = scmp.eq.s32.totalorder %s17, 0
    %p101 = por %p99, %p100
    %p102 = scmp.ne.s32.totalorder %s90, %s91
    %p103 = scmp.eq.s32.totalorder %s18, 1
    %p104 = por %p102, %p103
    %p106 = scmp.ne.s32.totalorder %s91, %s105
    %p107 = scmp.eq.s32.totalorder %s18, 0
    %p108 = por %p106, %p107
    %s109 = ssub.s32 %s12, %s19
    %p110 = scmp.eq.s32.totalorder %s109, 0
    %s112 = sadd.s32 %s111, 1
    %s113 = scalar_select %p110, %s111, %s112
    %p116 = pneg %p110
    %p117 = scmp.eq.s32.totalorder %s12, 1
    %p118 = por %p116, %p117
    %p119 = scmp.ne.s32.totalorder %s111, %s114
    %p120 = scmp.eq.s32.totalorder %s12, 0
    %p121 = por %p119, %p120
    %p122 = scmp.ne.s32.totalorder %s111, %s114
    %p123 = scmp.eq.s32.totalorder %s17, 1
    %p124 = por %p122, %p123
    %p125 = scmp.ne.s32.totalorder %s114, %s115
    %p126 = scmp.eq.s32.totalorder %s17, 0
    %p127 = por %p125, %p126
    %p128 = scmp.ne.s32.totalorder %s114, %s115
    %p129 = scmp.eq.s32.totalorder %s18, 1
    %p130 = por %p128, %p129
    %p132 = scmp.ne.s32.totalorder %s115, %s131
    %p133 = scmp.eq.s32.totalorder %s18, 0
    %p134 = por %p132, %p133
    %s135 = ssub.s32 %s12, %s19
    %p136 = scmp.eq.s32.totalorder %s135, 0
    %s138 = sadd.s32 %s137, 1
    %s139 = scalar_select %p136, %s137, %s138
    %p142 = pneg %p136
    %p143 = scmp.eq.s32.totalorder %s12, 1
    %p144 = por %p142, %p143
    %p145 = scmp.ne.s32.totalorder %s137, %s140
    %p146 = scmp.eq.s32.totalorder %s12, 0
    %p147 = por %p145, %p146
    %p148 = scmp.ne.s32.totalorder %s137, %s140
    %p149 = scmp.eq.s32.totalorder %s17, 1
    %p150 = por %p148, %p149
    %p151 = scmp.ne.s32.totalorder %s140, %s141
    %p152 = scmp.eq.s32.totalorder %s17, 0
    %p153 = por %p151, %p152
    %p154 = scmp.ne.s32.totalorder %s140, %s141
    %p155 = scmp.eq.s32.totalorder %s18, 1
    %p156 = por %p154, %p155
    %p158 = scmp.ne.s32.totalorder %s141, %s157
    %p159 = scmp.eq.s32.totalorder %s18, 0
    %p160 = por %p158, %p159
    %p161 = scmp.le.s32.totalorder 1, %s12
    %p162 = scmp.lt.s32.totalorder %s12, 3
    %p163 = pnand %p161, %p162
    %p164 = pneg %p163
    // Predicated region
    $region9: #{generator_forward.7} parent=5 // pred_check
      _
    $region10: #{generator_forward.7} parent=5 // pred_check_branch
      %166 = sbr.rel (%p163) target = $region12
    $region11: #{generator_forward.7} parent=5 // pred_region
      %s167 = ssub.s32 %s12, 1
      // Predicated region
      $region13: #{generator_forward.7} parent=11 // pred_check
        %p168 = pneg %p59
      $region14: #{generator_forward.7} parent=11 // pred_check_branch
        %170 = sbr.rel (%p168) target = $region16
      $region15: #{generator_forward.7} parent=11 // pred_region
        _
      $region16: #{generator_forward.7} parent=11 // pred_fallthru
        _
      // Predicated region
      $region17: #{generator_forward.7} parent=11 // pred_check
        %p171 = pneg %p80
      $region18: #{generator_forward.7} parent=11 // pred_check_branch
        %173 = sbr.rel (%p171) target = $region20
      $region19: #{generator_forward.7} parent=11 // pred_region
        _
      $region20: #{generator_forward.7} parent=11 // pred_fallthru
        _
      // Predicated region
      $region21: #{generator_forward.7} parent=11 // pred_check
        %p174 = pneg %p101
      $region22: #{generator_forward.7} parent=11 // pred_check_branch
        %176 = sbr.rel (%p174) target = $region24
      $region23: #{generator_forward.7} parent=11 // pred_region
        _
      $region24: #{generator_forward.7} parent=11 // pred_fallthru
        _
    $region12: #{generator_forward.7} parent=5 // pred_fallthru
      _
    %p177 = scmp.lt.s32.totalorder %s12, 2
    // Predicated region
    $region25: #{generator_forward.7} parent=5 // pred_check
      %p178 = pneg %p177
    $region26: #{generator_forward.7} parent=5 // pred_check_branch
      %180 = sbr.rel (%p178) target = $region28
    $region27: #{generator_forward.7} parent=5 // pred_region
      // Predicated region
      $region29: #{generator_forward.7} parent=27 // pred_check
        %p181 = pneg %p32
      $region30: #{generator_forward.7} parent=27 // pred_check_branch
        %183 = sbr.rel (%p181) target = $region32
      $region31: #{generator_forward.7} parent=27 // pred_region
        %p184 = scmp.lt.s32.totalorder %s12, 1
        %s185 = scalar_select %p184, %s12, 1
        %s186 = smul.addr %s185, 12
        %s187 = smul.addr %s186, 4
        %s188 = scalar_lea.vmem %s0, %s187
      $region32: #{generator_forward.7} parent=27 // pred_fallthru
        _
    $region28: #{generator_forward.7} parent=5 // pred_fallthru
      _
    %p189 = scmp.le.s32.totalorder 1, %s12
    %p190 = scmp.lt.s32.totalorder %s12, 3
    %p191 = pnand %p189, %p190
    %p192 = pneg %p191
    // Predicated region
    $region33: #{generator_forward.7} parent=5 // pred_check
      _
    $region34: #{generator_forward.7} parent=5 // pred_check_branch
      %194 = sbr.rel (%p191) target = $region36
    $region35: #{generator_forward.7} parent=5 // pred_region
      %s195 = ssub.s32 %s12, 1
      %p196 = scmp.lt.s32.totalorder %s17, 1
      %s197 = scalar_select %p196, %s17, 1
      %s198 = smul.addr %s197, 12
      %s199 = smul.addr %s198, 4
      %s200 = scalar_lea.vmem %s0, %s199
      %p201 = pneg %p38
      %p202 = pneg %p35
      %p203 = pneg %p59
      %p204 = pneg %p56
      %p205 = pneg %p80
      %p206 = pneg %p77
      %p207 = pneg %p101
      %p208 = pneg %p98
      %p209 = pneg %p127
      %p210 = pneg %p124
      %p211 = scmp.lt.s32.totalorder %s17, 1
      %s212 = scalar_select %p211, %s17, 1
      %s213 = smul.addr %s212, 10
      %s214 = smul.addr %s213, 4
      %s215 = scalar_lea.vmem %s4, %s214
      %p216 = pneg %p153
      %p217 = pneg %p150
      %p218 = scmp.lt.s32.totalorder %s17, 1
      %s219 = scalar_select %p218, %s17, 1
      %s220 = smul.addr %s219, 2
      %s221 = scalar_lea.vmem %s5, %s220
      %p222 = scmp.lt.s32.totalorder %s17, 1
      %s223 = scalar_select %p222, %s17, 1
      %s224 = smul.addr %s223, 12
      %s225 = smul.addr %s224, 4
      %s226 = scalar_lea.vmem %s0, %s225
      %p227 = scmp.lt.s32.totalorder %s17, 1
      %s228 = scalar_select %p227, %s17, 1
      %s229 = smul.addr %s228, 10
      %s230 = smul.addr %s229, 4
      %s231 = scalar_lea.vmem %s4, %s230
      %p232 = scmp.lt.s32.totalorder %s17, 1
      %s233 = scalar_select %p232, %s17, 1
      %s234 = smul.addr %s233, 2
      %s235 = scalar_lea.vmem %s5, %s234
      %v237 = vld [vmem:[%s2] sm:$0x1]
      %v238 = vld [vmem:[%s3] sm:$0xff]
      %v239 = vld [vmem:[%s3 + $0x8] sm:$0xff]
      %v240 = vld [vmem:[%s3 + $0x10] sm:$0xff]
      %v241 = vld [vmem:[%s3 + $0x18] sm:$0xff]
      %v242 = vld [vmem:[%s3 + $0x20] sm:$0xff]
      %v243 = vld [vmem:[%s3 + $0x28] sm:$0xff]
      %v244 = vld [vmem:[%s3 + $0x30] sm:$0xff]
      %v245 = vld [vmem:[%s3 + $0x38] sm:$0xff]
      %v246 = vld [vmem:[%s3 + $0x40] sm:$0xff]
      %v247 = vld [vmem:[%s3 + $0x48] sm:$0xff]
      %v248 = vld [vmem:[%s226] sm:$0xf]
      %v249 = vld [vmem:[%s226 + $0x4] sm:$0xf]
      %v250 = vld [vmem:[%s226 + $0x8] sm:$0xf]
      %v251 = vld [vmem:[%s226 + $0xc] sm:$0xf]
      %v252 = vld [vmem:[%s226 + $0x10] sm:$0xf]
      %v253 = vld [vmem:[%s226 + $0x14] sm:$0xf]
      %v254 = vld [vmem:[%s226 + $0x18] sm:$0xf]
      %v255 = vld [vmem:[%s226 + $0x1c] sm:$0xf]
      %v256 = vld [vmem:[%s226 + $0x20] sm:$0xf]
      %v257 = vld [vmem:[%s226 + $0x24] sm:$0xf]
      %v258 = vld [vmem:[%s1] sm:$0xf]
      %v259 = vld [vmem:[%s1 + $0x4] sm:$0x3]
      %v260 = vld [vmem:[%s226 + $0x28] sm:$0x1]
      %s261 = scalar_lea.vmem %s1, 8
      %v262 = vld [vmem:[%s261] sm:$0xf]
      %v263 = vld [vmem:[%s261 + $0x4] sm:$0x3]
      %v275 = vunpack.c.l.b16 %v248
      %v276 = vunpack.c.l.b16 %v249
      %v277 = vunpack.c.l.b16 %v250
      %v278 = vunpack.c.l.b16 %v251
      %v279 = vunpack.c.l.b16 %v252
      %v280 = vunpack.c.l.b16 %v253
      %v281 = vunpack.c.l.b16 %v254
      %v282 = vunpack.c.l.b16 %v255
      %v283 = vunpack.c.l.b16 %v256
      %v284 = vunpack.c.l.b16 %v257
      %v285 = vunpack.c.l.b16 %v260
      %v286 = vpack.c.b16 %v276, %v275
      %v287 = vpack.c.b16 %v278, %v277
      %v288 = vpack.c.b16 %v280, %v279
      %v289 = vpack.c.b16 %v282, %v281
      %v290 = vpack.c.b16 %v284, %v283
      %v291 = vpack.c.b16 %v285, %v285
      %vm292 = vsmask.f32 7424
      %v294 = vshrl.u32 %v286, 16
      %v296 = vshll.u32 %v286, 16
      %v298 = vrot.slane %v296, 1
      %v299 = vor.u32 %v294, %v298
      %v301 = vshll.u32 %v287, 16
      %v303 = vrot.slane %v301, 1
      %v304 = vsel %vm292, %v299, %v303
      %v305 = vshrl.u32 %v287, 16
      %v307 = vor.u32 %v305, %v303
      %v309 = vshll.u32 %v288, 16
      %v311 = vrot.slane %v309, 1
      %v312 = vsel %vm292, %v307, %v311
      %v313 = vshrl.u32 %v288, 16
      %v315 = vor.u32 %v313, %v311
      %v317 = vshll.u32 %v289, 16
      %v319 = vrot.slane %v317, 1
      %v320 = vsel %vm292, %v315, %v319
      %v321 = vshrl.u32 %v289, 16
      %v323 = vor.u32 %v321, %v319
      %v325 = vshll.u32 %v290, 16
      %v327 = vrot.slane %v325, 1
      %v328 = vsel %vm292, %v323, %v327
      %v329 = vshrl.u32 %v290, 16
      %v331 = vor.u32 %v329, %v327
      %v333 = vshll.u32 %v291, 16
      %v335 = vrot.slane %v333, 1
      %v336 = vsel %vm292, %v331, %v335
      %v339 = vunpack.c.l.b16 %v262
      %v340 = vunpack.c.l.b16 %v263
      %v341 = vpack.c.b16 %v340, %v339
      %vm342 = vcmask 97280
      %v344 = vsel %vm342, %v304, 0
      %v347 = vsel %vm342, %v312, 0
      %v350 = vsel %vm342, %v320, 0
      %v353 = vsel %vm342, %v328, 0
      %v356 = vsel %vm342, %v336, 0
      %vm358 = vcmask 1045504
      %v360 = vsel %vm358, %v341, 0
      %362 = vmatprep.subr.bf16.mxu0 0
      %363 = vmatpush1.bf16.msra.mxu0 0
      %364 = vmatprep.subr.bf16.mxu0 0
      %365 = vmatpush1.bf16.msra.mxu0 0
      %366 = vmatprep.subr.bf16.mxu0 0
      %367 = vmatpush1.bf16.msra.mxu0 0
      %368 = vmatprep.subr.bf16.mxu0 0
      %369 = vmatpush1.bf16.msra.mxu0 0
      %370 = vmatprep.subr.bf16.mxu0 0
      %371 = vmatpush1.bf16.msra.mxu0 0
      %372 = vmatprep.subr.bf16.mxu0 0
      %373 = vmatpush1.bf16.msra.mxu0 0
      %374 = vmatprep.subr.bf16.mxu0 0
      %375 = vmatpush1.bf16.msra.mxu0 0
      %376 = vmatprep.subr.bf16.mxu0 0
      %377 = vmatpush1.bf16.msra.mxu0 %v360
      %378 = vmatprep.subr.bf16.mxu0 0
      %379 = vmatpush2.bf16.msra.mxu0 0
      %380 = vmatprep.subr.bf16.mxu0 0
      %381 = vmatpush2.bf16.msra.mxu0 0
      %382 = vmatprep.subr.bf16.mxu0 0
      %383 = vmatpush2.bf16.msra.mxu0 0
      %384 = vmatprep.subr.bf16.mxu0 0
      %385 = vmatpush2.bf16.msra.mxu0 0
      %386 = vmatprep.subr.bf16.mxu0 0
      %387 = vmatpush2.bf16.msra.mxu0 0
      %388 = vmatprep.subr.bf16.mxu0 0
      %389 = vmatpush2.bf16.msra.mxu0 0
      %390 = vmatprep.subr.bf16.mxu0 0
      %391 = vmatpush2.bf16.msra.mxu0 0
      %392 = vmatprep.subr.bf16.mxu0 0
      %393 = vmatpush2.bf16.msra.mxu0 0
      %394 = vmatprep.mubr.bf16.mxu0 0
      %395 = vmatmul.mubr.bf16.gmra.mxu0 %v344
      %v396 = vpop.f32.mrf.mxu0
      %v397 = vadd.f32 0.0, %v396
      %v398 = vpop.f32.mrf.mxu0
      %v399 = vpop.f32.mrf.mxu0
      %v400 = vadd.f32 0.0, %v399
      %v401 = vpop.f32.mrf.mxu0
      %402 = vmatprep.mubr.bf16.mxu0 0
      %403 = vmatmul.mubr.bf16.gmra.mxu0 %v347
      %v404 = vpop.f32.mrf.mxu0
      %v405 = vadd.f32 0.0, %v404
      %v406 = vpop.f32.mrf.mxu0
      %v407 = vpop.f32.mrf.mxu0
      %v408 = vadd.f32 0.0, %v407
      %v409 = vpop.f32.mrf.mxu0
      %410 = vmatprep.mubr.bf16.mxu0 0
      %411 = vmatmul.mubr.bf16.gmra.mxu0 %v350
      %v412 = vpop.f32.mrf.mxu0
      %v413 = vadd.f32 0.0, %v412
      %v414 = vpop.f32.mrf.mxu0
      %v415 = vpop.f32.mrf.mxu0
      %v416 = vadd.f32 0.0, %v415
      %v417 = vpop.f32.mrf.mxu0
      %418 = vmatprep.mubr.bf16.mxu0 0
      %419 = vmatmul.mubr.bf16.gmra.mxu0 %v353
      %v420 = vpop.f32.mrf.mxu0
      %v421 = vadd.f32 0.0, %v420
      %v422 = vpop.f32.mrf.mxu0
      %v423 = vpop.f32.mrf.mxu0
      %v424 = vadd.f32 0.0, %v423
      %v425 = vpop.f32.mrf.mxu0
      %426 = vmatprep.mubr.bf16.mxu0 0
      %427 = vmatmul.mubr.bf16.gmra.mxu0 %v356
      %v428 = vpop.f32.mrf.mxu0
      %v429 = vadd.f32 0.0, %v428
      %v430 = vpop.f32.mrf.mxu0
      %v431 = vpop.f32.mrf.mxu0
      %v432 = vadd.f32 0.0, %v431
      %v433 = vpop.f32.mrf.mxu0
      %434 = vdwg.mxu0
      %v437 = vunpack.c.l.b16 %v258
      %v438 = vunpack.c.l.b16 %v259
      %v439 = vpack.c.b16 %v438, %v437
      %v440 = vsel %vm342, %v286, 0
      %v442 = vsel %vm342, %v287, 0
      %v444 = vsel %vm342, %v288, 0
      %v446 = vsel %vm342, %v289, 0
      %v448 = vsel %vm342, %v290, 0
      %v451 = vsel %vm358, %v439, 0
      %453 = vmatprep.subr.bf16.mxu0 0
      %454 = vmatpush1.bf16.msra.mxu0 0
      %455 = vmatprep.subr.bf16.mxu0 0
      %456 = vmatpush1.bf16.msra.mxu0 0
      %457 = vmatprep.subr.bf16.mxu0 0
      %458 = vmatpush1.bf16.msra.mxu0 0
      %459 = vmatprep.subr.bf16.mxu0 0
      %460 = vmatpush1.bf16.msra.mxu0 0
      %461 = vmatprep.subr.bf16.mxu0 0
      %462 = vmatpush1.bf16.msra.mxu0 0
      %463 = vmatprep.subr.bf16.mxu0 0
      %464 = vmatpush1.bf16.msra.mxu0 0
      %465 = vmatprep.subr.bf16.mxu0 0
      %466 = vmatpush1.bf16.msra.mxu0 0
      %467 = vmatprep.subr.bf16.mxu0 0
      %468 = vmatpush1.bf16.msra.mxu0 %v451
      %469 = vmatprep.subr.bf16.mxu0 0
      %470 = vmatpush2.bf16.msra.mxu0 0
      %471 = vmatprep.subr.bf16.mxu0 0
      %472 = vmatpush2.bf16.msra.mxu0 0
      %473 = vmatprep.subr.bf16.mxu0 0
      %474 = vmatpush2.bf16.msra.mxu0 0
      %475 = vmatprep.subr.bf16.mxu0 0
      %476 = vmatpush2.bf16.msra.mxu0 0
      %477 = vmatprep.subr.bf16.mxu0 0
      %478 = vmatpush2.bf16.msra.mxu0 0
      %479 = vmatprep.subr.bf16.mxu0 0
      %480 = vmatpush2.bf16.msra.mxu0 0
      %481 = vmatprep.subr.bf16.mxu0 0
      %482 = vmatpush2.bf16.msra.mxu0 0
      %483 = vmatprep.subr.bf16.mxu0 0
      %484 = vmatpush2.bf16.msra.mxu0 0
      %485 = vmatprep.mubr.bf16.mxu0 0
      %486 = vmatmul.mubr.bf16.gmra.mxu0 %v440
      %v487 = vpop.f32.mrf.mxu0
      %v488 = vadd.f32 %v397, %v487
      %v489 = vpop.f32.mrf.mxu0
      %v490 = vpop.f32.mrf.mxu0
      %v491 = vadd.f32 %v400, %v490
      %v492 = vpop.f32.mrf.mxu0
      %493 = vmatprep.mubr.bf16.mxu0 0
      %494 = vmatmul.mubr.bf16.gmra.mxu0 %v442
      %v495 = vpop.f32.mrf.mxu0
      %v496 = vadd.f32 %v405, %v495
      %v497 = vpop.f32.mrf.mxu0
      %v498 = vpop.f32.mrf.mxu0
      %v499 = vadd.f32 %v408, %v498
      %v500 = vpop.f32.mrf.mxu0
      %501 = vmatprep.mubr.bf16.mxu0 0
      %502 = vmatmul.mubr.bf16.gmra.mxu0 %v444
      %v503 = vpop.f32.mrf.mxu0
      %v504 = vadd.f32 %v413, %v503
      %v505 = vpop.f32.mrf.mxu0
      %v506 = vpop.f32.mrf.mxu0
      %v507 = vadd.f32 %v416, %v506
      %v508 = vpop.f32.mrf.mxu0
      %509 = vmatprep.mubr.bf16.mxu0 0
      %510 = vmatmul.mubr.bf16.gmra.mxu0 %v446
      %v511 = vpop.f32.mrf.mxu0
      %v512 = vadd.f32 %v421, %v511
      %v513 = vpop.f32.mrf.mxu0
      %v514 = vpop.f32.mrf.mxu0
      %v515 = vadd.f32 %v424, %v514
      %v516 = vpop.f32.mrf.mxu0
      %517 = vmatprep.mubr.bf16.mxu0 0
      %518 = vmatmul.mubr.bf16.gmra.mxu0 %v448
      %v519 = vpop.f32.mrf.mxu0
      %v520 = vadd.f32 %v429, %v519
      %v521 = vpop.f32.mrf.mxu0
      %v522 = vpop.f32.mrf.mxu0
      %v523 = vadd.f32 %v432, %v522
      %v524 = vpop.f32.mrf.mxu0
      %525 = vdwg.mxu0
      %v526 = vld [vmem:[%s226 + $0x4] sm:$0xf]
      %v527 = vld [vmem:[%s226 + $0x8] sm:$0xf]
      %v528 = vld [vmem:[%s226 + $0xc] sm:$0xf]
      %v529 = vld [vmem:[%s226 + $0x10] sm:$0xf]
      %v530 = vld [vmem:[%s226 + $0x14] sm:$0xf]
      %v531 = vld [vmem:[%s226 + $0x18] sm:$0xf]
      %v532 = vld [vmem:[%s226 + $0x1c] sm:$0xf]
      %v533 = vld [vmem:[%s226 + $0x20] sm:$0xf]
      %v534 = vld [vmem:[%s226 + $0x24] sm:$0xf]
      %v535 = vld [vmem:[%s226 + $0x28] sm:$0xf]
      %v536 = vld [vmem:[%s226 + $0x2c] sm:$0x1]
      %s537 = scalar_lea.vmem %s1, 16
      %v538 = vld [vmem:[%s537] sm:$0xf]
      %v539 = vld [vmem:[%s537 + $0x4] sm:$0x3]
      %v551 = vunpack.c.l.b16 %v526
      %v552 = vunpack.c.l.b16 %v527
      %v553 = vunpack.c.l.b16 %v528
      %v554 = vunpack.c.l.b16 %v529
      %v555 = vunpack.c.l.b16 %v530
      %v556 = vunpack.c.l.b16 %v531
      %v557 = vunpack.c.l.b16 %v532
      %v558 = vunpack.c.l.b16 %v533
      %v559 = vunpack.c.l.b16 %v534
      %v560 = vunpack.c.l.b16 %v535
      %v561 = vunpack.c.l.b16 %v536
      %v562 = vpack.c.b16 %v552, %v551
      %v563 = vpack.c.b16 %v554, %v553
      %v564 = vpack.c.b16 %v556, %v555
      %v565 = vpack.c.b16 %v558, %v557
      %v566 = vpack.c.b16 %v560, %v559
      %v567 = vpack.c.b16 %v561, %v561
      %v569 = vshrl.u32 %v562, 16
      %v571 = vshll.u32 %v562, 16
      %v573 = vrot.slane %v571, 1
      %v574 = vor.u32 %v569, %v573
      %v576 = vshll.u32 %v563, 16
      %v578 = vrot.slane %v576, 1
      %v579 = vsel %vm292, %v574, %v578
      %v580 = vshrl.u32 %v563, 16
      %v582 = vor.u32 %v580, %v578
      %v584 = vshll.u32 %v564, 16
      %v586 = vrot.slane %v584, 1
      %v587 = vsel %vm292, %v582, %v586
      %v588 = vshrl.u32 %v564, 16
      %v590 = vor.u32 %v588, %v586
      %v592 = vshll.u32 %v565, 16
      %v594 = vrot.slane %v592, 1
      %v595 = vsel %vm292, %v590, %v594
      %v596 = vshrl.u32 %v565, 16
      %v598 = vor.u32 %v596, %v594
      %v600 = vshll.u32 %v566, 16
      %v602 = vrot.slane %v600, 1
      %v603 = vsel %vm292, %v598, %v602
      %v604 = vshrl.u32 %v566, 16
      %v606 = vor.u32 %v604, %v602
      %v608 = vshll.u32 %v567, 16
      %v610 = vrot.slane %v608, 1
      %v611 = vsel %vm292, %v606, %v610
      %v614 = vunpack.c.l.b16 %v538
      %v615 = vunpack.c.l.b16 %v539
      %v616 = vpack.c.b16 %v615, %v614
      %v618 = vsel %vm342, %v579, 0
      %v621 = vsel %vm342, %v587, 0
      %v624 = vsel %vm342, %v595, 0
      %v627 = vsel %vm342, %v603, 0
      %v630 = vsel %vm342, %v611, 0
      %v633 = vsel %vm358, %v616, 0
      %635 = vmatprep.subr.bf16.mxu0 0
      %636 = vmatpush1.bf16.msra.mxu0 0
      %637 = vmatprep.subr.bf16.mxu0 0
      %638 = vmatpush1.bf16.msra.mxu0 0
      %639 = vmatprep.subr.bf16.mxu0 0
      %640 = vmatpush1.bf16.msra.mxu0 0
      %641 = vmatprep.subr.bf16.mxu0 0
      %642 = vmatpush1.bf16.msra.mxu0 0
      %643 = vmatprep.subr.bf16.mxu0 0
      %644 = vmatpush1.bf16.msra.mxu0 0
      %645 = vmatprep.subr.bf16.mxu0 0
      %646 = vmatpush1.bf16.msra.mxu0 0
      %647 = vmatprep.subr.bf16.mxu0 0
      %648 = vmatpush1.bf16.msra.mxu0 0
      %649 = vmatprep.subr.bf16.mxu0 0
      %650 = vmatpush1.bf16.msra.mxu0 %v633
      %651 = vmatprep.subr.bf16.mxu0 0
      %652 = vmatpush2.bf16.msra.mxu0 0
      %653 = vmatprep.subr.bf16.mxu0 0
      %654 = vmatpush2.bf16.msra.mxu0 0
      %655 = vmatprep.subr.bf16.mxu0 0
      %656 = vmatpush2.bf16.msra.mxu0 0
      %657 = vmatprep.subr.bf16.mxu0 0
      %658 = vmatpush2.bf16.msra.mxu0 0
      %659 = vmatprep.subr.bf16.mxu0 0
      %660 = vmatpush2.bf16.msra.mxu0 0
      %661 = vmatprep.subr.bf16.mxu0 0
      %662 = vmatpush2.bf16.msra.mxu0 0
      %663 = vmatprep.subr.bf16.mxu0 0
      %664 = vmatpush2.bf16.msra.mxu0 0
      %665 = vmatprep.subr.bf16.mxu0 0
      %666 = vmatpush2.bf16.msra.mxu0 0
      %667 = vmatprep.mubr.bf16.mxu0 0
      %668 = vmatmul.mubr.bf16.gmra.mxu0 %v618
      %v669 = vpop.f32.mrf.mxu0
      %v670 = vadd.f32 0.0, %v669
      %v671 = vpop.f32.mrf.mxu0
      %v672 = vpop.f32.mrf.mxu0
      %v673 = vadd.f32 0.0, %v672
      %v674 = vpop.f32.mrf.mxu0
      %675 = vmatprep.mubr.bf16.mxu0 0
      %676 = vmatmul.mubr.bf16.gmra.mxu0 %v621
      %v677 = vpop.f32.mrf.mxu0
      %v678 = vadd.f32 0.0, %v677
      %v679 = vpop.f32.mrf.mxu0
      %v680 = vpop.f32.mrf.mxu0
      %v681 = vadd.f32 0.0, %v680
      %v682 = vpop.f32.mrf.mxu0
      %683 = vmatprep.mubr.bf16.mxu0 0
      %684 = vmatmul.mubr.bf16.gmra.mxu0 %v624
      %v685 = vpop.f32.mrf.mxu0
      %v686 = vadd.f32 0.0, %v685
      %v687 = vpop.f32.mrf.mxu0
      %v688 = vpop.f32.mrf.mxu0
      %v689 = vadd.f32 0.0, %v688
      %v690 = vpop.f32.mrf.mxu0
      %691 = vmatprep.mubr.bf16.mxu0 0
      %692 = vmatmul.mubr.bf16.gmra.mxu0 %v627
      %v693 = vpop.f32.mrf.mxu0
      %v694 = vadd.f32 0.0, %v693
      %v695 = vpop.f32.mrf.mxu0
      %v696 = vpop.f32.mrf.mxu0
      %v697 = vadd.f32 0.0, %v696
      %v698 = vpop.f32.mrf.mxu0
      %699 = vmatprep.mubr.bf16.mxu0 0
      %700 = vmatmul.mubr.bf16.gmra.mxu0 %v630
      %v701 = vpop.f32.mrf.mxu0
      %v702 = vadd.f32 0.0, %v701
      %v703 = vpop.f32.mrf.mxu0
      %v704 = vpop.f32.mrf.mxu0
      %v705 = vadd.f32 0.0, %v704
      %v706 = vpop.f32.mrf.mxu0
      %707 = vdwg.mxu0
      %v708 = vadd.f32 %v488, %v670
      %v709 = vadd.f32 %v491, %v673
      %v710 = vadd.f32 %v496, %v678
      %v711 = vadd.f32 %v499, %v681
      %v712 = vadd.f32 %v504, %v686
      %v713 = vadd.f32 %v507, %v689
      %v714 = vadd.f32 %v512, %v694
      %v715 = vadd.f32 %v515, %v697
      %v716 = vadd.f32 %v520, %v702
      %v717 = vadd.f32 %v523, %v705
      %v718 = vld [vmem:[%s226 + $0x4] sm:$0xe]
      %s719 = scalar_lea.vmem %s1, 24
      %v720 = vld [vmem:[%s719] sm:$0xf]
      %v721 = vld [vmem:[%s719 + $0x4] sm:$0x3]
      %v723 = vunpack.c.l.b16 %v718
      %v724 = vpack.c.b16 %v552, %v723
      %vm725 = vcmask 1046528
      %v726 = vrot.slane %v724, 1
      %v727 = vrot.slane %v563, 1
      %v728 = vsel %vm725, %v726, %v727
      %v729 = vrot.slane %v564, 1
      %v730 = vsel %vm725, %v727, %v729
      %v731 = vrot.slane %v565, 1
      %v732 = vsel %vm725, %v729, %v731
      %v733 = vrot.slane %v566, 1
      %v734 = vsel %vm725, %v731, %v733
      %v735 = vrot.slane %v567, 1
      %v736 = vsel %vm725, %v733, %v735
      %v739 = vunpack.c.l.b16 %v720
      %v740 = vunpack.c.l.b16 %v721
      %v741 = vpack.c.b16 %v740, %v739
      %v743 = vsel %vm342, %v728, 0
      %v746 = vsel %vm342, %v730, 0
      %v749 = vsel %vm342, %v732, 0
      %v752 = vsel %vm342, %v734, 0
      %v755 = vsel %vm342, %v736, 0
      %v758 = vsel %vm358, %v741, 0
      %760 = vmatprep.subr.bf16.mxu0 0
      %761 = vmatpush1.bf16.msra.mxu0 0
      %762 = vmatprep.subr.bf16.mxu0 0
      %763 = vmatpush1.bf16.msra.mxu0 0
      %764 = vmatprep.subr.bf16.mxu0 0
      %765 = vmatpush1.bf16.msra.mxu0 0
      %766 = vmatprep.subr.bf16.mxu0 0
      %767 = vmatpush1.bf16.msra.mxu0 0
      %768 = vmatprep.subr.bf16.mxu0 0
      %769 = vmatpush1.bf16.msra.mxu0 0
      %770 = vmatprep.subr.bf16.mxu0 0
      %771 = vmatpush1.bf16.msra.mxu0 0
      %772 = vmatprep.subr.bf16.mxu0 0
      %773 = vmatpush1.bf16.msra.mxu0 0
      %774 = vmatprep.subr.bf16.mxu0 0
      %775 = vmatpush1.bf16.msra.mxu0 %v758
      %776 = vmatprep.subr.bf16.mxu0 0
      %777 = vmatpush2.bf16.msra.mxu0 0
      %778 = vmatprep.subr.bf16.mxu0 0
      %779 = vmatpush2.bf16.msra.mxu0 0
      %780 = vmatprep.subr.bf16.mxu0 0
      %781 = vmatpush2.bf16.msra.mxu0 0
      %782 = vmatprep.subr.bf16.mxu0 0
      %783 = vmatpush2.bf16.msra.mxu0 0
      %784 = vmatprep.subr.bf16.mxu0 0
      %785 = vmatpush2.bf16.msra.mxu0 0
      %786 = vmatprep.subr.bf16.mxu0 0
      %787 = vmatpush2.bf16.msra.mxu0 0
      %788 = vmatprep.subr.bf16.mxu0 0
      %789 = vmatpush2.bf16.msra.mxu0 0
      %790 = vmatprep.subr.bf16.mxu0 0
      %791 = vmatpush2.bf16.msra.mxu0 0
      %792 = vmatprep.mubr.bf16.mxu0 0
      %793 = vmatmul.mubr.bf16.gmra.mxu0 %v743
      %v794 = vpop.f32.mrf.mxu0
      %v795 = vadd.f32 0.0, %v794
      %v796 = vpop.f32.mrf.mxu0
      %v797 = vpop.f32.mrf.mxu0
      %v798 = vadd.f32 0.0, %v797
      %v799 = vpop.f32.mrf.mxu0
      %800 = vmatprep.mubr.bf16.mxu0 0
      %801 = vmatmul.mubr.bf16.gmra.mxu0 %v746
      %v802 = vpop.f32.mrf.mxu0
      %v803 = vadd.f32 0.0, %v802
      %v804 = vpop.f32.mrf.mxu0
      %v805 = vpop.f32.mrf.mxu0
      %v806 = vadd.f32 0.0, %v805
      %v807 = vpop.f32.mrf.mxu0
      %808 = vmatprep.mubr.bf16.mxu0 0
      %809 = vmatmul.mubr.bf16.gmra.mxu0 %v749
      %v810 = vpop.f32.mrf.mxu0
      %v811 = vadd.f32 0.0, %v810
      %v812 = vpop.f32.mrf.mxu0
      %v813 = vpop.f32.mrf.mxu0
      %v814 = vadd.f32 0.0, %v813
      %v815 = vpop.f32.mrf.mxu0
      %816 = vmatprep.mubr.bf16.mxu0 0
      %817 = vmatmul.mubr.bf16.gmra.mxu0 %v752
      %v818 = vpop.f32.mrf.mxu0
      %v819 = vadd.f32 0.0, %v818
      %v820 = vpop.f32.mrf.mxu0
      %v821 = vpop.f32.mrf.mxu0
      %v822 = vadd.f32 0.0, %v821
      %v823 = vpop.f32.mrf.mxu0
      %824 = vmatprep.mubr.bf16.mxu0 0
      %825 = vmatmul.mubr.bf16.gmra.mxu0 %v755
      %v826 = vpop.f32.mrf.mxu0
      %v827 = vadd.f32 0.0, %v826
      %v828 = vpop.f32.mrf.mxu0
      %v829 = vpop.f32.mrf.mxu0
      %v830 = vadd.f32 0.0, %v829
      %v831 = vpop.f32.mrf.mxu0
      %832 = vdwg.mxu0
      %v833 = vadd.f32 %v708, %v795
      %v834 = vadd.f32 %v709, %v798
      %v835 = vadd.f32 %v710, %v803
      %v836 = vadd.f32 %v711, %v806
      %v837 = vadd.f32 %v712, %v811
      %v838 = vadd.f32 %v713, %v814
      %v839 = vadd.f32 %v714, %v819
      %v840 = vadd.f32 %v715, %v822
      %v841 = vadd.f32 %v716, %v827
      %v842 = vadd.f32 %v717, %v830
      %v844 = vlaneseq
      %v845 = vshrl.u32 %v844, 7
      %v846 = vsub.s32 0, %v845
      %v847 = vrot.slane %v237, %v846
      %v849 = vadd.f32 %v833, %v847
      %v850 = vadd.f32 %v834, %v847
      %v851 = vadd.f32 %v835, %v847
      %v852 = vadd.f32 %v836, %v847
      %v853 = vadd.f32 %v837, %v847
      %v854 = vadd.f32 %v838, %v847
      %v855 = vadd.f32 %v839, %v847
      %v856 = vadd.f32 %v840, %v847
      %v857 = vadd.f32 %v841, %v847
      %v858 = vadd.f32 %v842, %v847
      %v859 = vpack.c.bf16 %v850, %v849
      %v860 = vpack.c.bf16 %v852, %v851
      %v861 = vpack.c.bf16 %v854, %v853
      %v862 = vpack.c.bf16 %v856, %v855
      %v863 = vpack.c.bf16 %v858, %v857
      %v869 = vunpack.c.l.b16 %v859
      %v870 = vunpack.c.h.b16 %v859
      %v871 = vunpack.c.l.b16 %v860
      %v872 = vunpack.c.h.b16 %v860
      %v873 = vunpack.c.l.b16 %v861
      %v874 = vunpack.c.h.b16 %v861
      %v875 = vunpack.c.l.b16 %v862
      %v876 = vunpack.c.h.b16 %v862
      %v877 = vunpack.c.l.b16 %v863
      %v878 = vunpack.c.h.b16 %v863
      %v879 = vpack.c.b16 %v869, %v869
      %v880 = vpack.c.b16 %v870, %v870
      %v881 = vpack.c.b16 %v871, %v871
      %v882 = vpack.c.b16 %v872, %v872
      %v883 = vpack.c.b16 %v873, %v873
      %v884 = vpack.c.b16 %v874, %v874
      %v885 = vpack.c.b16 %v875, %v875
      %v886 = vpack.c.b16 %v876, %v876
      %v887 = vpack.c.b16 %v877, %v877
      %v888 = vpack.c.b16 %v878, %v878
      %vm899 = vcmask 519168
      %900 = vst.msk [vmem:[%s231] sm:$0xf] %vm899, %v879
      %901 = vst.msk [vmem:[%s231 + $0x4] sm:$0xf] %vm899, %v880
      %902 = vst.msk [vmem:[%s231 + $0x8] sm:$0xf] %vm899, %v881
      %903 = vst.msk [vmem:[%s231 + $0xc] sm:$0xf] %vm899, %v882
      %904 = vst.msk [vmem:[%s231 + $0x10] sm:$0xf] %vm899, %v883
      %905 = vst.msk [vmem:[%s231 + $0x14] sm:$0xf] %vm899, %v884
      %906 = vst.msk [vmem:[%s231 + $0x18] sm:$0xf] %vm899, %v885
      %907 = vst.msk [vmem:[%s231 + $0x1c] sm:$0xf] %vm899, %v886
      %908 = vst.msk [vmem:[%s231 + $0x20] sm:$0xf] %vm899, %v887
      %909 = vst.msk [vmem:[%s231 + $0x24] sm:$0xf] %vm899, %v888
      %911 = vset.pattern.permute.xlu0 0
      %912 = vperm.xlu0 %911, %v238
      %v913 = vpop.permute.xlu0 %912
      %916 = vset.pattern.permute.xlu0 0
      %917 = vperm.xlu0 %916, %v239
      %v918 = vpop.permute.xlu0 %917
      %921 = vset.pattern.permute.xlu0 0
      %922 = vperm.xlu0 %921, %v240
      %v923 = vpop.permute.xlu0 %922
      %926 = vset.pattern.permute.xlu0 0
      %927 = vperm.xlu0 %926, %v241
      %v928 = vpop.permute.xlu0 %927
      %931 = vset.pattern.permute.xlu0 0
      %932 = vperm.xlu0 %931, %v242
      %v933 = vpop.permute.xlu0 %932
      %936 = vset.pattern.permute.xlu0 0
      %937 = vperm.xlu0 %936, %v243
      %v938 = vpop.permute.xlu0 %937
      %941 = vset.pattern.permute.xlu0 0
      %942 = vperm.xlu0 %941, %v244
      %v943 = vpop.permute.xlu0 %942
      %946 = vset.pattern.permute.xlu0 0
      %947 = vperm.xlu0 %946, %v245
      %v948 = vpop.permute.xlu0 %947
      %951 = vset.pattern.permute.xlu0 0
      %952 = vperm.xlu0 %951, %v246
      %v953 = vpop.permute.xlu0 %952
      %956 = vset.pattern.permute.xlu0 0
      %957 = vperm.xlu0 %956, %v247
      %v958 = vpop.permute.xlu0 %957
      %v960 = vmul.f32 %v849, %v913
      %v961 = vmul.f32 %v850, %v918
      %v962 = vmul.f32 %v851, %v923
      %v963 = vmul.f32 %v852, %v928
      %v964 = vmul.f32 %v853, %v933
      %v965 = vmul.f32 %v854, %v938
      %v966 = vmul.f32 %v855, %v943
      %v967 = vmul.f32 %v856, %v948
      %v968 = vmul.f32 %v857, %v953
      %v969 = vmul.f32 %v858, %v958
      %vm970 = vcmask 523264
      %v971 = vsel %vm970, %v960, 0.0
      %v972 = vsel %vm970, %v961, 0.0
      %v973 = vadd.f32 %v971, %v972
      %v974 = vsel %vm970, %v962, 0.0
      %v975 = vadd.f32 %v973, %v974
      %v976 = vsel %vm970, %v963, 0.0
      %v977 = vadd.f32 %v975, %v976
      %v978 = vsel %vm970, %v964, 0.0
      %v979 = vadd.f32 %v977, %v978
      %v980 = vsel %vm970, %v965, 0.0
      %v981 = vadd.f32 %v979, %v980
      %v982 = vsel %vm970, %v966, 0.0
      %v983 = vadd.f32 %v981, %v982
      %v984 = vsel %vm970, %v967, 0.0
      %v985 = vadd.f32 %v983, %v984
      %v986 = vsel %vm970, %v968, 0.0
      %v987 = vadd.f32 %v985, %v986
      %v988 = vsel %vm970, %v969, 0.0
      %v989 = vadd.f32 %v987, %v988
      %v990 = vrot.slane %v989, 4
      %v991 = vadd.f32 %v989, %v990
      %v992 = vrot.slane %v991, 2
      %v993 = vadd.f32 %v991, %v992
      %v994 = vrot.slane %v993, 1
      %v995 = vadd.f32 %v993, %v994
      %v996 = vadd.f32 %v995, 0.0
      %v997 = vmul.f32 %v960, %v960
      %v998 = vmul.f32 %v961, %v961
      %v999 = vmul.f32 %v962, %v962
      %v1000 = vmul.f32 %v963, %v963
      %v1001 = vmul.f32 %v964, %v964
      %v1002 = vmul.f32 %v965, %v965
      %v1003 = vmul.f32 %v966, %v966
      %v1004 = vmul.f32 %v967, %v967
      %v1005 = vmul.f32 %v968, %v968
      %v1006 = vmul.f32 %v969, %v969
      %v1007 = vsel %vm970, %v997, 0.0
      %v1008 = vsel %vm970, %v998, 0.0
      %v1009 = vadd.f32 %v1007, %v1008
      %v1010 = vsel %vm970, %v999, 0.0
      %v1011 = vadd.f32 %v1009, %v1010
      %v1012 = vsel %vm970, %v1000, 0.0
      %v1013 = vadd.f32 %v1011, %v1012
      %v1014 = vsel %vm970, %v1001, 0.0
      %v1015 = vadd.f32 %v1013, %v1014
      %v1016 = vsel %vm970, %v1002, 0.0
      %v1017 = vadd.f32 %v1015, %v1016
      %v1018 = vsel %vm970, %v1003, 0.0
      %v1019 = vadd.f32 %v1017, %v1018
      %v1020 = vsel %vm970, %v1004, 0.0
      %v1021 = vadd.f32 %v1019, %v1020
      %v1022 = vsel %vm970, %v1005, 0.0
      %v1023 = vadd.f32 %v1021, %v1022
      %v1024 = vsel %vm970, %v1006, 0.0
      %v1025 = vadd.f32 %v1023, %v1024
      %v1026 = vrot.slane %v1025, 4
      %v1027 = vadd.f32 %v1025, %v1026
      %v1028 = vrot.slane %v1027, 2
      %v1029 = vadd.f32 %v1027, %v1028
      %v1030 = vrot.slane %v1029, 1
      %v1031 = vadd.f32 %v1029, %v1030
      %v1032 = vadd.f32 %v1031, 0.0
      %vm1033 = vcmask 1040384
      %v1034 = vsel %vm1033, %v996, %v1032
      %vm1035 = vcmask 517120
      %1036 = vst.msk [vmem:[%s235] sm:$0x3] %vm1035, %v1034
      %p1037 = scmp.lt.s32.totalorder %s17, 1
      %s1038 = scalar_select %p1037, %s17, 1
      %s1039 = smul.addr %s1038, 10
      %s1040 = smul.addr %s1039, 4
      %s1041 = scalar_lea.vmem %s4, %s1040
      %p1042 = scmp.lt.s32.totalorder %s17, 1
      %s1043 = scalar_select %p1042, %s17, 1
      %s1044 = smul.addr %s1043, 2
      %s1045 = scalar_lea.vmem %s5, %s1044
      // Predicated region
      $region37: #{generator_forward.7} parent=35 // pred_check
        %p1046 = pneg %p124
      $region38: #{generator_forward.7} parent=35 // pred_check_branch
        %1048 = sbr.rel (%p1046) target = $region40
      $region39: #{generator_forward.7} parent=35 // pred_region
        _
      $region40: #{generator_forward.7} parent=35 // pred_fallthru
        _
      // Predicated region
      $region41: #{generator_forward.7} parent=35 // pred_check
        %p1049 = pneg %p150
      $region42: #{generator_forward.7} parent=35 // pred_check_branch
        %1051 = sbr.rel (%p1049) target = $region44
      $region43: #{generator_forward.7} parent=35 // pred_region
        _
      $region44: #{generator_forward.7} parent=35 // pred_fallthru
        _
    $region36: #{generator_forward.7} parent=5 // pred_fallthru
      _
    %p1052 = scmp.le.s32.totalorder 2, %s12
    // Predicated region
    $region45: #{generator_forward.7} parent=5 // pred_check
      %p1053 = pneg %p1052
    $region46: #{generator_forward.7} parent=5 // pred_check_branch
      %1055 = sbr.rel (%p1053) target = $region48
    $region47: #{generator_forward.7} parent=5 // pred_region
      %s1056 = ssub.s32 %s12, 2
      // Predicated region
      $region49: #{generator_forward.7} parent=47 // pred_check
        %p1057 = pneg %p130
      $region50: #{generator_forward.7} parent=47 // pred_check_branch
        %1059 = sbr.rel (%p1057) target = $region52
      $region51: #{generator_forward.7} parent=47 // pred_region
        %p1060 = scmp.lt.s32.totalorder %s18, 1
        %s1061 = scalar_select %p1060, %s18, 1
        %s1062 = smul.addr %s1061, 10
        %s1063 = smul.addr %s1062, 4
        %s1064 = scalar_lea.vmem %s4, %s1063
      $region52: #{generator_forward.7} parent=47 // pred_fallthru
        _
      // Predicated region
      $region53: #{generator_forward.7} parent=47 // pred_check
        %p1065 = pneg %p156
      $region54: #{generator_forward.7} parent=47 // pred_check_branch
        %1067 = sbr.rel (%p1065) target = $region56
      $region55: #{generator_forward.7} parent=47 // pred_region
        %p1068 = scmp.lt.s32.totalorder %s18, 1
        %s1069 = scalar_select %p1068, %s18, 1
        %s1070 = smul.addr %s1069, 2
        %s1071 = scalar_lea.vmem %s5, %s1070
      $region56: #{generator_forward.7} parent=47 // pred_fallthru
        _
    $region48: #{generator_forward.7} parent=5 // pred_fallthru
      _
  $region6: #{generator_forward.7} parent=0 // loop_footer
    %s16 = sadd.s32 1, %s12
  $region7: #{generator_forward.7} parent=0 // loop_footer_branch
    %11 = sbr.rel target = $region3
  $region8: #{generator_forward.7} parent=0 // loop_exit
    _

// kernel: generator_forward.10
$region0: #{generator_forward.10}
  #allocation0 [shape = 'u32[]', space=smem, size = 0x4, offset = 0x4, fixed_abs, tag = 'smem constant byte address 0x4 - core index']
  #allocation1 [shape = 'u32[144,128]{1,0:T(1,128)}', space=vmem, size = 0x12000, scoped, tag = 'internal scratch']
  %s0 = inlined_call_operand.vmem [shape: bf16[64,128], index: 0, kind: input, shape index: {}]
  %s1 = inlined_call_operand.vmem [shape: f32[2,128], index: 1, kind: input, shape index: {}]
  %s2 = inlined_call_operand.vmem [shape: f32[1,128], index: 2, kind: input, shape index: {}]
  %s3 = inlined_call_operand.vmem [shape: f32[1,128], index: 3, kind: input, shape index: {}]
  %s4 = inlined_call_operand.vmem [shape: bf16[64,128], index: 4, kind: output, shape index: {}]
  %s5 = sld [smem:[#allocation0]]
  $region26: #{generator_forward.10} parent=0
    _
  %s7 = ssub.s32 1, %s5
  %s8 = scalar_select 0, %s7, %s5
  // Predicated region
  $region2: #{generator_forward.10} parent=0 // pred_check
    _
  $region3: #{generator_forward.10} parent=0 // pred_check_branch
    %10 = sbr.rel (0) target = $region5
  $region4: #{generator_forward.10} parent=0 // pred_region
    _
  $region5: #{generator_forward.10} parent=0 // pred_fallthru
    _
  // Predicated region
  $region6: #{generator_forward.10} parent=0 // pred_check
    _
  $region7: #{generator_forward.10} parent=0 // pred_check_branch
    %12 = sbr.rel (0) target = $region9
  $region8: #{generator_forward.10} parent=0 // pred_region
    _
  $region9: #{generator_forward.10} parent=0 // pred_fallthru
    _
  // Predicated region
  $region10: #{generator_forward.10} parent=0 // pred_check
    _
  $region11: #{generator_forward.10} parent=0 // pred_check_branch
    %14 = sbr.rel (0) target = $region13
  $region12: #{generator_forward.10} parent=0 // pred_region
    _
  $region13: #{generator_forward.10} parent=0 // pred_fallthru
    _
  // Predicated region
  $region14: #{generator_forward.10} parent=0 // pred_check
    _
  $region15: #{generator_forward.10} parent=0 // pred_check_branch
    %16 = sbr.rel (0) target = $region17
  $region16: #{generator_forward.10} parent=0 // pred_region
    _
  $region17: #{generator_forward.10} parent=0 // pred_fallthru
    _
  %v17 = vld [vmem:[%s1] sm:$0x1]
  %v18 = vmul.f32 %v17, 0.03125
  %v19 = vld [vmem:[%s1 + $0x1] sm:$0x1]
  %v20 = vmul.f32 %v19, 0.03125
  %v21 = vmul.f32 %v18, %v18
  %v22 = vsub.f32 %v20, %v21
  %v23 = vmax.f32 %v22, 0.0
  %v24 = vld [vmem:[%s2] sm:$0x1]
  %v25 = vadd.f32 %v23, 1e-05
  %v26 = vrsqrt.pop %v25
  %v27 = vmul.f32 %v24, %v26
  %v28 = vld [vmem:[%s3] sm:$0x1]
  %v29 = vmul.f32 %v18, %v27
  %v30 = vsub.f32 %v28, %v29
  %v31 = vld [vmem:[%s0] sm:$0xf]
  %v32 = vld [vmem:[%s0 + $0x4] sm:$0xf]
  %v33 = vld [vmem:[%s0 + $0x8] sm:$0xf]
  %v34 = vld [vmem:[%s0 + $0xc] sm:$0xf]
  %v35 = vld [vmem:[%s0 + $0x10] sm:$0xf]
  %v36 = vld [vmem:[%s0 + $0x14] sm:$0xf]
  %v37 = vld [vmem:[%s0 + $0x18] sm:$0xf]
  %v38 = vld [vmem:[%s0 + $0x1c] sm:$0xf]
  %v39 = vunpack.c.l.bf16 %v31
  %v40 = vunpack.c.l.bf16 %v32
  %v41 = vunpack.c.l.bf16 %v33
  %v42 = vunpack.c.l.bf16 %v34
  %v43 = vunpack.c.l.bf16 %v35
  %v44 = vunpack.c.l.bf16 %v36
  %v45 = vunpack.c.l.bf16 %v37
  %v46 = vunpack.c.l.bf16 %v38
  %v48 = vlaneseq
  %v49 = vshrl.u32 %v48, 7
  %v50 = vsub.s32 0, %v49
  %v51 = vrot.slane %v27, %v50
  %v53 = vmul.f32 %v39, %v51
  %v54 = vmul.f32 %v40, %v51
  %v55 = vmul.f32 %v41, %v51
  %v56 = vmul.f32 %v42, %v51
  %v57 = vmul.f32 %v43, %v51
  %v58 = vmul.f32 %v44, %v51
  %v59 = vmul.f32 %v45, %v51
  %v60 = vmul.f32 %v46, %v51
  %v62 = vlaneseq
  %v63 = vshrl.u32 %v62, 7
  %v64 = vsub.s32 0, %v63
  %v65 = vrot.slane %v30, %v64
  %v67 = vadd.f32 %v53, %v65
  %v68 = vadd.f32 %v54, %v65
  %v69 = vadd.f32 %v55, %v65
  %v70 = vadd.f32 %v56, %v65
  %v71 = vadd.f32 %v57, %v65
  %v72 = vadd.f32 %v58, %v65
  %v73 = vadd.f32 %v59, %v65
  %v74 = vadd.f32 %v60, %v65
  %vm75 = vcmp.ge.f32.partialorder %v67, 0.0
  %vm76 = vcmp.ge.f32.partialorder %v68, 0.0
  %vm77 = vcmp.ge.f32.partialorder %v69, 0.0
  %vm78 = vcmp.ge.f32.partialorder %v70, 0.0
  %vm79 = vcmp.ge.f32.partialorder %v71, 0.0
  %vm80 = vcmp.ge.f32.partialorder %v72, 0.0
  %vm81 = vcmp.ge.f32.partialorder %v73, 0.0
  %vm82 = vcmp.ge.f32.partialorder %v74, 0.0
  %v83 = vmul.f32 %v67, 0.01
  %v84 = vmul.f32 %v68, 0.01
  %v85 = vmul.f32 %v69, 0.01
  %v86 = vmul.f32 %v70, 0.01
  %v87 = vmul.f32 %v71, 0.01
  %v88 = vmul.f32 %v72, 0.01
  %v89 = vmul.f32 %v73, 0.01
  %v90 = vmul.f32 %v74, 0.01
  %v91 = vsel %vm75, %v67, %v83
  %v92 = vsel %vm76, %v68, %v84
  %v93 = vsel %vm77, %v69, %v85
  %v94 = vsel %vm78, %v70, %v86
  %v95 = vsel %vm79, %v71, %v87
  %v96 = vsel %vm80, %v72, %v88
  %v97 = vsel %vm81, %v73, %v89
  %v98 = vsel %vm82, %v74, %v90
  %v99 = vpack.c.bf16 %v92, %v91
  %v100 = vpack.c.bf16 %v94, %v93
  %v101 = vpack.c.bf16 %v96, %v95
  %v102 = vpack.c.bf16 %v98, %v97
  %v107 = vunpack.c.l.b16 %v99
  %v108 = vunpack.c.h.b16 %v99
  %v109 = vunpack.c.l.b16 %v100
  %v110 = vunpack.c.h.b16 %v100
  %v111 = vunpack.c.l.b16 %v101
  %v112 = vunpack.c.h.b16 %v101
  %v113 = vunpack.c.l.b16 %v102
  %v114 = vunpack.c.h.b16 %v102
  %v115 = vpack.c.b16 %v107, %v107
  %v116 = vpack.c.b16 %v108, %v108
  %v117 = vpack.c.b16 %v109, %v109
  %v118 = vpack.c.b16 %v110, %v110
  %v119 = vpack.c.b16 %v111, %v111
  %v120 = vpack.c.b16 %v112, %v112
  %v121 = vpack.c.b16 %v113, %v113
  %v122 = vpack.c.b16 %v114, %v114
  %131 = vst [vmem:[%s4] sm:$0xf] %v115
  %132 = vst [vmem:[%s4 + $0x4] sm:$0xf] %v116
  %133 = vst [vmem:[%s4 + $0x8] sm:$0xf] %v117
  %134 = vst [vmem:[%s4 + $0xc] sm:$0xf] %v118
  %135 = vst [vmem:[%s4 + $0x10] sm:$0xf] %v119
  %136 = vst [vmem:[%s4 + $0x14] sm:$0xf] %v120
  %137 = vst [vmem:[%s4 + $0x18] sm:$0xf] %v121
  %138 = vst [vmem:[%s4 + $0x1c] sm:$0xf] %v122
  // Predicated region
  $region18: #{generator_forward.10} parent=0 // pred_check
    _
  $region19: #{generator_forward.10} parent=0 // pred_check_branch
    %140 = sbr.rel (0) target = $region21
  $region20: #{generator_forward.10} parent=0 // pred_region
    _
  $region21: #{generator_forward.10} parent=0 // pred_fallthru
    _
  // Predicated region
  $region22: #{generator_forward.10} parent=0 // pred_check
    _
  $region23: #{generator_forward.10} parent=0 // pred_check_branch
    %142 = sbr.rel (0) target = $region25
  $region24: #{generator_forward.10} parent=0 // pred_region
    _
  $region25: #{generator_forward.10} parent=0 // pred_fallthru
    _

// kernel: generator_forward.9
$region0: #{generator_forward.9}
  #allocation0 [shape = 'u32[]', space=smem, size = 0x4, offset = 0x4, fixed_abs, tag = 'smem constant byte address 0x4 - core index']
  #allocation1 [shape = 'u32[144,128]{1,0:T(1,128)}', space=vmem, size = 0x12000, scoped, tag = 'internal scratch']
  %s0 = inlined_call_operand.vmem [shape: bf16[2,40,256], index: 0, kind: input, shape index: {}]
  %s1 = inlined_call_operand.vmem [shape: bf16[4,256,128], index: 1, kind: input, shape index: {}]
  %s2 = inlined_call_operand.vmem [shape: f32[1,128], index: 2, kind: input, shape index: {}]
  %s3 = inlined_call_operand.vmem [shape: f32[32,1], index: 3, kind: input, shape index: {}]
  %s4 = inlined_call_operand.vmem [shape: bf16[2,1,32,128], index: 4, kind: output, shape index: {0}]
  %s5 = inlined_call_operand.vmem [shape: f32[2,2,128], index: 5, kind: output, shape index: {1}]
  %6 = xla_tuple %s4, %s5
  %s7 = sld [smem:[#allocation0]]
  $region57: #{generator_forward.9} parent=0
    _
  %s9 = ssub.s32 1, %s7
  %s10 = scalar_select 0, %s9, %s7
  loop: start=0, step=1, limit=4
  $region2: #{generator_forward.9} parent=0 // loop_pre_header
    _
  $region3: #{generator_forward.9} parent=0 // loop_header
    %s12 = sphi 0, %s16
    %p13 = scmp.ge.s32.totalorder %s12, 4
    %s22 = sphi 0, %s24
    %s25 = sphi 0, %s22
    %s26 = sphi 0, %s25
    %s42 = sphi 0, %s26
    %s46 = sphi 0, %s46
    %s48 = sphi 0, %s46
    %s49 = sphi 0, %s48
    %s63 = sphi 0, %s49
    %s67 = sphi 0, %s67
    %s69 = sphi 0, %s67
    %s70 = sphi 0, %s69
    %s84 = sphi 0, %s70
    %s88 = sphi 0, %s88
    %s90 = sphi 0, %s88
    %s91 = sphi 0, %s90
    %s105 = sphi 0, %s91
    %s111 = sphi 0, %s113
    %s114 = sphi 0, %s111
    %s115 = sphi 0, %s114
    %s131 = sphi 0, %s115
    %s137 = sphi 0, %s139
    %s140 = sphi 0, %s137
    %s141 = sphi 0, %s140
    %s157 = sphi 0, %s141
  $region4: #{generator_forward.9} parent=0 // loop_header_branch
    %15 = sbr.rel (%p13) target = $region8
  $region5: #{generator_forward.9} parent=0 // loop_body
    %s17 = ssub.s32 %s12, 1
    %s18 = ssub.s32 %s12, 2
    %s19 = sadd.s32 %s12, 1
    %s20 = ssub.s32 %s12, %s19
    %p21 = scmp.eq.s32.totalorder %s20, 0
    %s23 = sadd.s32 %s22, 1
    %s24 = scalar_select %p21, %s22, %s23
    %p27 = pneg %p21
    %p28 = scmp.eq.s32.totalorder %s12, 1
    %p29 = por %p27, %p28
    %p30 = scmp.ne.s32.totalorder %s22, %s25
    %p31 = scmp.eq.s32.totalorder %s12, 0
    %p32 = por %p30, %p31
    %p33 = scmp.ne.s32.totalorder %s22, %s25
    %p34 = scmp.eq.s32.totalorder %s17, 1
    %p35 = por %p33, %p34
    %p36 = scmp.ne.s32.totalorder %s25, %s26
    %p37 = scmp.eq.s32.totalorder %s17, 0
    %p38 = por %p36, %p37
    %p39 = scmp.ne.s32.totalorder %s25, %s26
    %p40 = scmp.eq.s32.totalorder %s18, 1
    %p41 = por %p39, %p40
    %p43 = scmp.ne.s32.totalorder %s26, %s42
    %p44 = scmp.eq.s32.totalorder %s18, 0
    %p45 = por %p43, %p44
    %s47 = sadd.s32 %s46, 1
    %p50 = scmp.eq.s32.totalorder %s12, 1
    %p51 = scmp.ne.s32.totalorder %s46, %s48
    %p52 = scmp.eq.s32.totalorder %s12, 0
    %p53 = por %p51, %p52
    %p54 = scmp.ne.s32.totalorder %s46, %s48
    %p55 = scmp.eq.s32.totalorder %s17, 1
    %p56 = por %p54, %p55
    %p57 = scmp.ne.s32.totalorder %s48, %s49
    %p58 = scmp.eq.s32.totalorder %s17, 0
    %p59 = por %p57, %p58
    %p60 = scmp.ne.s32.totalorder %s48, %s49
    %p61 = scmp.eq.s32.totalorder %s18, 1
    %p62 = por %p60, %p61
    %p64 = scmp.ne.s32.totalorder %s49, %s63
    %p65 = scmp.eq.s32.totalorder %s18, 0
    %p66 = por %p64, %p65
    %s68 = sadd.s32 %s67, 1
    %p71 = scmp.eq.s32.totalorder %s12, 1
    %p72 = scmp.ne.s32.totalorder %s67, %s69
    %p73 = scmp.eq.s32.totalorder %s12, 0
    %p74 = por %p72, %p73
    %p75 = scmp.ne.s32.totalorder %s67, %s69
    %p76 = scmp.eq.s32.totalorder %s17, 1
    %p77 = por %p75, %p76
    %p78 = scmp.ne.s32.totalorder %s69, %s70
    %p79 = scmp.eq.s32.totalorder %s17, 0
    %p80 = por %p78, %p79
    %p81 = scmp.ne.s32.totalorder %s69, %s70
    %p82 = scmp.eq.s32.totalorder %s18, 1
    %p83 = por %p81, %p82
    %p85 = scmp.ne.s32.totalorder %s70, %s84
    %p86 = scmp.eq.s32.totalorder %s18, 0
    %p87 = por %p85, %p86
    %s89 = sadd.s32 %s88, 1
    %p92 = scmp.eq.s32.totalorder %s12, 1
    %p93 = scmp.ne.s32.totalorder %s88, %s90
    %p94 = scmp.eq.s32.totalorder %s12, 0
    %p95 = por %p93, %p94
    %p96 = scmp.ne.s32.totalorder %s88, %s90
    %p97 = scmp.eq.s32.totalorder %s17, 1
    %p98 = por %p96, %p97
    %p99 = scmp.ne.s32.totalorder %s90, %s91
    %p100 = scmp.eq.s32.totalorder %s17, 0
    %p101 = por %p99, %p100
    %p102 = scmp.ne.s32.totalorder %s90, %s91
    %p103 = scmp.eq.s32.totalorder %s18, 1
    %p104 = por %p102, %p103
    %p106 = scmp.ne.s32.totalorder %s91, %s105
    %p107 = scmp.eq.s32.totalorder %s18, 0
    %p108 = por %p106, %p107
    %s109 = ssub.s32 %s12, %s19
    %p110 = scmp.eq.s32.totalorder %s109, 0
    %s112 = sadd.s32 %s111, 1
    %s113 = scalar_select %p110, %s111, %s112
    %p116 = pneg %p110
    %p117 = scmp.eq.s32.totalorder %s12, 1
    %p118 = por %p116, %p117
    %p119 = scmp.ne.s32.totalorder %s111, %s114
    %p120 = scmp.eq.s32.totalorder %s12, 0
    %p121 = por %p119, %p120
    %p122 = scmp.ne.s32.totalorder %s111, %s114
    %p123 = scmp.eq.s32.totalorder %s17, 1
    %p124 = por %p122, %p123
    %p125 = scmp.ne.s32.totalorder %s114, %s115
    %p126 = scmp.eq.s32.totalorder %s17, 0
    %p127 = por %p125, %p126
    %p128 = scmp.ne.s32.totalorder %s114, %s115
    %p129 = scmp.eq.s32.totalorder %s18, 1
    %p130 = por %p128, %p129
    %p132 = scmp.ne.s32.totalorder %s115, %s131
    %p133 = scmp.eq.s32.totalorder %s18, 0
    %p134 = por %p132, %p133
    %s135 = ssub.s32 %s12, %s19
    %p136 = scmp.eq.s32.totalorder %s135, 0
    %s138 = sadd.s32 %s137, 1
    %s139 = scalar_select %p136, %s137, %s138
    %p142 = pneg %p136
    %p143 = scmp.eq.s32.totalorder %s12, 1
    %p144 = por %p142, %p143
    %p145 = scmp.ne.s32.totalorder %s137, %s140
    %p146 = scmp.eq.s32.totalorder %s12, 0
    %p147 = por %p145, %p146
    %p148 = scmp.ne.s32.totalorder %s137, %s140
    %p149 = scmp.eq.s32.totalorder %s17, 1
    %p150 = por %p148, %p149
    %p151 = scmp.ne.s32.totalorder %s140, %s141
    %p152 = scmp.eq.s32.totalorder %s17, 0
    %p153 = por %p151, %p152
    %p154 = scmp.ne.s32.totalorder %s140, %s141
    %p155 = scmp.eq.s32.totalorder %s18, 1
    %p156 = por %p154, %p155
    %p158 = scmp.ne.s32.totalorder %s141, %s157
    %p159 = scmp.eq.s32.totalorder %s18, 0
    %p160 = por %p158, %p159
    %p161 = scmp.le.s32.totalorder 1, %s12
    %p162 = scmp.lt.s32.totalorder %s12, 3
    %p163 = pnand %p161, %p162
    %p164 = pneg %p163
    // Predicated region
    $region9: #{generator_forward.9} parent=5 // pred_check
      _
    $region10: #{generator_forward.9} parent=5 // pred_check_branch
      %166 = sbr.rel (%p163) target = $region12
    $region11: #{generator_forward.9} parent=5 // pred_region
      %s167 = ssub.s32 %s12, 1
      // Predicated region
      $region13: #{generator_forward.9} parent=11 // pred_check
        %p168 = pneg %p59
      $region14: #{generator_forward.9} parent=11 // pred_check_branch
        %170 = sbr.rel (%p168) target = $region16
      $region15: #{generator_forward.9} parent=11 // pred_region
        _
      $region16: #{generator_forward.9} parent=11 // pred_fallthru
        _
      // Predicated region
      $region17: #{generator_forward.9} parent=11 // pred_check
        %p171 = pneg %p80
      $region18: #{generator_forward.9} parent=11 // pred_check_branch
        %173 = sbr.rel (%p171) target = $region20
      $region19: #{generator_forward.9} parent=11 // pred_region
        _
      $region20: #{generator_forward.9} parent=11 // pred_fallthru
        _
      // Predicated region
      $region21: #{generator_forward.9} parent=11 // pred_check
        %p174 = pneg %p101
      $region22: #{generator_forward.9} parent=11 // pred_check_branch
        %176 = sbr.rel (%p174) target = $region24
      $region23: #{generator_forward.9} parent=11 // pred_region
        _
      $region24: #{generator_forward.9} parent=11 // pred_fallthru
        _
    $region12: #{generator_forward.9} parent=5 // pred_fallthru
      _
    %p177 = scmp.lt.s32.totalorder %s12, 2
    // Predicated region
    $region25: #{generator_forward.9} parent=5 // pred_check
      %p178 = pneg %p177
    $region26: #{generator_forward.9} parent=5 // pred_check_branch
      %180 = sbr.rel (%p178) target = $region28
    $region27: #{generator_forward.9} parent=5 // pred_region
      // Predicated region
      $region29: #{generator_forward.9} parent=27 // pred_check
        %p181 = pneg %p32
      $region30: #{generator_forward.9} parent=27 // pred_check_branch
        %183 = sbr.rel (%p181) target = $region32
      $region31: #{generator_forward.9} parent=27 // pred_region
        %p184 = scmp.lt.s32.totalorder %s12, 1
        %s185 = scalar_select %p184, %s12, 1
        %s186 = smul.addr %s185, 10
        %s187 = smul.addr %s186, 4
        %s188 = scalar_lea.vmem %s0, %s187
      $region32: #{generator_forward.9} parent=27 // pred_fallthru
        _
    $region28: #{generator_forward.9} parent=5 // pred_fallthru
      _
    %p189 = scmp.le.s32.totalorder 1, %s12
    %p190 = scmp.lt.s32.totalorder %s12, 3
    %p191 = pnand %p189, %p190
    %p192 = pneg %p191
    // Predicated region
    $region33: #{generator_forward.9} parent=5 // pred_check
      _
    $region34: #{generator_forward.9} parent=5 // pred_check_branch
      %194 = sbr.rel (%p191) target = $region36
    $region35: #{generator_forward.9} parent=5 // pred_region
      %s195 = ssub.s32 %s12, 1
      %p196 = scmp.lt.s32.totalorder %s17, 1
      %s197 = scalar_select %p196, %s17, 1
      %s198 = smul.addr %s197, 10
      %s199 = smul.addr %s198, 4
      %s200 = scalar_lea.vmem %s0, %s199
      %p201 = pneg %p38
      %p202 = pneg %p35
      %p203 = pneg %p59
      %p204 = pneg %p56
      %p205 = pneg %p80
      %p206 = pneg %p77
      %p207 = pneg %p101
      %p208 = pneg %p98
      %p209 = pneg %p127
      %p210 = pneg %p124
      %p211 = scmp.lt.s32.totalorder %s17, 1
      %s212 = scalar_select %p211, %s17, 1
      %s213 = smul.addr %s212, 4
      %s214 = smul.addr %s213, 4
      %s215 = scalar_lea.vmem %s4, %s214
      %p216 = pneg %p153
      %p217 = pneg %p150
      %p218 = scmp.lt.s32.totalorder %s17, 1
      %s219 = scalar_select %p218, %s17, 1
      %s220 = smul.addr %s219, 2
      %s221 = scalar_lea.vmem %s5, %s220
      %p222 = scmp.lt.s32.totalorder %s17, 1
      %s223 = scalar_select %p222, %s17, 1
      %s224 = smul.addr %s223, 10
      %s225 = smul.addr %s224, 4
      %s226 = scalar_lea.vmem %s0, %s225
      %p227 = scmp.lt.s32.totalorder %s17, 1
      %s228 = scalar_select %p227, %s17, 1
      %s229 = smul.addr %s228, 4
      %s230 = smul.addr %s229, 4
      %s231 = scalar_lea.vmem %s4, %s230
      %p232 = scmp.lt.s32.totalorder %s17, 1
      %s233 = scalar_select %p232, %s17, 1
      %s234 = smul.addr %s233, 2
      %s235 = scalar_lea.vmem %s5, %s234
      %v237 = vld [vmem:[%s2] sm:$0x1]
      %v238 = vld [vmem:[%s3] sm:$0xff]
      %v239 = vld [vmem:[%s3 + $0x8] sm:$0xff]
      %v240 = vld [vmem:[%s3 + $0x10] sm:$0xff]
      %v241 = vld [vmem:[%s3 + $0x18] sm:$0xff]
      %v242 = vld [vmem:[%s226] sm:$0xff]
      %v243 = vld [vmem:[%s226 + $0x8] sm:$0xff]
      %v244 = vld [vmem:[%s226 + $0x10] sm:$0xff]
      %v245 = vld [vmem:[%s226 + $0x18] sm:$0xff]
      %v246 = vld [vmem:[%s1] sm:$0xf]
      %v247 = vld [vmem:[%s1 + $0x4] sm:$0xf]
      %v248 = vld [vmem:[%s1 + $0x8] sm:$0xf]
      %v249 = vld [vmem:[%s1 + $0xc] sm:$0xf]
      %v250 = vld [vmem:[%s1 + $0x10] sm:$0xf]
      %v251 = vld [vmem:[%s1 + $0x14] sm:$0xf]
      %v252 = vld [vmem:[%s1 + $0x18] sm:$0xf]
      %v253 = vld [vmem:[%s1 + $0x1c] sm:$0xf]
      %v254 = vld [vmem:[%s1 + $0x20] sm:$0xf]
      %v255 = vld [vmem:[%s1 + $0x24] sm:$0xf]
      %v256 = vld [vmem:[%s1 + $0x28] sm:$0xf]
      %v257 = vld [vmem:[%s1 + $0x2c] sm:$0xf]
      %v258 = vld [vmem:[%s1 + $0x30] sm:$0xf]
      %v259 = vld [vmem:[%s1 + $0x34] sm:$0xf]
      %v260 = vld [vmem:[%s1 + $0x38] sm:$0xf]
      %v261 = vld [vmem:[%s1 + $0x3c] sm:$0xf]
      %v262 = vld [vmem:[%s1 + $0x40] sm:$0xf]
      %v263 = vld [vmem:[%s1 + $0x44] sm:$0xf]
      %v264 = vld [vmem:[%s1 + $0x48] sm:$0xf]
      %v265 = vld [vmem:[%s1 + $0x4c] sm:$0xf]
      %v266 = vld [vmem:[%s1 + $0x50] sm:$0xf]
      %v267 = vld [vmem:[%s1 + $0x54] sm:$0xf]
      %v268 = vld [vmem:[%s1 + $0x58] sm:$0xf]
      %v269 = vld [vmem:[%s1 + $0x5c] sm:$0xf]
      %v270 = vld [vmem:[%s1 + $0x60] sm:$0xf]
      %v271 = vld [vmem:[%s1 + $0x64] sm:$0xf]
      %v272 = vld [vmem:[%s1 + $0x68] sm:$0xf]
      %v273 = vld [vmem:[%s1 + $0x6c] sm:$0xf]
      %v274 = vld [vmem:[%s1 + $0x70] sm:$0xf]
      %v275 = vld [vmem:[%s1 + $0x74] sm:$0xf]
      %v276 = vld [vmem:[%s1 + $0x78] sm:$0xf]
      %v277 = vld [vmem:[%s1 + $0x7c] sm:$0xf]
      %v278 = vld [vmem:[%s226] sm:$0xff]
      %v279 = vld [vmem:[%s226 + $0x8] sm:$0xff]
      %v280 = vld [vmem:[%s226 + $0x10] sm:$0xff]
      %v281 = vld [vmem:[%s226 + $0x18] sm:$0xff]
      %v282 = vld [vmem:[%s226 + $0x20] sm:$0x11]
      %s283 = scalar_lea.vmem %s1, 128
      %v284 = vld [vmem:[%s283] sm:$0xf]
      %v285 = vld [vmem:[%s283 + $0x4] sm:$0xf]
      %v286 = vld [vmem:[%s283 + $0x8] sm:$0xf]
      %v287 = vld [vmem:[%s283 + $0xc] sm:$0xf]
      %v288 = vld [vmem:[%s283 + $0x10] sm:$0xf]
      %v289 = vld [vmem:[%s283 + $0x14] sm:$0xf]
      %v290 = vld [vmem:[%s283 + $0x18] sm:$0xf]
      %v291 = vld [vmem:[%s283 + $0x1c] sm:$0xf]
      %v292 = vld [vmem:[%s283 + $0x20] sm:$0xf]
      %v293 = vld [vmem:[%s283 + $0x24] sm:$0xf]
      %v294 = vld [vmem:[%s283 + $0x28] sm:$0xf]
      %v295 = vld [vmem:[%s283 + $0x2c] sm:$0xf]
      %v296 = vld [vmem:[%s283 + $0x30] sm:$0xf]
      %v297 = vld [vmem:[%s283 + $0x34] sm:$0xf]
      %v298 = vld [vmem:[%s283 + $0x38] sm:$0xf]
      %v299 = vld [vmem:[%s283 + $0x3c] sm:$0xf]
      %v300 = vld [vmem:[%s283 + $0x40] sm:$0xf]
      %v301 = vld [vmem:[%s283 + $0x44] sm:$0xf]
      %v302 = vld [vmem:[%s283 + $0x48] sm:$0xf]
      %v303 = vld [vmem:[%s283 + $0x4c] sm:$0xf]
      %v304 = vld [vmem:[%s283 + $0x50] sm:$0xf]
      %v305 = vld [vmem:[%s283 + $0x54] sm:$0xf]
      %v306 = vld [vmem:[%s283 + $0x58] sm:$0xf]
      %v307 = vld [vmem:[%s283 + $0x5c] sm:$0xf]
      %v308 = vld [vmem:[%s283 + $0x60] sm:$0xf]
      %v309 = vld [vmem:[%s283 + $0x64] sm:$0xf]
      %v310 = vld [vmem:[%s283 + $0x68] sm:$0xf]
      %v311 = vld [vmem:[%s283 + $0x6c] sm:$0xf]
      %v312 = vld [vmem:[%s283 + $0x70] sm:$0xf]
      %v313 = vld [vmem:[%s283 + $0x74] sm:$0xf]
      %v314 = vld [vmem:[%s283 + $0x78] sm:$0xf]
      %v315 = vld [vmem:[%s283 + $0x7c] sm:$0xf]
      %v321 = vunpack.c.l.b16 %v278
      %v322 = vunpack.c.h.b16 %v278
      %v323 = vunpack.c.l.b16 %v279
      %v324 = vunpack.c.h.b16 %v279
      %v325 = vunpack.c.l.b16 %v280
      %v326 = vunpack.c.h.b16 %v280
      %v327 = vunpack.c.l.b16 %v281
      %v328 = vunpack.c.h.b16 %v281
      %v329 = vunpack.c.l.b16 %v282
      %v330 = vunpack.c.h.b16 %v282
      %v331 = vpack.c.b16 %v323, %v321
      %v332 = vpack.c.b16 %v324, %v322
      %v333 = vpack.c.b16 %v327, %v325
      %v334 = vpack.c.b16 %v328, %v326
      %v335 = vpack.c.b16 %v329, %v329
      %v336 = vpack.c.b16 %v330, %v330
      %vm337 = vsmask.f32 7424
      %v339 = vshrl.u32 %v331, 16
      %v341 = vshll.u32 %v331, 16
      %v343 = vrot.slane %v341, 1
      %v344 = vor.u32 %v339, %v343
      %v346 = vshll.u32 %v333, 16
      %v348 = vrot.slane %v346, 1
      %v349 = vsel %vm337, %v344, %v348
      %v351 = vshrl.u32 %v332, 16
      %v353 = vshll.u32 %v332, 16
      %v355 = vrot.slane %v353, 1
      %v356 = vor.u32 %v351, %v355
      %v358 = vshll.u32 %v334, 16
      %v360 = vrot.slane %v358, 1
      %v361 = vsel %vm337, %v356, %v360
      %v362 = vshrl.u32 %v333, 16
      %v364 = vor.u32 %v362, %v348
      %v366 = vshll.u32 %v335, 16
      %v368 = vrot.slane %v366, 1
      %v369 = vsel %vm337, %v364, %v368
      %v370 = vshrl.u32 %v334, 16
      %v372 = vor.u32 %v370, %v360
      %v374 = vshll.u32 %v336, 16
      %v376 = vrot.slane %v374, 1
      %v377 = vsel %vm337, %v372, %v376
      %v414 = vunpack.c.l.b16 %v284
      %v415 = vunpack.c.l.b16 %v285
      %v416 = vunpack.c.l.b16 %v286
      %v417 = vunpack.c.l.b16 %v287
      %v418 = vunpack.c.l.b16 %v288
      %v419 = vunpack.c.l.b16 %v289
      %v420 = vunpack.c.l.b16 %v290
      %v421 = vunpack.c.l.b16 %v291
      %v422 = vunpack.c.l.b16 %v292
      %v423 = vunpack.c.l.b16 %v293
      %v424 = vunpack.c.l.b16 %v294
      %v425 = vunpack.c.l.b16 %v295
      %v426 = vunpack.c.l.b16 %v296
      %v427 = vunpack.c.l.b16 %v297
      %v428 = vunpack.c.l.b16 %v298
      %v429 = vunpack.c.l.b16 %v299
      %v430 = vunpack.c.l.b16 %v300
      %v431 = vunpack.c.l.b16 %v301
      %v432 = vunpack.c.l.b16 %v302
      %v433 = vunpack.c.l.b16 %v303
      %v434 = vunpack.c.l.b16 %v304
      %v435 = vunpack.c.l.b16 %v305
      %v436 = vunpack.c.l.b16 %v306
      %v437 = vunpack.c.l.b16 %v307
      %v438 = vunpack.c.l.b16 %v308
      %v439 = vunpack.c.l.b16 %v309
      %v440 = vunpack.c.l.b16 %v310
      %v441 = vunpack.c.l.b16 %v311
      %v442 = vunpack.c.l.b16 %v312
      %v443 = vunpack.c.l.b16 %v313
      %v444 = vunpack.c.l.b16 %v314
      %v445 = vunpack.c.l.b16 %v315
      %v446 = vpack.c.b16 %v415, %v414
      %v447 = vpack.c.b16 %v417, %v416
      %v448 = vpack.c.b16 %v419, %v418
      %v449 = vpack.c.b16 %v421, %v420
      %v450 = vpack.c.b16 %v423, %v422
      %v451 = vpack.c.b16 %v425, %v424
      %v452 = vpack.c.b16 %v427, %v426
      %v453 = vpack.c.b16 %v429, %v428
      %v454 = vpack.c.b16 %v431, %v430
      %v455 = vpack.c.b16 %v433, %v432
      %v456 = vpack.c.b16 %v435, %v434
      %v457 = vpack.c.b16 %v437, %v436
      %v458 = vpack.c.b16 %v439, %v438
      %v459 = vpack.c.b16 %v441, %v440
      %v460 = vpack.c.b16 %v443, %v442
      %v461 = vpack.c.b16 %v445, %v444
      %478 = vmatprep.subr.bf16.mxu0 0
      %479 = vmatpush1.bf16.msra.mxu0 %v453
      %480 = vmatprep.subr.bf16.mxu0 0
      %481 = vmatpush1.bf16.msra.mxu0 %v452
      %482 = vmatprep.subr.bf16.mxu0 0
      %483 = vmatpush1.bf16.msra.mxu0 %v451
      %484 = vmatprep.subr.bf16.mxu0 0
      %485 = vmatpush1.bf16.msra.mxu0 %v450
      %486 = vmatprep.subr.bf16.mxu0 0
      %487 = vmatpush1.bf16.msra.mxu0 %v449
      %488 = vmatprep.subr.bf16.mxu0 0
      %489 = vmatpush1.bf16.msra.mxu0 %v448
      %490 = vmatprep.subr.bf16.mxu0 0
      %491 = vmatpush1.bf16.msra.mxu0 %v447
      %492 = vmatprep.subr.bf16.mxu0 0
      %493 = vmatpush1.bf16.msra.mxu0 %v446
      %494 = vmatprep.subr.bf16.mxu0 0
      %495 = vmatpush2.bf16.msra.mxu0 %v461
      %496 = vmatprep.subr.bf16.mxu0 0
      %497 = vmatpush2.bf16.msra.mxu0 %v460
      %498 = vmatprep.subr.bf16.mxu0 0
      %499 = vmatpush2.bf16.msra.mxu0 %v459
      %500 = vmatprep.subr.bf16.mxu0 0
      %501 = vmatpush2.bf16.msra.mxu0 %v458
      %502 = vmatprep.subr.bf16.mxu0 0
      %503 = vmatpush2.bf16.msra.mxu0 %v457
      %504 = vmatprep.subr.bf16.mxu0 0
      %505 = vmatpush2.bf16.msra.mxu0 %v456
      %506 = vmatprep.subr.bf16.mxu0 0
      %507 = vmatpush2.bf16.msra.mxu0 %v455
      %508 = vmatprep.subr.bf16.mxu0 0
      %509 = vmatpush2.bf16.msra.mxu0 %v454
      %510 = vmatprep.mubr.bf16.mxu0 %v361
      %511 = vmatmul.mubr.bf16.gmra.mxu0 %v349
      %v512 = vpop.f32.mrf.mxu0
      %v513 = vadd.f32 0.0, %v512
      %v514 = vpop.f32.mrf.mxu0
      %v515 = vpop.f32.mrf.mxu0
      %v516 = vadd.f32 0.0, %v515
      %v517 = vpop.f32.mrf.mxu0
      %518 = vmatprep.mubr.bf16.mxu0 %v377
      %519 = vmatmul.mubr.bf16.gmra.mxu0 %v369
      %v520 = vpop.f32.mrf.mxu0
      %v521 = vadd.f32 0.0, %v520
      %v522 = vpop.f32.mrf.mxu0
      %v523 = vpop.f32.mrf.mxu0
      %v524 = vadd.f32 0.0, %v523
      %v525 = vpop.f32.mrf.mxu0
      %526 = vdwg.mxu0
      %v531 = vunpack.c.l.b16 %v242
      %v532 = vunpack.c.h.b16 %v242
      %v533 = vunpack.c.l.b16 %v243
      %v534 = vunpack.c.h.b16 %v243
      %v535 = vunpack.c.l.b16 %v244
      %v536 = vunpack.c.h.b16 %v244
      %v537 = vunpack.c.l.b16 %v245
      %v538 = vunpack.c.h.b16 %v245
      %v539 = vpack.c.b16 %v533, %v531
      %v540 = vpack.c.b16 %v534, %v532
      %v541 = vpack.c.b16 %v537, %v535
      %v542 = vpack.c.b16 %v538, %v536
      %v579 = vunpack.c.l.b16 %v246
      %v580 = vunpack.c.l.b16 %v247
      %v581 = vunpack.c.l.b16 %v248
      %v582 = vunpack.c.l.b16 %v249
      %v583 = vunpack.c.l.b16 %v250
      %v584 = vunpack.c.l.b16 %v251
      %v585 = vunpack.c.l.b16 %v252
      %v586 = vunpack.c.l.b16 %v253
      %v587 = vunpack.c.l.b16 %v254
      %v588 = vunpack.c.l.b16 %v255
      %v589 = vunpack.c.l.b16 %v256
      %v590 = vunpack.c.l.b16 %v257
      %v591 = vunpack.c.l.b16 %v258
      %v592 = vunpack.c.l.b16 %v259
      %v593 = vunpack.c.l.b16 %v260
      %v594 = vunpack.c.l.b16 %v261
      %v595 = vunpack.c.l.b16 %v262
      %v596 = vunpack.c.l.b16 %v263
      %v597 = vunpack.c.l.b16 %v264
      %v598 = vunpack.c.l.b16 %v265
      %v599 = vunpack.c.l.b16 %v266
      %v600 = vunpack.c.l.b16 %v267
      %v601 = vunpack.c.l.b16 %v268
      %v602 = vunpack.c.l.b16 %v269
      %v603 = vunpack.c.l.b16 %v270
      %v604 = vunpack.c.l.b16 %v271
      %v605 = vunpack.c.l.b16 %v272
      %v606 = vunpack.c.l.b16 %v273
      %v607 = vunpack.c.l.b16 %v274
      %v608 = vunpack.c.l.b16 %v275
      %v609 = vunpack.c.l.b16 %v276
      %v610 = vunpack.c.l.b16 %v277
      %v611 = vpack.c.b16 %v580, %v579
      %v612 = vpack.c.b16 %v582, %v581
      %v613 = vpack.c.b16 %v584, %v583
      %v614 = vpack.c.b16 %v586, %v585
      %v615 = vpack.c.b16 %v588, %v587
      %v616 = vpack.c.b16 %v590, %v589
      %v617 = vpack.c.b16 %v592, %v591
      %v618 = vpack.c.b16 %v594, %v593
      %v619 = vpack.c.b16 %v596, %v595
      %v620 = vpack.c.b16 %v598, %v597
      %v621 = vpack.c.b16 %v600, %v599
      %v622 = vpack.c.b16 %v602, %v601
      %v623 = vpack.c.b16 %v604, %v603
      %v624 = vpack.c.b16 %v606, %v605
      %v625 = vpack.c.b16 %v608, %v607
      %v626 = vpack.c.b16 %v610, %v609
      %643 = vmatprep.subr.bf16.mxu0 0
      %644 = vmatpush1.bf16.msra.mxu0 %v618
      %645 = vmatprep.subr.bf16.mxu0 0
      %646 = vmatpush1.bf16.msra.mxu0 %v617
      %647 = vmatprep.subr.bf16.mxu0 0
      %648 = vmatpush1.bf16.msra.mxu0 %v616
      %649 = vmatprep.subr.bf16.mxu0 0
      %650 = vmatpush1.bf16.msra.mxu0 %v615
      %651 = vmatprep.subr.bf16.mxu0 0
      %652 = vmatpush1.bf16.msra.mxu0 %v614
      %653 = vmatprep.subr.bf16.mxu0 0
      %654 = vmatpush1.bf16.msra.mxu0 %v613
      %655 = vmatprep.subr.bf16.mxu0 0
      %656 = vmatpush1.bf16.msra.mxu0 %v612
      %657 = vmatprep.subr.bf16.mxu0 0
      %658 = vmatpush1.bf16.msra.mxu0 %v611
      %659 = vmatprep.subr.bf16.mxu0 0
      %660 = vmatpush2.bf16.msra.mxu0 %v626
      %661 = vmatprep.subr.bf16.mxu0 0
      %662 = vmatpush2.bf16.msra.mxu0 %v625
      %663 = vmatprep.subr.bf16.mxu0 0
      %664 = vmatpush2.bf16.msra.mxu0 %v624
      %665 = vmatprep.subr.bf16.mxu0 0
      %666 = vmatpush2.bf16.msra.mxu0 %v623
      %667 = vmatprep.subr.bf16.mxu0 0
      %668 = vmatpush2.bf16.msra.mxu0 %v622
      %669 = vmatprep.subr.bf16.mxu0 0
      %670 = vmatpush2.bf16.msra.mxu0 %v621
      %671 = vmatprep.subr.bf16.mxu0 0
      %672 = vmatpush2.bf16.msra.mxu0 %v620
      %673 = vmatprep.subr.bf16.mxu0 0
      %674 = vmatpush2.bf16.msra.mxu0 %v619
      %675 = vmatprep.mubr.bf16.mxu0 %v540
      %676 = vmatmul.mubr.bf16.gmra.mxu0 %v539
      %v677 = vpop.f32.mrf.mxu0
      %v678 = vadd.f32 %v513, %v677
      %v679 = vpop.f32.mrf.mxu0
      %v680 = vpop.f32.mrf.mxu0
      %v681 = vadd.f32 %v516, %v680
      %v682 = vpop.f32.mrf.mxu0
      %683 = vmatprep.mubr.bf16.mxu0 %v542
      %684 = vmatmul.mubr.bf16.gmra.mxu0 %v541
      %v685 = vpop.f32.mrf.mxu0
      %v686 = vadd.f32 %v521, %v685
      %v687 = vpop.f32.mrf.mxu0
      %v688 = vpop.f32.mrf.mxu0
      %v689 = vadd.f32 %v524, %v688
      %v690 = vpop.f32.mrf.mxu0
      %691 = vdwg.mxu0
      %v692 = vld [vmem:[%s226] sm:$0xcc]
      %v693 = vld [vmem:[%s226 + $0x20] sm:$0x77]
      %s694 = scalar_lea.vmem %s1, 256
      %v695 = vld [vmem:[%s694] sm:$0xf]
      %v696 = vld [vmem:[%s694 + $0x4] sm:$0xf]
      %v697 = vld [vmem:[%s694 + $0x8] sm:$0xf]
      %v698 = vld [vmem:[%s694 + $0xc] sm:$0xf]
      %v699 = vld [vmem:[%s694 + $0x10] sm:$0xf]
      %v700 = vld [vmem:[%s694 + $0x14] sm:$0xf]
      %v701 = vld [vmem:[%s694 + $0x18] sm:$0xf]
      %v702 = vld [vmem:[%s694 + $0x1c] sm:$0xf]
      %v703 = vld [vmem:[%s694 + $0x20] sm:$0xf]
      %v704 = vld [vmem:[%s694 + $0x24] sm:$0xf]
      %v705 = vld [vmem:[%s694 + $0x28] sm:$0xf]
      %v706 = vld [vmem:[%s694 + $0x2c] sm:$0xf]
      %v707 = vld [vmem:[%s694 + $0x30] sm:$0xf]
      %v708 = vld [vmem:[%s694 + $0x34] sm:$0xf]
      %v709 = vld [vmem:[%s694 + $0x38] sm:$0xf]
      %v710 = vld [vmem:[%s694 + $0x3c] sm:$0xf]
      %v711 = vld [vmem:[%s694 + $0x40] sm:$0xf]
      %v712 = vld [vmem:[%s694 + $0x44] sm:$0xf]
      %v713 = vld [vmem:[%s694 + $0x48] sm:$0xf]
      %v714 = vld [vmem:[%s694 + $0x4c] sm:$0xf]
      %v715 = vld [vmem:[%s694 + $0x50] sm:$0xf]
      %v716 = vld [vmem:[%s694 + $0x54] sm:$0xf]
      %v717 = vld [vmem:[%s694 + $0x58] sm:$0xf]
      %v718 = vld [vmem:[%s694 + $0x5c] sm:$0xf]
      %v719 = vld [vmem:[%s694 + $0x60] sm:$0xf]
      %v720 = vld [vmem:[%s694 + $0x64] sm:$0xf]
      %v721 = vld [vmem:[%s694 + $0x68] sm:$0xf]
      %v722 = vld [vmem:[%s694 + $0x6c] sm:$0xf]
      %v723 = vld [vmem:[%s694 + $0x70] sm:$0xf]
      %v724 = vld [vmem:[%s694 + $0x74] sm:$0xf]
      %v725 = vld [vmem:[%s694 + $0x78] sm:$0xf]
      %v726 = vld [vmem:[%s694 + $0x7c] sm:$0xf]
      %v729 = vunpack.c.l.b16 %v692
      %v730 = vunpack.c.h.b16 %v692
      %v731 = vunpack.c.l.b16 %v693
      %v732 = vunpack.c.h.b16 %v693
      %v733 = vpack.c.b16 %v323, %v729
      %v734 = vpack.c.b16 %v324, %v730
      %v735 = vpack.c.b16 %v731, %v731
      %v736 = vpack.c.b16 %v732, %v732
      %vm737 = vsmask.f32 5376
      %v739 = vshrl.u32 %v733, 16
      %v741 = vrot.slane %v739, 2
      %v742 = vshll.u32 %v733, 16
      %v744 = vrot.slane %v742, 3
      %v745 = vor.u32 %v741, %v744
      %v746 = vrot.slane %v362, 2
      %v747 = vrot.slane %v346, 3
      %v748 = vor.u32 %v746, %v747
      %v749 = vsel %vm737, %v745, %v748
      %v751 = vshrl.u32 %v734, 16
      %v753 = vrot.slane %v751, 2
      %v754 = vshll.u32 %v734, 16
      %v756 = vrot.slane %v754, 3
      %v757 = vor.u32 %v753, %v756
      %v758 = vrot.slane %v370, 2
      %v759 = vrot.slane %v358, 3
      %v760 = vor.u32 %v758, %v759
      %v761 = vsel %vm737, %v757, %v760
      %v763 = vshrl.u32 %v735, 16
      %v765 = vrot.slane %v763, 2
      %v766 = vshll.u32 %v735, 16
      %v768 = vrot.slane %v766, 3
      %v769 = vor.u32 %v765, %v768
      %v770 = vsel %vm737, %v748, %v769
      %v772 = vshrl.u32 %v736, 16
      %v774 = vrot.slane %v772, 2
      %v775 = vshll.u32 %v736, 16
      %v777 = vrot.slane %v775, 3
      %v778 = vor.u32 %v774, %v777
      %v779 = vsel %vm737, %v760, %v778
      %v816 = vunpack.c.l.b16 %v695
      %v817 = vunpack.c.l.b16 %v696
      %v818 = vunpack.c.l.b16 %v697
      %v819 = vunpack.c.l.b16 %v698
      %v820 = vunpack.c.l.b16 %v699
      %v821 = vunpack.c.l.b16 %v700
      %v822 = vunpack.c.l.b16 %v701
      %v823 = vunpack.c.l.b16 %v702
      %v824 = vunpack.c.l.b16 %v703
      %v825 = vunpack.c.l.b16 %v704
      %v826 = vunpack.c.l.b16 %v705
      %v827 = vunpack.c.l.b16 %v706
      %v828 = vunpack.c.l.b16 %v707
      %v829 = vunpack.c.l.b16 %v708
      %v830 = vunpack.c.l.b16 %v709
      %v831 = vunpack.c.l.b16 %v710
      %v832 = vunpack.c.l.b16 %v711
      %v833 = vunpack.c.l.b16 %v712
      %v834 = vunpack.c.l.b16 %v713
      %v835 = vunpack.c.l.b16 %v714
      %v836 = vunpack.c.l.b16 %v715
      %v837 = vunpack.c.l.b16 %v716
      %v838 = vunpack.c.l.b16 %v717
      %v839 = vunpack.c.l.b16 %v718
      %v840 = vunpack.c.l.b16 %v719
      %v841 = vunpack.c.l.b16 %v720
      %v842 = vunpack.c.l.b16 %v721
      %v843 = vunpack.c.l.b16 %v722
      %v844 = vunpack.c.l.b16 %v723
      %v845 = vunpack.c.l.b16 %v724
      %v846 = vunpack.c.l.b16 %v725
      %v847 = vunpack.c.l.b16 %v726
      %v848 = vpack.c.b16 %v817, %v816
      %v849 = vpack.c.b16 %v819, %v818
      %v850 = vpack.c.b16 %v821, %v820
      %v851 = vpack.c.b16 %v823, %v822
      %v852 = vpack.c.b16 %v825, %v824
      %v853 = vpack.c.b16 %v827, %v826
      %v854 = vpack.c.b16 %v829, %v828
      %v855 = vpack.c.b16 %v831, %v830
      %v856 = vpack.c.b16 %v833, %v832
      %v857 = vpack.c.b16 %v835, %v834
      %v858 = vpack.c.b16 %v837, %v836
      %v859 = vpack.c.b16 %v839, %v838
      %v860 = vpack.c.b16 %v841, %v840
      %v861 = vpack.c.b16 %v843, %v842
      %v862 = vpack.c.b16 %v845, %v844
      %v863 = vpack.c.b16 %v847, %v846
      %880 = vmatprep.subr.bf16.mxu0 0
      %881 = vmatpush1.bf16.msra.mxu0 %v855
      %882 = vmatprep.subr.bf16.mxu0 0
      %883 = vmatpush1.bf16.msra.mxu0 %v854
      %884 = vmatprep.subr.bf16.mxu0 0
      %885 = vmatpush1.bf16.msra.mxu0 %v853
      %886 = vmatprep.subr.bf16.mxu0 0
      %887 = vmatpush1.bf16.msra.mxu0 %v852
      %888 = vmatprep.subr.bf16.mxu0 0
      %889 = vmatpush1.bf16.msra.mxu0 %v851
      %890 = vmatprep.subr.bf16.mxu0 0
      %891 = vmatpush1.bf16.msra.mxu0 %v850
      %892 = vmatprep.subr.bf16.mxu0 0
      %893 = vmatpush1.bf16.msra.mxu0 %v849
      %894 = vmatprep.subr.bf16.mxu0 0
      %895 = vmatpush1.bf16.msra.mxu0 %v848
      %896 = vmatprep.subr.bf16.mxu0 0
      %897 = vmatpush2.bf16.msra.mxu0 %v863
      %898 = vmatprep.subr.bf16.mxu0 0
      %899 = vmatpush2.bf16.msra.mxu0 %v862
      %900 = vmatprep.subr.bf16.mxu0 0
      %901 = vmatpush2.bf16.msra.mxu0 %v861
      %902 = vmatprep.subr.bf16.mxu0 0
      %903 = vmatpush2.bf16.msra.mxu0 %v860
      %904 = vmatprep.subr.bf16.mxu0 0
      %905 = vmatpush2.bf16.msra.mxu0 %v859
      %906 = vmatprep.subr.bf16.mxu0 0
      %907 = vmatpush2.bf16.msra.mxu0 %v858
      %908 = vmatprep.subr.bf16.mxu0 0
      %909 = vmatpush2.bf16.msra.mxu0 %v857
      %910 = vmatprep.subr.bf16.mxu0 0
      %911 = vmatpush2.bf16.msra.mxu0 %v856
      %912 = vmatprep.mubr.bf16.mxu0 %v761
      %913 = vmatmul.mubr.bf16.gmra.mxu0 %v749
      %v914 = vpop.f32.mrf.mxu0
      %v915 = vadd.f32 0.0, %v914
      %v916 = vpop.f32.mrf.mxu0
      %v917 = vpop.f32.mrf.mxu0
      %v918 = vadd.f32 0.0, %v917
      %v919 = vpop.f32.mrf.mxu0
      %920 = vmatprep.mubr.bf16.mxu0 %v779
      %921 = vmatmul.mubr.bf16.gmra.mxu0 %v770
      %v922 = vpop.f32.mrf.mxu0
      %v923 = vadd.f32 0.0, %v922
      %v924 = vpop.f32.mrf.mxu0
      %v925 = vpop.f32.mrf.mxu0
      %v926 = vadd.f32 0.0, %v925
      %v927 = vpop.f32.mrf.mxu0
      %928 = vdwg.mxu0
      %v929 = vadd.f32 %v678, %v915
      %v930 = vadd.f32 %v681, %v918
      %v931 = vadd.f32 %v686, %v923
      %v932 = vadd.f32 %v689, %v926
      %v933 = vld [vmem:[%s226] sm:$0x88]
      %s934 = scalar_lea.vmem %s1, 384
      %v935 = vld [vmem:[%s934] sm:$0xf]
      %v936 = vld [vmem:[%s934 + $0x4] sm:$0xf]
      %v937 = vld [vmem:[%s934 + $0x8] sm:$0xf]
      %v938 = vld [vmem:[%s934 + $0xc] sm:$0xf]
      %v939 = vld [vmem:[%s934 + $0x10] sm:$0xf]
      %v940 = vld [vmem:[%s934 + $0x14] sm:$0xf]
      %v941 = vld [vmem:[%s934 + $0x18] sm:$0xf]
      %v942 = vld [vmem:[%s934 + $0x1c] sm:$0xf]
      %v943 = vld [vmem:[%s934 + $0x20] sm:$0xf]
      %v944 = vld [vmem:[%s934 + $0x24] sm:$0xf]
      %v945 = vld [vmem:[%s934 + $0x28] sm:$0xf]
      %v946 = vld [vmem:[%s934 + $0x2c] sm:$0xf]
      %v947 = vld [vmem:[%s934 + $0x30] sm:$0xf]
      %v948 = vld [vmem:[%s934 + $0x34] sm:$0xf]
      %v949 = vld [vmem:[%s934 + $0x38] sm:$0xf]
      %v950 = vld [vmem:[%s934 + $0x3c] sm:$0xf]
      %v951 = vld [vmem:[%s934 + $0x40] sm:$0xf]
      %v952 = vld [vmem:[%s934 + $0x44] sm:$0xf]
      %v953 = vld [vmem:[%s934 + $0x48] sm:$0xf]
      %v954 = vld [vmem:[%s934 + $0x4c] sm:$0xf]
      %v955 = vld [vmem:[%s934 + $0x50] sm:$0xf]
      %v956 = vld [vmem:[%s934 + $0x54] sm:$0xf]
      %v957 = vld [vmem:[%s934 + $0x58] sm:$0xf]
      %v958 = vld [vmem:[%s934 + $0x5c] sm:$0xf]
      %v959 = vld [vmem:[%s934 + $0x60] sm:$0xf]
      %v960 = vld [vmem:[%s934 + $0x64] sm:$0xf]
      %v961 = vld [vmem:[%s934 + $0x68] sm:$0xf]
      %v962 = vld [vmem:[%s934 + $0x6c] sm:$0xf]
      %v963 = vld [vmem:[%s934 + $0x70] sm:$0xf]
      %v964 = vld [vmem:[%s934 + $0x74] sm:$0xf]
      %v965 = vld [vmem:[%s934 + $0x78] sm:$0xf]
      %v966 = vld [vmem:[%s934 + $0x7c] sm:$0xf]
      %v968 = vunpack.c.l.b16 %v933
      %v969 = vunpack.c.h.b16 %v933
      %v970 = vpack.c.b16 %v323, %v968
      %v971 = vpack.c.b16 %v324, %v969
      %vm972 = vcmask 1044480
      %v973 = vrot.slane %v970, 3
      %v974 = vrot.slane %v333, 3
      %v975 = vsel %vm972, %v973, %v974
      %v976 = vrot.slane %v971, 3
      %v977 = vrot.slane %v334, 3
      %v978 = vsel %vm972, %v976, %v977
      %v979 = vrot.slane %v735, 3
      %v980 = vsel %vm972, %v974, %v979
      %v981 = vrot.slane %v736, 3
      %v982 = vsel %vm972, %v977, %v981
      %v1019 = vunpack.c.l.b16 %v935
      %v1020 = vunpack.c.l.b16 %v936
      %v1021 = vunpack.c.l.b16 %v937
      %v1022 = vunpack.c.l.b16 %v938
      %v1023 = vunpack.c.l.b16 %v939
      %v1024 = vunpack.c.l.b16 %v940
      %v1025 = vunpack.c.l.b16 %v941
      %v1026 = vunpack.c.l.b16 %v942
      %v1027 = vunpack.c.l.b16 %v943
      %v1028 = vunpack.c.l.b16 %v944
      %v1029 = vunpack.c.l.b16 %v945
      %v1030 = vunpack.c.l.b16 %v946
      %v1031 = vunpack.c.l.b16 %v947
      %v1032 = vunpack.c.l.b16 %v948
      %v1033 = vunpack.c.l.b16 %v949
      %v1034 = vunpack.c.l.b16 %v950
      %v1035 = vunpack.c.l.b16 %v951
      %v1036 = vunpack.c.l.b16 %v952
      %v1037 = vunpack.c.l.b16 %v953
      %v1038 = vunpack.c.l.b16 %v954
      %v1039 = vunpack.c.l.b16 %v955
      %v1040 = vunpack.c.l.b16 %v956
      %v1041 = vunpack.c.l.b16 %v957
      %v1042 = vunpack.c.l.b16 %v958
      %v1043 = vunpack.c.l.b16 %v959
      %v1044 = vunpack.c.l.b16 %v960
      %v1045 = vunpack.c.l.b16 %v961
      %v1046 = vunpack.c.l.b16 %v962
      %v1047 = vunpack.c.l.b16 %v963
      %v1048 = vunpack.c.l.b16 %v964
      %v1049 = vunpack.c.l.b16 %v965
      %v1050 = vunpack.c.l.b16 %v966
      %v1051 = vpack.c.b16 %v1020, %v1019
      %v1052 = vpack.c.b16 %v1022, %v1021
      %v1053 = vpack.c.b16 %v1024, %v1023
      %v1054 = vpack.c.b16 %v1026, %v1025
      %v1055 = vpack.c.b16 %v1028, %v1027
      %v1056 = vpack.c.b16 %v1030, %v1029
      %v1057 = vpack.c.b16 %v1032, %v1031
      %v1058 = vpack.c.b16 %v1034, %v1033
      %v1059 = vpack.c.b16 %v1036, %v1035
      %v1060 = vpack.c.b16 %v1038, %v1037
      %v1061 = vpack.c.b16 %v1040, %v1039
      %v1062 = vpack.c.b16 %v1042, %v1041
      %v1063 = vpack.c.b16 %v1044, %v1043
      %v1064 = vpack.c.b16 %v1046, %v1045
      %v1065 = vpack.c.b16 %v1048, %v1047
      %v1066 = vpack.c.b16 %v1050, %v1049
      %1083 = vmatprep.subr.bf16.mxu0 0
      %1084 = vmatpush1.bf16.msra.mxu0 %v1058
      %1085 = vmatprep.subr.bf16.mxu0 0
      %1086 = vmatpush1.bf16.msra.mxu0 %v1057
      %1087 = vmatprep.subr.bf16.mxu0 0
      %1088 = vmatpush1.bf16.msra.mxu0 %v1056
      %1089 = vmatprep.subr.bf16.mxu0 0
      %1090 = vmatpush1.bf16.msra.mxu0 %v1055
      %1091 = vmatprep.subr.bf16.mxu0 0
      %1092 = vmatpush1.bf16.msra.mxu0 %v1054
      %1093 = vmatprep.subr.bf16.mxu0 0
      %1094 = vmatpush1.bf16.msra.mxu0 %v1053
      %1095 = vmatprep.subr.bf16.mxu0 0
      %1096 = vmatpush1.bf16.msra.mxu0 %v1052
      %1097 = vmatprep.subr.bf16.mxu0 0
      %1098 = vmatpush1.bf16.msra.mxu0 %v1051
      %1099 = vmatprep.subr.bf16.mxu0 0
      %1100 = vmatpush2.bf16.msra.mxu0 %v1066
      %1101 = vmatprep.subr.bf16.mxu0 0
      %1102 = vmatpush2.bf16.msra.mxu0 %v1065
      %1103 = vmatprep.subr.bf16.mxu0 0
      %1104 = vmatpush2.bf16.msra.mxu0 %v1064
      %1105 = vmatprep.subr.bf16.mxu0 0
      %1106 = vmatpush2.bf16.msra.mxu0 %v1063
      %1107 = vmatprep.subr.bf16.mxu0 0
      %1108 = vmatpush2.bf16.msra.mxu0 %v1062
      %1109 = vmatprep.subr.bf16.mxu0 0
      %1110 = vmatpush2.bf16.msra.mxu0 %v1061
      %1111 = vmatprep.subr.bf16.mxu0 0
      %1112 = vmatpush2.bf16.msra.mxu0 %v1060
      %1113 = vmatprep.subr.bf16.mxu0 0
      %1114 = vmatpush2.bf16.msra.mxu0 %v1059
      %1115 = vmatprep.mubr.bf16.mxu0 %v978
      %1116 = vmatmul.mubr.bf16.gmra.mxu0 %v975
      %v1117 = vpop.f32.mrf.mxu0
      %v1118 = vadd.f32 0.0, %v1117
      %v1119 = vpop.f32.mrf.mxu0
      %v1120 = vpop.f32.mrf.mxu0
      %v1121 = vadd.f32 0.0, %v1120
      %v1122 = vpop.f32.mrf.mxu0
      %1123 = vmatprep.mubr.bf16.mxu0 %v982
      %1124 = vmatmul.mubr.bf16.gmra.mxu0 %v980
      %v1125 = vpop.f32.mrf.mxu0
      %v1126 = vadd.f32 0.0, %v1125
      %v1127 = vpop.f32.mrf.mxu0
      %v1128 = vpop.f32.mrf.mxu0
      %v1129 = vadd.f32 0.0, %v1128
      %v1130 = vpop.f32.mrf.mxu0
      %1131 = vdwg.mxu0
      %v1132 = vadd.f32 %v929, %v1118
      %v1133 = vadd.f32 %v930, %v1121
      %v1134 = vadd.f32 %v931, %v1126
      %v1135 = vadd.f32 %v932, %v1129
      %v1137 = vlaneseq
      %v1138 = vshrl.u32 %v1137, 7
      %v1139 = vsub.s32 0, %v1138
      %v1140 = vrot.slane %v237, %v1139
      %v1142 = vadd.f32 %v1132, %v1140
      %v1143 = vadd.f32 %v1133, %v1140
      %v1144 = vadd.f32 %v1134, %v1140
      %v1145 = vadd.f32 %v1135, %v1140
      %v1146 = vpack.c.bf16 %v1143, %v1142
      %v1147 = vpack.c.bf16 %v1145, %v1144
      %v1150 = vunpack.c.l.b16 %v1146
      %v1151 = vunpack.c.h.b16 %v1146
      %v1152 = vunpack.c.l.b16 %v1147
      %v1153 = vunpack.c.h.b16 %v1147
      %v1154 = vpack.c.b16 %v1150, %v1150
      %v1155 = vpack.c.b16 %v1151, %v1151
      %v1156 = vpack.c.b16 %v1152, %v1152
      %v1157 = vpack.c.b16 %v1153, %v1153
      %1162 = vst [vmem:[%s231] sm:$0xf] %v1154
      %1163 = vst [vmem:[%s231 + $0x4] sm:$0xf] %v1155
      %1164 = vst [vmem:[%s231 + $0x8] sm:$0xf] %v1156
      %1165 = vst [vmem:[%s231 + $0xc] sm:$0xf] %v1157
      %1167 = vset.pattern.permute.xlu0 0
      %1168 = vperm.xlu0 %1167, %v238
      %v1169 = vpop.permute.xlu0 %1168
      %1172 = vset.pattern.permute.xlu0 0
      %1173 = vperm.xlu0 %1172, %v239
      %v1174 = vpop.permute.xlu0 %1173
      %1177 = vset.pattern.permute.xlu0 0
      %1178 = vperm.xlu0 %1177, %v240
      %v1179 = vpop.permute.xlu0 %1178
      %1182 = vset.pattern.permute.xlu0 0
      %1183 = vperm.xlu0 %1182, %v241
      %v1184 = vpop.permute.xlu0 %1183
      %v1186 = vmul.f32 %v1142, %v1169
      %v1187 = vmul.f32 %v1143, %v1174
      %v1188 = vmul.f32 %v1144, %v1179
      %v1189 = vmul.f32 %v1145, %v1184
      %v1190 = vadd.f32 %v1186, %v1187
      %v1191 = vadd.f32 %v1190, %v1188
      %v1192 = vadd.f32 %v1191, %v1189
      %v1193 = vrot.slane %v1192, 4
      %v1194 = vadd.f32 %v1192, %v1193
      %v1195 = vrot.slane %v1194, 2
      %v1196 = vadd.f32 %v1194, %v1195
      %v1197 = vrot.slane %v1196, 1
      %v1198 = vadd.f32 %v1196, %v1197
      %v1199 = vadd.f32 %v1198, 0.0
      %v1200 = vmul.f32 %v1186, %v1186
      %v1201 = vmul.f32 %v1187, %v1187
      %v1202 = vmul.f32 %v1188, %v1188
      %v1203 = vmul.f32 %v1189, %v1189
      %v1204 = vadd.f32 %v1200, %v1201
      %v1205 = vadd.f32 %v1204, %v1202
      %v1206 = vadd.f32 %v1205, %v1203
      %v1207 = vrot.slane %v1206, 4
      %v1208 = vadd.f32 %v1206, %v1207
      %v1209 = vrot.slane %v1208, 2
      %v1210 = vadd.f32 %v1208, %v1209
      %v1211 = vrot.slane %v1210, 1
      %v1212 = vadd.f32 %v1210, %v1211
      %v1213 = vadd.f32 %v1212, 0.0
      %vm1214 = vcmask 1040384
      %v1215 = vsel %vm1214, %v1199, %v1213
      %1216 = vst [vmem:[%s235] sm:$0x3] %v1215
      %p1217 = scmp.lt.s32.totalorder %s17, 1
      %s1218 = scalar_select %p1217, %s17, 1
      %s1219 = smul.addr %s1218, 4
      %s1220 = smul.addr %s1219, 4
      %s1221 = scalar_lea.vmem %s4, %s1220
      %p1222 = scmp.lt.s32.totalorder %s17, 1
      %s1223 = scalar_select %p1222, %s17, 1
      %s1224 = smul.addr %s1223, 2
      %s1225 = scalar_lea.vmem %s5, %s1224
      // Predicated region
      $region37: #{generator_forward.9} parent=35 // pred_check
        %p1226 = pneg %p124
      $region38: #{generator_forward.9} parent=35 // pred_check_branch
        %1228 = sbr.rel (%p1226) target = $region40
      $region39: #{generator_forward.9} parent=35 // pred_region
        _
      $region40: #{generator_forward.9} parent=35 // pred_fallthru
        _
      // Predicated region
      $region41: #{generator_forward.9} parent=35 // pred_check
        %p1229 = pneg %p150
      $region42: #{generator_forward.9} parent=35 // pred_check_branch
        %1231 = sbr.rel (%p1229) target = $region44
      $region43: #{generator_forward.9} parent=35 // pred_region
        _
      $region44: #{generator_forward.9} parent=35 // pred_fallthru
        _
    $region36: #{generator_forward.9} parent=5 // pred_fallthru
      _
    %p1232 = scmp.le.s32.totalorder 2, %s12
    // Predicated region
    $region45: #{generator_forward.9} parent=5 // pred_check
      %p1233 = pneg %p1232
    $region46: #{generator_forward.9} parent=5 // pred_check_branch
      %1235 = sbr.rel (%p1233) target = $region48
    $region47: #{generator_forward.9} parent=5 // pred_region
      %s1236 = ssub.s32 %s12, 2
      // Predicated region
      $region49: #{generator_forward.9} parent=47 // pred_check
        %p1237 = pneg %p130
      $region50: #{generator_forward.9} parent=47 // pred_check_branch
        %1239 = sbr.rel (%p1237) target = $region52
      $region51: #{generator_forward.9} parent=47 // pred_region
        %p1240 = scmp.lt.s32.totalorder %s18, 1
        %s1241 = scalar_select %p1240, %s18, 1
        %s1242 = smul.addr %s1241, 4
        %s1243 = smul.addr %s1242, 4
        %s1244 = scalar_lea.vmem %s4, %s1243
      $region52: #{generator_forward.9} parent=47 // pred_fallthru
        _
      // Predicated region
      $region53: #{generator_forward.9} parent=47 // pred_check
        %p1245 = pneg %p156
      $region54: #{generator_forward.9} parent=47 // pred_check_branch
        %1247 = sbr.rel (%p1245) target = $region56
      $region55: #{generator_forward.9} parent=47 // pred_region
        %p1248 = scmp.lt.s32.totalorder %s18, 1
        %s1249 = scalar_select %p1248, %s18, 1
        %s1250 = smul.addr %s1249, 2
        %s1251 = scalar_lea.vmem %s5, %s1250
      $region56: #{generator_forward.9} parent=47 // pred_fallthru
        _
    $region48: #{generator_forward.9} parent=5 // pred_fallthru
      _
  $region6: #{generator_forward.9} parent=0 // loop_footer
    %s16 = sadd.s32 1, %s12
  $region7: #{generator_forward.9} parent=0 // loop_footer_branch
    %11 = sbr.rel target = $region3
  $region8: #{generator_forward.9} parent=0 // loop_exit
    _

// kernel: generator_forward.12
$region0: #{generator_forward.12}
  #allocation0 [shape = 'u32[]', space=smem, size = 0x4, offset = 0x4, fixed_abs, tag = 'smem constant byte address 0x4 - core index']
  #allocation1 [shape = 'u32[144,128]{1,0:T(1,128)}', space=vmem, size = 0x12000, scoped, tag = 'internal scratch']
  %s0 = inlined_call_operand.vmem [shape: bf16[128,128], index: 0, kind: input, shape index: {}]
  %s1 = inlined_call_operand.vmem [shape: f32[2,128], index: 1, kind: input, shape index: {}]
  %s2 = inlined_call_operand.vmem [shape: f32[1,128], index: 2, kind: input, shape index: {}]
  %s3 = inlined_call_operand.vmem [shape: f32[1,128], index: 3, kind: input, shape index: {}]
  %s4 = inlined_call_operand.vmem [shape: bf16[128,128], index: 4, kind: output, shape index: {}]
  %s5 = sld [smem:[#allocation0]]
  $region26: #{generator_forward.12} parent=0
    _
  %s7 = ssub.s32 1, %s5
  %s8 = scalar_select 0, %s7, %s5
  // Predicated region
  $region2: #{generator_forward.12} parent=0 // pred_check
    _
  $region3: #{generator_forward.12} parent=0 // pred_check_branch
    %10 = sbr.rel (0) target = $region5
  $region4: #{generator_forward.12} parent=0 // pred_region
    _
  $region5: #{generator_forward.12} parent=0 // pred_fallthru
    _
  // Predicated region
  $region6: #{generator_forward.12} parent=0 // pred_check
    _
  $region7: #{generator_forward.12} parent=0 // pred_check_branch
    %12 = sbr.rel (0) target = $region9
  $region8: #{generator_forward.12} parent=0 // pred_region
    _
  $region9: #{generator_forward.12} parent=0 // pred_fallthru
    _
  // Predicated region
  $region10: #{generator_forward.12} parent=0 // pred_check
    _
  $region11: #{generator_forward.12} parent=0 // pred_check_branch
    %14 = sbr.rel (0) target = $region13
  $region12: #{generator_forward.12} parent=0 // pred_region
    _
  $region13: #{generator_forward.12} parent=0 // pred_fallthru
    _
  // Predicated region
  $region14: #{generator_forward.12} parent=0 // pred_check
    _
  $region15: #{generator_forward.12} parent=0 // pred_check_branch
    %16 = sbr.rel (0) target = $region17
  $region16: #{generator_forward.12} parent=0 // pred_region
    _
  $region17: #{generator_forward.12} parent=0 // pred_fallthru
    _
  %v17 = vld [vmem:[%s1] sm:$0x1]
  %v18 = vmul.f32 %v17, 0.0078125
  %v19 = vld [vmem:[%s1 + $0x1] sm:$0x1]
  %v20 = vmul.f32 %v19, 0.0078125
  %v21 = vmul.f32 %v18, %v18
  %v22 = vsub.f32 %v20, %v21
  %v23 = vmax.f32 %v22, 0.0
  %v24 = vld [vmem:[%s2] sm:$0x1]
  %v25 = vadd.f32 %v23, 1e-05
  %v26 = vrsqrt.pop %v25
  %v27 = vmul.f32 %v24, %v26
  %v28 = vld [vmem:[%s3] sm:$0x1]
  %v29 = vmul.f32 %v18, %v27
  %v30 = vsub.f32 %v28, %v29
  %v31 = vld [vmem:[%s0] sm:$0xf]
  %v32 = vld [vmem:[%s0 + $0x4] sm:$0xf]
  %v33 = vld [vmem:[%s0 + $0x8] sm:$0xf]
  %v34 = vld [vmem:[%s0 + $0xc] sm:$0xf]
  %v35 = vld [vmem:[%s0 + $0x10] sm:$0xf]
  %v36 = vld [vmem:[%s0 + $0x14] sm:$0xf]
  %v37 = vld [vmem:[%s0 + $0x18] sm:$0xf]
  %v38 = vld [vmem:[%s0 + $0x1c] sm:$0xf]
  %v39 = vld [vmem:[%s0 + $0x20] sm:$0xf]
  %v40 = vld [vmem:[%s0 + $0x24] sm:$0xf]
  %v41 = vld [vmem:[%s0 + $0x28] sm:$0xf]
  %v42 = vld [vmem:[%s0 + $0x2c] sm:$0xf]
  %v43 = vld [vmem:[%s0 + $0x30] sm:$0xf]
  %v44 = vld [vmem:[%s0 + $0x34] sm:$0xf]
  %v45 = vld [vmem:[%s0 + $0x38] sm:$0xf]
  %v46 = vld [vmem:[%s0 + $0x3c] sm:$0xf]
  %v47 = vunpack.c.l.bf16 %v31
  %v48 = vunpack.c.l.bf16 %v32
  %v49 = vunpack.c.l.bf16 %v33
  %v50 = vunpack.c.l.bf16 %v34
  %v51 = vunpack.c.l.bf16 %v35
  %v52 = vunpack.c.l.bf16 %v36
  %v53 = vunpack.c.l.bf16 %v37
  %v54 = vunpack.c.l.bf16 %v38
  %v55 = vunpack.c.l.bf16 %v39
  %v56 = vunpack.c.l.bf16 %v40
  %v57 = vunpack.c.l.bf16 %v41
  %v58 = vunpack.c.l.bf16 %v42
  %v59 = vunpack.c.l.bf16 %v43
  %v60 = vunpack.c.l.bf16 %v44
  %v61 = vunpack.c.l.bf16 %v45
  %v62 = vunpack.c.l.bf16 %v46
  %v64 = vlaneseq
  %v65 = vshrl.u32 %v64, 7
  %v66 = vsub.s32 0, %v65
  %v67 = vrot.slane %v27, %v66
  %v69 = vmul.f32 %v47, %v67
  %v70 = vmul.f32 %v48, %v67
  %v71 = vmul.f32 %v49, %v67
  %v72 = vmul.f32 %v50, %v67
  %v73 = vmul.f32 %v51, %v67
  %v74 = vmul.f32 %v52, %v67
  %v75 = vmul.f32 %v53, %v67
  %v76 = vmul.f32 %v54, %v67
  %v77 = vmul.f32 %v55, %v67
  %v78 = vmul.f32 %v56, %v67
  %v79 = vmul.f32 %v57, %v67
  %v80 = vmul.f32 %v58, %v67
  %v81 = vmul.f32 %v59, %v67
  %v82 = vmul.f32 %v60, %v67
  %v83 = vmul.f32 %v61, %v67
  %v84 = vmul.f32 %v62, %v67
  %v86 = vlaneseq
  %v87 = vshrl.u32 %v86, 7
  %v88 = vsub.s32 0, %v87
  %v89 = vrot.slane %v30, %v88
  %v91 = vadd.f32 %v69, %v89
  %v92 = vadd.f32 %v70, %v89
  %v93 = vadd.f32 %v71, %v89
  %v94 = vadd.f32 %v72, %v89
  %v95 = vadd.f32 %v73, %v89
  %v96 = vadd.f32 %v74, %v89
  %v97 = vadd.f32 %v75, %v89
  %v98 = vadd.f32 %v76, %v89
  %v99 = vadd.f32 %v77, %v89
  %v100 = vadd.f32 %v78, %v89
  %v101 = vadd.f32 %v79, %v89
  %v102 = vadd.f32 %v80, %v89
  %v103 = vadd.f32 %v81, %v89
  %v104 = vadd.f32 %v82, %v89
  %v105 = vadd.f32 %v83, %v89
  %v106 = vadd.f32 %v84, %v89
  %vm107 = vcmp.ge.f32.partialorder %v91, 0.0
  %vm108 = vcmp.ge.f32.partialorder %v92, 0.0
  %vm109 = vcmp.ge.f32.partialorder %v93, 0.0
  %vm110 = vcmp.ge.f32.partialorder %v94, 0.0
  %vm111 = vcmp.ge.f32.partialorder %v95, 0.0
  %vm112 = vcmp.ge.f32.partialorder %v96, 0.0
  %vm113 = vcmp.ge.f32.partialorder %v97, 0.0
  %vm114 = vcmp.ge.f32.partialorder %v98, 0.0
  %vm115 = vcmp.ge.f32.partialorder %v99, 0.0
  %vm116 = vcmp.ge.f32.partialorder %v100, 0.0
  %vm117 = vcmp.ge.f32.partialorder %v101, 0.0
  %vm118 = vcmp.ge.f32.partialorder %v102, 0.0
  %vm119 = vcmp.ge.f32.partialorder %v103, 0.0
  %vm120 = vcmp.ge.f32.partialorder %v104, 0.0
  %vm121 = vcmp.ge.f32.partialorder %v105, 0.0
  %vm122 = vcmp.ge.f32.partialorder %v106, 0.0
  %v123 = vmul.f32 %v91, 0.01
  %v124 = vmul.f32 %v92, 0.01
  %v125 = vmul.f32 %v93, 0.01
  %v126 = vmul.f32 %v94, 0.01
  %v127 = vmul.f32 %v95, 0.01
  %v128 = vmul.f32 %v96, 0.01
  %v129 = vmul.f32 %v97, 0.01
  %v130 = vmul.f32 %v98, 0.01
  %v131 = vmul.f32 %v99, 0.01
  %v132 = vmul.f32 %v100, 0.01
  %v133 = vmul.f32 %v101, 0.01
  %v134 = vmul.f32 %v102, 0.01
  %v135 = vmul.f32 %v103, 0.01
  %v136 = vmul.f32 %v104, 0.01
  %v137 = vmul.f32 %v105, 0.01
  %v138 = vmul.f32 %v106, 0.01
  %v139 = vsel %vm107, %v91, %v123
  %v140 = vsel %vm108, %v92, %v124
  %v141 = vsel %vm109, %v93, %v125
  %v142 = vsel %vm110, %v94, %v126
  %v143 = vsel %vm111, %v95, %v127
  %v144 = vsel %vm112, %v96, %v128
  %v145 = vsel %vm113, %v97, %v129
  %v146 = vsel %vm114, %v98, %v130
  %v147 = vsel %vm115, %v99, %v131
  %v148 = vsel %vm116, %v100, %v132
  %v149 = vsel %vm117, %v101, %v133
  %v150 = vsel %vm118, %v102, %v134
  %v151 = vsel %vm119, %v103, %v135
  %v152 = vsel %vm120, %v104, %v136
  %v153 = vsel %vm121, %v105, %v137
  %v154 = vsel %vm122, %v106, %v138
  %v155 = vpack.c.bf16 %v140, %v139
  %v156 = vpack.c.bf16 %v142, %v141
  %v157 = vpack.c.bf16 %v144, %v143
  %v158 = vpack.c.bf16 %v146, %v145
  %v159 = vpack.c.bf16 %v148, %v147
  %v160 = vpack.c.bf16 %v150, %v149
  %v161 = vpack.c.bf16 %v152, %v151
  %v162 = vpack.c.bf16 %v154, %v153
  %v171 = vunpack.c.l.b16 %v155
  %v172 = vunpack.c.h.b16 %v155
  %v173 = vunpack.c.l.b16 %v156
  %v174 = vunpack.c.h.b16 %v156
  %v175 = vunpack.c.l.b16 %v157
  %v176 = vunpack.c.h.b16 %v157
  %v177 = vunpack.c.l.b16 %v158
  %v178 = vunpack.c.h.b16 %v158
  %v179 = vunpack.c.l.b16 %v159
  %v180 = vunpack.c.h.b16 %v159
  %v181 = vunpack.c.l.b16 %v160
  %v182 = vunpack.c.h.b16 %v160
  %v183 = vunpack.c.l.b16 %v161
  %v184 = vunpack.c.h.b16 %v161
  %v185 = vunpack.c.l.b16 %v162
  %v186 = vunpack.c.h.b16 %v162
  %v187 = vpack.c.b16 %v171, %v171
  %v188 = vpack.c.b16 %v172, %v172
  %v189 = vpack.c.b16 %v173, %v173
  %v190 = vpack.c.b16 %v174, %v174
  %v191 = vpack.c.b16 %v175, %v175
  %v192 = vpack.c.b16 %v176, %v176
  %v193 = vpack.c.b16 %v177, %v177
  %v194 = vpack.c.b16 %v178, %v178
  %v195 = vpack.c.b16 %v179, %v179
  %v196 = vpack.c.b16 %v180, %v180
  %v197 = vpack.c.b16 %v181, %v181
  %v198 = vpack.c.b16 %v182, %v182
  %v199 = vpack.c.b16 %v183, %v183
  %v200 = vpack.c.b16 %v184, %v184
  %v201 = vpack.c.b16 %v185, %v185
  %v202 = vpack.c.b16 %v186, %v186
  %219 = vst [vmem:[%s4] sm:$0xf] %v187
  %220 = vst [vmem:[%s4 + $0x4] sm:$0xf] %v188
  %221 = vst [vmem:[%s4 + $0x8] sm:$0xf] %v189
  %222 = vst [vmem:[%s4 + $0xc] sm:$0xf] %v190
  %223 = vst [vmem:[%s4 + $0x10] sm:$0xf] %v191
  %224 = vst [vmem:[%s4 + $0x14] sm:$0xf] %v192
  %225 = vst [vmem:[%s4 + $0x18] sm:$0xf] %v193
  %226 = vst [vmem:[%s4 + $0x1c] sm:$0xf] %v194
  %227 = vst [vmem:[%s4 + $0x20] sm:$0xf] %v195
  %228 = vst [vmem:[%s4 + $0x24] sm:$0xf] %v196
  %229 = vst [vmem:[%s4 + $0x28] sm:$0xf] %v197
  %230 = vst [vmem:[%s4 + $0x2c] sm:$0xf] %v198
  %231 = vst [vmem:[%s4 + $0x30] sm:$0xf] %v199
  %232 = vst [vmem:[%s4 + $0x34] sm:$0xf] %v200
  %233 = vst [vmem:[%s4 + $0x38] sm:$0xf] %v201
  %234 = vst [vmem:[%s4 + $0x3c] sm:$0xf] %v202
  // Predicated region
  $region18: #{generator_forward.12} parent=0 // pred_check
    _
  $region19: #{generator_forward.12} parent=0 // pred_check_branch
    %236 = sbr.rel (0) target = $region21
  $region20: #{generator_forward.12} parent=0 // pred_region
    _
  $region21: #{generator_forward.12} parent=0 // pred_fallthru
    _
  // Predicated region
  $region22: #{generator_forward.12} parent=0 // pred_check
    _
  $region23: #{generator_forward.12} parent=0 // pred_check_branch
    %238 = sbr.rel (0) target = $region25
  $region24: #{generator_forward.12} parent=0 // pred_region
    _
  $region25: #{generator_forward.12} parent=0 // pred_fallthru
    _

// kernel: generator_forward.11
$region0: #{generator_forward.11}
  #allocation0 [shape = 'u32[]', space=smem, size = 0x4, offset = 0x4, fixed_abs, tag = 'smem constant byte address 0x4 - core index']
  #allocation1 [shape = 'u32[144,128]{1,0:T(1,128)}', space=vmem, size = 0x12000, scoped, tag = 'internal scratch']
  %s0 = inlined_call_operand.vmem [shape: bf16[2,48,128], index: 0, kind: input, shape index: {}]
  %s1 = inlined_call_operand.vmem [shape: bf16[16,128,64], index: 1, kind: input, shape index: {}]
  %s2 = inlined_call_operand.vmem [shape: f32[1,64], index: 2, kind: input, shape index: {}]
  %s3 = inlined_call_operand.vmem [shape: f32[32,1], index: 3, kind: input, shape index: {}]
  %s4 = inlined_call_operand.vmem [shape: bf16[2,4,32,64], index: 4, kind: output, shape index: {0}]
  %s5 = inlined_call_operand.vmem [shape: f32[2,2,64], index: 5, kind: output, shape index: {1}]
  %6 = xla_tuple %s4, %s5
  %s7 = sld [smem:[#allocation0]]
  $region57: #{generator_forward.11} parent=0
    _
  %s9 = ssub.s32 1, %s7
  %s10 = scalar_select 0, %s9, %s7
  loop: start=0, step=1, limit=4
  $region2: #{generator_forward.11} parent=0 // loop_pre_header
    _
  $region3: #{generator_forward.11} parent=0 // loop_header
    %s12 = sphi 0, %s16
    %p13 = scmp.ge.s32.totalorder %s12, 4
    %s22 = sphi 0, %s24
    %s25 = sphi 0, %s22
    %s26 = sphi 0, %s25
    %s42 = sphi 0, %s26
    %s46 = sphi 0, %s46
    %s48 = sphi 0, %s46
    %s49 = sphi 0, %s48
    %s63 = sphi 0, %s49
    %s67 = sphi 0, %s67
    %s69 = sphi 0, %s67
    %s70 = sphi 0, %s69
    %s84 = sphi 0, %s70
    %s88 = sphi 0, %s88
    %s90 = sphi 0, %s88
    %s91 = sphi 0, %s90
    %s105 = sphi 0, %s91
    %s111 = sphi 0, %s113
    %s114 = sphi 0, %s111
    %s115 = sphi 0, %s114
    %s131 = sphi 0, %s115
    %s137 = sphi 0, %s139
    %s140 = sphi 0, %s137
    %s141 = sphi 0, %s140
    %s157 = sphi 0, %s141
  $region4: #{generator_forward.11} parent=0 // loop_header_branch
    %15 = sbr.rel (%p13) target = $region8
  $region5: #{generator_forward.11} parent=0 // loop_body
    %s17 = ssub.s32 %s12, 1
    %s18 = ssub.s32 %s12, 2
    %s19 = sadd.s32 %s12, 1
    %s20 = ssub.s32 %s12, %s19
    %p21 = scmp.eq.s32.totalorder %s20, 0
    %s23 = sadd.s32 %s22, 1
    %s24 = scalar_select %p21, %s22, %s23
    %p27 = pneg %p21
    %p28 = scmp.eq.s32.totalorder %s12, 1
    %p29 = por %p27, %p28
    %p30 = scmp.ne.s32.totalorder %s22, %s25
    %p31 = scmp.eq.s32.totalorder %s12, 0
    %p32 = por %p30, %p31
    %p33 = scmp.ne.s32.totalorder %s22, %s25
    %p34 = scmp.eq.s32.totalorder %s17, 1
    %p35 = por %p33, %p34
    %p36 = scmp.ne.s32.totalorder %s25, %s26
    %p37 = scmp.eq.s32.totalorder %s17, 0
    %p38 = por %p36, %p37
    %p39 = scmp.ne.s32.totalorder %s25, %s26
    %p40 = scmp.eq.s32.totalorder %s18, 1
    %p41 = por %p39, %p40
    %p43 = scmp.ne.s32.totalorder %s26, %s42
    %p44 = scmp.eq.s32.totalorder %s18, 0
    %p45 = por %p43, %p44
    %s47 = sadd.s32 %s46, 1
    %p50 = scmp.eq.s32.totalorder %s12, 1
    %p51 = scmp.ne.s32.totalorder %s46, %s48
    %p52 = scmp.eq.s32.totalorder %s12, 0
    %p53 = por %p51, %p52
    %p54 = scmp.ne.s32.totalorder %s46, %s48
    %p55 = scmp.eq.s32.totalorder %s17, 1
    %p56 = por %p54, %p55
    %p57 = scmp.ne.s32.totalorder %s48, %s49
    %p58 = scmp.eq.s32.totalorder %s17, 0
    %p59 = por %p57, %p58
    %p60 = scmp.ne.s32.totalorder %s48, %s49
    %p61 = scmp.eq.s32.totalorder %s18, 1
    %p62 = por %p60, %p61
    %p64 = scmp.ne.s32.totalorder %s49, %s63
    %p65 = scmp.eq.s32.totalorder %s18, 0
    %p66 = por %p64, %p65
    %s68 = sadd.s32 %s67, 1
    %p71 = scmp.eq.s32.totalorder %s12, 1
    %p72 = scmp.ne.s32.totalorder %s67, %s69
    %p73 = scmp.eq.s32.totalorder %s12, 0
    %p74 = por %p72, %p73
    %p75 = scmp.ne.s32.totalorder %s67, %s69
    %p76 = scmp.eq.s32.totalorder %s17, 1
    %p77 = por %p75, %p76
    %p78 = scmp.ne.s32.totalorder %s69, %s70
    %p79 = scmp.eq.s32.totalorder %s17, 0
    %p80 = por %p78, %p79
    %p81 = scmp.ne.s32.totalorder %s69, %s70
    %p82 = scmp.eq.s32.totalorder %s18, 1
    %p83 = por %p81, %p82
    %p85 = scmp.ne.s32.totalorder %s70, %s84
    %p86 = scmp.eq.s32.totalorder %s18, 0
    %p87 = por %p85, %p86
    %s89 = sadd.s32 %s88, 1
    %p92 = scmp.eq.s32.totalorder %s12, 1
    %p93 = scmp.ne.s32.totalorder %s88, %s90
    %p94 = scmp.eq.s32.totalorder %s12, 0
    %p95 = por %p93, %p94
    %p96 = scmp.ne.s32.totalorder %s88, %s90
    %p97 = scmp.eq.s32.totalorder %s17, 1
    %p98 = por %p96, %p97
    %p99 = scmp.ne.s32.totalorder %s90, %s91
    %p100 = scmp.eq.s32.totalorder %s17, 0
    %p101 = por %p99, %p100
    %p102 = scmp.ne.s32.totalorder %s90, %s91
    %p103 = scmp.eq.s32.totalorder %s18, 1
    %p104 = por %p102, %p103
    %p106 = scmp.ne.s32.totalorder %s91, %s105
    %p107 = scmp.eq.s32.totalorder %s18, 0
    %p108 = por %p106, %p107
    %s109 = ssub.s32 %s12, %s19
    %p110 = scmp.eq.s32.totalorder %s109, 0
    %s112 = sadd.s32 %s111, 1
    %s113 = scalar_select %p110, %s111, %s112
    %p116 = pneg %p110
    %p117 = scmp.eq.s32.totalorder %s12, 1
    %p118 = por %p116, %p117
    %p119 = scmp.ne.s32.totalorder %s111, %s114
    %p120 = scmp.eq.s32.totalorder %s12, 0
    %p121 = por %p119, %p120
    %p122 = scmp.ne.s32.totalorder %s111, %s114
    %p123 = scmp.eq.s32.totalorder %s17, 1
    %p124 = por %p122, %p123
    %p125 = scmp.ne.s32.totalorder %s114, %s115
    %p126 = scmp.eq.s32.totalorder %s17, 0
    %p127 = por %p125, %p126
    %p128 = scmp.ne.s32.totalorder %s114, %s115
    %p129 = scmp.eq.s32.totalorder %s18, 1
    %p130 = por %p128, %p129
    %p132 = scmp.ne.s32.totalorder %s115, %s131
    %p133 = scmp.eq.s32.totalorder %s18, 0
    %p134 = por %p132, %p133
    %s135 = ssub.s32 %s12, %s19
    %p136 = scmp.eq.s32.totalorder %s135, 0
    %s138 = sadd.s32 %s137, 1
    %s139 = scalar_select %p136, %s137, %s138
    %p142 = pneg %p136
    %p143 = scmp.eq.s32.totalorder %s12, 1
    %p144 = por %p142, %p143
    %p145 = scmp.ne.s32.totalorder %s137, %s140
    %p146 = scmp.eq.s32.totalorder %s12, 0
    %p147 = por %p145, %p146
    %p148 = scmp.ne.s32.totalorder %s137, %s140
    %p149 = scmp.eq.s32.totalorder %s17, 1
    %p150 = por %p148, %p149
    %p151 = scmp.ne.s32.totalorder %s140, %s141
    %p152 = scmp.eq.s32.totalorder %s17, 0
    %p153 = por %p151, %p152
    %p154 = scmp.ne.s32.totalorder %s140, %s141
    %p155 = scmp.eq.s32.totalorder %s18, 1
    %p156 = por %p154, %p155
    %p158 = scmp.ne.s32.totalorder %s141, %s157
    %p159 = scmp.eq.s32.totalorder %s18, 0
    %p160 = por %p158, %p159
    %p161 = scmp.le.s32.totalorder 1, %s12
    %p162 = scmp.lt.s32.totalorder %s12, 3
    %p163 = pnand %p161, %p162
    %p164 = pneg %p163
    // Predicated region
    $region9: #{generator_forward.11} parent=5 // pred_check
      _
    $region10: #{generator_forward.11} parent=5 // pred_check_branch
      %166 = sbr.rel (%p163) target = $region12
    $region11: #{generator_forward.11} parent=5 // pred_region
      %s167 = ssub.s32 %s12, 1
      // Predicated region
      $region13: #{generator_forward.11} parent=11 // pred_check
        %p168 = pneg %p59
      $region14: #{generator_forward.11} parent=11 // pred_check_branch
        %170 = sbr.rel (%p168) target = $region16
      $region15: #{generator_forward.11} parent=11 // pred_region
        _
      $region16: #{generator_forward.11} parent=11 // pred_fallthru
        _
      // Predicated region
      $region17: #{generator_forward.11} parent=11 // pred_check
        %p171 = pneg %p80
      $region18: #{generator_forward.11} parent=11 // pred_check_branch
        %173 = sbr.rel (%p171) target = $region20
      $region19: #{generator_forward.11} parent=11 // pred_region
        _
      $region20: #{generator_forward.11} parent=11 // pred_fallthru
        _
      // Predicated region
      $region21: #{generator_forward.11} parent=11 // pred_check
        %p174 = pneg %p101
      $region22: #{generator_forward.11} parent=11 // pred_check_branch
        %176 = sbr.rel (%p174) target = $region24
      $region23: #{generator_forward.11} parent=11 // pred_region
        _
      $region24: #{generator_forward.11} parent=11 // pred_fallthru
        _
    $region12: #{generator_forward.11} parent=5 // pred_fallthru
      _
    %p177 = scmp.lt.s32.totalorder %s12, 2
    // Predicated region
    $region25: #{generator_forward.11} parent=5 // pred_check
      %p178 = pneg %p177
    $region26: #{generator_forward.11} parent=5 // pred_check_branch
      %180 = sbr.rel (%p178) target = $region28
    $region27: #{generator_forward.11} parent=5 // pred_region
      // Predicated region
      $region29: #{generator_forward.11} parent=27 // pred_check
        %p181 = pneg %p32
      $region30: #{generator_forward.11} parent=27 // pred_check_branch
        %183 = sbr.rel (%p181) target = $region32
      $region31: #{generator_forward.11} parent=27 // pred_region
        %p184 = scmp.lt.s32.totalorder %s12, 1
        %s185 = scalar_select %p184, %s12, 1
        %s186 = smul.addr %s185, 6
        %s187 = smul.addr %s186, 4
        %s188 = scalar_lea.vmem %s0, %s187
      $region32: #{generator_forward.11} parent=27 // pred_fallthru
        _
    $region28: #{generator_forward.11} parent=5 // pred_fallthru
      _
    %p189 = scmp.le.s32.totalorder 1, %s12
    %p190 = scmp.lt.s32.totalorder %s12, 3
    %p191 = pnand %p189, %p190
    %p192 = pneg %p191
    // Predicated region
    $region33: #{generator_forward.11} parent=5 // pred_check
      _
    $region34: #{generator_forward.11} parent=5 // pred_check_branch
      %194 = sbr.rel (%p191) target = $region36
    $region35: #{generator_forward.11} parent=5 // pred_region
      %s195 = ssub.s32 %s12, 1
      %p196 = scmp.lt.s32.totalorder %s17, 1
      %s197 = scalar_select %p196, %s17, 1
      %s198 = smul.addr %s197, 6
      %s199 = smul.addr %s198, 4
      %s200 = scalar_lea.vmem %s0, %s199
      %p201 = pneg %p38
      %p202 = pneg %p35
      %p203 = pneg %p59
      %p204 = pneg %p56
      %p205 = pneg %p80
      %p206 = pneg %p77
      %p207 = pneg %p101
      %p208 = pneg %p98
      %p209 = pneg %p127
      %p210 = pneg %p124
      %p211 = scmp.lt.s32.totalorder %s17, 1
      %s212 = scalar_select %p211, %s17, 1
      %s213 = smul.addr %s212, 16
      %s214 = smul.addr %s213, 4
      %s215 = scalar_lea.vmem %s4, %s214
      %p216 = pneg %p153
      %p217 = pneg %p150
      %p218 = scmp.lt.s32.totalorder %s17, 1
      %s219 = scalar_select %p218, %s17, 1
      %s220 = smul.addr %s219, 2
      %s221 = scalar_lea.vmem %s5, %s220
      %p222 = scmp.lt.s32.totalorder %s17, 1
      %s223 = scalar_select %p222, %s17, 1
      %s224 = smul.addr %s223, 6
      %s225 = smul.addr %s224, 4
      %s226 = scalar_lea.vmem %s0, %s225
      %p227 = scmp.lt.s32.totalorder %s17, 1
      %s228 = scalar_select %p227, %s17, 1
      %s229 = smul.addr %s228, 16
      %s230 = smul.addr %s229, 4
      %s231 = scalar_lea.vmem %s4, %s230
      %p232 = scmp.lt.s32.totalorder %s17, 1
      %s233 = scalar_select %p232, %s17, 1
      %s234 = smul.addr %s233, 2
      %s235 = scalar_lea.vmem %s5, %s234
      %v237 = vld [vmem:[%s2] sm:$0x1]
      %v238 = vld [vmem:[%s3] sm:$0xff]
      %v239 = vld [vmem:[%s3 + $0x8] sm:$0xff]
      %v240 = vld [vmem:[%s3 + $0x10] sm:$0xff]
      %v241 = vld [vmem:[%s3 + $0x18] sm:$0xff]
      %v242 = vld [vmem:[%s226] sm:$0xf]
      %v243 = vld [vmem:[%s226 + $0x4] sm:$0xf]
      %v244 = vld [vmem:[%s226 + $0x8] sm:$0xf]
      %v245 = vld [vmem:[%s226 + $0xc] sm:$0xf]
      %v246 = vld [vmem:[%s1] sm:$0xf]
      %v247 = vld [vmem:[%s1 + $0x4] sm:$0xf]
      %v248 = vld [vmem:[%s1 + $0x8] sm:$0xf]
      %v249 = vld [vmem:[%s1 + $0xc] sm:$0xf]
      %v250 = vld [vmem:[%s1 + $0x10] sm:$0xf]
      %v251 = vld [vmem:[%s1 + $0x14] sm:$0xf]
      %v252 = vld [vmem:[%s1 + $0x18] sm:$0xf]
      %v253 = vld [vmem:[%s1 + $0x1c] sm:$0xf]
      %v254 = vld [vmem:[%s1 + $0x20] sm:$0xf]
      %v255 = vld [vmem:[%s1 + $0x24] sm:$0xf]
      %v256 = vld [vmem:[%s1 + $0x28] sm:$0xf]
      %v257 = vld [vmem:[%s1 + $0x2c] sm:$0xf]
      %v258 = vld [vmem:[%s1 + $0x30] sm:$0xf]
      %v259 = vld [vmem:[%s1 + $0x34] sm:$0xf]
      %v260 = vld [vmem:[%s1 + $0x38] sm:$0xf]
      %v261 = vld [vmem:[%s1 + $0x3c] sm:$0xf]
      %v262 = vld [vmem:[%s226 + $0x10] sm:$0x1]
      %s263 = scalar_lea.vmem %s1, 64
      %v264 = vld [vmem:[%s263] sm:$0xf]
      %v265 = vld [vmem:[%s263 + $0x4] sm:$0xf]
      %v266 = vld [vmem:[%s263 + $0x8] sm:$0xf]
      %v267 = vld [vmem:[%s263 + $0xc] sm:$0xf]
      %v268 = vld [vmem:[%s263 + $0x10] sm:$0xf]
      %v269 = vld [vmem:[%s263 + $0x14] sm:$0xf]
      %v270 = vld [vmem:[%s263 + $0x18] sm:$0xf]
      %v271 = vld [vmem:[%s263 + $0x1c] sm:$0xf]
      %v272 = vld [vmem:[%s263 + $0x20] sm:$0xf]
      %v273 = vld [vmem:[%s263 + $0x24] sm:$0xf]
      %v274 = vld [vmem:[%s263 + $0x28] sm:$0xf]
      %v275 = vld [vmem:[%s263 + $0x2c] sm:$0xf]
      %v276 = vld [vmem:[%s263 + $0x30] sm:$0xf]
      %v277 = vld [vmem:[%s263 + $0x34] sm:$0xf]
      %v278 = vld [vmem:[%s263 + $0x38] sm:$0xf]
      %v279 = vld [vmem:[%s263 + $0x3c] sm:$0xf]
      %v285 = vunpack.c.l.b16 %v242
      %v286 = vunpack.c.l.b16 %v243
      %v287 = vunpack.c.l.b16 %v244
      %v288 = vunpack.c.l.b16 %v245
      %v289 = vunpack.c.l.b16 %v262
      %v290 = vpack.c.b16 %v286, %v285
      %v291 = vpack.c.b16 %v288, %v287
      %v292 = vpack.c.b16 %v289, %v289
      %vm293 = vsmask.f32 7424
      %v295 = vshrl.u32 %v290, 16
      %v297 = vshll.u32 %v290, 16
      %v299 = vrot.slane %v297, 1
      %v300 = vor.u32 %v295, %v299
      %v302 = vshll.u32 %v291, 16
      %v304 = vrot.slane %v302, 1
      %v305 = vsel %vm293, %v300, %v304
      %v306 = vshrl.u32 %v291, 16
      %v308 = vor.u32 %v306, %v304
      %v310 = vshll.u32 %v292, 16
      %v312 = vrot.slane %v310, 1
      %v313 = vsel %vm293, %v308, %v312
      %v332 = vunpack.c.l.b16 %v264
      %v333 = vunpack.c.l.b16 %v265
      %v334 = vunpack.c.l.b16 %v266
      %v335 = vunpack.c.l.b16 %v267
      %v336 = vunpack.c.l.b16 %v268
      %v337 = vunpack.c.l.b16 %v269
      %v338 = vunpack.c.l.b16 %v270
      %v339 = vunpack.c.l.b16 %v271
      %v340 = vunpack.c.l.b16 %v272
      %v341 = vunpack.c.l.b16 %v273
      %v342 = vunpack.c.l.b16 %v274
      %v343 = vunpack.c.l.b16 %v275
      %v344 = vunpack.c.l.b16 %v276
      %v345 = vunpack.c.l.b16 %v277
      %v346 = vunpack.c.l.b16 %v278
      %v347 = vunpack.c.l.b16 %v279
      %v348 = vpack.c.b16 %v333, %v332
      %v349 = vpack.c.b16 %v335, %v334
      %v350 = vpack.c.b16 %v337, %v336
      %v351 = vpack.c.b16 %v339, %v338
      %v352 = vpack.c.b16 %v341, %v340
      %v353 = vpack.c.b16 %v343, %v342
      %v354 = vpack.c.b16 %v345, %v344
      %v355 = vpack.c.b16 %v347, %v346
      %364 = vmatprep.subr.bf16.mxu0 0
      %365 = vmatpush1.bf16.msra.mxu0 %v355
      %366 = vmatprep.subr.bf16.mxu0 0
      %367 = vmatpush1.bf16.msra.mxu0 %v354
      %368 = vmatprep.subr.bf16.mxu0 0
      %369 = vmatpush1.bf16.msra.mxu0 %v353
      %370 = vmatprep.subr.bf16.mxu0 0
      %371 = vmatpush1.bf16.msra.mxu0 %v352
      %372 = vmatprep.subr.bf16.mxu0 0
      %373 = vmatpush1.bf16.msra.mxu0 %v351
      %374 = vmatprep.subr.bf16.mxu0 0
      %375 = vmatpush1.bf16.msra.mxu0 %v350
      %376 = vmatprep.subr.bf16.mxu0 0
      %377 = vmatpush1.bf16.msra.mxu0 %v349
      %378 = vmatprep.subr.bf16.mxu0 0
      %379 = vmatpush1.bf16.msra.mxu0 %v348
      %380 = vmatprep.subr.bf16.mxu0 0
      %381 = vmatpush2.bf16.msra.mxu0 0
      %382 = vmatprep.subr.bf16.mxu0 0
      %383 = vmatpush2.bf16.msra.mxu0 0
      %384 = vmatprep.subr.bf16.mxu0 0
      %385 = vmatpush2.bf16.msra.mxu0 0
      %386 = vmatprep.subr.bf16.mxu0 0
      %387 = vmatpush2.bf16.msra.mxu0 0
      %388 = vmatprep.subr.bf16.mxu0 0
      %389 = vmatpush2.bf16.msra.mxu0 0
      %390 = vmatprep.subr.bf16.mxu0 0
      %391 = vmatpush2.bf16.msra.mxu0 0
      %392 = vmatprep.subr.bf16.mxu0 0
      %393 = vmatpush2.bf16.msra.mxu0 0
      %394 = vmatprep.subr.bf16.mxu0 0
      %395 = vmatpush2.bf16.msra.mxu0 0
      %396 = vmatprep.mubr.bf16.mxu0 0
      %397 = vmatmul.mubr.bf16.gmra.mxu0 %v305
      %v398 = vpop.f32.mrf.mxu0
      %v399 = vadd.f32 0.0, %v398
      %v400 = vpop.f32.mrf.mxu0
      %v401 = vpop.f32.mrf.mxu0
      %v402 = vadd.f32 0.0, %v401
      %v403 = vpop.f32.mrf.mxu0
      %404 = vmatprep.mubr.bf16.mxu0 0
      %405 = vmatmul.mubr.bf16.gmra.mxu0 %v313
      %v406 = vpop.f32.mrf.mxu0
      %v407 = vadd.f32 0.0, %v406
      %v408 = vpop.f32.mrf.mxu0
      %v409 = vpop.f32.mrf.mxu0
      %v410 = vadd.f32 0.0, %v409
      %v411 = vpop.f32.mrf.mxu0
      %412 = vdwg.mxu0
      %v431 = vunpack.c.l.b16 %v246
      %v432 = vunpack.c.l.b16 %v247
      %v433 = vunpack.c.l.b16 %v248
      %v434 = vunpack.c.l.b16 %v249
      %v435 = vunpack.c.l.b16 %v250
      %v436 = vunpack.c.l.b16 %v251
      %v437 = vunpack.c.l.b16 %v252
      %v438 = vunpack.c.l.b16 %v253
      %v439 = vunpack.c.l.b16 %v254
      %v440 = vunpack.c.l.b16 %v255
      %v441 = vunpack.c.l.b16 %v256
      %v442 = vunpack.c.l.b16 %v257
      %v443 = vunpack.c.l.b16 %v258
      %v444 = vunpack.c.l.b16 %v259
      %v445 = vunpack.c.l.b16 %v260
      %v446 = vunpack.c.l.b16 %v261
      %v447 = vpack.c.b16 %v432, %v431
      %v448 = vpack.c.b16 %v434, %v433
      %v449 = vpack.c.b16 %v436, %v435
      %v450 = vpack.c.b16 %v438, %v437
      %v451 = vpack.c.b16 %v440, %v439
      %v452 = vpack.c.b16 %v442, %v441
      %v453 = vpack.c.b16 %v444, %v443
      %v454 = vpack.c.b16 %v446, %v445
      %463 = vmatprep.subr.bf16.mxu0 0
      %464 = vmatpush1.bf16.msra.mxu0 %v454
      %465 = vmatprep.subr.bf16.mxu0 0
      %466 = vmatpush1.bf16.msra.mxu0 %v453
      %467 = vmatprep.subr.bf16.mxu0 0
      %468 = vmatpush1.bf16.msra.mxu0 %v452
      %469 = vmatprep.subr.bf16.mxu0 0
      %470 = vmatpush1.bf16.msra.mxu0 %v451
      %471 = vmatprep.subr.bf16.mxu0 0
      %472 = vmatpush1.bf16.msra.mxu0 %v450
      %473 = vmatprep.subr.bf16.mxu0 0
      %474 = vmatpush1.bf16.msra.mxu0 %v449
      %475 = vmatprep.subr.bf16.mxu0 0
      %476 = vmatpush1.bf16.msra.mxu0 %v448
      %477 = vmatprep.subr.bf16.mxu0 0
      %478 = vmatpush1.bf16.msra.mxu0 %v447
      %479 = vmatprep.subr.bf16.mxu0 0
      %480 = vmatpush2.bf16.msra.mxu0 0
      %481 = vmatprep.subr.bf16.mxu0 0
      %482 = vmatpush2.bf16.msra.mxu0 0
      %483 = vmatprep.subr.bf16.mxu0 0
      %484 = vmatpush2.bf16.msra.mxu0 0
      %485 = vmatprep.subr.bf16.mxu0 0
      %486 = vmatpush2.bf16.msra.mxu0 0
      %487 = vmatprep.subr.bf16.mxu0 0
      %488 = vmatpush2.bf16.msra.mxu0 0
      %489 = vmatprep.subr.bf16.mxu0 0
      %490 = vmatpush2.bf16.msra.mxu0 0
      %491 = vmatprep.subr.bf16.mxu0 0
      %492 = vmatpush2.bf16.msra.mxu0 0
      %493 = vmatprep.subr.bf16.mxu0 0
      %494 = vmatpush2.bf16.msra.mxu0 0
      %495 = vmatprep.mubr.bf16.mxu0 0
      %496 = vmatmul.mubr.bf16.gmra.mxu0 %v290
      %v497 = vpop.f32.mrf.mxu0
      %v498 = vadd.f32 %v399, %v497
      %v499 = vpop.f32.mrf.mxu0
      %v500 = vpop.f32.mrf.mxu0
      %v501 = vadd.f32 %v402, %v500
      %v502 = vpop.f32.mrf.mxu0
      %503 = vmatprep.mubr.bf16.mxu0 0
      %504 = vmatmul.mubr.bf16.gmra.mxu0 %v291
      %v505 = vpop.f32.mrf.mxu0
      %v506 = vadd.f32 %v407, %v505
      %v507 = vpop.f32.mrf.mxu0
      %v508 = vpop.f32.mrf.mxu0
      %v509 = vadd.f32 %v410, %v508
      %v510 = vpop.f32.mrf.mxu0
      %511 = vdwg.mxu0
      %v512 = vld [vmem:[%s226] sm:$0x8]
      %v513 = vld [vmem:[%s226 + $0x10] sm:$0x7]
      %s514 = scalar_lea.vmem %s1, 128
      %v515 = vld [vmem:[%s514] sm:$0xf]
      %v516 = vld [vmem:[%s514 + $0x4] sm:$0xf]
      %v517 = vld [vmem:[%s514 + $0x8] sm:$0xf]
      %v518 = vld [vmem:[%s514 + $0xc] sm:$0xf]
      %v519 = vld [vmem:[%s514 + $0x10] sm:$0xf]
      %v520 = vld [vmem:[%s514 + $0x14] sm:$0xf]
      %v521 = vld [vmem:[%s514 + $0x18] sm:$0xf]
      %v522 = vld [vmem:[%s514 + $0x1c] sm:$0xf]
      %v523 = vld [vmem:[%s514 + $0x20] sm:$0xf]
      %v524 = vld [vmem:[%s514 + $0x24] sm:$0xf]
      %v525 = vld [vmem:[%s514 + $0x28] sm:$0xf]
      %v526 = vld [vmem:[%s514 + $0x2c] sm:$0xf]
      %v527 = vld [vmem:[%s514 + $0x30] sm:$0xf]
      %v528 = vld [vmem:[%s514 + $0x34] sm:$0xf]
      %v529 = vld [vmem:[%s514 + $0x38] sm:$0xf]
      %v530 = vld [vmem:[%s514 + $0x3c] sm:$0xf]
      %v533 = vunpack.c.l.b16 %v512
      %v534 = vunpack.c.l.b16 %v513
      %v535 = vpack.c.b16 %v286, %v533
      %v536 = vpack.c.b16 %v534, %v534
      %vm537 = vcmask 1044480
      %v538 = vrot.slane %v535, 3
      %v539 = vrot.slane %v291, 3
      %v540 = vsel %vm537, %v538, %v539
      %v541 = vrot.slane %v536, 3
      %v542 = vsel %vm537, %v539, %v541
      %v561 = vunpack.c.l.b16 %v515
      %v562 = vunpack.c.l.b16 %v516
      %v563 = vunpack.c.l.b16 %v517
      %v564 = vunpack.c.l.b16 %v518
      %v565 = vunpack.c.l.b16 %v519
      %v566 = vunpack.c.l.b16 %v520
      %v567 = vunpack.c.l.b16 %v521
      %v568 = vunpack.c.l.b16 %v522
      %v569 = vunpack.c.l.b16 %v523
      %v570 = vunpack.c.l.b16 %v524
      %v571 = vunpack.c.l.b16 %v525
      %v572 = vunpack.c.l.b16 %v526
      %v573 = vunpack.c.l.b16 %v527
      %v574 = vunpack.c.l.b16 %v528
      %v575 = vunpack.c.l.b16 %v529
      %v576 = vunpack.c.l.b16 %v530
      %v577 = vpack.c.b16 %v562, %v561
      %v578 = vpack.c.b16 %v564, %v563
      %v579 = vpack.c.b16 %v566, %v565
      %v580 = vpack.c.b16 %v568, %v567
      %v581 = vpack.c.b16 %v570, %v569
      %v582 = vpack.c.b16 %v572, %v571
      %v583 = vpack.c.b16 %v574, %v573
      %v584 = vpack.c.b16 %v576, %v575
      %593 = vmatprep.subr.bf16.mxu0 0
      %594 = vmatpush1.bf16.msra.mxu0 %v584
      %595 = vmatprep.subr.bf16.mxu0 0
      %596 = vmatpush1.bf16.msra.mxu0 %v583
      %597 = vmatprep.subr.bf16.mxu0 0
      %598 = vmatpush1.bf16.msra.mxu0 %v582
      %599 = vmatprep.subr.bf16.mxu0 0
      %600 = vmatpush1.bf16.msra.mxu0 %v581
      %601 = vmatprep.subr.bf16.mxu0 0
      %602 = vmatpush1.bf16.msra.mxu0 %v580
      %603 = vmatprep.subr.bf16.mxu0 0
      %604 = vmatpush1.bf16.msra.mxu0 %v579
      %605 = vmatprep.subr.bf16.mxu0 0
      %606 = vmatpush1.bf16.msra.mxu0 %v578
      %607 = vmatprep.subr.bf16.mxu0 0
      %608 = vmatpush1.bf16.msra.mxu0 %v577
      %609 = vmatprep.subr.bf16.mxu0 0
      %610 = vmatpush2.bf16.msra.mxu0 0
      %611 = vmatprep.subr.bf16.mxu0 0
      %612 = vmatpush2.bf16.msra.mxu0 0
      %613 = vmatprep.subr.bf16.mxu0 0
      %614 = vmatpush2.bf16.msra.mxu0 0
      %615 = vmatprep.subr.bf16.mxu0 0
      %616 = vmatpush2.bf16.msra.mxu0 0
      %617 = vmatprep.subr.bf16.mxu0 0
      %618 = vmatpush2.bf16.msra.mxu0 0
      %619 = vmatprep.subr.bf16.mxu0 0
      %620 = vmatpush2.bf16.msra.mxu0 0
      %621 = vmatprep.subr.bf16.mxu0 0
      %622 = vmatpush2.bf16.msra.mxu0 0
      %623 = vmatprep.subr.bf16.mxu0 0
      %624 = vmatpush2.bf16.msra.mxu0 0
      %625 = vmatprep.mubr.bf16.mxu0 0
      %626 = vmatmul.mubr.bf16.gmra.mxu0 %v540
      %v627 = vpop.f32.mrf.mxu0
      %v628 = vadd.f32 0.0, %v627
      %v629 = vpop.f32.mrf.mxu0
      %v630 = vpop.f32.mrf.mxu0
      %v631 = vadd.f32 0.0, %v630
      %v632 = vpop.f32.mrf.mxu0
      %633 = vmatprep.mubr.bf16.mxu0 0
      %634 = vmatmul.mubr.bf16.gmra.mxu0 %v542
      %v635 = vpop.f32.mrf.mxu0
      %v636 = vadd.f32 0.0, %v635
      %v637 = vpop.f32.mrf.mxu0
      %v638 = vpop.f32.mrf.mxu0
      %v639 = vadd.f32 0.0, %v638
      %v640 = vpop.f32.mrf.mxu0
      %641 = vdwg.mxu0
      %v642 = vadd.f32 %v498, %v628
      %v643 = vadd.f32 %v501, %v631
      %v644 = vadd.f32 %v506, %v636
      %v645 = vadd.f32 %v509, %v639
      %v646 = vld [vmem:[%s226 + $0x10] sm:$0xf]
      %s647 = scalar_lea.vmem %s1, 192
      %v648 = vld [vmem:[%s647] sm:$0xf]
      %v649 = vld [vmem:[%s647 + $0x4] sm:$0xf]
      %v650 = vld [vmem:[%s647 + $0x8] sm:$0xf]
      %v651 = vld [vmem:[%s647 + $0xc] sm:$0xf]
      %v652 = vld [vmem:[%s647 + $0x10] sm:$0xf]
      %v653 = vld [vmem:[%s647 + $0x14] sm:$0xf]
      %v654 = vld [vmem:[%s647 + $0x18] sm:$0xf]
      %v655 = vld [vmem:[%s647 + $0x1c] sm:$0xf]
      %v656 = vld [vmem:[%s647 + $0x20] sm:$0xf]
      %v657 = vld [vmem:[%s647 + $0x24] sm:$0xf]
      %v658 = vld [vmem:[%s647 + $0x28] sm:$0xf]
      %v659 = vld [vmem:[%s647 + $0x2c] sm:$0xf]
      %v660 = vld [vmem:[%s647 + $0x30] sm:$0xf]
      %v661 = vld [vmem:[%s647 + $0x34] sm:$0xf]
      %v662 = vld [vmem:[%s647 + $0x38] sm:$0xf]
      %v663 = vld [vmem:[%s647 + $0x3c] sm:$0xf]
      %v665 = vunpack.c.l.b16 %v646
      %v666 = vpack.c.b16 %v665, %v665
      %vm667 = vsmask.f32 4352
      %v669 = vshrl.u32 %v535, 16
      %v671 = vrot.slane %v669, 3
      %v672 = vshll.u32 %v535, 16
      %v674 = vrot.slane %v672, 4
      %v675 = vor.u32 %v671, %v674
      %v676 = vrot.slane %v306, 3
      %v677 = vrot.slane %v302, 4
      %v678 = vor.u32 %v676, %v677
      %v679 = vsel %vm667, %v675, %v678
      %v681 = vshrl.u32 %v666, 16
      %v683 = vrot.slane %v681, 3
      %v684 = vshll.u32 %v666, 16
      %v686 = vrot.slane %v684, 4
      %v687 = vor.u32 %v683, %v686
      %v688 = vsel %vm667, %v678, %v687
      %v707 = vunpack.c.l.b16 %v648
      %v708 = vunpack.c.l.b16 %v649
      %v709 = vunpack.c.l.b16 %v650
      %v710 = vunpack.c.l.b16 %v651
      %v711 = vunpack.c.l.b16 %v652
      %v712 = vunpack.c.l.b16 %v653
      %v713 = vunpack.c.l.b16 %v654
      %v714 = vunpack.c.l.b16 %v655
      %v715 = vunpack.c.l.b16 %v656
      %v716 = vunpack.c.l.b16 %v657
      %v717 = vunpack.c.l.b16 %v658
      %v718 = vunpack.c.l.b16 %v659
      %v719 = vunpack.c.l.b16 %v660
      %v720 = vunpack.c.l.b16 %v661
      %v721 = vunpack.c.l.b16 %v662
      %v722 = vunpack.c.l.b16 %v663
      %v723 = vpack.c.b16 %v708, %v707
      %v724 = vpack.c.b16 %v710, %v709
      %v725 = vpack.c.b16 %v712, %v711
      %v726 = vpack.c.b16 %v714, %v713
      %v727 = vpack.c.b16 %v716, %v715
      %v728 = vpack.c.b16 %v718, %v717
      %v729 = vpack.c.b16 %v720, %v719
      %v730 = vpack.c.b16 %v722, %v721
      %739 = vmatprep.subr.bf16.mxu0 0
      %740 = vmatpush1.bf16.msra.mxu0 %v730
      %741 = vmatprep.subr.bf16.mxu0 0
      %742 = vmatpush1.bf16.msra.mxu0 %v729
      %743 = vmatprep.subr.bf16.mxu0 0
      %744 = vmatpush1.bf16.msra.mxu0 %v728
      %745 = vmatprep.subr.bf16.mxu0 0
      %746 = vmatpush1.bf16.msra.mxu0 %v727
      %747 = vmatprep.subr.bf16.mxu0 0
      %748 = vmatpush1.bf16.msra.mxu0 %v726
      %749 = vmatprep.subr.bf16.mxu0 0
      %750 = vmatpush1.bf16.msra.mxu0 %v725
      %751 = vmatprep.subr.bf16.mxu0 0
      %752 = vmatpush1.bf16.msra.mxu0 %v724
      %753 = vmatprep.subr.bf16.mxu0 0
      %754 = vmatpush1.bf16.msra.mxu0 %v723
      %755 = vmatprep.subr.bf16.mxu0 0
      %756 = vmatpush2.bf16.msra.mxu0 0
      %757 = vmatprep.subr.bf16.mxu0 0
      %758 = vmatpush2.bf16.msra.mxu0 0
      %759 = vmatprep.subr.bf16.mxu0 0
      %760 = vmatpush2.bf16.msra.mxu0 0
      %761 = vmatprep.subr.bf16.mxu0 0
      %762 = vmatpush2.bf16.msra.mxu0 0
      %763 = vmatprep.subr.bf16.mxu0 0
      %764 = vmatpush2.bf16.msra.mxu0 0
      %765 = vmatprep.subr.bf16.mxu0 0
      %766 = vmatpush2.bf16.msra.mxu0 0
      %767 = vmatprep.subr.bf16.mxu0 0
      %768 = vmatpush2.bf16.msra.mxu0 0
      %769 = vmatprep.subr.bf16.mxu0 0
      %770 = vmatpush2.bf16.msra.mxu0 0
      %771 = vmatprep.mubr.bf16.mxu0 0
      %772 = vmatmul.mubr.bf16.gmra.mxu0 %v679
      %v773 = vpop.f32.mrf.mxu0
      %v774 = vadd.f32 0.0, %v773
      %v775 = vpop.f32.mrf.mxu0
      %v776 = vpop.f32.mrf.mxu0
      %v777 = vadd.f32 0.0, %v776
      %v778 = vpop.f32.mrf.mxu0
      %779 = vmatprep.mubr.bf16.mxu0 0
      %780 = vmatmul.mubr.bf16.gmra.mxu0 %v688
      %v781 = vpop.f32.mrf.mxu0
      %v782 = vadd.f32 0.0, %v781
      %v783 = vpop.f32.mrf.mxu0
      %v784 = vpop.f32.mrf.mxu0
      %v785 = vadd.f32 0.0, %v784
      %v786 = vpop.f32.mrf.mxu0
      %787 = vdwg.mxu0
      %v788 = vadd.f32 %v642, %v774
      %v789 = vadd.f32 %v643, %v777
      %v790 = vadd.f32 %v644, %v782
      %v791 = vadd.f32 %v645, %v785
      %v793 = vlaneseq
      %v794 = vshrl.u32 %v793, 7
      %v795 = vsub.s32 0, %v794
      %v796 = vrot.slane %v237, %v795
      %v798 = vadd.f32 %v788, %v796
      %v799 = vadd.f32 %v789, %v796
      %v800 = vadd.f32 %v790, %v796
      %v801 = vadd.f32 %v791, %v796
      %v802 = vpack.c.bf16 %v799, %v798
      %v803 = vpack.c.bf16 %v801, %v800
      %v806 = vunpack.c.l.b16 %v802
      %v807 = vunpack.c.h.b16 %v802
      %v808 = vunpack.c.l.b16 %v803
      %v809 = vunpack.c.h.b16 %v803
      %v810 = vpack.c.b16 %v806, %v806
      %v811 = vpack.c.b16 %v807, %v807
      %v812 = vpack.c.b16 %v808, %v808
      %v813 = vpack.c.b16 %v809, %v809
      %vm818 = vcmask 519168
      %819 = vst.msk [vmem:[%s231] sm:$0xf] %vm818, %v810
      %820 = vst.msk [vmem:[%s231 + $0x4] sm:$0xf] %vm818, %v811
      %821 = vst.msk [vmem:[%s231 + $0x8] sm:$0xf] %vm818, %v812
      %822 = vst.msk [vmem:[%s231 + $0xc] sm:$0xf] %vm818, %v813
      %824 = vset.pattern.permute.xlu0 0
      %825 = vperm.xlu0 %824, %v238
      %v826 = vpop.permute.xlu0 %825
      %829 = vset.pattern.permute.xlu0 0
      %830 = vperm.xlu0 %829, %v239
      %v831 = vpop.permute.xlu0 %830
      %834 = vset.pattern.permute.xlu0 0
      %835 = vperm.xlu0 %834, %v240
      %v836 = vpop.permute.xlu0 %835
      %839 = vset.pattern.permute.xlu0 0
      %840 = vperm.xlu0 %839, %v241
      %v841 = vpop.permute.xlu0 %840
      %v843 = vmul.f32 %v798, %v826
      %v844 = vmul.f32 %v799, %v831
      %v845 = vmul.f32 %v800, %v836
      %v846 = vmul.f32 %v801, %v841
      %vm847 = vcmask 523264
      %v848 = vsel %vm847, %v843, 0.0
      %v849 = vsel %vm847, %v844, 0.0
      %v850 = vadd.f32 %v848, %v849
      %v851 = vsel %vm847, %v845, 0.0
      %v852 = vadd.f32 %v850, %v851
      %v853 = vsel %vm847, %v846, 0.0
      %v854 = vadd.f32 %v852, %v853
      %v855 = vrot.slane %v854, 4
      %v856 = vadd.f32 %v854, %v855
      %v857 = vrot.slane %v856, 2
      %v858 = vadd.f32 %v856, %v857
      %v859 = vrot.slane %v858, 1
      %v860 = vadd.f32 %v858, %v859
      %v861 = vadd.f32 %v860, 0.0
      %v862 = vmul.f32 %v843, %v843
      %v863 = vmul.f32 %v844, %v844
      %v864 = vmul.f32 %v845, %v845
      %v865 = vmul.f32 %v846, %v846
      %v866 = vsel %vm847, %v862, 0.0
      %v867 = vsel %vm847, %v863, 0.0
      %v868 = vadd.f32 %v866, %v867
      %v869 = vsel %vm847, %v864, 0.0
      %v870 = vadd.f32 %v868, %v869
      %v871 = vsel %vm847, %v865, 0.0
      %v872 = vadd.f32 %v870, %v871
      %v873 = vrot.slane %v872, 4
      %v874 = vadd.f32 %v872, %v873
      %v875 = vrot.slane %v874, 2
      %v876 = vadd.f32 %v874, %v875
      %v877 = vrot.slane %v876, 1
      %v878 = vadd.f32 %v876, %v877
      %v879 = vadd.f32 %v878, 0.0
      %v880 = vld [vmem:[%s226] sm:$0xf]
      %v881 = vld [vmem:[%s226 + $0x4] sm:$0xf]
      %v882 = vld [vmem:[%s226 + $0x8] sm:$0xf]
      %v883 = vld [vmem:[%s226 + $0xc] sm:$0xf]
      %v884 = vld [vmem:[%s226 + $0x10] sm:$0x1]
      %s885 = scalar_lea.vmem %s1, 256
      %v886 = vld [vmem:[%s885] sm:$0xf]
      %v887 = vld [vmem:[%s885 + $0x4] sm:$0xf]
      %v888 = vld [vmem:[%s885 + $0x8] sm:$0xf]
      %v889 = vld [vmem:[%s885 + $0xc] sm:$0xf]
      %v890 = vld [vmem:[%s885 + $0x10] sm:$0xf]
      %v891 = vld [vmem:[%s885 + $0x14] sm:$0xf]
      %v892 = vld [vmem:[%s885 + $0x18] sm:$0xf]
      %v893 = vld [vmem:[%s885 + $0x1c] sm:$0xf]
      %v894 = vld [vmem:[%s885 + $0x20] sm:$0xf]
      %v895 = vld [vmem:[%s885 + $0x24] sm:$0xf]
      %v896 = vld [vmem:[%s885 + $0x28] sm:$0xf]
      %v897 = vld [vmem:[%s885 + $0x2c] sm:$0xf]
      %v898 = vld [vmem:[%s885 + $0x30] sm:$0xf]
      %v899 = vld [vmem:[%s885 + $0x34] sm:$0xf]
      %v900 = vld [vmem:[%s885 + $0x38] sm:$0xf]
      %v901 = vld [vmem:[%s885 + $0x3c] sm:$0xf]
      %v902 = vld [vmem:[%s226] sm:$0xe]
      %s903 = scalar_lea.vmem %s1, 320
      %v904 = vld [vmem:[%s903] sm:$0xf]
      %v905 = vld [vmem:[%s903 + $0x4] sm:$0xf]
      %v906 = vld [vmem:[%s903 + $0x8] sm:$0xf]
      %v907 = vld [vmem:[%s903 + $0xc] sm:$0xf]
      %v908 = vld [vmem:[%s903 + $0x10] sm:$0xf]
      %v909 = vld [vmem:[%s903 + $0x14] sm:$0xf]
      %v910 = vld [vmem:[%s903 + $0x18] sm:$0xf]
      %v911 = vld [vmem:[%s903 + $0x1c] sm:$0xf]
      %v912 = vld [vmem:[%s903 + $0x20] sm:$0xf]
      %v913 = vld [vmem:[%s903 + $0x24] sm:$0xf]
      %v914 = vld [vmem:[%s903 + $0x28] sm:$0xf]
      %v915 = vld [vmem:[%s903 + $0x2c] sm:$0xf]
      %v916 = vld [vmem:[%s903 + $0x30] sm:$0xf]
      %v917 = vld [vmem:[%s903 + $0x34] sm:$0xf]
      %v918 = vld [vmem:[%s903 + $0x38] sm:$0xf]
      %v919 = vld [vmem:[%s903 + $0x3c] sm:$0xf]
      %v925 = vunpack.c.l.b16 %v902
      %v926 = vunpack.c.l.b16 %v881
      %v927 = vunpack.c.l.b16 %v882
      %v928 = vunpack.c.l.b16 %v883
      %v929 = vunpack.c.l.b16 %v884
      %v930 = vpack.c.b16 %v926, %v925
      %v931 = vpack.c.b16 %v928, %v927
      %v932 = vpack.c.b16 %v929, %v929
      %vm933 = vcmask 1046528
      %v934 = vrot.slane %v930, 1
      %v935 = vrot.slane %v931, 1
      %v936 = vsel %vm933, %v934, %v935
      %v937 = vrot.slane %v932, 1
      %v938 = vsel %vm933, %v935, %v937
      %v957 = vunpack.c.l.b16 %v904
      %v958 = vunpack.c.l.b16 %v905
      %v959 = vunpack.c.l.b16 %v906
      %v960 = vunpack.c.l.b16 %v907
      %v961 = vunpack.c.l.b16 %v908
      %v962 = vunpack.c.l.b16 %v909
      %v963 = vunpack.c.l.b16 %v910
      %v964 = vunpack.c.l.b16 %v911
      %v965 = vunpack.c.l.b16 %v912
      %v966 = vunpack.c.l.b16 %v913
      %v967 = vunpack.c.l.b16 %v914
      %v968 = vunpack.c.l.b16 %v915
      %v969 = vunpack.c.l.b16 %v916
      %v970 = vunpack.c.l.b16 %v917
      %v971 = vunpack.c.l.b16 %v918
      %v972 = vunpack.c.l.b16 %v919
      %v973 = vpack.c.b16 %v958, %v957
      %v974 = vpack.c.b16 %v960, %v959
      %v975 = vpack.c.b16 %v962, %v961
      %v976 = vpack.c.b16 %v964, %v963
      %v977 = vpack.c.b16 %v966, %v965
      %v978 = vpack.c.b16 %v968, %v967
      %v979 = vpack.c.b16 %v970, %v969
      %v980 = vpack.c.b16 %v972, %v971
      %989 = vmatprep.subr.bf16.mxu0 0
      %990 = vmatpush1.bf16.msra.mxu0 %v980
      %991 = vmatprep.subr.bf16.mxu0 0
      %992 = vmatpush1.bf16.msra.mxu0 %v979
      %993 = vmatprep.subr.bf16.mxu0 0
      %994 = vmatpush1.bf16.msra.mxu0 %v978
      %995 = vmatprep.subr.bf16.mxu0 0
      %996 = vmatpush1.bf16.msra.mxu0 %v977
      %997 = vmatprep.subr.bf16.mxu0 0
      %998 = vmatpush1.bf16.msra.mxu0 %v976
      %999 = vmatprep.subr.bf16.mxu0 0
      %1000 = vmatpush1.bf16.msra.mxu0 %v975
      %1001 = vmatprep.subr.bf16.mxu0 0
      %1002 = vmatpush1.bf16.msra.mxu0 %v974
      %1003 = vmatprep.subr.bf16.mxu0 0
      %1004 = vmatpush1.bf16.msra.mxu0 %v973
      %1005 = vmatprep.subr.bf16.mxu0 0
      %1006 = vmatpush2.bf16.msra.mxu0 0
      %1007 = vmatprep.subr.bf16.mxu0 0
      %1008 = vmatpush2.bf16.msra.mxu0 0
      %1009 = vmatprep.subr.bf16.mxu0 0
      %1010 = vmatpush2.bf16.msra.mxu0 0
      %1011 = vmatprep.subr.bf16.mxu0 0
      %1012 = vmatpush2.bf16.msra.mxu0 0
      %1013 = vmatprep.subr.bf16.mxu0 0
      %1014 = vmatpush2.bf16.msra.mxu0 0
      %1015 = vmatprep.subr.bf16.mxu0 0
      %1016 = vmatpush2.bf16.msra.mxu0 0
      %1017 = vmatprep.subr.bf16.mxu0 0
      %1018 = vmatpush2.bf16.msra.mxu0 0
      %1019 = vmatprep.subr.bf16.mxu0 0
      %1020 = vmatpush2.bf16.msra.mxu0 0
      %1021 = vmatprep.mubr.bf16.mxu0 0
      %1022 = vmatmul.mubr.bf16.gmra.mxu0 %v936
      %v1023 = vpop.f32.mrf.mxu0
      %v1024 = vadd.f32 0.0, %v1023
      %v1025 = vpop.f32.mrf.mxu0
      %v1026 = vpop.f32.mrf.mxu0
      %v1027 = vadd.f32 0.0, %v1026
      %v1028 = vpop.f32.mrf.mxu0
      %1029 = vmatprep.mubr.bf16.mxu0 0
      %1030 = vmatmul.mubr.bf16.gmra.mxu0 %v938
      %v1031 = vpop.f32.mrf.mxu0
      %v1032 = vadd.f32 0.0, %v1031
      %v1033 = vpop.f32.mrf.mxu0
      %v1034 = vpop.f32.mrf.mxu0
      %v1035 = vadd.f32 0.0, %v1034
      %v1036 = vpop.f32.mrf.mxu0
      %1037 = vdwg.mxu0
      %v1039 = vunpack.c.l.b16 %v880
      %v1040 = vpack.c.b16 %v926, %v1039
      %v1042 = vshrl.u32 %v1040, 16
      %v1044 = vshll.u32 %v1040, 16
      %v1046 = vrot.slane %v1044, 1
      %v1047 = vor.u32 %v1042, %v1046
      %v1049 = vshll.u32 %v931, 16
      %v1051 = vrot.slane %v1049, 1
      %v1052 = vsel %vm293, %v1047, %v1051
      %v1053 = vshrl.u32 %v931, 16
      %v1055 = vor.u32 %v1053, %v1051
      %v1057 = vshll.u32 %v932, 16
      %v1059 = vrot.slane %v1057, 1
      %v1060 = vsel %vm293, %v1055, %v1059
      %v1079 = vunpack.c.l.b16 %v886
      %v1080 = vunpack.c.l.b16 %v887
      %v1081 = vunpack.c.l.b16 %v888
      %v1082 = vunpack.c.l.b16 %v889
      %v1083 = vunpack.c.l.b16 %v890
      %v1084 = vunpack.c.l.b16 %v891
      %v1085 = vunpack.c.l.b16 %v892
      %v1086 = vunpack.c.l.b16 %v893
      %v1087 = vunpack.c.l.b16 %v894
      %v1088 = vunpack.c.l.b16 %v895
      %v1089 = vunpack.c.l.b16 %v896
      %v1090 = vunpack.c.l.b16 %v897
      %v1091 = vunpack.c.l.b16 %v898
      %v1092 = vunpack.c.l.b16 %v899
      %v1093 = vunpack.c.l.b16 %v900
      %v1094 = vunpack.c.l.b16 %v901
      %v1095 = vpack.c.b16 %v1080, %v1079
      %v1096 = vpack.c.b16 %v1082, %v1081
      %v1097 = vpack.c.b16 %v1084, %v1083
      %v1098 = vpack.c.b16 %v1086, %v1085
      %v1099 = vpack.c.b16 %v1088, %v1087
      %v1100 = vpack.c.b16 %v1090, %v1089
      %v1101 = vpack.c.b16 %v1092, %v1091
      %v1102 = vpack.c.b16 %v1094, %v1093
      %1111 = vmatprep.subr.bf16.mxu0 0
      %1112 = vmatpush1.bf16.msra.mxu0 %v1102
      %1113 = vmatprep.subr.bf16.mxu0 0
      %1114 = vmatpush1.bf16.msra.mxu0 %v1101
      %1115 = vmatprep.subr.bf16.mxu0 0
      %1116 = vmatpush1.bf16.msra.mxu0 %v1100
      %1117 = vmatprep.subr.bf16.mxu0 0
      %1118 = vmatpush1.bf16.msra.mxu0 %v1099
      %1119 = vmatprep.subr.bf16.mxu0 0
      %1120 = vmatpush1.bf16.msra.mxu0 %v1098
      %1121 = vmatprep.subr.bf16.mxu0 0
      %1122 = vmatpush1.bf16.msra.mxu0 %v1097
      %1123 = vmatprep.subr.bf16.mxu0 0
      %1124 = vmatpush1.bf16.msra.mxu0 %v1096
      %1125 = vmatprep.subr.bf16.mxu0 0
      %1126 = vmatpush1.bf16.msra.mxu0 %v1095
      %1127 = vmatprep.subr.bf16.mxu0 0
      %1128 = vmatpush2.bf16.msra.mxu0 0
      %1129 = vmatprep.subr.bf16.mxu0 0
      %1130 = vmatpush2.bf16.msra.mxu0 0
      %1131 = vmatprep.subr.bf16.mxu0 0
      %1132 = vmatpush2.bf16.msra.mxu0 0
      %1133 = vmatprep.subr.bf16.mxu0 0
      %1134 = vmatpush2.bf16.msra.mxu0 0
      %1135 = vmatprep.subr.bf16.mxu0 0
      %1136 = vmatpush2.bf16.msra.mxu0 0
      %1137 = vmatprep.subr.bf16.mxu0 0
      %1138 = vmatpush2.bf16.msra.mxu0 0
      %1139 = vmatprep.subr.bf16.mxu0 0
      %1140 = vmatpush2.bf16.msra.mxu0 0
      %1141 = vmatprep.subr.bf16.mxu0 0
      %1142 = vmatpush2.bf16.msra.mxu0 0
      %1143 = vmatprep.mubr.bf16.mxu0 0
      %1144 = vmatmul.mubr.bf16.gmra.mxu0 %v1052
      %v1145 = vpop.f32.mrf.mxu0
      %v1146 = vadd.f32 %v1024, %v1145
      %v1147 = vpop.f32.mrf.mxu0
      %v1148 = vpop.f32.mrf.mxu0
      %v1149 = vadd.f32 %v1027, %v1148
      %v1150 = vpop.f32.mrf.mxu0
      %1151 = vmatprep.mubr.bf16.mxu0 0
      %1152 = vmatmul.mubr.bf16.gmra.mxu0 %v1060
      %v1153 = vpop.f32.mrf.mxu0
      %v1154 = vadd.f32 %v1032, %v1153
      %v1155 = vpop.f32.mrf.mxu0
      %v1156 = vpop.f32.mrf.mxu0
      %v1157 = vadd.f32 %v1035, %v1156
      %v1158 = vpop.f32.mrf.mxu0
      %1159 = vdwg.mxu0
      %v1160 = vld [vmem:[%s226] sm:$0x8]
      %v1161 = vld [vmem:[%s226 + $0x10] sm:$0xf]
      %s1162 = scalar_lea.vmem %s1, 384
      %v1163 = vld [vmem:[%s1162] sm:$0xf]
      %v1164 = vld [vmem:[%s1162 + $0x4] sm:$0xf]
      %v1165 = vld [vmem:[%s1162 + $0x8] sm:$0xf]
      %v1166 = vld [vmem:[%s1162 + $0xc] sm:$0xf]
      %v1167 = vld [vmem:[%s1162 + $0x10] sm:$0xf]
      %v1168 = vld [vmem:[%s1162 + $0x14] sm:$0xf]
      %v1169 = vld [vmem:[%s1162 + $0x18] sm:$0xf]
      %v1170 = vld [vmem:[%s1162 + $0x1c] sm:$0xf]
      %v1171 = vld [vmem:[%s1162 + $0x20] sm:$0xf]
      %v1172 = vld [vmem:[%s1162 + $0x24] sm:$0xf]
      %v1173 = vld [vmem:[%s1162 + $0x28] sm:$0xf]
      %v1174 = vld [vmem:[%s1162 + $0x2c] sm:$0xf]
      %v1175 = vld [vmem:[%s1162 + $0x30] sm:$0xf]
      %v1176 = vld [vmem:[%s1162 + $0x34] sm:$0xf]
      %v1177 = vld [vmem:[%s1162 + $0x38] sm:$0xf]
      %v1178 = vld [vmem:[%s1162 + $0x3c] sm:$0xf]
      %v1181 = vunpack.c.l.b16 %v1160
      %v1182 = vunpack.c.l.b16 %v1161
      %v1183 = vpack.c.b16 %v926, %v1181
      %v1184 = vpack.c.b16 %v1182, %v1182
      %v1186 = vshrl.u32 %v1183, 16
      %v1188 = vrot.slane %v1186, 3
      %v1189 = vshll.u32 %v1183, 16
      %v1191 = vrot.slane %v1189, 4
      %v1192 = vor.u32 %v1188, %v1191
      %v1193 = vrot.slane %v1053, 3
      %v1194 = vrot.slane %v1049, 4
      %v1195 = vor.u32 %v1193, %v1194
      %v1196 = vsel %vm667, %v1192, %v1195
      %v1198 = vshrl.u32 %v1184, 16
      %v1200 = vrot.slane %v1198, 3
      %v1201 = vshll.u32 %v1184, 16
      %v1203 = vrot.slane %v1201, 4
      %v1204 = vor.u32 %v1200, %v1203
      %v1205 = vsel %vm667, %v1195, %v1204
      %v1224 = vunpack.c.l.b16 %v1163
      %v1225 = vunpack.c.l.b16 %v1164
      %v1226 = vunpack.c.l.b16 %v1165
      %v1227 = vunpack.c.l.b16 %v1166
      %v1228 = vunpack.c.l.b16 %v1167
      %v1229 = vunpack.c.l.b16 %v1168
      %v1230 = vunpack.c.l.b16 %v1169
      %v1231 = vunpack.c.l.b16 %v1170
      %v1232 = vunpack.c.l.b16 %v1171
      %v1233 = vunpack.c.l.b16 %v1172
      %v1234 = vunpack.c.l.b16 %v1173
      %v1235 = vunpack.c.l.b16 %v1174
      %v1236 = vunpack.c.l.b16 %v1175
      %v1237 = vunpack.c.l.b16 %v1176
      %v1238 = vunpack.c.l.b16 %v1177
      %v1239 = vunpack.c.l.b16 %v1178
      %v1240 = vpack.c.b16 %v1225, %v1224
      %v1241 = vpack.c.b16 %v1227, %v1226
      %v1242 = vpack.c.b16 %v1229, %v1228
      %v1243 = vpack.c.b16 %v1231, %v1230
      %v1244 = vpack.c.b16 %v1233, %v1232
      %v1245 = vpack.c.b16 %v1235, %v1234
      %v1246 = vpack.c.b16 %v1237, %v1236
      %v1247 = vpack.c.b16 %v1239, %v1238
      %1256 = vmatprep.subr.bf16.mxu0 0
      %1257 = vmatpush1.bf16.msra.mxu0 %v1247
      %1258 = vmatprep.subr.bf16.mxu0 0
      %1259 = vmatpush1.bf16.msra.mxu0 %v1246
      %1260 = vmatprep.subr.bf16.mxu0 0
      %1261 = vmatpush1.bf16.msra.mxu0 %v1245
      %1262 = vmatprep.subr.bf16.mxu0 0
      %1263 = vmatpush1.bf16.msra.mxu0 %v1244
      %1264 = vmatprep.subr.bf16.mxu0 0
      %1265 = vmatpush1.bf16.msra.mxu0 %v1243
      %1266 = vmatprep.subr.bf16.mxu0 0
      %1267 = vmatpush1.bf16.msra.mxu0 %v1242
      %1268 = vmatprep.subr.bf16.mxu0 0
      %1269 = vmatpush1.bf16.msra.mxu0 %v1241
      %1270 = vmatprep.subr.bf16.mxu0 0
      %1271 = vmatpush1.bf16.msra.mxu0 %v1240
      %1272 = vmatprep.subr.bf16.mxu0 0
      %1273 = vmatpush2.bf16.msra.mxu0 0
      %1274 = vmatprep.subr.bf16.mxu0 0
      %1275 = vmatpush2.bf16.msra.mxu0 0
      %1276 = vmatprep.subr.bf16.mxu0 0
      %1277 = vmatpush2.bf16.msra.mxu0 0
      %1278 = vmatprep.subr.bf16.mxu0 0
      %1279 = vmatpush2.bf16.msra.mxu0 0
      %1280 = vmatprep.subr.bf16.mxu0 0
      %1281 = vmatpush2.bf16.msra.mxu0 0
      %1282 = vmatprep.subr.bf16.mxu0 0
      %1283 = vmatpush2.bf16.msra.mxu0 0
      %1284 = vmatprep.subr.bf16.mxu0 0
      %1285 = vmatpush2.bf16.msra.mxu0 0
      %1286 = vmatprep.subr.bf16.mxu0 0
      %1287 = vmatpush2.bf16.msra.mxu0 0
      %1288 = vmatprep.mubr.bf16.mxu0 0
      %1289 = vmatmul.mubr.bf16.gmra.mxu0 %v1196
      %v1290 = vpop.f32.mrf.mxu0
      %v1291 = vadd.f32 0.0, %v1290
      %v1292 = vpop.f32.mrf.mxu0
      %v1293 = vpop.f32.mrf.mxu0
      %v1294 = vadd.f32 0.0, %v1293
      %v1295 = vpop.f32.mrf.mxu0
      %1296 = vmatprep.mubr.bf16.mxu0 0
      %1297 = vmatmul.mubr.bf16.gmra.mxu0 %v1205
      %v1298 = vpop.f32.mrf.mxu0
      %v1299 = vadd.f32 0.0, %v1298
      %v1300 = vpop.f32.mrf.mxu0
      %v1301 = vpop.f32.mrf.mxu0
      %v1302 = vadd.f32 0.0, %v1301
      %v1303 = vpop.f32.mrf.mxu0
      %1304 = vdwg.mxu0
      %v1305 = vadd.f32 %v1146, %v1291
      %v1306 = vadd.f32 %v1149, %v1294
      %v1307 = vadd.f32 %v1154, %v1299
      %v1308 = vadd.f32 %v1157, %v1302
      %s1309 = scalar_lea.vmem %s1, 448
      %v1310 = vld [vmem:[%s1309] sm:$0xf]
      %v1311 = vld [vmem:[%s1309 + $0x4] sm:$0xf]
      %v1312 = vld [vmem:[%s1309 + $0x8] sm:$0xf]
      %v1313 = vld [vmem:[%s1309 + $0xc] sm:$0xf]
      %v1314 = vld [vmem:[%s1309 + $0x10] sm:$0xf]
      %v1315 = vld [vmem:[%s1309 + $0x14] sm:$0xf]
      %v1316 = vld [vmem:[%s1309 + $0x18] sm:$0xf]
      %v1317 = vld [vmem:[%s1309 + $0x1c] sm:$0xf]
      %v1318 = vld [vmem:[%s1309 + $0x20] sm:$0xf]
      %v1319 = vld [vmem:[%s1309 + $0x24] sm:$0xf]
      %v1320 = vld [vmem:[%s1309 + $0x28] sm:$0xf]
      %v1321 = vld [vmem:[%s1309 + $0x2c] sm:$0xf]
      %v1322 = vld [vmem:[%s1309 + $0x30] sm:$0xf]
      %v1323 = vld [vmem:[%s1309 + $0x34] sm:$0xf]
      %v1324 = vld [vmem:[%s1309 + $0x38] sm:$0xf]
      %v1325 = vld [vmem:[%s1309 + $0x3c] sm:$0xf]
      %v1326 = vpack.c.b16 %v927, %v926
      %v1327 = vpack.c.b16 %v1182, %v928
      %v1346 = vunpack.c.l.b16 %v1310
      %v1347 = vunpack.c.l.b16 %v1311
      %v1348 = vunpack.c.l.b16 %v1312
      %v1349 = vunpack.c.l.b16 %v1313
      %v1350 = vunpack.c.l.b16 %v1314
      %v1351 = vunpack.c.l.b16 %v1315
      %v1352 = vunpack.c.l.b16 %v1316
      %v1353 = vunpack.c.l.b16 %v1317
      %v1354 = vunpack.c.l.b16 %v1318
      %v1355 = vunpack.c.l.b16 %v1319
      %v1356 = vunpack.c.l.b16 %v1320
      %v1357 = vunpack.c.l.b16 %v1321
      %v1358 = vunpack.c.l.b16 %v1322
      %v1359 = vunpack.c.l.b16 %v1323
      %v1360 = vunpack.c.l.b16 %v1324
      %v1361 = vunpack.c.l.b16 %v1325
      %v1362 = vpack.c.b16 %v1347, %v1346
      %v1363 = vpack.c.b16 %v1349, %v1348
      %v1364 = vpack.c.b16 %v1351, %v1350
      %v1365 = vpack.c.b16 %v1353, %v1352
      %v1366 = vpack.c.b16 %v1355, %v1354
      %v1367 = vpack.c.b16 %v1357, %v1356
      %v1368 = vpack.c.b16 %v1359, %v1358
      %v1369 = vpack.c.b16 %v1361, %v1360
      %1378 = vmatprep.subr.bf16.mxu0 0
      %1379 = vmatpush1.bf16.msra.mxu0 %v1369
      %1380 = vmatprep.subr.bf16.mxu0 0
      %1381 = vmatpush1.bf16.msra.mxu0 %v1368
      %1382 = vmatprep.subr.bf16.mxu0 0
      %1383 = vmatpush1.bf16.msra.mxu0 %v1367
      %1384 = vmatprep.subr.bf16.mxu0 0
      %1385 = vmatpush1.bf16.msra.mxu0 %v1366
      %1386 = vmatprep.subr.bf16.mxu0 0
      %1387 = vmatpush1.bf16.msra.mxu0 %v1365
      %1388 = vmatprep.subr.bf16.mxu0 0
      %1389 = vmatpush1.bf16.msra.mxu0 %v1364
      %1390 = vmatprep.subr.bf16.mxu0 0
      %1391 = vmatpush1.bf16.msra.mxu0 %v1363
      %1392 = vmatprep.subr.bf16.mxu0 0
      %1393 = vmatpush1.bf16.msra.mxu0 %v1362
      %1394 = vmatprep.subr.bf16.mxu0 0
      %1395 = vmatpush2.bf16.msra.mxu0 0
      %1396 = vmatprep.subr.bf16.mxu0 0
      %1397 = vmatpush2.bf16.msra.mxu0 0
      %1398 = vmatprep.subr.bf16.mxu0 0
      %1399 = vmatpush2.bf16.msra.mxu0 0
      %1400 = vmatprep.subr.bf16.mxu0 0
      %1401 = vmatpush2.bf16.msra.mxu0 0
      %1402 = vmatprep.subr.bf16.mxu0 0
      %1403 = vmatpush2.bf16.msra.mxu0 0
      %1404 = vmatprep.subr.bf16.mxu0 0
      %1405 = vmatpush2.bf16.msra.mxu0 0
      %1406 = vmatprep.subr.bf16.mxu0 0
      %1407 = vmatpush2.bf16.msra.mxu0 0
      %1408 = vmatprep.subr.bf16.mxu0 0
      %1409 = vmatpush2.bf16.msra.mxu0 0
      %1410 = vmatprep.mubr.bf16.mxu0 0
      %1411 = vmatmul.mubr.bf16.gmra.mxu0 %v1326
      %v1412 = vpop.f32.mrf.mxu0
      %v1413 = vadd.f32 0.0, %v1412
      %v1414 = vpop.f32.mrf.mxu0
      %v1415 = vpop.f32.mrf.mxu0
      %v1416 = vadd.f32 0.0, %v1415
      %v1417 = vpop.f32.mrf.mxu0
      %1418 = vmatprep.mubr.bf16.mxu0 0
      %1419 = vmatmul.mubr.bf16.gmra.mxu0 %v1327
      %v1420 = vpop.f32.mrf.mxu0
      %v1421 = vadd.f32 0.0, %v1420
      %v1422 = vpop.f32.mrf.mxu0
      %v1423 = vpop.f32.mrf.mxu0
      %v1424 = vadd.f32 0.0, %v1423
      %v1425 = vpop.f32.mrf.mxu0
      %1426 = vdwg.mxu0
      %v1427 = vadd.f32 %v1305, %v1413
      %v1428 = vadd.f32 %v1306, %v1416
      %v1429 = vadd.f32 %v1307, %v1421
      %v1430 = vadd.f32 %v1308, %v1424
      %v1431 = vadd.f32 %v1427, %v796
      %v1432 = vadd.f32 %v1428, %v796
      %v1433 = vadd.f32 %v1429, %v796
      %v1434 = vadd.f32 %v1430, %v796
      %v1435 = vpack.c.bf16 %v1432, %v1431
      %v1436 = vpack.c.bf16 %v1434, %v1433
      %v1439 = vunpack.c.l.b16 %v1435
      %v1440 = vunpack.c.h.b16 %v1435
      %v1441 = vunpack.c.l.b16 %v1436
      %v1442 = vunpack.c.h.b16 %v1436
      %v1443 = vpack.c.b16 %v1439, %v1439
      %v1444 = vpack.c.b16 %v1440, %v1440
      %v1445 = vpack.c.b16 %v1441, %v1441
      %v1446 = vpack.c.b16 %v1442, %v1442
      %s1451 = scalar_lea.vmem %s231, 16
      %1452 = vst.msk [vmem:[%s1451] sm:$0xf] %vm818, %v1443
      %1453 = vst.msk [vmem:[%s1451 + $0x4] sm:$0xf] %vm818, %v1444
      %1454 = vst.msk [vmem:[%s1451 + $0x8] sm:$0xf] %vm818, %v1445
      %1455 = vst.msk [vmem:[%s1451 + $0xc] sm:$0xf] %vm818, %v1446
      %v1456 = vmul.f32 %v1431, %v826
      %v1457 = vmul.f32 %v1432, %v831
      %v1458 = vmul.f32 %v1433, %v836
      %v1459 = vmul.f32 %v1434, %v841
      %v1460 = vsel %vm847, %v1456, 0.0
      %v1461 = vsel %vm847, %v1457, 0.0
      %v1462 = vadd.f32 %v1460, %v1461
      %v1463 = vsel %vm847, %v1458, 0.0
      %v1464 = vadd.f32 %v1462, %v1463
      %v1465 = vsel %vm847, %v1459, 0.0
      %v1466 = vadd.f32 %v1464, %v1465
      %v1467 = vrot.slane %v1466, 4
      %v1468 = vadd.f32 %v1466, %v1467
      %v1469 = vrot.slane %v1468, 2
      %v1470 = vadd.f32 %v1468, %v1469
      %v1471 = vrot.slane %v1470, 1
      %v1472 = vadd.f32 %v1470, %v1471
      %v1473 = vadd.f32 %v861, %v1472
      %v1474 = vmul.f32 %v1456, %v1456
      %v1475 = vmul.f32 %v1457, %v1457
      %v1476 = vmul.f32 %v1458, %v1458
      %v1477 = vmul.f32 %v1459, %v1459
      %v1478 = vsel %vm847, %v1474, 0.0
      %v1479 = vsel %vm847, %v1475, 0.0
      %v1480 = vadd.f32 %v1478, %v1479
      %v1481 = vsel %vm847, %v1476, 0.0
      %v1482 = vadd.f32 %v1480, %v1481
      %v1483 = vsel %vm847, %v1477, 0.0
      %v1484 = vadd.f32 %v1482, %v1483
      %v1485 = vrot.slane %v1484, 4
      %v1486 = vadd.f32 %v1484, %v1485
      %v1487 = vrot.slane %v1486, 2
      %v1488 = vadd.f32 %v1486, %v1487
      %v1489 = vrot.slane %v1488, 1
      %v1490 = vadd.f32 %v1488, %v1489
      %v1491 = vadd.f32 %v879, %v1490
      %v1492 = vld [vmem:[%s226] sm:$0x8]
      %v1493 = vld [vmem:[%s226 + $0x4] sm:$0xf]
      %v1494 = vld [vmem:[%s226 + $0x8] sm:$0xf]
      %v1495 = vld [vmem:[%s226 + $0xc] sm:$0xf]
      %v1496 = vld [vmem:[%s226 + $0x10] sm:$0x7]
      %s1497 = scalar_lea.vmem %s1, 512
      %v1498 = vld [vmem:[%s1497] sm:$0xf]
      %v1499 = vld [vmem:[%s1497 + $0x4] sm:$0xf]
      %v1500 = vld [vmem:[%s1497 + $0x8] sm:$0xf]
      %v1501 = vld [vmem:[%s1497 + $0xc] sm:$0xf]
      %v1502 = vld [vmem:[%s1497 + $0x10] sm:$0xf]
      %v1503 = vld [vmem:[%s1497 + $0x14] sm:$0xf]
      %v1504 = vld [vmem:[%s1497 + $0x18] sm:$0xf]
      %v1505 = vld [vmem:[%s1497 + $0x1c] sm:$0xf]
      %v1506 = vld [vmem:[%s1497 + $0x20] sm:$0xf]
      %v1507 = vld [vmem:[%s1497 + $0x24] sm:$0xf]
      %v1508 = vld [vmem:[%s1497 + $0x28] sm:$0xf]
      %v1509 = vld [vmem:[%s1497 + $0x2c] sm:$0xf]
      %v1510 = vld [vmem:[%s1497 + $0x30] sm:$0xf]
      %v1511 = vld [vmem:[%s1497 + $0x34] sm:$0xf]
      %v1512 = vld [vmem:[%s1497 + $0x38] sm:$0xf]
      %v1513 = vld [vmem:[%s1497 + $0x3c] sm:$0xf]
      %v1514 = vld [vmem:[%s226 + $0x10] sm:$0xf]
      %s1515 = scalar_lea.vmem %s1, 576
      %v1516 = vld [vmem:[%s1515] sm:$0xf]
      %v1517 = vld [vmem:[%s1515 + $0x4] sm:$0xf]
      %v1518 = vld [vmem:[%s1515 + $0x8] sm:$0xf]
      %v1519 = vld [vmem:[%s1515 + $0xc] sm:$0xf]
      %v1520 = vld [vmem:[%s1515 + $0x10] sm:$0xf]
      %v1521 = vld [vmem:[%s1515 + $0x14] sm:$0xf]
      %v1522 = vld [vmem:[%s1515 + $0x18] sm:$0xf]
      %v1523 = vld [vmem:[%s1515 + $0x1c] sm:$0xf]
      %v1524 = vld [vmem:[%s1515 + $0x20] sm:$0xf]
      %v1525 = vld [vmem:[%s1515 + $0x24] sm:$0xf]
      %v1526 = vld [vmem:[%s1515 + $0x28] sm:$0xf]
      %v1527 = vld [vmem:[%s1515 + $0x2c] sm:$0xf]
      %v1528 = vld [vmem:[%s1515 + $0x30] sm:$0xf]
      %v1529 = vld [vmem:[%s1515 + $0x34] sm:$0xf]
      %v1530 = vld [vmem:[%s1515 + $0x38] sm:$0xf]
      %v1531 = vld [vmem:[%s1515 + $0x3c] sm:$0xf]
      %v1537 = vunpack.c.l.b16 %v1492
      %v1538 = vunpack.c.l.b16 %v1493
      %v1539 = vunpack.c.l.b16 %v1494
      %v1540 = vunpack.c.l.b16 %v1495
      %v1541 = vunpack.c.l.b16 %v1514
      %v1542 = vpack.c.b16 %v1538, %v1537
      %v1543 = vpack.c.b16 %v1540, %v1539
      %v1544 = vpack.c.b16 %v1541, %v1541
      %v1546 = vshrl.u32 %v1542, 16
      %v1548 = vrot.slane %v1546, 3
      %v1549 = vshll.u32 %v1542, 16
      %v1551 = vrot.slane %v1549, 4
      %v1552 = vor.u32 %v1548, %v1551
      %v1554 = vshrl.u32 %v1543, 16
      %v1556 = vrot.slane %v1554, 3
      %v1557 = vshll.u32 %v1543, 16
      %v1559 = vrot.slane %v1557, 4
      %v1560 = vor.u32 %v1556, %v1559
      %v1561 = vsel %vm667, %v1552, %v1560
      %v1563 = vshrl.u32 %v1544, 16
      %v1565 = vrot.slane %v1563, 3
      %v1566 = vshll.u32 %v1544, 16
      %v1568 = vrot.slane %v1566, 4
      %v1569 = vor.u32 %v1565, %v1568
      %v1570 = vsel %vm667, %v1560, %v1569
      %v1589 = vunpack.c.l.b16 %v1516
      %v1590 = vunpack.c.l.b16 %v1517
      %v1591 = vunpack.c.l.b16 %v1518
      %v1592 = vunpack.c.l.b16 %v1519
      %v1593 = vunpack.c.l.b16 %v1520
      %v1594 = vunpack.c.l.b16 %v1521
      %v1595 = vunpack.c.l.b16 %v1522
      %v1596 = vunpack.c.l.b16 %v1523
      %v1597 = vunpack.c.l.b16 %v1524
      %v1598 = vunpack.c.l.b16 %v1525
      %v1599 = vunpack.c.l.b16 %v1526
      %v1600 = vunpack.c.l.b16 %v1527
      %v1601 = vunpack.c.l.b16 %v1528
      %v1602 = vunpack.c.l.b16 %v1529
      %v1603 = vunpack.c.l.b16 %v1530
      %v1604 = vunpack.c.l.b16 %v1531
      %v1605 = vpack.c.b16 %v1590, %v1589
      %v1606 = vpack.c.b16 %v1592, %v1591
      %v1607 = vpack.c.b16 %v1594, %v1593
      %v1608 = vpack.c.b16 %v1596, %v1595
      %v1609 = vpack.c.b16 %v1598, %v1597
      %v1610 = vpack.c.b16 %v1600, %v1599
      %v1611 = vpack.c.b16 %v1602, %v1601
      %v1612 = vpack.c.b16 %v1604, %v1603
      %1621 = vmatprep.subr.bf16.mxu0 0
      %1622 = vmatpush1.bf16.msra.mxu0 %v1612
      %1623 = vmatprep.subr.bf16.mxu0 0
      %1624 = vmatpush1.bf16.msra.mxu0 %v1611
      %1625 = vmatprep.subr.bf16.mxu0 0
      %1626 = vmatpush1.bf16.msra.mxu0 %v1610
      %1627 = vmatprep.subr.bf16.mxu0 0
      %1628 = vmatpush1.bf16.msra.mxu0 %v1609
      %1629 = vmatprep.subr.bf16.mxu0 0
      %1630 = vmatpush1.bf16.msra.mxu0 %v1608
      %1631 = vmatprep.subr.bf16.mxu0 0
      %1632 = vmatpush1.bf16.msra.mxu0 %v1607
      %1633 = vmatprep.subr.bf16.mxu0 0
      %1634 = vmatpush1.bf16.msra.mxu0 %v1606
      %1635 = vmatprep.subr.bf16.mxu0 0
      %1636 = vmatpush1.bf16.msra.mxu0 %v1605
      %1637 = vmatprep.subr.bf16.mxu0 0
      %1638 = vmatpush2.bf16.msra.mxu0 0
      %1639 = vmatprep.subr.bf16.mxu0 0
      %1640 = vmatpush2.bf16.msra.mxu0 0
      %1641 = vmatprep.subr.bf16.mxu0 0
      %1642 = vmatpush2.bf16.msra.mxu0 0
      %1643 = vmatprep.subr.bf16.mxu0 0
      %1644 = vmatpush2.bf16.msra.mxu0 0
      %1645 = vmatprep.subr.bf16.mxu0 0
      %1646 = vmatpush2.bf16.msra.mxu0 0
      %1647 = vmatprep.subr.bf16.mxu0 0
      %1648 = vmatpush2.bf16.msra.mxu0 0
      %1649 = vmatprep.subr.bf16.mxu0 0
      %1650 = vmatpush2.bf16.msra.mxu0 0
      %1651 = vmatprep.subr.bf16.mxu0 0
      %1652 = vmatpush2.bf16.msra.mxu0 0
      %1653 = vmatprep.mubr.bf16.mxu0 0
      %1654 = vmatmul.mubr.bf16.gmra.mxu0 %v1561
      %v1655 = vpop.f32.mrf.mxu0
      %v1656 = vadd.f32 0.0, %v1655
      %v1657 = vpop.f32.mrf.mxu0
      %v1658 = vpop.f32.mrf.mxu0
      %v1659 = vadd.f32 0.0, %v1658
      %v1660 = vpop.f32.mrf.mxu0
      %1661 = vmatprep.mubr.bf16.mxu0 0
      %1662 = vmatmul.mubr.bf16.gmra.mxu0 %v1570
      %v1663 = vpop.f32.mrf.mxu0
      %v1664 = vadd.f32 0.0, %v1663
      %v1665 = vpop.f32.mrf.mxu0
      %v1666 = vpop.f32.mrf.mxu0
      %v1667 = vadd.f32 0.0, %v1666
      %v1668 = vpop.f32.mrf.mxu0
      %1669 = vdwg.mxu0
      %v1671 = vunpack.c.l.b16 %v1496
      %v1672 = vpack.c.b16 %v1671, %v1671
      %v1673 = vrot.slane %v1542, 3
      %v1674 = vrot.slane %v1543, 3
      %v1675 = vsel %vm537, %v1673, %v1674
      %v1676 = vrot.slane %v1672, 3
      %v1677 = vsel %vm537, %v1674, %v1676
      %v1696 = vunpack.c.l.b16 %v1498
      %v1697 = vunpack.c.l.b16 %v1499
      %v1698 = vunpack.c.l.b16 %v1500
      %v1699 = vunpack.c.l.b16 %v1501
      %v1700 = vunpack.c.l.b16 %v1502
      %v1701 = vunpack.c.l.b16 %v1503
      %v1702 = vunpack.c.l.b16 %v1504
      %v1703 = vunpack.c.l.b16 %v1505
      %v1704 = vunpack.c.l.b16 %v1506
      %v1705 = vunpack.c.l.b16 %v1507
      %v1706 = vunpack.c.l.b16 %v1508
      %v1707 = vunpack.c.l.b16 %v1509
      %v1708 = vunpack.c.l.b16 %v1510
      %v1709 = vunpack.c.l.b16 %v1511
      %v1710 = vunpack.c.l.b16 %v1512
      %v1711 = vunpack.c.l.b16 %v1513
      %v1712 = vpack.c.b16 %v1697, %v1696
      %v1713 = vpack.c.b16 %v1699, %v1698
      %v1714 = vpack.c.b16 %v1701, %v1700
      %v1715 = vpack.c.b16 %v1703, %v1702
      %v1716 = vpack.c.b16 %v1705, %v1704
      %v1717 = vpack.c.b16 %v1707, %v1706
      %v1718 = vpack.c.b16 %v1709, %v1708
      %v1719 = vpack.c.b16 %v1711, %v1710
      %1728 = vmatprep.subr.bf16.mxu0 0
      %1729 = vmatpush1.bf16.msra.mxu0 %v1719
      %1730 = vmatprep.subr.bf16.mxu0 0
      %1731 = vmatpush1.bf16.msra.mxu0 %v1718
      %1732 = vmatprep.subr.bf16.mxu0 0
      %1733 = vmatpush1.bf16.msra.mxu0 %v1717
      %1734 = vmatprep.subr.bf16.mxu0 0
      %1735 = vmatpush1.bf16.msra.mxu0 %v1716
      %1736 = vmatprep.subr.bf16.mxu0 0
      %1737 = vmatpush1.bf16.msra.mxu0 %v1715
      %1738 = vmatprep.subr.bf16.mxu0 0
      %1739 = vmatpush1.bf16.msra.mxu0 %v1714
      %1740 = vmatprep.subr.bf16.mxu0 0
      %1741 = vmatpush1.bf16.msra.mxu0 %v1713
      %1742 = vmatprep.subr.bf16.mxu0 0
      %1743 = vmatpush1.bf16.msra.mxu0 %v1712
      %1744 = vmatprep.subr.bf16.mxu0 0
      %1745 = vmatpush2.bf16.msra.mxu0 0
      %1746 = vmatprep.subr.bf16.mxu0 0
      %1747 = vmatpush2.bf16.msra.mxu0 0
      %1748 = vmatprep.subr.bf16.mxu0 0
      %1749 = vmatpush2.bf16.msra.mxu0 0
      %1750 = vmatprep.subr.bf16.mxu0 0
      %1751 = vmatpush2.bf16.msra.mxu0 0
      %1752 = vmatprep.subr.bf16.mxu0 0
      %1753 = vmatpush2.bf16.msra.mxu0 0
      %1754 = vmatprep.subr.bf16.mxu0 0
      %1755 = vmatpush2.bf16.msra.mxu0 0
      %1756 = vmatprep.subr.bf16.mxu0 0
      %1757 = vmatpush2.bf16.msra.mxu0 0
      %1758 = vmatprep.subr.bf16.mxu0 0
      %1759 = vmatpush2.bf16.msra.mxu0 0
      %1760 = vmatprep.mubr.bf16.mxu0 0
      %1761 = vmatmul.mubr.bf16.gmra.mxu0 %v1675
      %v1762 = vpop.f32.mrf.mxu0
      %v1763 = vadd.f32 %v1656, %v1762
      %v1764 = vpop.f32.mrf.mxu0
      %v1765 = vpop.f32.mrf.mxu0
      %v1766 = vadd.f32 %v1659, %v1765
      %v1767 = vpop.f32.mrf.mxu0
      %1768 = vmatprep.mubr.bf16.mxu0 0
      %1769 = vmatmul.mubr.bf16.gmra.mxu0 %v1677
      %v1770 = vpop.f32.mrf.mxu0
      %v1771 = vadd.f32 %v1664, %v1770
      %v1772 = vpop.f32.mrf.mxu0
      %v1773 = vpop.f32.mrf.mxu0
      %v1774 = vadd.f32 %v1667, %v1773
      %v1775 = vpop.f32.mrf.mxu0
      %1776 = vdwg.mxu0
      %v1777 = vld [vmem:[%s226 + $0x4] sm:$0xc]
      %v1778 = vld [vmem:[%s226 + $0x8] sm:$0xf]
      %v1779 = vld [vmem:[%s226 + $0xc] sm:$0xf]
      %v1780 = vld [vmem:[%s226 + $0x10] sm:$0xf]
      %v1781 = vld [vmem:[%s226 + $0x14] sm:$0x3]
      %s1782 = scalar_lea.vmem %s1, 640
      %v1783 = vld [vmem:[%s1782] sm:$0xf]
      %v1784 = vld [vmem:[%s1782 + $0x4] sm:$0xf]
      %v1785 = vld [vmem:[%s1782 + $0x8] sm:$0xf]
      %v1786 = vld [vmem:[%s1782 + $0xc] sm:$0xf]
      %v1787 = vld [vmem:[%s1782 + $0x10] sm:$0xf]
      %v1788 = vld [vmem:[%s1782 + $0x14] sm:$0xf]
      %v1789 = vld [vmem:[%s1782 + $0x18] sm:$0xf]
      %v1790 = vld [vmem:[%s1782 + $0x1c] sm:$0xf]
      %v1791 = vld [vmem:[%s1782 + $0x20] sm:$0xf]
      %v1792 = vld [vmem:[%s1782 + $0x24] sm:$0xf]
      %v1793 = vld [vmem:[%s1782 + $0x28] sm:$0xf]
      %v1794 = vld [vmem:[%s1782 + $0x2c] sm:$0xf]
      %v1795 = vld [vmem:[%s1782 + $0x30] sm:$0xf]
      %v1796 = vld [vmem:[%s1782 + $0x34] sm:$0xf]
      %v1797 = vld [vmem:[%s1782 + $0x38] sm:$0xf]
      %v1798 = vld [vmem:[%s1782 + $0x3c] sm:$0xf]
      %v1804 = vunpack.c.l.b16 %v1777
      %v1805 = vunpack.c.l.b16 %v1778
      %v1806 = vunpack.c.l.b16 %v1779
      %v1807 = vunpack.c.l.b16 %v1780
      %v1808 = vunpack.c.l.b16 %v1781
      %v1809 = vpack.c.b16 %v1805, %v1804
      %v1810 = vpack.c.b16 %v1807, %v1806
      %v1811 = vpack.c.b16 %v1808, %v1808
      %vm1812 = vcmask 1045504
      %v1813 = vrot.slane %v1809, 2
      %v1814 = vrot.slane %v1810, 2
      %v1815 = vsel %vm1812, %v1813, %v1814
      %v1816 = vrot.slane %v1811, 2
      %v1817 = vsel %vm1812, %v1814, %v1816
      %v1836 = vunpack.c.l.b16 %v1783
      %v1837 = vunpack.c.l.b16 %v1784
      %v1838 = vunpack.c.l.b16 %v1785
      %v1839 = vunpack.c.l.b16 %v1786
      %v1840 = vunpack.c.l.b16 %v1787
      %v1841 = vunpack.c.l.b16 %v1788
      %v1842 = vunpack.c.l.b16 %v1789
      %v1843 = vunpack.c.l.b16 %v1790
      %v1844 = vunpack.c.l.b16 %v1791
      %v1845 = vunpack.c.l.b16 %v1792
      %v1846 = vunpack.c.l.b16 %v1793
      %v1847 = vunpack.c.l.b16 %v1794
      %v1848 = vunpack.c.l.b16 %v1795
      %v1849 = vunpack.c.l.b16 %v1796
      %v1850 = vunpack.c.l.b16 %v1797
      %v1851 = vunpack.c.l.b16 %v1798
      %v1852 = vpack.c.b16 %v1837, %v1836
      %v1853 = vpack.c.b16 %v1839, %v1838
      %v1854 = vpack.c.b16 %v1841, %v1840
      %v1855 = vpack.c.b16 %v1843, %v1842
      %v1856 = vpack.c.b16 %v1845, %v1844
      %v1857 = vpack.c.b16 %v1847, %v1846
      %v1858 = vpack.c.b16 %v1849, %v1848
      %v1859 = vpack.c.b16 %v1851, %v1850
      %1868 = vmatprep.subr.bf16.mxu0 0
      %1869 = vmatpush1.bf16.msra.mxu0 %v1859
      %1870 = vmatprep.subr.bf16.mxu0 0
      %1871 = vmatpush1.bf16.msra.mxu0 %v1858
      %1872 = vmatprep.subr.bf16.mxu0 0
      %1873 = vmatpush1.bf16.msra.mxu0 %v1857
      %1874 = vmatprep.subr.bf16.mxu0 0
      %1875 = vmatpush1.bf16.msra.mxu0 %v1856
      %1876 = vmatprep.subr.bf16.mxu0 0
      %1877 = vmatpush1.bf16.msra.mxu0 %v1855
      %1878 = vmatprep.subr.bf16.mxu0 0
      %1879 = vmatpush1.bf16.msra.mxu0 %v1854
      %1880 = vmatprep.subr.bf16.mxu0 0
      %1881 = vmatpush1.bf16.msra.mxu0 %v1853
      %1882 = vmatprep.subr.bf16.mxu0 0
      %1883 = vmatpush1.bf16.msra.mxu0 %v1852
      %1884 = vmatprep.subr.bf16.mxu0 0
      %1885 = vmatpush2.bf16.msra.mxu0 0
      %1886 = vmatprep.subr.bf16.mxu0 0
      %1887 = vmatpush2.bf16.msra.mxu0 0
      %1888 = vmatprep.subr.bf16.mxu0 0
      %1889 = vmatpush2.bf16.msra.mxu0 0
      %1890 = vmatprep.subr.bf16.mxu0 0
      %1891 = vmatpush2.bf16.msra.mxu0 0
      %1892 = vmatprep.subr.bf16.mxu0 0
      %1893 = vmatpush2.bf16.msra.mxu0 0
      %1894 = vmatprep.subr.bf16.mxu0 0
      %1895 = vmatpush2.bf16.msra.mxu0 0
      %1896 = vmatprep.subr.bf16.mxu0 0
      %1897 = vmatpush2.bf16.msra.mxu0 0
      %1898 = vmatprep.subr.bf16.mxu0 0
      %1899 = vmatpush2.bf16.msra.mxu0 0
      %1900 = vmatprep.mubr.bf16.mxu0 0
      %1901 = vmatmul.mubr.bf16.gmra.mxu0 %v1815
      %v1902 = vpop.f32.mrf.mxu0
      %v1903 = vadd.f32 0.0, %v1902
      %v1904 = vpop.f32.mrf.mxu0
      %v1905 = vpop.f32.mrf.mxu0
      %v1906 = vadd.f32 0.0, %v1905
      %v1907 = vpop.f32.mrf.mxu0
      %1908 = vmatprep.mubr.bf16.mxu0 0
      %1909 = vmatmul.mubr.bf16.gmra.mxu0 %v1817
      %v1910 = vpop.f32.mrf.mxu0
      %v1911 = vadd.f32 0.0, %v1910
      %v1912 = vpop.f32.mrf.mxu0
      %v1913 = vpop.f32.mrf.mxu0
      %v1914 = vadd.f32 0.0, %v1913
      %v1915 = vpop.f32.mrf.mxu0
      %1916 = vdwg.mxu0
      %v1917 = vadd.f32 %v1763, %v1903
      %v1918 = vadd.f32 %v1766, %v1906
      %v1919 = vadd.f32 %v1771, %v1911
      %v1920 = vadd.f32 %v1774, %v1914
      %v1921 = vld [vmem:[%s226 + $0x14] sm:$0x7]
      %s1922 = scalar_lea.vmem %s1, 704
      %v1923 = vld [vmem:[%s1922] sm:$0xf]
      %v1924 = vld [vmem:[%s1922 + $0x4] sm:$0xf]
      %v1925 = vld [vmem:[%s1922 + $0x8] sm:$0xf]
      %v1926 = vld [vmem:[%s1922 + $0xc] sm:$0xf]
      %v1927 = vld [vmem:[%s1922 + $0x10] sm:$0xf]
      %v1928 = vld [vmem:[%s1922 + $0x14] sm:$0xf]
      %v1929 = vld [vmem:[%s1922 + $0x18] sm:$0xf]
      %v1930 = vld [vmem:[%s1922 + $0x1c] sm:$0xf]
      %v1931 = vld [vmem:[%s1922 + $0x20] sm:$0xf]
      %v1932 = vld [vmem:[%s1922 + $0x24] sm:$0xf]
      %v1933 = vld [vmem:[%s1922 + $0x28] sm:$0xf]
      %v1934 = vld [vmem:[%s1922 + $0x2c] sm:$0xf]
      %v1935 = vld [vmem:[%s1922 + $0x30] sm:$0xf]
      %v1936 = vld [vmem:[%s1922 + $0x34] sm:$0xf]
      %v1937 = vld [vmem:[%s1922 + $0x38] sm:$0xf]
      %v1938 = vld [vmem:[%s1922 + $0x3c] sm:$0xf]
      %v1940 = vunpack.c.l.b16 %v1921
      %v1941 = vpack.c.b16 %v1940, %v1940
      %vm1942 = vsmask.f32 5376
      %v1944 = vshrl.u32 %v1809, 16
      %v1946 = vrot.slane %v1944, 2
      %v1947 = vshll.u32 %v1809, 16
      %v1949 = vrot.slane %v1947, 3
      %v1950 = vor.u32 %v1946, %v1949
      %v1952 = vshrl.u32 %v1810, 16
      %v1954 = vrot.slane %v1952, 2
      %v1955 = vshll.u32 %v1810, 16
      %v1957 = vrot.slane %v1955, 3
      %v1958 = vor.u32 %v1954, %v1957
      %v1959 = vsel %vm1942, %v1950, %v1958
      %v1961 = vshrl.u32 %v1941, 16
      %v1963 = vrot.slane %v1961, 2
      %v1964 = vshll.u32 %v1941, 16
      %v1966 = vrot.slane %v1964, 3
      %v1967 = vor.u32 %v1963, %v1966
      %v1968 = vsel %vm1942, %v1958, %v1967
      %v1987 = vunpack.c.l.b16 %v1923
      %v1988 = vunpack.c.l.b16 %v1924
      %v1989 = vunpack.c.l.b16 %v1925
      %v1990 = vunpack.c.l.b16 %v1926
      %v1991 = vunpack.c.l.b16 %v1927
      %v1992 = vunpack.c.l.b16 %v1928
      %v1993 = vunpack.c.l.b16 %v1929
      %v1994 = vunpack.c.l.b16 %v1930
      %v1995 = vunpack.c.l.b16 %v1931
      %v1996 = vunpack.c.l.b16 %v1932
      %v1997 = vunpack.c.l.b16 %v1933
      %v1998 = vunpack.c.l.b16 %v1934
      %v1999 = vunpack.c.l.b16 %v1935
      %v2000 = vunpack.c.l.b16 %v1936
      %v2001 = vunpack.c.l.b16 %v1937
      %v2002 = vunpack.c.l.b16 %v1938
      %v2003 = vpack.c.b16 %v1988, %v1987
      %v2004 = vpack.c.b16 %v1990, %v1989
      %v2005 = vpack.c.b16 %v1992, %v1991
      %v2006 = vpack.c.b16 %v1994, %v1993
      %v2007 = vpack.c.b16 %v1996, %v1995
      %v2008 = vpack.c.b16 %v1998, %v1997
      %v2009 = vpack.c.b16 %v2000, %v1999
      %v2010 = vpack.c.b16 %v2002, %v2001
      %2019 = vmatprep.subr.bf16.mxu0 0
      %2020 = vmatpush1.bf16.msra.mxu0 %v2010
      %2021 = vmatprep.subr.bf16.mxu0 0
      %2022 = vmatpush1.bf16.msra.mxu0 %v2009
      %2023 = vmatprep.subr.bf16.mxu0 0
      %2024 = vmatpush1.bf16.msra.mxu0 %v2008
      %2025 = vmatprep.subr.bf16.mxu0 0
      %2026 = vmatpush1.bf16.msra.mxu0 %v2007
      %2027 = vmatprep.subr.bf16.mxu0 0
      %2028 = vmatpush1.bf16.msra.mxu0 %v2006
      %2029 = vmatprep.subr.bf16.mxu0 0
      %2030 = vmatpush1.bf16.msra.mxu0 %v2005
      %2031 = vmatprep.subr.bf16.mxu0 0
      %2032 = vmatpush1.bf16.msra.mxu0 %v2004
      %2033 = vmatprep.subr.bf16.mxu0 0
      %2034 = vmatpush1.bf16.msra.mxu0 %v2003
      %2035 = vmatprep.subr.bf16.mxu0 0
      %2036 = vmatpush2.bf16.msra.mxu0 0
      %2037 = vmatprep.subr.bf16.mxu0 0
      %2038 = vmatpush2.bf16.msra.mxu0 0
      %2039 = vmatprep.subr.bf16.mxu0 0
      %2040 = vmatpush2.bf16.msra.mxu0 0
      %2041 = vmatprep.subr.bf16.mxu0 0
      %2042 = vmatpush2.bf16.msra.mxu0 0
      %2043 = vmatprep.subr.bf16.mxu0 0
      %2044 = vmatpush2.bf16.msra.mxu0 0
      %2045 = vmatprep.subr.bf16.mxu0 0
      %2046 = vmatpush2.bf16.msra.mxu0 0
      %2047 = vmatprep.subr.bf16.mxu0 0
      %2048 = vmatpush2.bf16.msra.mxu0 0
      %2049 = vmatprep.subr.bf16.mxu0 0
      %2050 = vmatpush2.bf16.msra.mxu0 0
      %2051 = vmatprep.mubr.bf16.mxu0 0
      %2052 = vmatmul.mubr.bf16.gmra.mxu0 %v1959
      %v2053 = vpop.f32.mrf.mxu0
      %v2054 = vadd.f32 0.0, %v2053
      %v2055 = vpop.f32.mrf.mxu0
      %v2056 = vpop.f32.mrf.mxu0
      %v2057 = vadd.f32 0.0, %v2056
      %v2058 = vpop.f32.mrf.mxu0
      %2059 = vmatprep.mubr.bf16.mxu0 0
      %2060 = vmatmul.mubr.bf16.gmra.mxu0 %v1968
      %v2061 = vpop.f32.mrf.mxu0
      %v2062 = vadd.f32 0.0, %v2061
      %v2063 = vpop.f32.mrf.mxu0
      %v2064 = vpop.f32.mrf.mxu0
      %v2065 = vadd.f32 0.0, %v2064
      %v2066 = vpop.f32.mrf.mxu0
      %2067 = vdwg.mxu0
      %v2068 = vadd.f32 %v1917, %v2054
      %v2069 = vadd.f32 %v1918, %v2057
      %v2070 = vadd.f32 %v1919, %v2062
      %v2071 = vadd.f32 %v1920, %v2065
      %v2072 = vadd.f32 %v2068, %v796
      %v2073 = vadd.f32 %v2069, %v796
      %v2074 = vadd.f32 %v2070, %v796
      %v2075 = vadd.f32 %v2071, %v796
      %v2076 = vpack.c.bf16 %v2073, %v2072
      %v2077 = vpack.c.bf16 %v2075, %v2074
      %v2080 = vunpack.c.l.b16 %v2076
      %v2081 = vunpack.c.h.b16 %v2076
      %v2082 = vunpack.c.l.b16 %v2077
      %v2083 = vunpack.c.h.b16 %v2077
      %v2084 = vpack.c.b16 %v2080, %v2080
      %v2085 = vpack.c.b16 %v2081, %v2081
      %v2086 = vpack.c.b16 %v2082, %v2082
      %v2087 = vpack.c.b16 %v2083, %v2083
      %s2092 = scalar_lea.vmem %s231, 32
      %2093 = vst.msk [vmem:[%s2092] sm:$0xf] %vm818, %v2084
      %2094 = vst.msk [vmem:[%s2092 + $0x4] sm:$0xf] %vm818, %v2085
      %2095 = vst.msk [vmem:[%s2092 + $0x8] sm:$0xf] %vm818, %v2086
      %2096 = vst.msk [vmem:[%s2092 + $0xc] sm:$0xf] %vm818, %v2087
      %v2097 = vmul.f32 %v2072, %v826
      %v2098 = vmul.f32 %v2073, %v831
      %v2099 = vmul.f32 %v2074, %v836
      %v2100 = vmul.f32 %v2075, %v841
      %v2101 = vsel %vm847, %v2097, 0.0
      %v2102 = vsel %vm847, %v2098, 0.0
      %v2103 = vadd.f32 %v2101, %v2102
      %v2104 = vsel %vm847, %v2099, 0.0
      %v2105 = vadd.f32 %v2103, %v2104
      %v2106 = vsel %vm847, %v2100, 0.0
      %v2107 = vadd.f32 %v2105, %v2106
      %v2108 = vrot.slane %v2107, 4
      %v2109 = vadd.f32 %v2107, %v2108
      %v2110 = vrot.slane %v2109, 2
      %v2111 = vadd.f32 %v2109, %v2110
      %v2112 = vrot.slane %v2111, 1
      %v2113 = vadd.f32 %v2111, %v2112
      %v2114 = vadd.f32 %v1473, %v2113
      %v2115 = vmul.f32 %v2097, %v2097
      %v2116 = vmul.f32 %v2098, %v2098
      %v2117 = vmul.f32 %v2099, %v2099
      %v2118 = vmul.f32 %v2100, %v2100
      %v2119 = vsel %vm847, %v2115, 0.0
      %v2120 = vsel %vm847, %v2116, 0.0
      %v2121 = vadd.f32 %v2119, %v2120
      %v2122 = vsel %vm847, %v2117, 0.0
      %v2123 = vadd.f32 %v2121, %v2122
      %v2124 = vsel %vm847, %v2118, 0.0
      %v2125 = vadd.f32 %v2123, %v2124
      %v2126 = vrot.slane %v2125, 4
      %v2127 = vadd.f32 %v2125, %v2126
      %v2128 = vrot.slane %v2127, 2
      %v2129 = vadd.f32 %v2127, %v2128
      %v2130 = vrot.slane %v2129, 1
      %v2131 = vadd.f32 %v2129, %v2130
      %v2132 = vadd.f32 %v1491, %v2131
      %v2133 = vld [vmem:[%s226] sm:$0x8]
      %v2134 = vld [vmem:[%s226 + $0x4] sm:$0xf]
      %v2135 = vld [vmem:[%s226 + $0x8] sm:$0xf]
      %v2136 = vld [vmem:[%s226 + $0xc] sm:$0xf]
      %v2137 = vld [vmem:[%s226 + $0x10] sm:$0xf]
      %s2138 = scalar_lea.vmem %s1, 768
      %v2139 = vld [vmem:[%s2138] sm:$0xf]
      %v2140 = vld [vmem:[%s2138 + $0x4] sm:$0xf]
      %v2141 = vld [vmem:[%s2138 + $0x8] sm:$0xf]
      %v2142 = vld [vmem:[%s2138 + $0xc] sm:$0xf]
      %v2143 = vld [vmem:[%s2138 + $0x10] sm:$0xf]
      %v2144 = vld [vmem:[%s2138 + $0x14] sm:$0xf]
      %v2145 = vld [vmem:[%s2138 + $0x18] sm:$0xf]
      %v2146 = vld [vmem:[%s2138 + $0x1c] sm:$0xf]
      %v2147 = vld [vmem:[%s2138 + $0x20] sm:$0xf]
      %v2148 = vld [vmem:[%s2138 + $0x24] sm:$0xf]
      %v2149 = vld [vmem:[%s2138 + $0x28] sm:$0xf]
      %v2150 = vld [vmem:[%s2138 + $0x2c] sm:$0xf]
      %v2151 = vld [vmem:[%s2138 + $0x30] sm:$0xf]
      %v2152 = vld [vmem:[%s2138 + $0x34] sm:$0xf]
      %v2153 = vld [vmem:[%s2138 + $0x38] sm:$0xf]
      %v2154 = vld [vmem:[%s2138 + $0x3c] sm:$0xf]
      %s2155 = scalar_lea.vmem %s1, 832
      %v2156 = vld [vmem:[%s2155] sm:$0xf]
      %v2157 = vld [vmem:[%s2155 + $0x4] sm:$0xf]
      %v2158 = vld [vmem:[%s2155 + $0x8] sm:$0xf]
      %v2159 = vld [vmem:[%s2155 + $0xc] sm:$0xf]
      %v2160 = vld [vmem:[%s2155 + $0x10] sm:$0xf]
      %v2161 = vld [vmem:[%s2155 + $0x14] sm:$0xf]
      %v2162 = vld [vmem:[%s2155 + $0x18] sm:$0xf]
      %v2163 = vld [vmem:[%s2155 + $0x1c] sm:$0xf]
      %v2164 = vld [vmem:[%s2155 + $0x20] sm:$0xf]
      %v2165 = vld [vmem:[%s2155 + $0x24] sm:$0xf]
      %v2166 = vld [vmem:[%s2155 + $0x28] sm:$0xf]
      %v2167 = vld [vmem:[%s2155 + $0x2c] sm:$0xf]
      %v2168 = vld [vmem:[%s2155 + $0x30] sm:$0xf]
      %v2169 = vld [vmem:[%s2155 + $0x34] sm:$0xf]
      %v2170 = vld [vmem:[%s2155 + $0x38] sm:$0xf]
      %v2171 = vld [vmem:[%s2155 + $0x3c] sm:$0xf]
      %v2176 = vunpack.c.l.b16 %v2134
      %v2177 = vunpack.c.l.b16 %v2135
      %v2178 = vunpack.c.l.b16 %v2136
      %v2179 = vunpack.c.l.b16 %v2137
      %v2180 = vpack.c.b16 %v2177, %v2176
      %v2181 = vpack.c.b16 %v2179, %v2178
      %v2200 = vunpack.c.l.b16 %v2156
      %v2201 = vunpack.c.l.b16 %v2157
      %v2202 = vunpack.c.l.b16 %v2158
      %v2203 = vunpack.c.l.b16 %v2159
      %v2204 = vunpack.c.l.b16 %v2160
      %v2205 = vunpack.c.l.b16 %v2161
      %v2206 = vunpack.c.l.b16 %v2162
      %v2207 = vunpack.c.l.b16 %v2163
      %v2208 = vunpack.c.l.b16 %v2164
      %v2209 = vunpack.c.l.b16 %v2165
      %v2210 = vunpack.c.l.b16 %v2166
      %v2211 = vunpack.c.l.b16 %v2167
      %v2212 = vunpack.c.l.b16 %v2168
      %v2213 = vunpack.c.l.b16 %v2169
      %v2214 = vunpack.c.l.b16 %v2170
      %v2215 = vunpack.c.l.b16 %v2171
      %v2216 = vpack.c.b16 %v2201, %v2200
      %v2217 = vpack.c.b16 %v2203, %v2202
      %v2218 = vpack.c.b16 %v2205, %v2204
      %v2219 = vpack.c.b16 %v2207, %v2206
      %v2220 = vpack.c.b16 %v2209, %v2208
      %v2221 = vpack.c.b16 %v2211, %v2210
      %v2222 = vpack.c.b16 %v2213, %v2212
      %v2223 = vpack.c.b16 %v2215, %v2214
      %2232 = vmatprep.subr.bf16.mxu0 0
      %2233 = vmatpush1.bf16.msra.mxu0 %v2223
      %2234 = vmatprep.subr.bf16.mxu0 0
      %2235 = vmatpush1.bf16.msra.mxu0 %v2222
      %2236 = vmatprep.subr.bf16.mxu0 0
      %2237 = vmatpush1.bf16.msra.mxu0 %v2221
      %2238 = vmatprep.subr.bf16.mxu0 0
      %2239 = vmatpush1.bf16.msra.mxu0 %v2220
      %2240 = vmatprep.subr.bf16.mxu0 0
      %2241 = vmatpush1.bf16.msra.mxu0 %v2219
      %2242 = vmatprep.subr.bf16.mxu0 0
      %2243 = vmatpush1.bf16.msra.mxu0 %v2218
      %2244 = vmatprep.subr.bf16.mxu0 0
      %2245 = vmatpush1.bf16.msra.mxu0 %v2217
      %2246 = vmatprep.subr.bf16.mxu0 0
      %2247 = vmatpush1.bf16.msra.mxu0 %v2216
      %2248 = vmatprep.subr.bf16.mxu0 0
      %2249 = vmatpush2.bf16.msra.mxu0 0
      %2250 = vmatprep.subr.bf16.mxu0 0
      %2251 = vmatpush2.bf16.msra.mxu0 0
      %2252 = vmatprep.subr.bf16.mxu0 0
      %2253 = vmatpush2.bf16.msra.mxu0 0
      %2254 = vmatprep.subr.bf16.mxu0 0
      %2255 = vmatpush2.bf16.msra.mxu0 0
      %2256 = vmatprep.subr.bf16.mxu0 0
      %2257 = vmatpush2.bf16.msra.mxu0 0
      %2258 = vmatprep.subr.bf16.mxu0 0
      %2259 = vmatpush2.bf16.msra.mxu0 0
      %2260 = vmatprep.subr.bf16.mxu0 0
      %2261 = vmatpush2.bf16.msra.mxu0 0
      %2262 = vmatprep.subr.bf16.mxu0 0
      %2263 = vmatpush2.bf16.msra.mxu0 0
      %2264 = vmatprep.mubr.bf16.mxu0 0
      %2265 = vmatmul.mubr.bf16.gmra.mxu0 %v2180
      %v2266 = vpop.f32.mrf.mxu0
      %v2267 = vadd.f32 0.0, %v2266
      %v2268 = vpop.f32.mrf.mxu0
      %v2269 = vpop.f32.mrf.mxu0
      %v2270 = vadd.f32 0.0, %v2269
      %v2271 = vpop.f32.mrf.mxu0
      %2272 = vmatprep.mubr.bf16.mxu0 0
      %2273 = vmatmul.mubr.bf16.gmra.mxu0 %v2181
      %v2274 = vpop.f32.mrf.mxu0
      %v2275 = vadd.f32 0.0, %v2274
      %v2276 = vpop.f32.mrf.mxu0
      %v2277 = vpop.f32.mrf.mxu0
      %v2278 = vadd.f32 0.0, %v2277
      %v2279 = vpop.f32.mrf.mxu0
      %2280 = vdwg.mxu0
      %v2282 = vunpack.c.l.b16 %v2133
      %v2283 = vpack.c.b16 %v2176, %v2282
      %v2284 = vpack.c.b16 %v2178, %v2177
      %v2285 = vpack.c.b16 %v2179, %v2179
      %v2287 = vshrl.u32 %v2283, 16
      %v2289 = vrot.slane %v2287, 3
      %v2290 = vshll.u32 %v2283, 16
      %v2292 = vrot.slane %v2290, 4
      %v2293 = vor.u32 %v2289, %v2292
      %v2295 = vshrl.u32 %v2284, 16
      %v2297 = vrot.slane %v2295, 3
      %v2298 = vshll.u32 %v2284, 16
      %v2300 = vrot.slane %v2298, 4
      %v2301 = vor.u32 %v2297, %v2300
      %v2302 = vsel %vm667, %v2293, %v2301
      %v2304 = vshrl.u32 %v2285, 16
      %v2306 = vrot.slane %v2304, 3
      %v2307 = vshll.u32 %v2285, 16
      %v2309 = vrot.slane %v2307, 4
      %v2310 = vor.u32 %v2306, %v2309
      %v2311 = vsel %vm667, %v2301, %v2310
      %v2330 = vunpack.c.l.b16 %v2139
      %v2331 = vunpack.c.l.b16 %v2140
      %v2332 = vunpack.c.l.b16 %v2141
      %v2333 = vunpack.c.l.b16 %v2142
      %v2334 = vunpack.c.l.b16 %v2143
      %v2335 = vunpack.c.l.b16 %v2144
      %v2336 = vunpack.c.l.b16 %v2145
      %v2337 = vunpack.c.l.b16 %v2146
      %v2338 = vunpack.c.l.b16 %v2147
      %v2339 = vunpack.c.l.b16 %v2148
      %v2340 = vunpack.c.l.b16 %v2149
      %v2341 = vunpack.c.l.b16 %v2150
      %v2342 = vunpack.c.l.b16 %v2151
      %v2343 = vunpack.c.l.b16 %v2152
      %v2344 = vunpack.c.l.b16 %v2153
      %v2345 = vunpack.c.l.b16 %v2154
      %v2346 = vpack.c.b16 %v2331, %v2330
      %v2347 = vpack.c.b16 %v2333, %v2332
      %v2348 = vpack.c.b16 %v2335, %v2334
      %v2349 = vpack.c.b16 %v2337, %v2336
      %v2350 = vpack.c.b16 %v2339, %v2338
      %v2351 = vpack.c.b16 %v2341, %v2340
      %v2352 = vpack.c.b16 %v2343, %v2342
      %v2353 = vpack.c.b16 %v2345, %v2344
      %2362 = vmatprep.subr.bf16.mxu0 0
      %2363 = vmatpush1.bf16.msra.mxu0 %v2353
      %2364 = vmatprep.subr.bf16.mxu0 0
      %2365 = vmatpush1.bf16.msra.mxu0 %v2352
      %2366 = vmatprep.subr.bf16.mxu0 0
      %2367 = vmatpush1.bf16.msra.mxu0 %v2351
      %2368 = vmatprep.subr.bf16.mxu0 0
      %2369 = vmatpush1.bf16.msra.mxu0 %v2350
      %2370 = vmatprep.subr.bf16.mxu0 0
      %2371 = vmatpush1.bf16.msra.mxu0 %v2349
      %2372 = vmatprep.subr.bf16.mxu0 0
      %2373 = vmatpush1.bf16.msra.mxu0 %v2348
      %2374 = vmatprep.subr.bf16.mxu0 0
      %2375 = vmatpush1.bf16.msra.mxu0 %v2347
      %2376 = vmatprep.subr.bf16.mxu0 0
      %2377 = vmatpush1.bf16.msra.mxu0 %v2346
      %2378 = vmatprep.subr.bf16.mxu0 0
      %2379 = vmatpush2.bf16.msra.mxu0 0
      %2380 = vmatprep.subr.bf16.mxu0 0
      %2381 = vmatpush2.bf16.msra.mxu0 0
      %2382 = vmatprep.subr.bf16.mxu0 0
      %2383 = vmatpush2.bf16.msra.mxu0 0
      %2384 = vmatprep.subr.bf16.mxu0 0
      %2385 = vmatpush2.bf16.msra.mxu0 0
      %2386 = vmatprep.subr.bf16.mxu0 0
      %2387 = vmatpush2.bf16.msra.mxu0 0
      %2388 = vmatprep.subr.bf16.mxu0 0
      %2389 = vmatpush2.bf16.msra.mxu0 0
      %2390 = vmatprep.subr.bf16.mxu0 0
      %2391 = vmatpush2.bf16.msra.mxu0 0
      %2392 = vmatprep.subr.bf16.mxu0 0
      %2393 = vmatpush2.bf16.msra.mxu0 0
      %2394 = vmatprep.mubr.bf16.mxu0 0
      %2395 = vmatmul.mubr.bf16.gmra.mxu0 %v2302
      %v2396 = vpop.f32.mrf.mxu0
      %v2397 = vadd.f32 %v2267, %v2396
      %v2398 = vpop.f32.mrf.mxu0
      %v2399 = vpop.f32.mrf.mxu0
      %v2400 = vadd.f32 %v2270, %v2399
      %v2401 = vpop.f32.mrf.mxu0
      %2402 = vmatprep.mubr.bf16.mxu0 0
      %2403 = vmatmul.mubr.bf16.gmra.mxu0 %v2311
      %v2404 = vpop.f32.mrf.mxu0
      %v2405 = vadd.f32 %v2275, %v2404
      %v2406 = vpop.f32.mrf.mxu0
      %v2407 = vpop.f32.mrf.mxu0
      %v2408 = vadd.f32 %v2278, %v2407
      %v2409 = vpop.f32.mrf.mxu0
      %2410 = vdwg.mxu0
      %v2411 = vld [vmem:[%s226 + $0x4] sm:$0xc]
      %v2412 = vld [vmem:[%s226 + $0x8] sm:$0xf]
      %v2413 = vld [vmem:[%s226 + $0xc] sm:$0xf]
      %v2414 = vld [vmem:[%s226 + $0x10] sm:$0xf]
      %v2415 = vld [vmem:[%s226 + $0x14] sm:$0x7]
      %s2416 = scalar_lea.vmem %s1, 896
      %v2417 = vld [vmem:[%s2416] sm:$0xf]
      %v2418 = vld [vmem:[%s2416 + $0x4] sm:$0xf]
      %v2419 = vld [vmem:[%s2416 + $0x8] sm:$0xf]
      %v2420 = vld [vmem:[%s2416 + $0xc] sm:$0xf]
      %v2421 = vld [vmem:[%s2416 + $0x10] sm:$0xf]
      %v2422 = vld [vmem:[%s2416 + $0x14] sm:$0xf]
      %v2423 = vld [vmem:[%s2416 + $0x18] sm:$0xf]
      %v2424 = vld [vmem:[%s2416 + $0x1c] sm:$0xf]
      %v2425 = vld [vmem:[%s2416 + $0x20] sm:$0xf]
      %v2426 = vld [vmem:[%s2416 + $0x24] sm:$0xf]
      %v2427 = vld [vmem:[%s2416 + $0x28] sm:$0xf]
      %v2428 = vld [vmem:[%s2416 + $0x2c] sm:$0xf]
      %v2429 = vld [vmem:[%s2416 + $0x30] sm:$0xf]
      %v2430 = vld [vmem:[%s2416 + $0x34] sm:$0xf]
      %v2431 = vld [vmem:[%s2416 + $0x38] sm:$0xf]
      %v2432 = vld [vmem:[%s2416 + $0x3c] sm:$0xf]
      %v2438 = vunpack.c.l.b16 %v2411
      %v2439 = vunpack.c.l.b16 %v2412
      %v2440 = vunpack.c.l.b16 %v2413
      %v2441 = vunpack.c.l.b16 %v2414
      %v2442 = vunpack.c.l.b16 %v2415
      %v2443 = vpack.c.b16 %v2439, %v2438
      %v2444 = vpack.c.b16 %v2441, %v2440
      %v2445 = vpack.c.b16 %v2442, %v2442
      %v2447 = vshrl.u32 %v2443, 16
      %v2449 = vrot.slane %v2447, 2
      %v2450 = vshll.u32 %v2443, 16
      %v2452 = vrot.slane %v2450, 3
      %v2453 = vor.u32 %v2449, %v2452
      %v2455 = vshrl.u32 %v2444, 16
      %v2457 = vrot.slane %v2455, 2
      %v2458 = vshll.u32 %v2444, 16
      %v2460 = vrot.slane %v2458, 3
      %v2461 = vor.u32 %v2457, %v2460
      %v2462 = vsel %vm1942, %v2453, %v2461
      %v2464 = vshrl.u32 %v2445, 16
      %v2466 = vrot.slane %v2464, 2
      %v2467 = vshll.u32 %v2445, 16
      %v2469 = vrot.slane %v2467, 3
      %v2470 = vor.u32 %v2466, %v2469
      %v2471 = vsel %vm1942, %v2461, %v2470
      %v2490 = vunpack.c.l.b16 %v2417
      %v2491 = vunpack.c.l.b16 %v2418
      %v2492 = vunpack.c.l.b16 %v2419
      %v2493 = vunpack.c.l.b16 %v2420
      %v2494 = vunpack.c.l.b16 %v2421
      %v2495 = vunpack.c.l.b16 %v2422
      %v2496 = vunpack.c.l.b16 %v2423
      %v2497 = vunpack.c.l.b16 %v2424
      %v2498 = vunpack.c.l.b16 %v2425
      %v2499 = vunpack.c.l.b16 %v2426
      %v2500 = vunpack.c.l.b16 %v2427
      %v2501 = vunpack.c.l.b16 %v2428
      %v2502 = vunpack.c.l.b16 %v2429
      %v2503 = vunpack.c.l.b16 %v2430
      %v2504 = vunpack.c.l.b16 %v2431
      %v2505 = vunpack.c.l.b16 %v2432
      %v2506 = vpack.c.b16 %v2491, %v2490
      %v2507 = vpack.c.b16 %v2493, %v2492
      %v2508 = vpack.c.b16 %v2495, %v2494
      %v2509 = vpack.c.b16 %v2497, %v2496
      %v2510 = vpack.c.b16 %v2499, %v2498
      %v2511 = vpack.c.b16 %v2501, %v2500
      %v2512 = vpack.c.b16 %v2503, %v2502
      %v2513 = vpack.c.b16 %v2505, %v2504
      %2522 = vmatprep.subr.bf16.mxu0 0
      %2523 = vmatpush1.bf16.msra.mxu0 %v2513
      %2524 = vmatprep.subr.bf16.mxu0 0
      %2525 = vmatpush1.bf16.msra.mxu0 %v2512
      %2526 = vmatprep.subr.bf16.mxu0 0
      %2527 = vmatpush1.bf16.msra.mxu0 %v2511
      %2528 = vmatprep.subr.bf16.mxu0 0
      %2529 = vmatpush1.bf16.msra.mxu0 %v2510
      %2530 = vmatprep.subr.bf16.mxu0 0
      %2531 = vmatpush1.bf16.msra.mxu0 %v2509
      %2532 = vmatprep.subr.bf16.mxu0 0
      %2533 = vmatpush1.bf16.msra.mxu0 %v2508
      %2534 = vmatprep.subr.bf16.mxu0 0
      %2535 = vmatpush1.bf16.msra.mxu0 %v2507
      %2536 = vmatprep.subr.bf16.mxu0 0
      %2537 = vmatpush1.bf16.msra.mxu0 %v2506
      %2538 = vmatprep.subr.bf16.mxu0 0
      %2539 = vmatpush2.bf16.msra.mxu0 0
      %2540 = vmatprep.subr.bf16.mxu0 0
      %2541 = vmatpush2.bf16.msra.mxu0 0
      %2542 = vmatprep.subr.bf16.mxu0 0
      %2543 = vmatpush2.bf16.msra.mxu0 0
      %2544 = vmatprep.subr.bf16.mxu0 0
      %2545 = vmatpush2.bf16.msra.mxu0 0
      %2546 = vmatprep.subr.bf16.mxu0 0
      %2547 = vmatpush2.bf16.msra.mxu0 0
      %2548 = vmatprep.subr.bf16.mxu0 0
      %2549 = vmatpush2.bf16.msra.mxu0 0
      %2550 = vmatprep.subr.bf16.mxu0 0
      %2551 = vmatpush2.bf16.msra.mxu0 0
      %2552 = vmatprep.subr.bf16.mxu0 0
      %2553 = vmatpush2.bf16.msra.mxu0 0
      %2554 = vmatprep.mubr.bf16.mxu0 0
      %2555 = vmatmul.mubr.bf16.gmra.mxu0 %v2462
      %v2556 = vpop.f32.mrf.mxu0
      %v2557 = vadd.f32 0.0, %v2556
      %v2558 = vpop.f32.mrf.mxu0
      %v2559 = vpop.f32.mrf.mxu0
      %v2560 = vadd.f32 0.0, %v2559
      %v2561 = vpop.f32.mrf.mxu0
      %2562 = vmatprep.mubr.bf16.mxu0 0
      %2563 = vmatmul.mubr.bf16.gmra.mxu0 %v2471
      %v2564 = vpop.f32.mrf.mxu0
      %v2565 = vadd.f32 0.0, %v2564
      %v2566 = vpop.f32.mrf.mxu0
      %v2567 = vpop.f32.mrf.mxu0
      %v2568 = vadd.f32 0.0, %v2567
      %v2569 = vpop.f32.mrf.mxu0
      %2570 = vdwg.mxu0
      %v2571 = vadd.f32 %v2397, %v2557
      %v2572 = vadd.f32 %v2400, %v2560
      %v2573 = vadd.f32 %v2405, %v2565
      %v2574 = vadd.f32 %v2408, %v2568
      %v2575 = vld [vmem:[%s226 + $0x4] sm:$0x8]
      %s2576 = scalar_lea.vmem %s1, 960
      %v2577 = vld [vmem:[%s2576] sm:$0xf]
      %v2578 = vld [vmem:[%s2576 + $0x4] sm:$0xf]
      %v2579 = vld [vmem:[%s2576 + $0x8] sm:$0xf]
      %v2580 = vld [vmem:[%s2576 + $0xc] sm:$0xf]
      %v2581 = vld [vmem:[%s2576 + $0x10] sm:$0xf]
      %v2582 = vld [vmem:[%s2576 + $0x14] sm:$0xf]
      %v2583 = vld [vmem:[%s2576 + $0x18] sm:$0xf]
      %v2584 = vld [vmem:[%s2576 + $0x1c] sm:$0xf]
      %v2585 = vld [vmem:[%s2576 + $0x20] sm:$0xf]
      %v2586 = vld [vmem:[%s2576 + $0x24] sm:$0xf]
      %v2587 = vld [vmem:[%s2576 + $0x28] sm:$0xf]
      %v2588 = vld [vmem:[%s2576 + $0x2c] sm:$0xf]
      %v2589 = vld [vmem:[%s2576 + $0x30] sm:$0xf]
      %v2590 = vld [vmem:[%s2576 + $0x34] sm:$0xf]
      %v2591 = vld [vmem:[%s2576 + $0x38] sm:$0xf]
      %v2592 = vld [vmem:[%s2576 + $0x3c] sm:$0xf]
      %v2594 = vunpack.c.l.b16 %v2575
      %v2595 = vpack.c.b16 %v2439, %v2594
      %v2596 = vrot.slane %v2595, 3
      %v2597 = vrot.slane %v2444, 3
      %v2598 = vsel %vm537, %v2596, %v2597
      %v2599 = vrot.slane %v2445, 3
      %v2600 = vsel %vm537, %v2597, %v2599
      %v2619 = vunpack.c.l.b16 %v2577
      %v2620 = vunpack.c.l.b16 %v2578
      %v2621 = vunpack.c.l.b16 %v2579
      %v2622 = vunpack.c.l.b16 %v2580
      %v2623 = vunpack.c.l.b16 %v2581
      %v2624 = vunpack.c.l.b16 %v2582
      %v2625 = vunpack.c.l.b16 %v2583
      %v2626 = vunpack.c.l.b16 %v2584
      %v2627 = vunpack.c.l.b16 %v2585
      %v2628 = vunpack.c.l.b16 %v2586
      %v2629 = vunpack.c.l.b16 %v2587
      %v2630 = vunpack.c.l.b16 %v2588
      %v2631 = vunpack.c.l.b16 %v2589
      %v2632 = vunpack.c.l.b16 %v2590
      %v2633 = vunpack.c.l.b16 %v2591
      %v2634 = vunpack.c.l.b16 %v2592
      %v2635 = vpack.c.b16 %v2620, %v2619
      %v2636 = vpack.c.b16 %v2622, %v2621
      %v2637 = vpack.c.b16 %v2624, %v2623
      %v2638 = vpack.c.b16 %v2626, %v2625
      %v2639 = vpack.c.b16 %v2628, %v2627
      %v2640 = vpack.c.b16 %v2630, %v2629
      %v2641 = vpack.c.b16 %v2632, %v2631
      %v2642 = vpack.c.b16 %v2634, %v2633
      %2651 = vmatprep.subr.bf16.mxu0 0
      %2652 = vmatpush1.bf16.msra.mxu0 %v2642
      %2653 = vmatprep.subr.bf16.mxu0 0
      %2654 = vmatpush1.bf16.msra.mxu0 %v2641
      %2655 = vmatprep.subr.bf16.mxu0 0
      %2656 = vmatpush1.bf16.msra.mxu0 %v2640
      %2657 = vmatprep.subr.bf16.mxu0 0
      %2658 = vmatpush1.bf16.msra.mxu0 %v2639
      %2659 = vmatprep.subr.bf16.mxu0 0
      %2660 = vmatpush1.bf16.msra.mxu0 %v2638
      %2661 = vmatprep.subr.bf16.mxu0 0
      %2662 = vmatpush1.bf16.msra.mxu0 %v2637
      %2663 = vmatprep.subr.bf16.mxu0 0
      %2664 = vmatpush1.bf16.msra.mxu0 %v2636
      %2665 = vmatprep.subr.bf16.mxu0 0
      %2666 = vmatpush1.bf16.msra.mxu0 %v2635
      %2667 = vmatprep.subr.bf16.mxu0 0
      %2668 = vmatpush2.bf16.msra.mxu0 0
      %2669 = vmatprep.subr.bf16.mxu0 0
      %2670 = vmatpush2.bf16.msra.mxu0 0
      %2671 = vmatprep.subr.bf16.mxu0 0
      %2672 = vmatpush2.bf16.msra.mxu0 0
      %2673 = vmatprep.subr.bf16.mxu0 0
      %2674 = vmatpush2.bf16.msra.mxu0 0
      %2675 = vmatprep.subr.bf16.mxu0 0
      %2676 = vmatpush2.bf16.msra.mxu0 0
      %2677 = vmatprep.subr.bf16.mxu0 0
      %2678 = vmatpush2.bf16.msra.mxu0 0
      %2679 = vmatprep.subr.bf16.mxu0 0
      %2680 = vmatpush2.bf16.msra.mxu0 0
      %2681 = vmatprep.subr.bf16.mxu0 0
      %2682 = vmatpush2.bf16.msra.mxu0 0
      %2683 = vmatprep.mubr.bf16.mxu0 0
      %2684 = vmatmul.mubr.bf16.gmra.mxu0 %v2598
      %v2685 = vpop.f32.mrf.mxu0
      %v2686 = vadd.f32 0.0, %v2685
      %v2687 = vpop.f32.mrf.mxu0
      %v2688 = vpop.f32.mrf.mxu0
      %v2689 = vadd.f32 0.0, %v2688
      %v2690 = vpop.f32.mrf.mxu0
      %2691 = vmatprep.mubr.bf16.mxu0 0
      %2692 = vmatmul.mubr.bf16.gmra.mxu0 %v2600
      %v2693 = vpop.f32.mrf.mxu0
      %v2694 = vadd.f32 0.0, %v2693
      %v2695 = vpop.f32.mrf.mxu0
      %v2696 = vpop.f32.mrf.mxu0
      %v2697 = vadd.f32 0.0, %v2696
      %v2698 = vpop.f32.mrf.mxu0
      %2699 = vdwg.mxu0
      %v2700 = vadd.f32 %v2571, %v2686
      %v2701 = vadd.f32 %v2572, %v2689
      %v2702 = vadd.f32 %v2573, %v2694
      %v2703 = vadd.f32 %v2574, %v2697
      %v2704 = vadd.f32 %v2700, %v796
      %v2705 = vadd.f32 %v2701, %v796
      %v2706 = vadd.f32 %v2702, %v796
      %v2707 = vadd.f32 %v2703, %v796
      %v2708 = vpack.c.bf16 %v2705, %v2704
      %v2709 = vpack.c.bf16 %v2707, %v2706
      %v2712 = vunpack.c.l.b16 %v2708
      %v2713 = vunpack.c.h.b16 %v2708
      %v2714 = vunpack.c.l.b16 %v2709
      %v2715 = vunpack.c.h.b16 %v2709
      %v2716 = vpack.c.b16 %v2712, %v2712
      %v2717 = vpack.c.b16 %v2713, %v2713
      %v2718 = vpack.c.b16 %v2714, %v2714
      %v2719 = vpack.c.b16 %v2715, %v2715
      %s2724 = scalar_lea.vmem %s231, 48
      %2725 = vst.msk [vmem:[%s2724] sm:$0xf] %vm818, %v2716
      %2726 = vst.msk [vmem:[%s2724 + $0x4] sm:$0xf] %vm818, %v2717
      %2727 = vst.msk [vmem:[%s2724 + $0x8] sm:$0xf] %vm818, %v2718
      %2728 = vst.msk [vmem:[%s2724 + $0xc] sm:$0xf] %vm818, %v2719
      %v2729 = vmul.f32 %v2704, %v826
      %v2730 = vmul.f32 %v2705, %v831
      %v2731 = vmul.f32 %v2706, %v836
      %v2732 = vmul.f32 %v2707, %v841
      %v2733 = vsel %vm847, %v2729, 0.0
      %v2734 = vsel %vm847, %v2730, 0.0
      %v2735 = vadd.f32 %v2733, %v2734
      %v2736 = vsel %vm847, %v2731, 0.0
      %v2737 = vadd.f32 %v2735, %v2736
      %v2738 = vsel %vm847, %v2732, 0.0
      %v2739 = vadd.f32 %v2737, %v2738
      %v2740 = vrot.slane %v2739, 4
      %v2741 = vadd.f32 %v2739, %v2740
      %v2742 = vrot.slane %v2741, 2
      %v2743 = vadd.f32 %v2741, %v2742
      %v2744 = vrot.slane %v2743, 1
      %v2745 = vadd.f32 %v2743, %v2744
      %v2746 = vadd.f32 %v2114, %v2745
      %v2747 = vmul.f32 %v2729, %v2729
      %v2748 = vmul.f32 %v2730, %v2730
      %v2749 = vmul.f32 %v2731, %v2731
      %v2750 = vmul.f32 %v2732, %v2732
      %v2751 = vsel %vm847, %v2747, 0.0
      %v2752 = vsel %vm847, %v2748, 0.0
      %v2753 = vadd.f32 %v2751, %v2752
      %v2754 = vsel %vm847, %v2749, 0.0
      %v2755 = vadd.f32 %v2753, %v2754
      %v2756 = vsel %vm847, %v2750, 0.0
      %v2757 = vadd.f32 %v2755, %v2756
      %v2758 = vrot.slane %v2757, 4
      %v2759 = vadd.f32 %v2757, %v2758
      %v2760 = vrot.slane %v2759, 2
      %v2761 = vadd.f32 %v2759, %v2760
      %v2762 = vrot.slane %v2761, 1
      %v2763 = vadd.f32 %v2761, %v2762
      %v2764 = vadd.f32 %v2132, %v2763
      %vm2765 = vcmask 1040384
      %v2766 = vsel %vm2765, %v2746, %v2764
      %vm2767 = vcmask 517120
      %2768 = vst.msk [vmem:[%s235] sm:$0x3] %vm2767, %v2766
      %p2769 = scmp.lt.s32.totalorder %s17, 1
      %s2770 = scalar_select %p2769, %s17, 1
      %s2771 = smul.addr %s2770, 16
      %s2772 = smul.addr %s2771, 4
      %s2773 = scalar_lea.vmem %s4, %s2772
      %p2774 = scmp.lt.s32.totalorder %s17, 1
      %s2775 = scalar_select %p2774, %s17, 1
      %s2776 = smul.addr %s2775, 2
      %s2777 = scalar_lea.vmem %s5, %s2776
      // Predicated region
      $region37: #{generator_forward.11} parent=35 // pred_check
        %p2778 = pneg %p124
      $region38: #{generator_forward.11} parent=35 // pred_check_branch
        %2780 = sbr.rel (%p2778) target = $region40
      $region39: #{generator_forward.11} parent=35 // pred_region
        _
      $region40: #{generator_forward.11} parent=35 // pred_fallthru
        _
      // Predicated region
      $region41: #{generator_forward.11} parent=35 // pred_check
        %p2781 = pneg %p150
      $region42: #{generator_forward.11} parent=35 // pred_check_branch
        %2783 = sbr.rel (%p2781) target = $region44
      $region43: #{generator_forward.11} parent=35 // pred_region
        _
      $region44: #{generator_forward.11} parent=35 // pred_fallthru
        _
    $region36: #{generator_forward.11} parent=5 // pred_fallthru
      _
    %p2784 = scmp.le.s32.totalorder 2, %s12
    // Predicated region
    $region45: #{generator_forward.11} parent=5 // pred_check
      %p2785 = pneg %p2784
    $region46: #{generator_forward.11} parent=5 // pred_check_branch
      %2787 = sbr.rel (%p2785) target = $region48
    $region47: #{generator_forward.11} parent=5 // pred_region
      %s2788 = ssub.s32 %s12, 2
      // Predicated region
      $region49: #{generator_forward.11} parent=47 // pred_check
        %p2789 = pneg %p130
      $region50: #{generator_forward.11} parent=47 // pred_check_branch
        %2791 = sbr.rel (%p2789) target = $region52
      $region51: #{generator_forward.11} parent=47 // pred_region
        %p2792 = scmp.lt.s32.totalorder %s18, 1
        %s2793 = scalar_select %p2792, %s18, 1
        %s2794 = smul.addr %s2793, 16
        %s2795 = smul.addr %s2794, 4
        %s2796 = scalar_lea.vmem %s4, %s2795
      $region52: #{generator_forward.11} parent=47 // pred_fallthru
        _
      // Predicated region
      $region53: #{generator_forward.11} parent=47 // pred_check
        %p2797 = pneg %p156
      $region54: #{generator_forward.11} parent=47 // pred_check_branch
        %2799 = sbr.rel (%p2797) target = $region56
      $region55: #{generator_forward.11} parent=47 // pred_region
        %p2800 = scmp.lt.s32.totalorder %s18, 1
        %s2801 = scalar_select %p2800, %s18, 1
        %s2802 = smul.addr %s2801, 2
        %s2803 = scalar_lea.vmem %s5, %s2802
      $region56: #{generator_forward.11} parent=47 // pred_fallthru
        _
    $region48: #{generator_forward.11} parent=5 // pred_fallthru
      _
  $region6: #{generator_forward.11} parent=0 // loop_footer
    %s16 = sadd.s32 1, %s12
  $region7: #{generator_forward.11} parent=0 // loop_footer_branch
    %11 = sbr.rel target = $region3
  $region8: #{generator_forward.11} parent=0 // loop_exit
    _

// kernel: generator_forward.13
$region0: #{generator_forward.13}
  #allocation0 [shape = 'u32[]', space=smem, size = 0x4, offset = 0x4, fixed_abs, tag = 'smem constant byte address 0x4 - core index']
  #allocation1 [shape = 'u32[144,128]{1,0:T(1,128)}', space=vmem, size = 0x12000, scoped, tag = 'internal scratch']
  %s0 = inlined_call_operand.vmem [shape: bf16[2,104,64], index: 0, kind: input, shape index: {}]
  %s1 = inlined_call_operand.vmem [shape: bf16[16,64,3], index: 1, kind: input, shape index: {}]
  %s2 = inlined_call_operand.vmem [shape: f32[1,3], index: 2, kind: input, shape index: {}]
  %s3 = inlined_call_operand.vmem [shape: f32[80,1], index: 3, kind: input, shape index: {}]
  %s4 = inlined_call_operand.vmem [shape: f32[2,4,80,3], index: 4, kind: output, shape index: {}]
  %s5 = sld [smem:[#allocation0]]
  $region49: #{generator_forward.13} parent=0
    _
  %s7 = ssub.s32 1, %s5
  %s8 = scalar_select 0, %s7, %s5
  loop: start=0, step=1, limit=4
  $region2: #{generator_forward.13} parent=0 // loop_pre_header
    _
  $region3: #{generator_forward.13} parent=0 // loop_header
    %s10 = sphi 0, %s14
    %p11 = scmp.ge.s32.totalorder %s10, 4
    %s20 = sphi 0, %s22
    %s23 = sphi 0, %s20
    %s24 = sphi 0, %s23
    %s40 = sphi 0, %s24
    %s44 = sphi 0, %s44
    %s46 = sphi 0, %s44
    %s47 = sphi 0, %s46
    %s61 = sphi 0, %s47
    %s65 = sphi 0, %s65
    %s67 = sphi 0, %s65
    %s68 = sphi 0, %s67
    %s82 = sphi 0, %s68
    %s86 = sphi 0, %s86
    %s88 = sphi 0, %s86
    %s89 = sphi 0, %s88
    %s103 = sphi 0, %s89
    %s109 = sphi 0, %s111
    %s112 = sphi 0, %s109
    %s113 = sphi 0, %s112
    %s129 = sphi 0, %s113
  $region4: #{generator_forward.13} parent=0 // loop_header_branch
    %13 = sbr.rel (%p11) target = $region8
  $region5: #{generator_forward.13} parent=0 // loop_body
    %s15 = ssub.s32 %s10, 1
    %s16 = ssub.s32 %s10, 2
    %s17 = sadd.s32 %s10, 1
    %s18 = ssub.s32 %s10, %s17
    %p19 = scmp.eq.s32.totalorder %s18, 0
    %s21 = sadd.s32 %s20, 1
    %s22 = scalar_select %p19, %s20, %s21
    %p25 = pneg %p19
    %p26 = scmp.eq.s32.totalorder %s10, 1
    %p27 = por %p25, %p26
    %p28 = scmp.ne.s32.totalorder %s20, %s23
    %p29 = scmp.eq.s32.totalorder %s10, 0
    %p30 = por %p28, %p29
    %p31 = scmp.ne.s32.totalorder %s20, %s23
    %p32 = scmp.eq.s32.totalorder %s15, 1
    %p33 = por %p31, %p32
    %p34 = scmp.ne.s32.totalorder %s23, %s24
    %p35 = scmp.eq.s32.totalorder %s15, 0
    %p36 = por %p34, %p35
    %p37 = scmp.ne.s32.totalorder %s23, %s24
    %p38 = scmp.eq.s32.totalorder %s16, 1
    %p39 = por %p37, %p38
    %p41 = scmp.ne.s32.totalorder %s24, %s40
    %p42 = scmp.eq.s32.totalorder %s16, 0
    %p43 = por %p41, %p42
    %s45 = sadd.s32 %s44, 1
    %p48 = scmp.eq.s32.totalorder %s10, 1
    %p49 = scmp.ne.s32.totalorder %s44, %s46
    %p50 = scmp.eq.s32.totalorder %s10, 0
    %p51 = por %p49, %p50
    %p52 = scmp.ne.s32.totalorder %s44, %s46
    %p53 = scmp.eq.s32.totalorder %s15, 1
    %p54 = por %p52, %p53
    %p55 = scmp.ne.s32.totalorder %s46, %s47
    %p56 = scmp.eq.s32.totalorder %s15, 0
    %p57 = por %p55, %p56
    %p58 = scmp.ne.s32.totalorder %s46, %s47
    %p59 = scmp.eq.s32.totalorder %s16, 1
    %p60 = por %p58, %p59
    %p62 = scmp.ne.s32.totalorder %s47, %s61
    %p63 = scmp.eq.s32.totalorder %s16, 0
    %p64 = por %p62, %p63
    %s66 = sadd.s32 %s65, 1
    %p69 = scmp.eq.s32.totalorder %s10, 1
    %p70 = scmp.ne.s32.totalorder %s65, %s67
    %p71 = scmp.eq.s32.totalorder %s10, 0
    %p72 = por %p70, %p71
    %p73 = scmp.ne.s32.totalorder %s65, %s67
    %p74 = scmp.eq.s32.totalorder %s15, 1
    %p75 = por %p73, %p74
    %p76 = scmp.ne.s32.totalorder %s67, %s68
    %p77 = scmp.eq.s32.totalorder %s15, 0
    %p78 = por %p76, %p77
    %p79 = scmp.ne.s32.totalorder %s67, %s68
    %p80 = scmp.eq.s32.totalorder %s16, 1
    %p81 = por %p79, %p80
    %p83 = scmp.ne.s32.totalorder %s68, %s82
    %p84 = scmp.eq.s32.totalorder %s16, 0
    %p85 = por %p83, %p84
    %s87 = sadd.s32 %s86, 1
    %p90 = scmp.eq.s32.totalorder %s10, 1
    %p91 = scmp.ne.s32.totalorder %s86, %s88
    %p92 = scmp.eq.s32.totalorder %s10, 0
    %p93 = por %p91, %p92
    %p94 = scmp.ne.s32.totalorder %s86, %s88
    %p95 = scmp.eq.s32.totalorder %s15, 1
    %p96 = por %p94, %p95
    %p97 = scmp.ne.s32.totalorder %s88, %s89
    %p98 = scmp.eq.s32.totalorder %s15, 0
    %p99 = por %p97, %p98
    %p100 = scmp.ne.s32.totalorder %s88, %s89
    %p101 = scmp.eq.s32.totalorder %s16, 1
    %p102 = por %p100, %p101
    %p104 = scmp.ne.s32.totalorder %s89, %s103
    %p105 = scmp.eq.s32.totalorder %s16, 0
    %p106 = por %p104, %p105
    %s107 = ssub.s32 %s10, %s17
    %p108 = scmp.eq.s32.totalorder %s107, 0
    %s110 = sadd.s32 %s109, 1
    %s111 = scalar_select %p108, %s109, %s110
    %p114 = pneg %p108
    %p115 = scmp.eq.s32.totalorder %s10, 1
    %p116 = por %p114, %p115
    %p117 = scmp.ne.s32.totalorder %s109, %s112
    %p118 = scmp.eq.s32.totalorder %s10, 0
    %p119 = por %p117, %p118
    %p120 = scmp.ne.s32.totalorder %s109, %s112
    %p121 = scmp.eq.s32.totalorder %s15, 1
    %p122 = por %p120, %p121
    %p123 = scmp.ne.s32.totalorder %s112, %s113
    %p124 = scmp.eq.s32.totalorder %s15, 0
    %p125 = por %p123, %p124
    %p126 = scmp.ne.s32.totalorder %s112, %s113
    %p127 = scmp.eq.s32.totalorder %s16, 1
    %p128 = por %p126, %p127
    %p130 = scmp.ne.s32.totalorder %s113, %s129
    %p131 = scmp.eq.s32.totalorder %s16, 0
    %p132 = por %p130, %p131
    %p133 = scmp.le.s32.totalorder 1, %s10
    %p134 = scmp.lt.s32.totalorder %s10, 3
    %p135 = pnand %p133, %p134
    %p136 = pneg %p135
    // Predicated region
    $region9: #{generator_forward.13} parent=5 // pred_check
      _
    $region10: #{generator_forward.13} parent=5 // pred_check_branch
      %138 = sbr.rel (%p135) target = $region12
    $region11: #{generator_forward.13} parent=5 // pred_region
      %s139 = ssub.s32 %s10, 1
      // Predicated region
      $region13: #{generator_forward.13} parent=11 // pred_check
        %p140 = pneg %p57
      $region14: #{generator_forward.13} parent=11 // pred_check_branch
        %142 = sbr.rel (%p140) target = $region16
      $region15: #{generator_forward.13} parent=11 // pred_region
        _
      $region16: #{generator_forward.13} parent=11 // pred_fallthru
        _
      // Predicated region
      $region17: #{generator_forward.13} parent=11 // pred_check
        %p143 = pneg %p78
      $region18: #{generator_forward.13} parent=11 // pred_check_branch
        %145 = sbr.rel (%p143) target = $region20
      $region19: #{generator_forward.13} parent=11 // pred_region
        _
      $region20: #{generator_forward.13} parent=11 // pred_fallthru
        _
      // Predicated region
      $region21: #{generator_forward.13} parent=11 // pred_check
        %p146 = pneg %p99
      $region22: #{generator_forward.13} parent=11 // pred_check_branch
        %148 = sbr.rel (%p146) target = $region24
      $region23: #{generator_forward.13} parent=11 // pred_region
        _
      $region24: #{generator_forward.13} parent=11 // pred_fallthru
        _
    $region12: #{generator_forward.13} parent=5 // pred_fallthru
      _
    %p149 = scmp.lt.s32.totalorder %s10, 2
    // Predicated region
    $region25: #{generator_forward.13} parent=5 // pred_check
      %p150 = pneg %p149
    $region26: #{generator_forward.13} parent=5 // pred_check_branch
      %152 = sbr.rel (%p150) target = $region28
    $region27: #{generator_forward.13} parent=5 // pred_region
      // Predicated region
      $region29: #{generator_forward.13} parent=27 // pred_check
        %p153 = pneg %p30
      $region30: #{generator_forward.13} parent=27 // pred_check_branch
        %155 = sbr.rel (%p153) target = $region32
      $region31: #{generator_forward.13} parent=27 // pred_region
        %p156 = scmp.lt.s32.totalorder %s10, 1
        %s157 = scalar_select %p156, %s10, 1
        %s158 = smul.addr %s157, 13
        %s159 = smul.addr %s158, 4
        %s160 = scalar_lea.vmem %s0, %s159
      $region32: #{generator_forward.13} parent=27 // pred_fallthru
        _
    $region28: #{generator_forward.13} parent=5 // pred_fallthru
      _
    %p161 = scmp.le.s32.totalorder 1, %s10
    %p162 = scmp.lt.s32.totalorder %s10, 3
    %p163 = pnand %p161, %p162
    %p164 = pneg %p163
    // Predicated region
    $region33: #{generator_forward.13} parent=5 // pred_check
      _
    $region34: #{generator_forward.13} parent=5 // pred_check_branch
      %166 = sbr.rel (%p163) target = $region36
    $region35: #{generator_forward.13} parent=5 // pred_region
      %s167 = ssub.s32 %s10, 1
      %p168 = scmp.lt.s32.totalorder %s15, 1
      %s169 = scalar_select %p168, %s15, 1
      %s170 = smul.addr %s169, 13
      %s171 = smul.addr %s170, 4
      %s172 = scalar_lea.vmem %s0, %s171
      %p173 = pneg %p36
      %p174 = pneg %p33
      %p175 = pneg %p57
      %p176 = pneg %p54
      %p177 = pneg %p78
      %p178 = pneg %p75
      %p179 = pneg %p99
      %p180 = pneg %p96
      %p181 = pneg %p125
      %p182 = pneg %p122
      %p183 = scmp.lt.s32.totalorder %s15, 1
      %s184 = scalar_select %p183, %s15, 1
      %s185 = smul.addr %s184, 40
      %s186 = smul.addr %s185, 8
      %s187 = scalar_lea.vmem %s4, %s186
      %p188 = scmp.lt.s32.totalorder %s15, 1
      %s189 = scalar_select %p188, %s15, 1
      %s190 = smul.addr %s189, 13
      %s191 = smul.addr %s190, 4
      %s192 = scalar_lea.vmem %s0, %s191
      %p193 = scmp.lt.s32.totalorder %s15, 1
      %s194 = scalar_select %p193, %s15, 1
      %s195 = smul.addr %s194, 40
      %s196 = smul.addr %s195, 8
      %s197 = scalar_lea.vmem %s4, %s196
      %v199 = vld [vmem:[%s2] sm:$0x1]
      %v200 = vld [vmem:[%s192] sm:$0xf]
      %v201 = vld [vmem:[%s192 + $0x4] sm:$0xf]
      %v202 = vld [vmem:[%s192 + $0x8] sm:$0xf]
      %v203 = vld [vmem:[%s192 + $0xc] sm:$0xf]
      %v204 = vld [vmem:[%s192 + $0x10] sm:$0xf]
      %v205 = vld [vmem:[%s192 + $0x14] sm:$0xf]
      %v206 = vld [vmem:[%s192 + $0x18] sm:$0xf]
      %v207 = vld [vmem:[%s192 + $0x1c] sm:$0xf]
      %v208 = vld [vmem:[%s192 + $0x20] sm:$0xf]
      %v209 = vld [vmem:[%s192 + $0x24] sm:$0xf]
      %v210 = vld [vmem:[%s1] sm:$0xf]
      %v211 = vld [vmem:[%s1 + $0x4] sm:$0xf]
      %v212 = vld [vmem:[%s1 + $0x8] sm:$0xf]
      %v213 = vld [vmem:[%s1 + $0xc] sm:$0xf]
      %v214 = vld [vmem:[%s1 + $0x10] sm:$0xf]
      %v215 = vld [vmem:[%s1 + $0x14] sm:$0xf]
      %v216 = vld [vmem:[%s1 + $0x18] sm:$0xf]
      %v217 = vld [vmem:[%s1 + $0x1c] sm:$0xf]
      %v218 = vld [vmem:[%s192 + $0x28] sm:$0x1]
      %s219 = scalar_lea.vmem %s1, 32
      %v220 = vld [vmem:[%s219] sm:$0xf]
      %v221 = vld [vmem:[%s219 + $0x4] sm:$0xf]
      %v222 = vld [vmem:[%s219 + $0x8] sm:$0xf]
      %v223 = vld [vmem:[%s219 + $0xc] sm:$0xf]
      %v224 = vld [vmem:[%s219 + $0x10] sm:$0xf]
      %v225 = vld [vmem:[%s219 + $0x14] sm:$0xf]
      %v226 = vld [vmem:[%s219 + $0x18] sm:$0xf]
      %v227 = vld [vmem:[%s219 + $0x1c] sm:$0xf]
      %v239 = vunpack.c.l.b16 %v200
      %v240 = vunpack.c.l.b16 %v201
      %v241 = vunpack.c.l.b16 %v202
      %v242 = vunpack.c.l.b16 %v203
      %v243 = vunpack.c.l.b16 %v204
      %v244 = vunpack.c.l.b16 %v205
      %v245 = vunpack.c.l.b16 %v206
      %v246 = vunpack.c.l.b16 %v207
      %v247 = vunpack.c.l.b16 %v208
      %v248 = vunpack.c.l.b16 %v209
      %v249 = vunpack.c.l.b16 %v218
      %v250 = vpack.c.b16 %v240, %v239
      %v251 = vpack.c.b16 %v242, %v241
      %v252 = vpack.c.b16 %v244, %v243
      %v253 = vpack.c.b16 %v246, %v245
      %v254 = vpack.c.b16 %v248, %v247
      %v255 = vpack.c.b16 %v249, %v249
      %vm256 = vsmask.f32 7424
      %v258 = vshrl.u32 %v250, 16
      %v260 = vshll.u32 %v250, 16
      %v262 = vrot.slane %v260, 1
      %v263 = vor.u32 %v258, %v262
      %v265 = vshll.u32 %v251, 16
      %v267 = vrot.slane %v265, 1
      %v268 = vsel %vm256, %v263, %v267
      %v269 = vshrl.u32 %v251, 16
      %v271 = vor.u32 %v269, %v267
      %v273 = vshll.u32 %v252, 16
      %v275 = vrot.slane %v273, 1
      %v276 = vsel %vm256, %v271, %v275
      %v277 = vshrl.u32 %v252, 16
      %v279 = vor.u32 %v277, %v275
      %v281 = vshll.u32 %v253, 16
      %v283 = vrot.slane %v281, 1
      %v284 = vsel %vm256, %v279, %v283
      %v285 = vshrl.u32 %v253, 16
      %v287 = vor.u32 %v285, %v283
      %v289 = vshll.u32 %v254, 16
      %v291 = vrot.slane %v289, 1
      %v292 = vsel %vm256, %v287, %v291
      %v293 = vshrl.u32 %v254, 16
      %v295 = vor.u32 %v293, %v291
      %v297 = vshll.u32 %v255, 16
      %v299 = vrot.slane %v297, 1
      %v300 = vsel %vm256, %v295, %v299
      %v309 = vunpack.c.l.b16 %v220
      %v310 = vunpack.c.l.b16 %v221
      %v311 = vunpack.c.l.b16 %v222
      %v312 = vunpack.c.l.b16 %v223
      %v313 = vunpack.c.l.b16 %v224
      %v314 = vunpack.c.l.b16 %v225
      %v315 = vunpack.c.l.b16 %v226
      %v316 = vunpack.c.l.b16 %v227
      %v317 = vpack.c.b16 %v310, %v309
      %v318 = vpack.c.b16 %v312, %v311
      %v319 = vpack.c.b16 %v314, %v313
      %v320 = vpack.c.b16 %v316, %v315
      %vm325 = vcmask 523264
      %v327 = vsel %vm325, %v268, 0
      %v330 = vsel %vm325, %v276, 0
      %v333 = vsel %vm325, %v284, 0
      %v336 = vsel %vm325, %v292, 0
      %v339 = vsel %vm325, %v300, 0
      %341 = vmatprep.subr.bf16.mxu0 0
      %342 = vmatpush1.bf16.msra.mxu0 0
      %343 = vmatprep.subr.bf16.mxu0 0
      %344 = vmatpush1.bf16.msra.mxu0 0
      %345 = vmatprep.subr.bf16.mxu0 0
      %346 = vmatpush1.bf16.msra.mxu0 0
      %347 = vmatprep.subr.bf16.mxu0 0
      %348 = vmatpush1.bf16.msra.mxu0 0
      %349 = vmatprep.subr.bf16.mxu0 0
      %350 = vmatpush1.bf16.msra.mxu0 %v320
      %351 = vmatprep.subr.bf16.mxu0 0
      %352 = vmatpush1.bf16.msra.mxu0 %v319
      %353 = vmatprep.subr.bf16.mxu0 0
      %354 = vmatpush1.bf16.msra.mxu0 %v318
      %355 = vmatprep.subr.bf16.mxu0 0
      %356 = vmatpush1.bf16.msra.mxu0 %v317
      %357 = vmatprep.subr.bf16.mxu0 0
      %358 = vmatpush2.bf16.msra.mxu0 0
      %359 = vmatprep.subr.bf16.mxu0 0
      %360 = vmatpush2.bf16.msra.mxu0 0
      %361 = vmatprep.subr.bf16.mxu0 0
      %362 = vmatpush2.bf16.msra.mxu0 0
      %363 = vmatprep.subr.bf16.mxu0 0
      %364 = vmatpush2.bf16.msra.mxu0 0
      %365 = vmatprep.subr.bf16.mxu0 0
      %366 = vmatpush2.bf16.msra.mxu0 0
      %367 = vmatprep.subr.bf16.mxu0 0
      %368 = vmatpush2.bf16.msra.mxu0 0
      %369 = vmatprep.subr.bf16.mxu0 0
      %370 = vmatpush2.bf16.msra.mxu0 0
      %371 = vmatprep.subr.bf16.mxu0 0
      %372 = vmatpush2.bf16.msra.mxu0 0
      %373 = vmatprep.mubr.bf16.mxu0 0
      %374 = vmatmul.mubr.bf16.gmra.mxu0 %v327
      %v375 = vpop.f32.mrf.mxu0
      %v376 = vadd.f32 0.0, %v375
      %v377 = vpop.f32.mrf.mxu0
      %v378 = vpop.f32.mrf.mxu0
      %v379 = vadd.f32 0.0, %v378
      %v380 = vpop.f32.mrf.mxu0
      %381 = vmatprep.mubr.bf16.mxu0 0
      %382 = vmatmul.mubr.bf16.gmra.mxu0 %v330
      %v383 = vpop.f32.mrf.mxu0
      %v384 = vadd.f32 0.0, %v383
      %v385 = vpop.f32.mrf.mxu0
      %v386 = vpop.f32.mrf.mxu0
      %v387 = vadd.f32 0.0, %v386
      %v388 = vpop.f32.mrf.mxu0
      %389 = vmatprep.mubr.bf16.mxu0 0
      %390 = vmatmul.mubr.bf16.gmra.mxu0 %v333
      %v391 = vpop.f32.mrf.mxu0
      %v392 = vadd.f32 0.0, %v391
      %v393 = vpop.f32.mrf.mxu0
      %v394 = vpop.f32.mrf.mxu0
      %v395 = vadd.f32 0.0, %v394
      %v396 = vpop.f32.mrf.mxu0
      %397 = vmatprep.mubr.bf16.mxu0 0
      %398 = vmatmul.mubr.bf16.gmra.mxu0 %v336
      %v399 = vpop.f32.mrf.mxu0
      %v400 = vadd.f32 0.0, %v399
      %v401 = vpop.f32.mrf.mxu0
      %v402 = vpop.f32.mrf.mxu0
      %v403 = vadd.f32 0.0, %v402
      %v404 = vpop.f32.mrf.mxu0
      %405 = vmatprep.mubr.bf16.mxu0 0
      %406 = vmatmul.mubr.bf16.gmra.mxu0 %v339
      %v407 = vpop.f32.mrf.mxu0
      %v408 = vadd.f32 0.0, %v407
      %v409 = vpop.f32.mrf.mxu0
      %v410 = vpop.f32.mrf.mxu0
      %v411 = vadd.f32 0.0, %v410
      %v412 = vpop.f32.mrf.mxu0
      %413 = vdwg.mxu0
      %v422 = vunpack.c.l.b16 %v210
      %v423 = vunpack.c.l.b16 %v211
      %v424 = vunpack.c.l.b16 %v212
      %v425 = vunpack.c.l.b16 %v213
      %v426 = vunpack.c.l.b16 %v214
      %v427 = vunpack.c.l.b16 %v215
      %v428 = vunpack.c.l.b16 %v216
      %v429 = vunpack.c.l.b16 %v217
      %v430 = vpack.c.b16 %v423, %v422
      %v431 = vpack.c.b16 %v425, %v424
      %v432 = vpack.c.b16 %v427, %v426
      %v433 = vpack.c.b16 %v429, %v428
      %v438 = vsel %vm325, %v250, 0
      %v440 = vsel %vm325, %v251, 0
      %v442 = vsel %vm325, %v252, 0
      %v444 = vsel %vm325, %v253, 0
      %v446 = vsel %vm325, %v254, 0
      %448 = vmatprep.subr.bf16.mxu0 0
      %449 = vmatpush1.bf16.msra.mxu0 0
      %450 = vmatprep.subr.bf16.mxu0 0
      %451 = vmatpush1.bf16.msra.mxu0 0
      %452 = vmatprep.subr.bf16.mxu0 0
      %453 = vmatpush1.bf16.msra.mxu0 0
      %454 = vmatprep.subr.bf16.mxu0 0
      %455 = vmatpush1.bf16.msra.mxu0 0
      %456 = vmatprep.subr.bf16.mxu0 0
      %457 = vmatpush1.bf16.msra.mxu0 %v433
      %458 = vmatprep.subr.bf16.mxu0 0
      %459 = vmatpush1.bf16.msra.mxu0 %v432
      %460 = vmatprep.subr.bf16.mxu0 0
      %461 = vmatpush1.bf16.msra.mxu0 %v431
      %462 = vmatprep.subr.bf16.mxu0 0
      %463 = vmatpush1.bf16.msra.mxu0 %v430
      %464 = vmatprep.subr.bf16.mxu0 0
      %465 = vmatpush2.bf16.msra.mxu0 0
      %466 = vmatprep.subr.bf16.mxu0 0
      %467 = vmatpush2.bf16.msra.mxu0 0
      %468 = vmatprep.subr.bf16.mxu0 0
      %469 = vmatpush2.bf16.msra.mxu0 0
      %470 = vmatprep.subr.bf16.mxu0 0
      %471 = vmatpush2.bf16.msra.mxu0 0
      %472 = vmatprep.subr.bf16.mxu0 0
      %473 = vmatpush2.bf16.msra.mxu0 0
      %474 = vmatprep.subr.bf16.mxu0 0
      %475 = vmatpush2.bf16.msra.mxu0 0
      %476 = vmatprep.subr.bf16.mxu0 0
      %477 = vmatpush2.bf16.msra.mxu0 0
      %478 = vmatprep.subr.bf16.mxu0 0
      %479 = vmatpush2.bf16.msra.mxu0 0
      %480 = vmatprep.mubr.bf16.mxu0 0
      %481 = vmatmul.mubr.bf16.gmra.mxu0 %v438
      %v482 = vpop.f32.mrf.mxu0
      %v483 = vadd.f32 %v376, %v482
      %v484 = vpop.f32.mrf.mxu0
      %v485 = vpop.f32.mrf.mxu0
      %v486 = vadd.f32 %v379, %v485
      %v487 = vpop.f32.mrf.mxu0
      %488 = vmatprep.mubr.bf16.mxu0 0
      %489 = vmatmul.mubr.bf16.gmra.mxu0 %v440
      %v490 = vpop.f32.mrf.mxu0
      %v491 = vadd.f32 %v384, %v490
      %v492 = vpop.f32.mrf.mxu0
      %v493 = vpop.f32.mrf.mxu0
      %v494 = vadd.f32 %v387, %v493
      %v495 = vpop.f32.mrf.mxu0
      %496 = vmatprep.mubr.bf16.mxu0 0
      %497 = vmatmul.mubr.bf16.gmra.mxu0 %v442
      %v498 = vpop.f32.mrf.mxu0
      %v499 = vadd.f32 %v392, %v498
      %v500 = vpop.f32.mrf.mxu0
      %v501 = vpop.f32.mrf.mxu0
      %v502 = vadd.f32 %v395, %v501
      %v503 = vpop.f32.mrf.mxu0
      %504 = vmatprep.mubr.bf16.mxu0 0
      %505 = vmatmul.mubr.bf16.gmra.mxu0 %v444
      %v506 = vpop.f32.mrf.mxu0
      %v507 = vadd.f32 %v400, %v506
      %v508 = vpop.f32.mrf.mxu0
      %v509 = vpop.f32.mrf.mxu0
      %v510 = vadd.f32 %v403, %v509
      %v511 = vpop.f32.mrf.mxu0
      %512 = vmatprep.mubr.bf16.mxu0 0
      %513 = vmatmul.mubr.bf16.gmra.mxu0 %v446
      %v514 = vpop.f32.mrf.mxu0
      %v515 = vadd.f32 %v408, %v514
      %v516 = vpop.f32.mrf.mxu0
      %v517 = vpop.f32.mrf.mxu0
      %v518 = vadd.f32 %v411, %v517
      %v519 = vpop.f32.mrf.mxu0
      %520 = vdwg.mxu0
      %v521 = vld [vmem:[%s192 + $0x4] sm:$0xe]
      %v522 = vld [vmem:[%s192 + $0x8] sm:$0xf]
      %v523 = vld [vmem:[%s192 + $0xc] sm:$0xf]
      %v524 = vld [vmem:[%s192 + $0x10] sm:$0xf]
      %v525 = vld [vmem:[%s192 + $0x14] sm:$0xf]
      %v526 = vld [vmem:[%s192 + $0x18] sm:$0xf]
      %v527 = vld [vmem:[%s192 + $0x1c] sm:$0xf]
      %v528 = vld [vmem:[%s192 + $0x20] sm:$0xf]
      %v529 = vld [vmem:[%s192 + $0x24] sm:$0xf]
      %v530 = vld [vmem:[%s192 + $0x28] sm:$0xf]
      %v531 = vld [vmem:[%s192 + $0x2c] sm:$0x1]
      %s532 = scalar_lea.vmem %s1, 64
      %v533 = vld [vmem:[%s532] sm:$0xf]
      %v534 = vld [vmem:[%s532 + $0x4] sm:$0xf]
      %v535 = vld [vmem:[%s532 + $0x8] sm:$0xf]
      %v536 = vld [vmem:[%s532 + $0xc] sm:$0xf]
      %v537 = vld [vmem:[%s532 + $0x10] sm:$0xf]
      %v538 = vld [vmem:[%s532 + $0x14] sm:$0xf]
      %v539 = vld [vmem:[%s532 + $0x18] sm:$0xf]
      %v540 = vld [vmem:[%s532 + $0x1c] sm:$0xf]
      %v552 = vunpack.c.l.b16 %v521
      %v553 = vunpack.c.l.b16 %v522
      %v554 = vunpack.c.l.b16 %v523
      %v555 = vunpack.c.l.b16 %v524
      %v556 = vunpack.c.l.b16 %v525
      %v557 = vunpack.c.l.b16 %v526
      %v558 = vunpack.c.l.b16 %v527
      %v559 = vunpack.c.l.b16 %v528
      %v560 = vunpack.c.l.b16 %v529
      %v561 = vunpack.c.l.b16 %v530
      %v562 = vunpack.c.l.b16 %v531
      %v563 = vpack.c.b16 %v553, %v552
      %v564 = vpack.c.b16 %v555, %v554
      %v565 = vpack.c.b16 %v557, %v556
      %v566 = vpack.c.b16 %v559, %v558
      %v567 = vpack.c.b16 %v561, %v560
      %v568 = vpack.c.b16 %v562, %v562
      %vm569 = vcmask 1046528
      %v570 = vrot.slane %v563, 1
      %v571 = vrot.slane %v564, 1
      %v572 = vsel %vm569, %v570, %v571
      %v573 = vrot.slane %v565, 1
      %v574 = vsel %vm569, %v571, %v573
      %v575 = vrot.slane %v566, 1
      %v576 = vsel %vm569, %v573, %v575
      %v577 = vrot.slane %v567, 1
      %v578 = vsel %vm569, %v575, %v577
      %v579 = vrot.slane %v568, 1
      %v580 = vsel %vm569, %v577, %v579
      %v589 = vunpack.c.l.b16 %v533
      %v590 = vunpack.c.l.b16 %v534
      %v591 = vunpack.c.l.b16 %v535
      %v592 = vunpack.c.l.b16 %v536
      %v593 = vunpack.c.l.b16 %v537
      %v594 = vunpack.c.l.b16 %v538
      %v595 = vunpack.c.l.b16 %v539
      %v596 = vunpack.c.l.b16 %v540
      %v597 = vpack.c.b16 %v590, %v589
      %v598 = vpack.c.b16 %v592, %v591
      %v599 = vpack.c.b16 %v594, %v593
      %v600 = vpack.c.b16 %v596, %v595
      %v606 = vsel %vm325, %v572, 0
      %v609 = vsel %vm325, %v574, 0
      %v612 = vsel %vm325, %v576, 0
      %v615 = vsel %vm325, %v578, 0
      %v618 = vsel %vm325, %v580, 0
      %620 = vmatprep.subr.bf16.mxu0 0
      %621 = vmatpush1.bf16.msra.mxu0 0
      %622 = vmatprep.subr.bf16.mxu0 0
      %623 = vmatpush1.bf16.msra.mxu0 0
      %624 = vmatprep.subr.bf16.mxu0 0
      %625 = vmatpush1.bf16.msra.mxu0 0
      %626 = vmatprep.subr.bf16.mxu0 0
      %627 = vmatpush1.bf16.msra.mxu0 0
      %628 = vmatprep.subr.bf16.mxu0 0
      %629 = vmatpush1.bf16.msra.mxu0 %v600
      %630 = vmatprep.subr.bf16.mxu0 0
      %631 = vmatpush1.bf16.msra.mxu0 %v599
      %632 = vmatprep.subr.bf16.mxu0 0
      %633 = vmatpush1.bf16.msra.mxu0 %v598
      %634 = vmatprep.subr.bf16.mxu0 0
      %635 = vmatpush1.bf16.msra.mxu0 %v597
      %636 = vmatprep.subr.bf16.mxu0 0
      %637 = vmatpush2.bf16.msra.mxu0 0
      %638 = vmatprep.subr.bf16.mxu0 0
      %639 = vmatpush2.bf16.msra.mxu0 0
      %640 = vmatprep.subr.bf16.mxu0 0
      %641 = vmatpush2.bf16.msra.mxu0 0
      %642 = vmatprep.subr.bf16.mxu0 0
      %643 = vmatpush2.bf16.msra.mxu0 0
      %644 = vmatprep.subr.bf16.mxu0 0
      %645 = vmatpush2.bf16.msra.mxu0 0
      %646 = vmatprep.subr.bf16.mxu0 0
      %647 = vmatpush2.bf16.msra.mxu0 0
      %648 = vmatprep.subr.bf16.mxu0 0
      %649 = vmatpush2.bf16.msra.mxu0 0
      %650 = vmatprep.subr.bf16.mxu0 0
      %651 = vmatpush2.bf16.msra.mxu0 0
      %652 = vmatprep.mubr.bf16.mxu0 0
      %653 = vmatmul.mubr.bf16.gmra.mxu0 %v606
      %v654 = vpop.f32.mrf.mxu0
      %v655 = vadd.f32 0.0, %v654
      %v656 = vpop.f32.mrf.mxu0
      %v657 = vpop.f32.mrf.mxu0
      %v658 = vadd.f32 0.0, %v657
      %v659 = vpop.f32.mrf.mxu0
      %660 = vmatprep.mubr.bf16.mxu0 0
      %661 = vmatmul.mubr.bf16.gmra.mxu0 %v609
      %v662 = vpop.f32.mrf.mxu0
      %v663 = vadd.f32 0.0, %v662
      %v664 = vpop.f32.mrf.mxu0
      %v665 = vpop.f32.mrf.mxu0
      %v666 = vadd.f32 0.0, %v665
      %v667 = vpop.f32.mrf.mxu0
      %668 = vmatprep.mubr.bf16.mxu0 0
      %669 = vmatmul.mubr.bf16.gmra.mxu0 %v612
      %v670 = vpop.f32.mrf.mxu0
      %v671 = vadd.f32 0.0, %v670
      %v672 = vpop.f32.mrf.mxu0
      %v673 = vpop.f32.mrf.mxu0
      %v674 = vadd.f32 0.0, %v673
      %v675 = vpop.f32.mrf.mxu0
      %676 = vmatprep.mubr.bf16.mxu0 0
      %677 = vmatmul.mubr.bf16.gmra.mxu0 %v615
      %v678 = vpop.f32.mrf.mxu0
      %v679 = vadd.f32 0.0, %v678
      %v680 = vpop.f32.mrf.mxu0
      %v681 = vpop.f32.mrf.mxu0
      %v682 = vadd.f32 0.0, %v681
      %v683 = vpop.f32.mrf.mxu0
      %684 = vmatprep.mubr.bf16.mxu0 0
      %685 = vmatmul.mubr.bf16.gmra.mxu0 %v618
      %v686 = vpop.f32.mrf.mxu0
      %v687 = vadd.f32 0.0, %v686
      %v688 = vpop.f32.mrf.mxu0
      %v689 = vpop.f32.mrf.mxu0
      %v690 = vadd.f32 0.0, %v689
      %v691 = vpop.f32.mrf.mxu0
      %692 = vdwg.mxu0
      %v693 = vadd.f32 %v483, %v655
      %v694 = vadd.f32 %v486, %v658
      %v695 = vadd.f32 %v491, %v663
      %v696 = vadd.f32 %v494, %v666
      %v697 = vadd.f32 %v499, %v671
      %v698 = vadd.f32 %v502, %v674
      %v699 = vadd.f32 %v507, %v679
      %v700 = vadd.f32 %v510, %v682
      %v701 = vadd.f32 %v515, %v687
      %v702 = vadd.f32 %v518, %v690
      %v703 = vld [vmem:[%s192 + $0x2c] sm:$0x3]
      %s704 = scalar_lea.vmem %s1, 96
      %v705 = vld [vmem:[%s704] sm:$0xf]
      %v706 = vld [vmem:[%s704 + $0x4] sm:$0xf]
      %v707 = vld [vmem:[%s704 + $0x8] sm:$0xf]
      %v708 = vld [vmem:[%s704 + $0xc] sm:$0xf]
      %v709 = vld [vmem:[%s704 + $0x10] sm:$0xf]
      %v710 = vld [vmem:[%s704 + $0x14] sm:$0xf]
      %v711 = vld [vmem:[%s704 + $0x18] sm:$0xf]
      %v712 = vld [vmem:[%s704 + $0x1c] sm:$0xf]
      %v714 = vunpack.c.l.b16 %v703
      %v715 = vpack.c.b16 %v714, %v714
      %vm716 = vsmask.f32 6400
      %v718 = vshrl.u32 %v563, 16
      %v720 = vrot.slane %v718, 1
      %v721 = vshll.u32 %v563, 16
      %v723 = vrot.slane %v721, 2
      %v724 = vor.u32 %v720, %v723
      %v726 = vshrl.u32 %v564, 16
      %v728 = vrot.slane %v726, 1
      %v729 = vshll.u32 %v564, 16
      %v731 = vrot.slane %v729, 2
      %v732 = vor.u32 %v728, %v731
      %v733 = vsel %vm716, %v724, %v732
      %v735 = vshrl.u32 %v565, 16
      %v737 = vrot.slane %v735, 1
      %v738 = vshll.u32 %v565, 16
      %v740 = vrot.slane %v738, 2
      %v741 = vor.u32 %v737, %v740
      %v742 = vsel %vm716, %v732, %v741
      %v744 = vshrl.u32 %v566, 16
      %v746 = vrot.slane %v744, 1
      %v747 = vshll.u32 %v566, 16
      %v749 = vrot.slane %v747, 2
      %v750 = vor.u32 %v746, %v749
      %v751 = vsel %vm716, %v741, %v750
      %v753 = vshrl.u32 %v567, 16
      %v755 = vrot.slane %v753, 1
      %v756 = vshll.u32 %v567, 16
      %v758 = vrot.slane %v756, 2
      %v759 = vor.u32 %v755, %v758
      %v760 = vsel %vm716, %v750, %v759
      %v762 = vshrl.u32 %v715, 16
      %v764 = vrot.slane %v762, 1
      %v765 = vshll.u32 %v715, 16
      %v767 = vrot.slane %v765, 2
      %v768 = vor.u32 %v764, %v767
      %v769 = vsel %vm716, %v759, %v768
      %v778 = vunpack.c.l.b16 %v705
      %v779 = vunpack.c.l.b16 %v706
      %v780 = vunpack.c.l.b16 %v707
      %v781 = vunpack.c.l.b16 %v708
      %v782 = vunpack.c.l.b16 %v709
      %v783 = vunpack.c.l.b16 %v710
      %v784 = vunpack.c.l.b16 %v711
      %v785 = vunpack.c.l.b16 %v712
      %v786 = vpack.c.b16 %v779, %v778
      %v787 = vpack.c.b16 %v781, %v780
      %v788 = vpack.c.b16 %v783, %v782
      %v789 = vpack.c.b16 %v785, %v784
      %v795 = vsel %vm325, %v733, 0
      %v798 = vsel %vm325, %v742, 0
      %v801 = vsel %vm325, %v751, 0
      %v804 = vsel %vm325, %v760, 0
      %v807 = vsel %vm325, %v769, 0
      %809 = vmatprep.subr.bf16.mxu0 0
      %810 = vmatpush1.bf16.msra.mxu0 0
      %811 = vmatprep.subr.bf16.mxu0 0
      %812 = vmatpush1.bf16.msra.mxu0 0
      %813 = vmatprep.subr.bf16.mxu0 0
      %814 = vmatpush1.bf16.msra.mxu0 0
      %815 = vmatprep.subr.bf16.mxu0 0
      %816 = vmatpush1.bf16.msra.mxu0 0
      %817 = vmatprep.subr.bf16.mxu0 0
      %818 = vmatpush1.bf16.msra.mxu0 %v789
      %819 = vmatprep.subr.bf16.mxu0 0
      %820 = vmatpush1.bf16.msra.mxu0 %v788
      %821 = vmatprep.subr.bf16.mxu0 0
      %822 = vmatpush1.bf16.msra.mxu0 %v787
      %823 = vmatprep.subr.bf16.mxu0 0
      %824 = vmatpush1.bf16.msra.mxu0 %v786
      %825 = vmatprep.subr.bf16.mxu0 0
      %826 = vmatpush2.bf16.msra.mxu0 0
      %827 = vmatprep.subr.bf16.mxu0 0
      %828 = vmatpush2.bf16.msra.mxu0 0
      %829 = vmatprep.subr.bf16.mxu0 0
      %830 = vmatpush2.bf16.msra.mxu0 0
      %831 = vmatprep.subr.bf16.mxu0 0
      %832 = vmatpush2.bf16.msra.mxu0 0
      %833 = vmatprep.subr.bf16.mxu0 0
      %834 = vmatpush2.bf16.msra.mxu0 0
      %835 = vmatprep.subr.bf16.mxu0 0
      %836 = vmatpush2.bf16.msra.mxu0 0
      %837 = vmatprep.subr.bf16.mxu0 0
      %838 = vmatpush2.bf16.msra.mxu0 0
      %839 = vmatprep.subr.bf16.mxu0 0
      %840 = vmatpush2.bf16.msra.mxu0 0
      %841 = vmatprep.mubr.bf16.mxu0 0
      %842 = vmatmul.mubr.bf16.gmra.mxu0 %v795
      %v843 = vpop.f32.mrf.mxu0
      %v844 = vadd.f32 0.0, %v843
      %v845 = vpop.f32.mrf.mxu0
      %v846 = vpop.f32.mrf.mxu0
      %v847 = vadd.f32 0.0, %v846
      %v848 = vpop.f32.mrf.mxu0
      %849 = vmatprep.mubr.bf16.mxu0 0
      %850 = vmatmul.mubr.bf16.gmra.mxu0 %v798
      %v851 = vpop.f32.mrf.mxu0
      %v852 = vadd.f32 0.0, %v851
      %v853 = vpop.f32.mrf.mxu0
      %v854 = vpop.f32.mrf.mxu0
      %v855 = vadd.f32 0.0, %v854
      %v856 = vpop.f32.mrf.mxu0
      %857 = vmatprep.mubr.bf16.mxu0 0
      %858 = vmatmul.mubr.bf16.gmra.mxu0 %v801
      %v859 = vpop.f32.mrf.mxu0
      %v860 = vadd.f32 0.0, %v859
      %v861 = vpop.f32.mrf.mxu0
      %v862 = vpop.f32.mrf.mxu0
      %v863 = vadd.f32 0.0, %v862
      %v864 = vpop.f32.mrf.mxu0
      %865 = vmatprep.mubr.bf16.mxu0 0
      %866 = vmatmul.mubr.bf16.gmra.mxu0 %v804
      %v867 = vpop.f32.mrf.mxu0
      %v868 = vadd.f32 0.0, %v867
      %v869 = vpop.f32.mrf.mxu0
      %v870 = vpop.f32.mrf.mxu0
      %v871 = vadd.f32 0.0, %v870
      %v872 = vpop.f32.mrf.mxu0
      %873 = vmatprep.mubr.bf16.mxu0 0
      %874 = vmatmul.mubr.bf16.gmra.mxu0 %v807
      %v875 = vpop.f32.mrf.mxu0
      %v876 = vadd.f32 0.0, %v875
      %v877 = vpop.f32.mrf.mxu0
      %v878 = vpop.f32.mrf.mxu0
      %v879 = vadd.f32 0.0, %v878
      %v880 = vpop.f32.mrf.mxu0
      %881 = vdwg.mxu0
      %v882 = vadd.f32 %v693, %v844
      %v883 = vadd.f32 %v694, %v847
      %v884 = vadd.f32 %v695, %v852
      %v885 = vadd.f32 %v696, %v855
      %v886 = vadd.f32 %v697, %v860
      %v887 = vadd.f32 %v698, %v863
      %v888 = vadd.f32 %v699, %v868
      %v889 = vadd.f32 %v700, %v871
      %v890 = vadd.f32 %v701, %v876
      %v891 = vadd.f32 %v702, %v879
      %v893 = vlaneseq
      %v894 = vshrl.u32 %v893, 7
      %v895 = vsub.s32 0, %v894
      %v896 = vrot.slane %v199, %v895
      %v898 = vadd.f32 %v882, %v896
      %v899 = vadd.f32 %v883, %v896
      %v900 = vadd.f32 %v884, %v896
      %v901 = vadd.f32 %v885, %v896
      %v902 = vadd.f32 %v886, %v896
      %v903 = vadd.f32 %v887, %v896
      %v904 = vadd.f32 %v888, %v896
      %v905 = vadd.f32 %v889, %v896
      %v906 = vadd.f32 %v890, %v896
      %v907 = vadd.f32 %v891, %v896
      %v908 = vtanh.pop %v898
      %v909 = vtanh.pop %v899
      %v910 = vtanh.pop %v900
      %v911 = vtanh.pop %v901
      %v912 = vtanh.pop %v902
      %v913 = vtanh.pop %v903
      %v914 = vtanh.pop %v904
      %v915 = vtanh.pop %v905
      %v916 = vtanh.pop %v906
      %v917 = vtanh.pop %v907
      %vm918 = vcmask 23552
      %919 = vst.msk [vmem:[%s197] sm:$0xff] %vm918, %v908
      %920 = vst.msk [vmem:[%s197 + $0x8] sm:$0xff] %vm918, %v909
      %921 = vst.msk [vmem:[%s197 + $0x10] sm:$0xff] %vm918, %v910
      %922 = vst.msk [vmem:[%s197 + $0x18] sm:$0xff] %vm918, %v911
      %923 = vst.msk [vmem:[%s197 + $0x20] sm:$0xff] %vm918, %v912
      %924 = vst.msk [vmem:[%s197 + $0x28] sm:$0xff] %vm918, %v913
      %925 = vst.msk [vmem:[%s197 + $0x30] sm:$0xff] %vm918, %v914
      %926 = vst.msk [vmem:[%s197 + $0x38] sm:$0xff] %vm918, %v915
      %927 = vst.msk [vmem:[%s197 + $0x40] sm:$0xff] %vm918, %v916
      %928 = vst.msk [vmem:[%s197 + $0x48] sm:$0xff] %vm918, %v917
      %v929 = vld [vmem:[%s192] sm:$0xf]
      %v930 = vld [vmem:[%s192 + $0x4] sm:$0xf]
      %v931 = vld [vmem:[%s192 + $0x8] sm:$0xf]
      %v932 = vld [vmem:[%s192 + $0xc] sm:$0xf]
      %v933 = vld [vmem:[%s192 + $0x10] sm:$0xf]
      %v934 = vld [vmem:[%s192 + $0x14] sm:$0xf]
      %v935 = vld [vmem:[%s192 + $0x18] sm:$0xf]
      %v936 = vld [vmem:[%s192 + $0x1c] sm:$0xf]
      %v937 = vld [vmem:[%s192 + $0x20] sm:$0xf]
      %v938 = vld [vmem:[%s192 + $0x24] sm:$0xf]
      %v939 = vld [vmem:[%s192 + $0x28] sm:$0x1]
      %s940 = scalar_lea.vmem %s1, 128
      %v941 = vld [vmem:[%s940] sm:$0xf]
      %v942 = vld [vmem:[%s940 + $0x4] sm:$0xf]
      %v943 = vld [vmem:[%s940 + $0x8] sm:$0xf]
      %v944 = vld [vmem:[%s940 + $0xc] sm:$0xf]
      %v945 = vld [vmem:[%s940 + $0x10] sm:$0xf]
      %v946 = vld [vmem:[%s940 + $0x14] sm:$0xf]
      %v947 = vld [vmem:[%s940 + $0x18] sm:$0xf]
      %v948 = vld [vmem:[%s940 + $0x1c] sm:$0xf]
      %v949 = vld [vmem:[%s192] sm:$0xe]
      %s950 = scalar_lea.vmem %s1, 160
      %v951 = vld [vmem:[%s950] sm:$0xf]
      %v952 = vld [vmem:[%s950 + $0x4] sm:$0xf]
      %v953 = vld [vmem:[%s950 + $0x8] sm:$0xf]
      %v954 = vld [vmem:[%s950 + $0xc] sm:$0xf]
      %v955 = vld [vmem:[%s950 + $0x10] sm:$0xf]
      %v956 = vld [vmem:[%s950 + $0x14] sm:$0xf]
      %v957 = vld [vmem:[%s950 + $0x18] sm:$0xf]
      %v958 = vld [vmem:[%s950 + $0x1c] sm:$0xf]
      %v970 = vunpack.c.l.b16 %v949
      %v971 = vunpack.c.l.b16 %v930
      %v972 = vunpack.c.l.b16 %v931
      %v973 = vunpack.c.l.b16 %v932
      %v974 = vunpack.c.l.b16 %v933
      %v975 = vunpack.c.l.b16 %v934
      %v976 = vunpack.c.l.b16 %v935
      %v977 = vunpack.c.l.b16 %v936
      %v978 = vunpack.c.l.b16 %v937
      %v979 = vunpack.c.l.b16 %v938
      %v980 = vunpack.c.l.b16 %v939
      %v981 = vpack.c.b16 %v971, %v970
      %v982 = vpack.c.b16 %v973, %v972
      %v983 = vpack.c.b16 %v975, %v974
      %v984 = vpack.c.b16 %v977, %v976
      %v985 = vpack.c.b16 %v979, %v978
      %v986 = vpack.c.b16 %v980, %v980
      %v987 = vrot.slane %v981, 1
      %v988 = vrot.slane %v982, 1
      %v989 = vsel %vm569, %v987, %v988
      %v990 = vrot.slane %v983, 1
      %v991 = vsel %vm569, %v988, %v990
      %v992 = vrot.slane %v984, 1
      %v993 = vsel %vm569, %v990, %v992
      %v994 = vrot.slane %v985, 1
      %v995 = vsel %vm569, %v992, %v994
      %v996 = vrot.slane %v986, 1
      %v997 = vsel %vm569, %v994, %v996
      %v1006 = vunpack.c.l.b16 %v951
      %v1007 = vunpack.c.l.b16 %v952
      %v1008 = vunpack.c.l.b16 %v953
      %v1009 = vunpack.c.l.b16 %v954
      %v1010 = vunpack.c.l.b16 %v955
      %v1011 = vunpack.c.l.b16 %v956
      %v1012 = vunpack.c.l.b16 %v957
      %v1013 = vunpack.c.l.b16 %v958
      %v1014 = vpack.c.b16 %v1007, %v1006
      %v1015 = vpack.c.b16 %v1009, %v1008
      %v1016 = vpack.c.b16 %v1011, %v1010
      %v1017 = vpack.c.b16 %v1013, %v1012
      %v1023 = vsel %vm325, %v989, 0
      %v1026 = vsel %vm325, %v991, 0
      %v1029 = vsel %vm325, %v993, 0
      %v1032 = vsel %vm325, %v995, 0
      %v1035 = vsel %vm325, %v997, 0
      %1037 = vmatprep.subr.bf16.mxu0 0
      %1038 = vmatpush1.bf16.msra.mxu0 0
      %1039 = vmatprep.subr.bf16.mxu0 0
      %1040 = vmatpush1.bf16.msra.mxu0 0
      %1041 = vmatprep.subr.bf16.mxu0 0
      %1042 = vmatpush1.bf16.msra.mxu0 0
      %1043 = vmatprep.subr.bf16.mxu0 0
      %1044 = vmatpush1.bf16.msra.mxu0 0
      %1045 = vmatprep.subr.bf16.mxu0 0
      %1046 = vmatpush1.bf16.msra.mxu0 %v1017
      %1047 = vmatprep.subr.bf16.mxu0 0
      %1048 = vmatpush1.bf16.msra.mxu0 %v1016
      %1049 = vmatprep.subr.bf16.mxu0 0
      %1050 = vmatpush1.bf16.msra.mxu0 %v1015
      %1051 = vmatprep.subr.bf16.mxu0 0
      %1052 = vmatpush1.bf16.msra.mxu0 %v1014
      %1053 = vmatprep.subr.bf16.mxu0 0
      %1054 = vmatpush2.bf16.msra.mxu0 0
      %1055 = vmatprep.subr.bf16.mxu0 0
      %1056 = vmatpush2.bf16.msra.mxu0 0
      %1057 = vmatprep.subr.bf16.mxu0 0
      %1058 = vmatpush2.bf16.msra.mxu0 0
      %1059 = vmatprep.subr.bf16.mxu0 0
      %1060 = vmatpush2.bf16.msra.mxu0 0
      %1061 = vmatprep.subr.bf16.mxu0 0
      %1062 = vmatpush2.bf16.msra.mxu0 0
      %1063 = vmatprep.subr.bf16.mxu0 0
      %1064 = vmatpush2.bf16.msra.mxu0 0
      %1065 = vmatprep.subr.bf16.mxu0 0
      %1066 = vmatpush2.bf16.msra.mxu0 0
      %1067 = vmatprep.subr.bf16.mxu0 0
      %1068 = vmatpush2.bf16.msra.mxu0 0
      %1069 = vmatprep.mubr.bf16.mxu0 0
      %1070 = vmatmul.mubr.bf16.gmra.mxu0 %v1023
      %v1071 = vpop.f32.mrf.mxu0
      %v1072 = vadd.f32 0.0, %v1071
      %v1073 = vpop.f32.mrf.mxu0
      %v1074 = vpop.f32.mrf.mxu0
      %v1075 = vadd.f32 0.0, %v1074
      %v1076 = vpop.f32.mrf.mxu0
      %1077 = vmatprep.mubr.bf16.mxu0 0
      %1078 = vmatmul.mubr.bf16.gmra.mxu0 %v1026
      %v1079 = vpop.f32.mrf.mxu0
      %v1080 = vadd.f32 0.0, %v1079
      %v1081 = vpop.f32.mrf.mxu0
      %v1082 = vpop.f32.mrf.mxu0
      %v1083 = vadd.f32 0.0, %v1082
      %v1084 = vpop.f32.mrf.mxu0
      %1085 = vmatprep.mubr.bf16.mxu0 0
      %1086 = vmatmul.mubr.bf16.gmra.mxu0 %v1029
      %v1087 = vpop.f32.mrf.mxu0
      %v1088 = vadd.f32 0.0, %v1087
      %v1089 = vpop.f32.mrf.mxu0
      %v1090 = vpop.f32.mrf.mxu0
      %v1091 = vadd.f32 0.0, %v1090
      %v1092 = vpop.f32.mrf.mxu0
      %1093 = vmatprep.mubr.bf16.mxu0 0
      %1094 = vmatmul.mubr.bf16.gmra.mxu0 %v1032
      %v1095 = vpop.f32.mrf.mxu0
      %v1096 = vadd.f32 0.0, %v1095
      %v1097 = vpop.f32.mrf.mxu0
      %v1098 = vpop.f32.mrf.mxu0
      %v1099 = vadd.f32 0.0, %v1098
      %v1100 = vpop.f32.mrf.mxu0
      %1101 = vmatprep.mubr.bf16.mxu0 0
      %1102 = vmatmul.mubr.bf16.gmra.mxu0 %v1035
      %v1103 = vpop.f32.mrf.mxu0
      %v1104 = vadd.f32 0.0, %v1103
      %v1105 = vpop.f32.mrf.mxu0
      %v1106 = vpop.f32.mrf.mxu0
      %v1107 = vadd.f32 0.0, %v1106
      %v1108 = vpop.f32.mrf.mxu0
      %1109 = vdwg.mxu0
      %v1111 = vunpack.c.l.b16 %v929
      %v1112 = vpack.c.b16 %v971, %v1111
      %v1114 = vshrl.u32 %v1112, 16
      %v1116 = vshll.u32 %v1112, 16
      %v1118 = vrot.slane %v1116, 1
      %v1119 = vor.u32 %v1114, %v1118
      %v1121 = vshll.u32 %v982, 16
      %v1123 = vrot.slane %v1121, 1
      %v1124 = vsel %vm256, %v1119, %v1123
      %v1125 = vshrl.u32 %v982, 16
      %v1127 = vor.u32 %v1125, %v1123
      %v1129 = vshll.u32 %v983, 16
      %v1131 = vrot.slane %v1129, 1
      %v1132 = vsel %vm256, %v1127, %v1131
      %v1133 = vshrl.u32 %v983, 16
      %v1135 = vor.u32 %v1133, %v1131
      %v1137 = vshll.u32 %v984, 16
      %v1139 = vrot.slane %v1137, 1
      %v1140 = vsel %vm256, %v1135, %v1139
      %v1141 = vshrl.u32 %v984, 16
      %v1143 = vor.u32 %v1141, %v1139
      %v1145 = vshll.u32 %v985, 16
      %v1147 = vrot.slane %v1145, 1
      %v1148 = vsel %vm256, %v1143, %v1147
      %v1149 = vshrl.u32 %v985, 16
      %v1151 = vor.u32 %v1149, %v1147
      %v1153 = vshll.u32 %v986, 16
      %v1155 = vrot.slane %v1153, 1
      %v1156 = vsel %vm256, %v1151, %v1155
      %v1165 = vunpack.c.l.b16 %v941
      %v1166 = vunpack.c.l.b16 %v942
      %v1167 = vunpack.c.l.b16 %v943
      %v1168 = vunpack.c.l.b16 %v944
      %v1169 = vunpack.c.l.b16 %v945
      %v1170 = vunpack.c.l.b16 %v946
      %v1171 = vunpack.c.l.b16 %v947
      %v1172 = vunpack.c.l.b16 %v948
      %v1173 = vpack.c.b16 %v1166, %v1165
      %v1174 = vpack.c.b16 %v1168, %v1167
      %v1175 = vpack.c.b16 %v1170, %v1169
      %v1176 = vpack.c.b16 %v1172, %v1171
      %v1182 = vsel %vm325, %v1124, 0
      %v1185 = vsel %vm325, %v1132, 0
      %v1188 = vsel %vm325, %v1140, 0
      %v1191 = vsel %vm325, %v1148, 0
      %v1194 = vsel %vm325, %v1156, 0
      %1196 = vmatprep.subr.bf16.mxu0 0
      %1197 = vmatpush1.bf16.msra.mxu0 0
      %1198 = vmatprep.subr.bf16.mxu0 0
      %1199 = vmatpush1.bf16.msra.mxu0 0
      %1200 = vmatprep.subr.bf16.mxu0 0
      %1201 = vmatpush1.bf16.msra.mxu0 0
      %1202 = vmatprep.subr.bf16.mxu0 0
      %1203 = vmatpush1.bf16.msra.mxu0 0
      %1204 = vmatprep.subr.bf16.mxu0 0
      %1205 = vmatpush1.bf16.msra.mxu0 %v1176
      %1206 = vmatprep.subr.bf16.mxu0 0
      %1207 = vmatpush1.bf16.msra.mxu0 %v1175
      %1208 = vmatprep.subr.bf16.mxu0 0
      %1209 = vmatpush1.bf16.msra.mxu0 %v1174
      %1210 = vmatprep.subr.bf16.mxu0 0
      %1211 = vmatpush1.bf16.msra.mxu0 %v1173
      %1212 = vmatprep.subr.bf16.mxu0 0
      %1213 = vmatpush2.bf16.msra.mxu0 0
      %1214 = vmatprep.subr.bf16.mxu0 0
      %1215 = vmatpush2.bf16.msra.mxu0 0
      %1216 = vmatprep.subr.bf16.mxu0 0
      %1217 = vmatpush2.bf16.msra.mxu0 0
      %1218 = vmatprep.subr.bf16.mxu0 0
      %1219 = vmatpush2.bf16.msra.mxu0 0
      %1220 = vmatprep.subr.bf16.mxu0 0
      %1221 = vmatpush2.bf16.msra.mxu0 0
      %1222 = vmatprep.subr.bf16.mxu0 0
      %1223 = vmatpush2.bf16.msra.mxu0 0
      %1224 = vmatprep.subr.bf16.mxu0 0
      %1225 = vmatpush2.bf16.msra.mxu0 0
      %1226 = vmatprep.subr.bf16.mxu0 0
      %1227 = vmatpush2.bf16.msra.mxu0 0
      %1228 = vmatprep.mubr.bf16.mxu0 0
      %1229 = vmatmul.mubr.bf16.gmra.mxu0 %v1182
      %v1230 = vpop.f32.mrf.mxu0
      %v1231 = vadd.f32 %v1072, %v1230
      %v1232 = vpop.f32.mrf.mxu0
      %v1233 = vpop.f32.mrf.mxu0
      %v1234 = vadd.f32 %v1075, %v1233
      %v1235 = vpop.f32.mrf.mxu0
      %1236 = vmatprep.mubr.bf16.mxu0 0
      %1237 = vmatmul.mubr.bf16.gmra.mxu0 %v1185
      %v1238 = vpop.f32.mrf.mxu0
      %v1239 = vadd.f32 %v1080, %v1238
      %v1240 = vpop.f32.mrf.mxu0
      %v1241 = vpop.f32.mrf.mxu0
      %v1242 = vadd.f32 %v1083, %v1241
      %v1243 = vpop.f32.mrf.mxu0
      %1244 = vmatprep.mubr.bf16.mxu0 0
      %1245 = vmatmul.mubr.bf16.gmra.mxu0 %v1188
      %v1246 = vpop.f32.mrf.mxu0
      %v1247 = vadd.f32 %v1088, %v1246
      %v1248 = vpop.f32.mrf.mxu0
      %v1249 = vpop.f32.mrf.mxu0
      %v1250 = vadd.f32 %v1091, %v1249
      %v1251 = vpop.f32.mrf.mxu0
      %1252 = vmatprep.mubr.bf16.mxu0 0
      %1253 = vmatmul.mubr.bf16.gmra.mxu0 %v1191
      %v1254 = vpop.f32.mrf.mxu0
      %v1255 = vadd.f32 %v1096, %v1254
      %v1256 = vpop.f32.mrf.mxu0
      %v1257 = vpop.f32.mrf.mxu0
      %v1258 = vadd.f32 %v1099, %v1257
      %v1259 = vpop.f32.mrf.mxu0
      %1260 = vmatprep.mubr.bf16.mxu0 0
      %1261 = vmatmul.mubr.bf16.gmra.mxu0 %v1194
      %v1262 = vpop.f32.mrf.mxu0
      %v1263 = vadd.f32 %v1104, %v1262
      %v1264 = vpop.f32.mrf.mxu0
      %v1265 = vpop.f32.mrf.mxu0
      %v1266 = vadd.f32 %v1107, %v1265
      %v1267 = vpop.f32.mrf.mxu0
      %1268 = vdwg.mxu0
      %v1269 = vld [vmem:[%s192 + $0x4] sm:$0xe]
      %v1270 = vld [vmem:[%s192 + $0x8] sm:$0xf]
      %v1271 = vld [vmem:[%s192 + $0xc] sm:$0xf]
      %v1272 = vld [vmem:[%s192 + $0x10] sm:$0xf]
      %v1273 = vld [vmem:[%s192 + $0x14] sm:$0xf]
      %v1274 = vld [vmem:[%s192 + $0x18] sm:$0xf]
      %v1275 = vld [vmem:[%s192 + $0x1c] sm:$0xf]
      %v1276 = vld [vmem:[%s192 + $0x20] sm:$0xf]
      %v1277 = vld [vmem:[%s192 + $0x24] sm:$0xf]
      %v1278 = vld [vmem:[%s192 + $0x28] sm:$0xf]
      %v1279 = vld [vmem:[%s192 + $0x2c] sm:$0x3]
      %s1280 = scalar_lea.vmem %s1, 192
      %v1281 = vld [vmem:[%s1280] sm:$0xf]
      %v1282 = vld [vmem:[%s1280 + $0x4] sm:$0xf]
      %v1283 = vld [vmem:[%s1280 + $0x8] sm:$0xf]
      %v1284 = vld [vmem:[%s1280 + $0xc] sm:$0xf]
      %v1285 = vld [vmem:[%s1280 + $0x10] sm:$0xf]
      %v1286 = vld [vmem:[%s1280 + $0x14] sm:$0xf]
      %v1287 = vld [vmem:[%s1280 + $0x18] sm:$0xf]
      %v1288 = vld [vmem:[%s1280 + $0x1c] sm:$0xf]
      %v1300 = vunpack.c.l.b16 %v1269
      %v1301 = vunpack.c.l.b16 %v1270
      %v1302 = vunpack.c.l.b16 %v1271
      %v1303 = vunpack.c.l.b16 %v1272
      %v1304 = vunpack.c.l.b16 %v1273
      %v1305 = vunpack.c.l.b16 %v1274
      %v1306 = vunpack.c.l.b16 %v1275
      %v1307 = vunpack.c.l.b16 %v1276
      %v1308 = vunpack.c.l.b16 %v1277
      %v1309 = vunpack.c.l.b16 %v1278
      %v1310 = vunpack.c.l.b16 %v1279
      %v1311 = vpack.c.b16 %v1301, %v1300
      %v1312 = vpack.c.b16 %v1303, %v1302
      %v1313 = vpack.c.b16 %v1305, %v1304
      %v1314 = vpack.c.b16 %v1307, %v1306
      %v1315 = vpack.c.b16 %v1309, %v1308
      %v1316 = vpack.c.b16 %v1310, %v1310
      %v1318 = vshrl.u32 %v1311, 16
      %v1320 = vrot.slane %v1318, 1
      %v1321 = vshll.u32 %v1311, 16
      %v1323 = vrot.slane %v1321, 2
      %v1324 = vor.u32 %v1320, %v1323
      %v1326 = vshrl.u32 %v1312, 16
      %v1328 = vrot.slane %v1326, 1
      %v1329 = vshll.u32 %v1312, 16
      %v1331 = vrot.slane %v1329, 2
      %v1332 = vor.u32 %v1328, %v1331
      %v1333 = vsel %vm716, %v1324, %v1332
      %v1335 = vshrl.u32 %v1313, 16
      %v1337 = vrot.slane %v1335, 1
      %v1338 = vshll.u32 %v1313, 16
      %v1340 = vrot.slane %v1338, 2
      %v1341 = vor.u32 %v1337, %v1340
      %v1342 = vsel %vm716, %v1332, %v1341
      %v1344 = vshrl.u32 %v1314, 16
      %v1346 = vrot.slane %v1344, 1
      %v1347 = vshll.u32 %v1314, 16
      %v1349 = vrot.slane %v1347, 2
      %v1350 = vor.u32 %v1346, %v1349
      %v1351 = vsel %vm716, %v1341, %v1350
      %v1353 = vshrl.u32 %v1315, 16
      %v1355 = vrot.slane %v1353, 1
      %v1356 = vshll.u32 %v1315, 16
      %v1358 = vrot.slane %v1356, 2
      %v1359 = vor.u32 %v1355, %v1358
      %v1360 = vsel %vm716, %v1350, %v1359
      %v1362 = vshrl.u32 %v1316, 16
      %v1364 = vrot.slane %v1362, 1
      %v1365 = vshll.u32 %v1316, 16
      %v1367 = vrot.slane %v1365, 2
      %v1368 = vor.u32 %v1364, %v1367
      %v1369 = vsel %vm716, %v1359, %v1368
      %v1378 = vunpack.c.l.b16 %v1281
      %v1379 = vunpack.c.l.b16 %v1282
      %v1380 = vunpack.c.l.b16 %v1283
      %v1381 = vunpack.c.l.b16 %v1284
      %v1382 = vunpack.c.l.b16 %v1285
      %v1383 = vunpack.c.l.b16 %v1286
      %v1384 = vunpack.c.l.b16 %v1287
      %v1385 = vunpack.c.l.b16 %v1288
      %v1386 = vpack.c.b16 %v1379, %v1378
      %v1387 = vpack.c.b16 %v1381, %v1380
      %v1388 = vpack.c.b16 %v1383, %v1382
      %v1389 = vpack.c.b16 %v1385, %v1384
      %v1395 = vsel %vm325, %v1333, 0
      %v1398 = vsel %vm325, %v1342, 0
      %v1401 = vsel %vm325, %v1351, 0
      %v1404 = vsel %vm325, %v1360, 0
      %v1407 = vsel %vm325, %v1369, 0
      %1409 = vmatprep.subr.bf16.mxu0 0
      %1410 = vmatpush1.bf16.msra.mxu0 0
      %1411 = vmatprep.subr.bf16.mxu0 0
      %1412 = vmatpush1.bf16.msra.mxu0 0
      %1413 = vmatprep.subr.bf16.mxu0 0
      %1414 = vmatpush1.bf16.msra.mxu0 0
      %1415 = vmatprep.subr.bf16.mxu0 0
      %1416 = vmatpush1.bf16.msra.mxu0 0
      %1417 = vmatprep.subr.bf16.mxu0 0
      %1418 = vmatpush1.bf16.msra.mxu0 %v1389
      %1419 = vmatprep.subr.bf16.mxu0 0
      %1420 = vmatpush1.bf16.msra.mxu0 %v1388
      %1421 = vmatprep.subr.bf16.mxu0 0
      %1422 = vmatpush1.bf16.msra.mxu0 %v1387
      %1423 = vmatprep.subr.bf16.mxu0 0
      %1424 = vmatpush1.bf16.msra.mxu0 %v1386
      %1425 = vmatprep.subr.bf16.mxu0 0
      %1426 = vmatpush2.bf16.msra.mxu0 0
      %1427 = vmatprep.subr.bf16.mxu0 0
      %1428 = vmatpush2.bf16.msra.mxu0 0
      %1429 = vmatprep.subr.bf16.mxu0 0
      %1430 = vmatpush2.bf16.msra.mxu0 0
      %1431 = vmatprep.subr.bf16.mxu0 0
      %1432 = vmatpush2.bf16.msra.mxu0 0
      %1433 = vmatprep.subr.bf16.mxu0 0
      %1434 = vmatpush2.bf16.msra.mxu0 0
      %1435 = vmatprep.subr.bf16.mxu0 0
      %1436 = vmatpush2.bf16.msra.mxu0 0
      %1437 = vmatprep.subr.bf16.mxu0 0
      %1438 = vmatpush2.bf16.msra.mxu0 0
      %1439 = vmatprep.subr.bf16.mxu0 0
      %1440 = vmatpush2.bf16.msra.mxu0 0
      %1441 = vmatprep.mubr.bf16.mxu0 0
      %1442 = vmatmul.mubr.bf16.gmra.mxu0 %v1395
      %v1443 = vpop.f32.mrf.mxu0
      %v1444 = vadd.f32 0.0, %v1443
      %v1445 = vpop.f32.mrf.mxu0
      %v1446 = vpop.f32.mrf.mxu0
      %v1447 = vadd.f32 0.0, %v1446
      %v1448 = vpop.f32.mrf.mxu0
      %1449 = vmatprep.mubr.bf16.mxu0 0
      %1450 = vmatmul.mubr.bf16.gmra.mxu0 %v1398
      %v1451 = vpop.f32.mrf.mxu0
      %v1452 = vadd.f32 0.0, %v1451
      %v1453 = vpop.f32.mrf.mxu0
      %v1454 = vpop.f32.mrf.mxu0
      %v1455 = vadd.f32 0.0, %v1454
      %v1456 = vpop.f32.mrf.mxu0
      %1457 = vmatprep.mubr.bf16.mxu0 0
      %1458 = vmatmul.mubr.bf16.gmra.mxu0 %v1401
      %v1459 = vpop.f32.mrf.mxu0
      %v1460 = vadd.f32 0.0, %v1459
      %v1461 = vpop.f32.mrf.mxu0
      %v1462 = vpop.f32.mrf.mxu0
      %v1463 = vadd.f32 0.0, %v1462
      %v1464 = vpop.f32.mrf.mxu0
      %1465 = vmatprep.mubr.bf16.mxu0 0
      %1466 = vmatmul.mubr.bf16.gmra.mxu0 %v1404
      %v1467 = vpop.f32.mrf.mxu0
      %v1468 = vadd.f32 0.0, %v1467
      %v1469 = vpop.f32.mrf.mxu0
      %v1470 = vpop.f32.mrf.mxu0
      %v1471 = vadd.f32 0.0, %v1470
      %v1472 = vpop.f32.mrf.mxu0
      %1473 = vmatprep.mubr.bf16.mxu0 0
      %1474 = vmatmul.mubr.bf16.gmra.mxu0 %v1407
      %v1475 = vpop.f32.mrf.mxu0
      %v1476 = vadd.f32 0.0, %v1475
      %v1477 = vpop.f32.mrf.mxu0
      %v1478 = vpop.f32.mrf.mxu0
      %v1479 = vadd.f32 0.0, %v1478
      %v1480 = vpop.f32.mrf.mxu0
      %1481 = vdwg.mxu0
      %v1482 = vadd.f32 %v1231, %v1444
      %v1483 = vadd.f32 %v1234, %v1447
      %v1484 = vadd.f32 %v1239, %v1452
      %v1485 = vadd.f32 %v1242, %v1455
      %v1486 = vadd.f32 %v1247, %v1460
      %v1487 = vadd.f32 %v1250, %v1463
      %v1488 = vadd.f32 %v1255, %v1468
      %v1489 = vadd.f32 %v1258, %v1471
      %v1490 = vadd.f32 %v1263, %v1476
      %v1491 = vadd.f32 %v1266, %v1479
      %v1492 = vld [vmem:[%s192 + $0x4] sm:$0xc]
      %s1493 = scalar_lea.vmem %s1, 224
      %v1494 = vld [vmem:[%s1493] sm:$0xf]
      %v1495 = vld [vmem:[%s1493 + $0x4] sm:$0xf]
      %v1496 = vld [vmem:[%s1493 + $0x8] sm:$0xf]
      %v1497 = vld [vmem:[%s1493 + $0xc] sm:$0xf]
      %v1498 = vld [vmem:[%s1493 + $0x10] sm:$0xf]
      %v1499 = vld [vmem:[%s1493 + $0x14] sm:$0xf]
      %v1500 = vld [vmem:[%s1493 + $0x18] sm:$0xf]
      %v1501 = vld [vmem:[%s1493 + $0x1c] sm:$0xf]
      %v1503 = vunpack.c.l.b16 %v1492
      %v1504 = vpack.c.b16 %v1301, %v1503
      %vm1505 = vcmask 1045504
      %v1506 = vrot.slane %v1504, 2
      %v1507 = vrot.slane %v1312, 2
      %v1508 = vsel %vm1505, %v1506, %v1507
      %v1509 = vrot.slane %v1313, 2
      %v1510 = vsel %vm1505, %v1507, %v1509
      %v1511 = vrot.slane %v1314, 2
      %v1512 = vsel %vm1505, %v1509, %v1511
      %v1513 = vrot.slane %v1315, 2
      %v1514 = vsel %vm1505, %v1511, %v1513
      %v1515 = vrot.slane %v1316, 2
      %v1516 = vsel %vm1505, %v1513, %v1515
      %v1525 = vunpack.c.l.b16 %v1494
      %v1526 = vunpack.c.l.b16 %v1495
      %v1527 = vunpack.c.l.b16 %v1496
      %v1528 = vunpack.c.l.b16 %v1497
      %v1529 = vunpack.c.l.b16 %v1498
      %v1530 = vunpack.c.l.b16 %v1499
      %v1531 = vunpack.c.l.b16 %v1500
      %v1532 = vunpack.c.l.b16 %v1501
      %v1533 = vpack.c.b16 %v1526, %v1525
      %v1534 = vpack.c.b16 %v1528, %v1527
      %v1535 = vpack.c.b16 %v1530, %v1529
      %v1536 = vpack.c.b16 %v1532, %v1531
      %v1542 = vsel %vm325, %v1508, 0
      %v1545 = vsel %vm325, %v1510, 0
      %v1548 = vsel %vm325, %v1512, 0
      %v1551 = vsel %vm325, %v1514, 0
      %v1554 = vsel %vm325, %v1516, 0
      %1556 = vmatprep.subr.bf16.mxu0 0
      %1557 = vmatpush1.bf16.msra.mxu0 0
      %1558 = vmatprep.subr.bf16.mxu0 0
      %1559 = vmatpush1.bf16.msra.mxu0 0
      %1560 = vmatprep.subr.bf16.mxu0 0
      %1561 = vmatpush1.bf16.msra.mxu0 0
      %1562 = vmatprep.subr.bf16.mxu0 0
      %1563 = vmatpush1.bf16.msra.mxu0 0
      %1564 = vmatprep.subr.bf16.mxu0 0
      %1565 = vmatpush1.bf16.msra.mxu0 %v1536
      %1566 = vmatprep.subr.bf16.mxu0 0
      %1567 = vmatpush1.bf16.msra.mxu0 %v1535
      %1568 = vmatprep.subr.bf16.mxu0 0
      %1569 = vmatpush1.bf16.msra.mxu0 %v1534
      %1570 = vmatprep.subr.bf16.mxu0 0
      %1571 = vmatpush1.bf16.msra.mxu0 %v1533
      %1572 = vmatprep.subr.bf16.mxu0 0
      %1573 = vmatpush2.bf16.msra.mxu0 0
      %1574 = vmatprep.subr.bf16.mxu0 0
      %1575 = vmatpush2.bf16.msra.mxu0 0
      %1576 = vmatprep.subr.bf16.mxu0 0
      %1577 = vmatpush2.bf16.msra.mxu0 0
      %1578 = vmatprep.subr.bf16.mxu0 0
      %1579 = vmatpush2.bf16.msra.mxu0 0
      %1580 = vmatprep.subr.bf16.mxu0 0
      %1581 = vmatpush2.bf16.msra.mxu0 0
      %1582 = vmatprep.subr.bf16.mxu0 0
      %1583 = vmatpush2.bf16.msra.mxu0 0
      %1584 = vmatprep.subr.bf16.mxu0 0
      %1585 = vmatpush2.bf16.msra.mxu0 0
      %1586 = vmatprep.subr.bf16.mxu0 0
      %1587 = vmatpush2.bf16.msra.mxu0 0
      %1588 = vmatprep.mubr.bf16.mxu0 0
      %1589 = vmatmul.mubr.bf16.gmra.mxu0 %v1542
      %v1590 = vpop.f32.mrf.mxu0
      %v1591 = vadd.f32 0.0, %v1590
      %v1592 = vpop.f32.mrf.mxu0
      %v1593 = vpop.f32.mrf.mxu0
      %v1594 = vadd.f32 0.0, %v1593
      %v1595 = vpop.f32.mrf.mxu0
      %1596 = vmatprep.mubr.bf16.mxu0 0
      %1597 = vmatmul.mubr.bf16.gmra.mxu0 %v1545
      %v1598 = vpop.f32.mrf.mxu0
      %v1599 = vadd.f32 0.0, %v1598
      %v1600 = vpop.f32.mrf.mxu0
      %v1601 = vpop.f32.mrf.mxu0
      %v1602 = vadd.f32 0.0, %v1601
      %v1603 = vpop.f32.mrf.mxu0
      %1604 = vmatprep.mubr.bf16.mxu0 0
      %1605 = vmatmul.mubr.bf16.gmra.mxu0 %v1548
      %v1606 = vpop.f32.mrf.mxu0
      %v1607 = vadd.f32 0.0, %v1606
      %v1608 = vpop.f32.mrf.mxu0
      %v1609 = vpop.f32.mrf.mxu0
      %v1610 = vadd.f32 0.0, %v1609
      %v1611 = vpop.f32.mrf.mxu0
      %1612 = vmatprep.mubr.bf16.mxu0 0
      %1613 = vmatmul.mubr.bf16.gmra.mxu0 %v1551
      %v1614 = vpop.f32.mrf.mxu0
      %v1615 = vadd.f32 0.0, %v1614
      %v1616 = vpop.f32.mrf.mxu0
      %v1617 = vpop.f32.mrf.mxu0
      %v1618 = vadd.f32 0.0, %v1617
      %v1619 = vpop.f32.mrf.mxu0
      %1620 = vmatprep.mubr.bf16.mxu0 0
      %1621 = vmatmul.mubr.bf16.gmra.mxu0 %v1554
      %v1622 = vpop.f32.mrf.mxu0
      %v1623 = vadd.f32 0.0, %v1622
      %v1624 = vpop.f32.mrf.mxu0
      %v1625 = vpop.f32.mrf.mxu0
      %v1626 = vadd.f32 0.0, %v1625
      %v1627 = vpop.f32.mrf.mxu0
      %1628 = vdwg.mxu0
      %v1629 = vadd.f32 %v1482, %v1591
      %v1630 = vadd.f32 %v1483, %v1594
      %v1631 = vadd.f32 %v1484, %v1599
      %v1632 = vadd.f32 %v1485, %v1602
      %v1633 = vadd.f32 %v1486, %v1607
      %v1634 = vadd.f32 %v1487, %v1610
      %v1635 = vadd.f32 %v1488, %v1615
      %v1636 = vadd.f32 %v1489, %v1618
      %v1637 = vadd.f32 %v1490, %v1623
      %v1638 = vadd.f32 %v1491, %v1626
      %v1639 = vadd.f32 %v1629, %v896
      %v1640 = vadd.f32 %v1630, %v896
      %v1641 = vadd.f32 %v1631, %v896
      %v1642 = vadd.f32 %v1632, %v896
      %v1643 = vadd.f32 %v1633, %v896
      %v1644 = vadd.f32 %v1634, %v896
      %v1645 = vadd.f32 %v1635, %v896
      %v1646 = vadd.f32 %v1636, %v896
      %v1647 = vadd.f32 %v1637, %v896
      %v1648 = vadd.f32 %v1638, %v896
      %v1649 = vtanh.pop %v1639
      %v1650 = vtanh.pop %v1640
      %v1651 = vtanh.pop %v1641
      %v1652 = vtanh.pop %v1642
      %v1653 = vtanh.pop %v1643
      %v1654 = vtanh.pop %v1644
      %v1655 = vtanh.pop %v1645
      %v1656 = vtanh.pop %v1646
      %v1657 = vtanh.pop %v1647
      %v1658 = vtanh.pop %v1648
      %s1659 = scalar_lea.vmem %s197, 80
      %1660 = vst.msk [vmem:[%s1659] sm:$0xff] %vm918, %v1649
      %1661 = vst.msk [vmem:[%s1659 + $0x8] sm:$0xff] %vm918, %v1650
      %1662 = vst.msk [vmem:[%s1659 + $0x10] sm:$0xff] %vm918, %v1651
      %1663 = vst.msk [vmem:[%s1659 + $0x18] sm:$0xff] %vm918, %v1652
      %1664 = vst.msk [vmem:[%s1659 + $0x20] sm:$0xff] %vm918, %v1653
      %1665 = vst.msk [vmem:[%s1659 + $0x28] sm:$0xff] %vm918, %v1654
      %1666 = vst.msk [vmem:[%s1659 + $0x30] sm:$0xff] %vm918, %v1655
      %1667 = vst.msk [vmem:[%s1659 + $0x38] sm:$0xff] %vm918, %v1656
      %1668 = vst.msk [vmem:[%s1659 + $0x40] sm:$0xff] %vm918, %v1657
      %1669 = vst.msk [vmem:[%s1659 + $0x48] sm:$0xff] %vm918, %v1658
      %v1670 = vld [vmem:[%s192 + $0x4] sm:$0xe]
      %v1671 = vld [vmem:[%s192 + $0x8] sm:$0xf]
      %v1672 = vld [vmem:[%s192 + $0xc] sm:$0xf]
      %v1673 = vld [vmem:[%s192 + $0x10] sm:$0xf]
      %v1674 = vld [vmem:[%s192 + $0x14] sm:$0xf]
      %v1675 = vld [vmem:[%s192 + $0x18] sm:$0xf]
      %v1676 = vld [vmem:[%s192 + $0x1c] sm:$0xf]
      %v1677 = vld [vmem:[%s192 + $0x20] sm:$0xf]
      %v1678 = vld [vmem:[%s192 + $0x24] sm:$0xf]
      %v1679 = vld [vmem:[%s192 + $0x28] sm:$0xf]
      %v1680 = vld [vmem:[%s192 + $0x2c] sm:$0x1]
      %s1681 = scalar_lea.vmem %s1, 256
      %v1682 = vld [vmem:[%s1681] sm:$0xf]
      %v1683 = vld [vmem:[%s1681 + $0x4] sm:$0xf]
      %v1684 = vld [vmem:[%s1681 + $0x8] sm:$0xf]
      %v1685 = vld [vmem:[%s1681 + $0xc] sm:$0xf]
      %v1686 = vld [vmem:[%s1681 + $0x10] sm:$0xf]
      %v1687 = vld [vmem:[%s1681 + $0x14] sm:$0xf]
      %v1688 = vld [vmem:[%s1681 + $0x18] sm:$0xf]
      %v1689 = vld [vmem:[%s1681 + $0x1c] sm:$0xf]
      %v1690 = vld [vmem:[%s192 + $0x2c] sm:$0x3]
      %s1691 = scalar_lea.vmem %s1, 288
      %v1692 = vld [vmem:[%s1691] sm:$0xf]
      %v1693 = vld [vmem:[%s1691 + $0x4] sm:$0xf]
      %v1694 = vld [vmem:[%s1691 + $0x8] sm:$0xf]
      %v1695 = vld [vmem:[%s1691 + $0xc] sm:$0xf]
      %v1696 = vld [vmem:[%s1691 + $0x10] sm:$0xf]
      %v1697 = vld [vmem:[%s1691 + $0x14] sm:$0xf]
      %v1698 = vld [vmem:[%s1691 + $0x18] sm:$0xf]
      %v1699 = vld [vmem:[%s1691 + $0x1c] sm:$0xf]
      %v1711 = vunpack.c.l.b16 %v1670
      %v1712 = vunpack.c.l.b16 %v1671
      %v1713 = vunpack.c.l.b16 %v1672
      %v1714 = vunpack.c.l.b16 %v1673
      %v1715 = vunpack.c.l.b16 %v1674
      %v1716 = vunpack.c.l.b16 %v1675
      %v1717 = vunpack.c.l.b16 %v1676
      %v1718 = vunpack.c.l.b16 %v1677
      %v1719 = vunpack.c.l.b16 %v1678
      %v1720 = vunpack.c.l.b16 %v1679
      %v1721 = vunpack.c.l.b16 %v1690
      %v1722 = vpack.c.b16 %v1712, %v1711
      %v1723 = vpack.c.b16 %v1714, %v1713
      %v1724 = vpack.c.b16 %v1716, %v1715
      %v1725 = vpack.c.b16 %v1718, %v1717
      %v1726 = vpack.c.b16 %v1720, %v1719
      %v1727 = vpack.c.b16 %v1721, %v1721
      %v1729 = vshrl.u32 %v1722, 16
      %v1731 = vrot.slane %v1729, 1
      %v1732 = vshll.u32 %v1722, 16
      %v1734 = vrot.slane %v1732, 2
      %v1735 = vor.u32 %v1731, %v1734
      %v1737 = vshrl.u32 %v1723, 16
      %v1739 = vrot.slane %v1737, 1
      %v1740 = vshll.u32 %v1723, 16
      %v1742 = vrot.slane %v1740, 2
      %v1743 = vor.u32 %v1739, %v1742
      %v1744 = vsel %vm716, %v1735, %v1743
      %v1746 = vshrl.u32 %v1724, 16
      %v1748 = vrot.slane %v1746, 1
      %v1749 = vshll.u32 %v1724, 16
      %v1751 = vrot.slane %v1749, 2
      %v1752 = vor.u32 %v1748, %v1751
      %v1753 = vsel %vm716, %v1743, %v1752
      %v1755 = vshrl.u32 %v1725, 16
      %v1757 = vrot.slane %v1755, 1
      %v1758 = vshll.u32 %v1725, 16
      %v1760 = vrot.slane %v1758, 2
      %v1761 = vor.u32 %v1757, %v1760
      %v1762 = vsel %vm716, %v1752, %v1761
      %v1764 = vshrl.u32 %v1726, 16
      %v1766 = vrot.slane %v1764, 1
      %v1767 = vshll.u32 %v1726, 16
      %v1769 = vrot.slane %v1767, 2
      %v1770 = vor.u32 %v1766, %v1769
      %v1771 = vsel %vm716, %v1761, %v1770
      %v1773 = vshrl.u32 %v1727, 16
      %v1775 = vrot.slane %v1773, 1
      %v1776 = vshll.u32 %v1727, 16
      %v1778 = vrot.slane %v1776, 2
      %v1779 = vor.u32 %v1775, %v1778
      %v1780 = vsel %vm716, %v1770, %v1779
      %v1789 = vunpack.c.l.b16 %v1692
      %v1790 = vunpack.c.l.b16 %v1693
      %v1791 = vunpack.c.l.b16 %v1694
      %v1792 = vunpack.c.l.b16 %v1695
      %v1793 = vunpack.c.l.b16 %v1696
      %v1794 = vunpack.c.l.b16 %v1697
      %v1795 = vunpack.c.l.b16 %v1698
      %v1796 = vunpack.c.l.b16 %v1699
      %v1797 = vpack.c.b16 %v1790, %v1789
      %v1798 = vpack.c.b16 %v1792, %v1791
      %v1799 = vpack.c.b16 %v1794, %v1793
      %v1800 = vpack.c.b16 %v1796, %v1795
      %v1806 = vsel %vm325, %v1744, 0
      %v1809 = vsel %vm325, %v1753, 0
      %v1812 = vsel %vm325, %v1762, 0
      %v1815 = vsel %vm325, %v1771, 0
      %v1818 = vsel %vm325, %v1780, 0
      %1820 = vmatprep.subr.bf16.mxu0 0
      %1821 = vmatpush1.bf16.msra.mxu0 0
      %1822 = vmatprep.subr.bf16.mxu0 0
      %1823 = vmatpush1.bf16.msra.mxu0 0
      %1824 = vmatprep.subr.bf16.mxu0 0
      %1825 = vmatpush1.bf16.msra.mxu0 0
      %1826 = vmatprep.subr.bf16.mxu0 0
      %1827 = vmatpush1.bf16.msra.mxu0 0
      %1828 = vmatprep.subr.bf16.mxu0 0
      %1829 = vmatpush1.bf16.msra.mxu0 %v1800
      %1830 = vmatprep.subr.bf16.mxu0 0
      %1831 = vmatpush1.bf16.msra.mxu0 %v1799
      %1832 = vmatprep.subr.bf16.mxu0 0
      %1833 = vmatpush1.bf16.msra.mxu0 %v1798
      %1834 = vmatprep.subr.bf16.mxu0 0
      %1835 = vmatpush1.bf16.msra.mxu0 %v1797
      %1836 = vmatprep.subr.bf16.mxu0 0
      %1837 = vmatpush2.bf16.msra.mxu0 0
      %1838 = vmatprep.subr.bf16.mxu0 0
      %1839 = vmatpush2.bf16.msra.mxu0 0
      %1840 = vmatprep.subr.bf16.mxu0 0
      %1841 = vmatpush2.bf16.msra.mxu0 0
      %1842 = vmatprep.subr.bf16.mxu0 0
      %1843 = vmatpush2.bf16.msra.mxu0 0
      %1844 = vmatprep.subr.bf16.mxu0 0
      %1845 = vmatpush2.bf16.msra.mxu0 0
      %1846 = vmatprep.subr.bf16.mxu0 0
      %1847 = vmatpush2.bf16.msra.mxu0 0
      %1848 = vmatprep.subr.bf16.mxu0 0
      %1849 = vmatpush2.bf16.msra.mxu0 0
      %1850 = vmatprep.subr.bf16.mxu0 0
      %1851 = vmatpush2.bf16.msra.mxu0 0
      %1852 = vmatprep.mubr.bf16.mxu0 0
      %1853 = vmatmul.mubr.bf16.gmra.mxu0 %v1806
      %v1854 = vpop.f32.mrf.mxu0
      %v1855 = vadd.f32 0.0, %v1854
      %v1856 = vpop.f32.mrf.mxu0
      %v1857 = vpop.f32.mrf.mxu0
      %v1858 = vadd.f32 0.0, %v1857
      %v1859 = vpop.f32.mrf.mxu0
      %1860 = vmatprep.mubr.bf16.mxu0 0
      %1861 = vmatmul.mubr.bf16.gmra.mxu0 %v1809
      %v1862 = vpop.f32.mrf.mxu0
      %v1863 = vadd.f32 0.0, %v1862
      %v1864 = vpop.f32.mrf.mxu0
      %v1865 = vpop.f32.mrf.mxu0
      %v1866 = vadd.f32 0.0, %v1865
      %v1867 = vpop.f32.mrf.mxu0
      %1868 = vmatprep.mubr.bf16.mxu0 0
      %1869 = vmatmul.mubr.bf16.gmra.mxu0 %v1812
      %v1870 = vpop.f32.mrf.mxu0
      %v1871 = vadd.f32 0.0, %v1870
      %v1872 = vpop.f32.mrf.mxu0
      %v1873 = vpop.f32.mrf.mxu0
      %v1874 = vadd.f32 0.0, %v1873
      %v1875 = vpop.f32.mrf.mxu0
      %1876 = vmatprep.mubr.bf16.mxu0 0
      %1877 = vmatmul.mubr.bf16.gmra.mxu0 %v1815
      %v1878 = vpop.f32.mrf.mxu0
      %v1879 = vadd.f32 0.0, %v1878
      %v1880 = vpop.f32.mrf.mxu0
      %v1881 = vpop.f32.mrf.mxu0
      %v1882 = vadd.f32 0.0, %v1881
      %v1883 = vpop.f32.mrf.mxu0
      %1884 = vmatprep.mubr.bf16.mxu0 0
      %1885 = vmatmul.mubr.bf16.gmra.mxu0 %v1818
      %v1886 = vpop.f32.mrf.mxu0
      %v1887 = vadd.f32 0.0, %v1886
      %v1888 = vpop.f32.mrf.mxu0
      %v1889 = vpop.f32.mrf.mxu0
      %v1890 = vadd.f32 0.0, %v1889
      %v1891 = vpop.f32.mrf.mxu0
      %1892 = vdwg.mxu0
      %v1894 = vunpack.c.l.b16 %v1680
      %v1895 = vpack.c.b16 %v1894, %v1894
      %v1896 = vrot.slane %v1722, 1
      %v1897 = vrot.slane %v1723, 1
      %v1898 = vsel %vm569, %v1896, %v1897
      %v1899 = vrot.slane %v1724, 1
      %v1900 = vsel %vm569, %v1897, %v1899
      %v1901 = vrot.slane %v1725, 1
      %v1902 = vsel %vm569, %v1899, %v1901
      %v1903 = vrot.slane %v1726, 1
      %v1904 = vsel %vm569, %v1901, %v1903
      %v1905 = vrot.slane %v1895, 1
      %v1906 = vsel %vm569, %v1903, %v1905
      %v1915 = vunpack.c.l.b16 %v1682
      %v1916 = vunpack.c.l.b16 %v1683
      %v1917 = vunpack.c.l.b16 %v1684
      %v1918 = vunpack.c.l.b16 %v1685
      %v1919 = vunpack.c.l.b16 %v1686
      %v1920 = vunpack.c.l.b16 %v1687
      %v1921 = vunpack.c.l.b16 %v1688
      %v1922 = vunpack.c.l.b16 %v1689
      %v1923 = vpack.c.b16 %v1916, %v1915
      %v1924 = vpack.c.b16 %v1918, %v1917
      %v1925 = vpack.c.b16 %v1920, %v1919
      %v1926 = vpack.c.b16 %v1922, %v1921
      %v1932 = vsel %vm325, %v1898, 0
      %v1935 = vsel %vm325, %v1900, 0
      %v1938 = vsel %vm325, %v1902, 0
      %v1941 = vsel %vm325, %v1904, 0
      %v1944 = vsel %vm325, %v1906, 0
      %1946 = vmatprep.subr.bf16.mxu0 0
      %1947 = vmatpush1.bf16.msra.mxu0 0
      %1948 = vmatprep.subr.bf16.mxu0 0
      %1949 = vmatpush1.bf16.msra.mxu0 0
      %1950 = vmatprep.subr.bf16.mxu0 0
      %1951 = vmatpush1.bf16.msra.mxu0 0
      %1952 = vmatprep.subr.bf16.mxu0 0
      %1953 = vmatpush1.bf16.msra.mxu0 0
      %1954 = vmatprep.subr.bf16.mxu0 0
      %1955 = vmatpush1.bf16.msra.mxu0 %v1926
      %1956 = vmatprep.subr.bf16.mxu0 0
      %1957 = vmatpush1.bf16.msra.mxu0 %v1925
      %1958 = vmatprep.subr.bf16.mxu0 0
      %1959 = vmatpush1.bf16.msra.mxu0 %v1924
      %1960 = vmatprep.subr.bf16.mxu0 0
      %1961 = vmatpush1.bf16.msra.mxu0 %v1923
      %1962 = vmatprep.subr.bf16.mxu0 0
      %1963 = vmatpush2.bf16.msra.mxu0 0
      %1964 = vmatprep.subr.bf16.mxu0 0
      %1965 = vmatpush2.bf16.msra.mxu0 0
      %1966 = vmatprep.subr.bf16.mxu0 0
      %1967 = vmatpush2.bf16.msra.mxu0 0
      %1968 = vmatprep.subr.bf16.mxu0 0
      %1969 = vmatpush2.bf16.msra.mxu0 0
      %1970 = vmatprep.subr.bf16.mxu0 0
      %1971 = vmatpush2.bf16.msra.mxu0 0
      %1972 = vmatprep.subr.bf16.mxu0 0
      %1973 = vmatpush2.bf16.msra.mxu0 0
      %1974 = vmatprep.subr.bf16.mxu0 0
      %1975 = vmatpush2.bf16.msra.mxu0 0
      %1976 = vmatprep.subr.bf16.mxu0 0
      %1977 = vmatpush2.bf16.msra.mxu0 0
      %1978 = vmatprep.mubr.bf16.mxu0 0
      %1979 = vmatmul.mubr.bf16.gmra.mxu0 %v1932
      %v1980 = vpop.f32.mrf.mxu0
      %v1981 = vadd.f32 %v1855, %v1980
      %v1982 = vpop.f32.mrf.mxu0
      %v1983 = vpop.f32.mrf.mxu0
      %v1984 = vadd.f32 %v1858, %v1983
      %v1985 = vpop.f32.mrf.mxu0
      %1986 = vmatprep.mubr.bf16.mxu0 0
      %1987 = vmatmul.mubr.bf16.gmra.mxu0 %v1935
      %v1988 = vpop.f32.mrf.mxu0
      %v1989 = vadd.f32 %v1863, %v1988
      %v1990 = vpop.f32.mrf.mxu0
      %v1991 = vpop.f32.mrf.mxu0
      %v1992 = vadd.f32 %v1866, %v1991
      %v1993 = vpop.f32.mrf.mxu0
      %1994 = vmatprep.mubr.bf16.mxu0 0
      %1995 = vmatmul.mubr.bf16.gmra.mxu0 %v1938
      %v1996 = vpop.f32.mrf.mxu0
      %v1997 = vadd.f32 %v1871, %v1996
      %v1998 = vpop.f32.mrf.mxu0
      %v1999 = vpop.f32.mrf.mxu0
      %v2000 = vadd.f32 %v1874, %v1999
      %v2001 = vpop.f32.mrf.mxu0
      %2002 = vmatprep.mubr.bf16.mxu0 0
      %2003 = vmatmul.mubr.bf16.gmra.mxu0 %v1941
      %v2004 = vpop.f32.mrf.mxu0
      %v2005 = vadd.f32 %v1879, %v2004
      %v2006 = vpop.f32.mrf.mxu0
      %v2007 = vpop.f32.mrf.mxu0
      %v2008 = vadd.f32 %v1882, %v2007
      %v2009 = vpop.f32.mrf.mxu0
      %2010 = vmatprep.mubr.bf16.mxu0 0
      %2011 = vmatmul.mubr.bf16.gmra.mxu0 %v1944
      %v2012 = vpop.f32.mrf.mxu0
      %v2013 = vadd.f32 %v1887, %v2012
      %v2014 = vpop.f32.mrf.mxu0
      %v2015 = vpop.f32.mrf.mxu0
      %v2016 = vadd.f32 %v1890, %v2015
      %v2017 = vpop.f32.mrf.mxu0
      %2018 = vdwg.mxu0
      %v2019 = vld [vmem:[%s192 + $0x8] sm:$0xc]
      %v2020 = vld [vmem:[%s192 + $0xc] sm:$0xf]
      %v2021 = vld [vmem:[%s192 + $0x10] sm:$0xf]
      %v2022 = vld [vmem:[%s192 + $0x14] sm:$0xf]
      %v2023 = vld [vmem:[%s192 + $0x18] sm:$0xf]
      %v2024 = vld [vmem:[%s192 + $0x1c] sm:$0xf]
      %v2025 = vld [vmem:[%s192 + $0x20] sm:$0xf]
      %v2026 = vld [vmem:[%s192 + $0x24] sm:$0xf]
      %v2027 = vld [vmem:[%s192 + $0x28] sm:$0xf]
      %v2028 = vld [vmem:[%s192 + $0x2c] sm:$0xf]
      %v2029 = vld [vmem:[%s192 + $0x30] sm:$0x3]
      %s2030 = scalar_lea.vmem %s1, 320
      %v2031 = vld [vmem:[%s2030] sm:$0xf]
      %v2032 = vld [vmem:[%s2030 + $0x4] sm:$0xf]
      %v2033 = vld [vmem:[%s2030 + $0x8] sm:$0xf]
      %v2034 = vld [vmem:[%s2030 + $0xc] sm:$0xf]
      %v2035 = vld [vmem:[%s2030 + $0x10] sm:$0xf]
      %v2036 = vld [vmem:[%s2030 + $0x14] sm:$0xf]
      %v2037 = vld [vmem:[%s2030 + $0x18] sm:$0xf]
      %v2038 = vld [vmem:[%s2030 + $0x1c] sm:$0xf]
      %v2050 = vunpack.c.l.b16 %v2019
      %v2051 = vunpack.c.l.b16 %v2020
      %v2052 = vunpack.c.l.b16 %v2021
      %v2053 = vunpack.c.l.b16 %v2022
      %v2054 = vunpack.c.l.b16 %v2023
      %v2055 = vunpack.c.l.b16 %v2024
      %v2056 = vunpack.c.l.b16 %v2025
      %v2057 = vunpack.c.l.b16 %v2026
      %v2058 = vunpack.c.l.b16 %v2027
      %v2059 = vunpack.c.l.b16 %v2028
      %v2060 = vunpack.c.l.b16 %v2029
      %v2061 = vpack.c.b16 %v2051, %v2050
      %v2062 = vpack.c.b16 %v2053, %v2052
      %v2063 = vpack.c.b16 %v2055, %v2054
      %v2064 = vpack.c.b16 %v2057, %v2056
      %v2065 = vpack.c.b16 %v2059, %v2058
      %v2066 = vpack.c.b16 %v2060, %v2060
      %v2067 = vrot.slane %v2061, 2
      %v2068 = vrot.slane %v2062, 2
      %v2069 = vsel %vm1505, %v2067, %v2068
      %v2070 = vrot.slane %v2063, 2
      %v2071 = vsel %vm1505, %v2068, %v2070
      %v2072 = vrot.slane %v2064, 2
      %v2073 = vsel %vm1505, %v2070, %v2072
      %v2074 = vrot.slane %v2065, 2
      %v2075 = vsel %vm1505, %v2072, %v2074
      %v2076 = vrot.slane %v2066, 2
      %v2077 = vsel %vm1505, %v2074, %v2076
      %v2086 = vunpack.c.l.b16 %v2031
      %v2087 = vunpack.c.l.b16 %v2032
      %v2088 = vunpack.c.l.b16 %v2033
      %v2089 = vunpack.c.l.b16 %v2034
      %v2090 = vunpack.c.l.b16 %v2035
      %v2091 = vunpack.c.l.b16 %v2036
      %v2092 = vunpack.c.l.b16 %v2037
      %v2093 = vunpack.c.l.b16 %v2038
      %v2094 = vpack.c.b16 %v2087, %v2086
      %v2095 = vpack.c.b16 %v2089, %v2088
      %v2096 = vpack.c.b16 %v2091, %v2090
      %v2097 = vpack.c.b16 %v2093, %v2092
      %v2103 = vsel %vm325, %v2069, 0
      %v2106 = vsel %vm325, %v2071, 0
      %v2109 = vsel %vm325, %v2073, 0
      %v2112 = vsel %vm325, %v2075, 0
      %v2115 = vsel %vm325, %v2077, 0
      %2117 = vmatprep.subr.bf16.mxu0 0
      %2118 = vmatpush1.bf16.msra.mxu0 0
      %2119 = vmatprep.subr.bf16.mxu0 0
      %2120 = vmatpush1.bf16.msra.mxu0 0
      %2121 = vmatprep.subr.bf16.mxu0 0
      %2122 = vmatpush1.bf16.msra.mxu0 0
      %2123 = vmatprep.subr.bf16.mxu0 0
      %2124 = vmatpush1.bf16.msra.mxu0 0
      %2125 = vmatprep.subr.bf16.mxu0 0
      %2126 = vmatpush1.bf16.msra.mxu0 %v2097
      %2127 = vmatprep.subr.bf16.mxu0 0
      %2128 = vmatpush1.bf16.msra.mxu0 %v2096
      %2129 = vmatprep.subr.bf16.mxu0 0
      %2130 = vmatpush1.bf16.msra.mxu0 %v2095
      %2131 = vmatprep.subr.bf16.mxu0 0
      %2132 = vmatpush1.bf16.msra.mxu0 %v2094
      %2133 = vmatprep.subr.bf16.mxu0 0
      %2134 = vmatpush2.bf16.msra.mxu0 0
      %2135 = vmatprep.subr.bf16.mxu0 0
      %2136 = vmatpush2.bf16.msra.mxu0 0
      %2137 = vmatprep.subr.bf16.mxu0 0
      %2138 = vmatpush2.bf16.msra.mxu0 0
      %2139 = vmatprep.subr.bf16.mxu0 0
      %2140 = vmatpush2.bf16.msra.mxu0 0
      %2141 = vmatprep.subr.bf16.mxu0 0
      %2142 = vmatpush2.bf16.msra.mxu0 0
      %2143 = vmatprep.subr.bf16.mxu0 0
      %2144 = vmatpush2.bf16.msra.mxu0 0
      %2145 = vmatprep.subr.bf16.mxu0 0
      %2146 = vmatpush2.bf16.msra.mxu0 0
      %2147 = vmatprep.subr.bf16.mxu0 0
      %2148 = vmatpush2.bf16.msra.mxu0 0
      %2149 = vmatprep.mubr.bf16.mxu0 0
      %2150 = vmatmul.mubr.bf16.gmra.mxu0 %v2103
      %v2151 = vpop.f32.mrf.mxu0
      %v2152 = vadd.f32 0.0, %v2151
      %v2153 = vpop.f32.mrf.mxu0
      %v2154 = vpop.f32.mrf.mxu0
      %v2155 = vadd.f32 0.0, %v2154
      %v2156 = vpop.f32.mrf.mxu0
      %2157 = vmatprep.mubr.bf16.mxu0 0
      %2158 = vmatmul.mubr.bf16.gmra.mxu0 %v2106
      %v2159 = vpop.f32.mrf.mxu0
      %v2160 = vadd.f32 0.0, %v2159
      %v2161 = vpop.f32.mrf.mxu0
      %v2162 = vpop.f32.mrf.mxu0
      %v2163 = vadd.f32 0.0, %v2162
      %v2164 = vpop.f32.mrf.mxu0
      %2165 = vmatprep.mubr.bf16.mxu0 0
      %2166 = vmatmul.mubr.bf16.gmra.mxu0 %v2109
      %v2167 = vpop.f32.mrf.mxu0
      %v2168 = vadd.f32 0.0, %v2167
      %v2169 = vpop.f32.mrf.mxu0
      %v2170 = vpop.f32.mrf.mxu0
      %v2171 = vadd.f32 0.0, %v2170
      %v2172 = vpop.f32.mrf.mxu0
      %2173 = vmatprep.mubr.bf16.mxu0 0
      %2174 = vmatmul.mubr.bf16.gmra.mxu0 %v2112
      %v2175 = vpop.f32.mrf.mxu0
      %v2176 = vadd.f32 0.0, %v2175
      %v2177 = vpop.f32.mrf.mxu0
      %v2178 = vpop.f32.mrf.mxu0
      %v2179 = vadd.f32 0.0, %v2178
      %v2180 = vpop.f32.mrf.mxu0
      %2181 = vmatprep.mubr.bf16.mxu0 0
      %2182 = vmatmul.mubr.bf16.gmra.mxu0 %v2115
      %v2183 = vpop.f32.mrf.mxu0
      %v2184 = vadd.f32 0.0, %v2183
      %v2185 = vpop.f32.mrf.mxu0
      %v2186 = vpop.f32.mrf.mxu0
      %v2187 = vadd.f32 0.0, %v2186
      %v2188 = vpop.f32.mrf.mxu0
      %2189 = vdwg.mxu0
      %v2190 = vadd.f32 %v1981, %v2152
      %v2191 = vadd.f32 %v1984, %v2155
      %v2192 = vadd.f32 %v1989, %v2160
      %v2193 = vadd.f32 %v1992, %v2163
      %v2194 = vadd.f32 %v1997, %v2168
      %v2195 = vadd.f32 %v2000, %v2171
      %v2196 = vadd.f32 %v2005, %v2176
      %v2197 = vadd.f32 %v2008, %v2179
      %v2198 = vadd.f32 %v2013, %v2184
      %v2199 = vadd.f32 %v2016, %v2187
      %v2200 = vld [vmem:[%s192 + $0x30] sm:$0x7]
      %s2201 = scalar_lea.vmem %s1, 352
      %v2202 = vld [vmem:[%s2201] sm:$0xf]
      %v2203 = vld [vmem:[%s2201 + $0x4] sm:$0xf]
      %v2204 = vld [vmem:[%s2201 + $0x8] sm:$0xf]
      %v2205 = vld [vmem:[%s2201 + $0xc] sm:$0xf]
      %v2206 = vld [vmem:[%s2201 + $0x10] sm:$0xf]
      %v2207 = vld [vmem:[%s2201 + $0x14] sm:$0xf]
      %v2208 = vld [vmem:[%s2201 + $0x18] sm:$0xf]
      %v2209 = vld [vmem:[%s2201 + $0x1c] sm:$0xf]
      %v2211 = vunpack.c.l.b16 %v2200
      %v2212 = vpack.c.b16 %v2211, %v2211
      %vm2213 = vsmask.f32 5376
      %v2215 = vshrl.u32 %v2061, 16
      %v2217 = vrot.slane %v2215, 2
      %v2218 = vshll.u32 %v2061, 16
      %v2220 = vrot.slane %v2218, 3
      %v2221 = vor.u32 %v2217, %v2220
      %v2223 = vshrl.u32 %v2062, 16
      %v2225 = vrot.slane %v2223, 2
      %v2226 = vshll.u32 %v2062, 16
      %v2228 = vrot.slane %v2226, 3
      %v2229 = vor.u32 %v2225, %v2228
      %v2230 = vsel %vm2213, %v2221, %v2229
      %v2232 = vshrl.u32 %v2063, 16
      %v2234 = vrot.slane %v2232, 2
      %v2235 = vshll.u32 %v2063, 16
      %v2237 = vrot.slane %v2235, 3
      %v2238 = vor.u32 %v2234, %v2237
      %v2239 = vsel %vm2213, %v2229, %v2238
      %v2241 = vshrl.u32 %v2064, 16
      %v2243 = vrot.slane %v2241, 2
      %v2244 = vshll.u32 %v2064, 16
      %v2246 = vrot.slane %v2244, 3
      %v2247 = vor.u32 %v2243, %v2246
      %v2248 = vsel %vm2213, %v2238, %v2247
      %v2250 = vshrl.u32 %v2065, 16
      %v2252 = vrot.slane %v2250, 2
      %v2253 = vshll.u32 %v2065, 16
      %v2255 = vrot.slane %v2253, 3
      %v2256 = vor.u32 %v2252, %v2255
      %v2257 = vsel %vm2213, %v2247, %v2256
      %v2259 = vshrl.u32 %v2212, 16
      %v2261 = vrot.slane %v2259, 2
      %v2262 = vshll.u32 %v2212, 16
      %v2264 = vrot.slane %v2262, 3
      %v2265 = vor.u32 %v2261, %v2264
      %v2266 = vsel %vm2213, %v2256, %v2265
      %v2275 = vunpack.c.l.b16 %v2202
      %v2276 = vunpack.c.l.b16 %v2203
      %v2277 = vunpack.c.l.b16 %v2204
      %v2278 = vunpack.c.l.b16 %v2205
      %v2279 = vunpack.c.l.b16 %v2206
      %v2280 = vunpack.c.l.b16 %v2207
      %v2281 = vunpack.c.l.b16 %v2208
      %v2282 = vunpack.c.l.b16 %v2209
      %v2283 = vpack.c.b16 %v2276, %v2275
      %v2284 = vpack.c.b16 %v2278, %v2277
      %v2285 = vpack.c.b16 %v2280, %v2279
      %v2286 = vpack.c.b16 %v2282, %v2281
      %v2292 = vsel %vm325, %v2230, 0
      %v2295 = vsel %vm325, %v2239, 0
      %v2298 = vsel %vm325, %v2248, 0
      %v2301 = vsel %vm325, %v2257, 0
      %v2304 = vsel %vm325, %v2266, 0
      %2306 = vmatprep.subr.bf16.mxu0 0
      %2307 = vmatpush1.bf16.msra.mxu0 0
      %2308 = vmatprep.subr.bf16.mxu0 0
      %2309 = vmatpush1.bf16.msra.mxu0 0
      %2310 = vmatprep.subr.bf16.mxu0 0
      %2311 = vmatpush1.bf16.msra.mxu0 0
      %2312 = vmatprep.subr.bf16.mxu0 0
      %2313 = vmatpush1.bf16.msra.mxu0 0
      %2314 = vmatprep.subr.bf16.mxu0 0
      %2315 = vmatpush1.bf16.msra.mxu0 %v2286
      %2316 = vmatprep.subr.bf16.mxu0 0
      %2317 = vmatpush1.bf16.msra.mxu0 %v2285
      %2318 = vmatprep.subr.bf16.mxu0 0
      %2319 = vmatpush1.bf16.msra.mxu0 %v2284
      %2320 = vmatprep.subr.bf16.mxu0 0
      %2321 = vmatpush1.bf16.msra.mxu0 %v2283
      %2322 = vmatprep.subr.bf16.mxu0 0
      %2323 = vmatpush2.bf16.msra.mxu0 0
      %2324 = vmatprep.subr.bf16.mxu0 0
      %2325 = vmatpush2.bf16.msra.mxu0 0
      %2326 = vmatprep.subr.bf16.mxu0 0
      %2327 = vmatpush2.bf16.msra.mxu0 0
      %2328 = vmatprep.subr.bf16.mxu0 0
      %2329 = vmatpush2.bf16.msra.mxu0 0
      %2330 = vmatprep.subr.bf16.mxu0 0
      %2331 = vmatpush2.bf16.msra.mxu0 0
      %2332 = vmatprep.subr.bf16.mxu0 0
      %2333 = vmatpush2.bf16.msra.mxu0 0
      %2334 = vmatprep.subr.bf16.mxu0 0
      %2335 = vmatpush2.bf16.msra.mxu0 0
      %2336 = vmatprep.subr.bf16.mxu0 0
      %2337 = vmatpush2.bf16.msra.mxu0 0
      %2338 = vmatprep.mubr.bf16.mxu0 0
      %2339 = vmatmul.mubr.bf16.gmra.mxu0 %v2292
      %v2340 = vpop.f32.mrf.mxu0
      %v2341 = vadd.f32 0.0, %v2340
      %v2342 = vpop.f32.mrf.mxu0
      %v2343 = vpop.f32.mrf.mxu0
      %v2344 = vadd.f32 0.0, %v2343
      %v2345 = vpop.f32.mrf.mxu0
      %2346 = vmatprep.mubr.bf16.mxu0 0
      %2347 = vmatmul.mubr.bf16.gmra.mxu0 %v2295
      %v2348 = vpop.f32.mrf.mxu0
      %v2349 = vadd.f32 0.0, %v2348
      %v2350 = vpop.f32.mrf.mxu0
      %v2351 = vpop.f32.mrf.mxu0
      %v2352 = vadd.f32 0.0, %v2351
      %v2353 = vpop.f32.mrf.mxu0
      %2354 = vmatprep.mubr.bf16.mxu0 0
      %2355 = vmatmul.mubr.bf16.gmra.mxu0 %v2298
      %v2356 = vpop.f32.mrf.mxu0
      %v2357 = vadd.f32 0.0, %v2356
      %v2358 = vpop.f32.mrf.mxu0
      %v2359 = vpop.f32.mrf.mxu0
      %v2360 = vadd.f32 0.0, %v2359
      %v2361 = vpop.f32.mrf.mxu0
      %2362 = vmatprep.mubr.bf16.mxu0 0
      %2363 = vmatmul.mubr.bf16.gmra.mxu0 %v2301
      %v2364 = vpop.f32.mrf.mxu0
      %v2365 = vadd.f32 0.0, %v2364
      %v2366 = vpop.f32.mrf.mxu0
      %v2367 = vpop.f32.mrf.mxu0
      %v2368 = vadd.f32 0.0, %v2367
      %v2369 = vpop.f32.mrf.mxu0
      %2370 = vmatprep.mubr.bf16.mxu0 0
      %2371 = vmatmul.mubr.bf16.gmra.mxu0 %v2304
      %v2372 = vpop.f32.mrf.mxu0
      %v2373 = vadd.f32 0.0, %v2372
      %v2374 = vpop.f32.mrf.mxu0
      %v2375 = vpop.f32.mrf.mxu0
      %v2376 = vadd.f32 0.0, %v2375
      %v2377 = vpop.f32.mrf.mxu0
      %2378 = vdwg.mxu0
      %v2379 = vadd.f32 %v2190, %v2341
      %v2380 = vadd.f32 %v2191, %v2344
      %v2381 = vadd.f32 %v2192, %v2349
      %v2382 = vadd.f32 %v2193, %v2352
      %v2383 = vadd.f32 %v2194, %v2357
      %v2384 = vadd.f32 %v2195, %v2360
      %v2385 = vadd.f32 %v2196, %v2365
      %v2386 = vadd.f32 %v2197, %v2368
      %v2387 = vadd.f32 %v2198, %v2373
      %v2388 = vadd.f32 %v2199, %v2376
      %v2389 = vadd.f32 %v2379, %v896
      %v2390 = vadd.f32 %v2380, %v896
      %v2391 = vadd.f32 %v2381, %v896
      %v2392 = vadd.f32 %v2382, %v896
      %v2393 = vadd.f32 %v2383, %v896
      %v2394 = vadd.f32 %v2384, %v896
      %v2395 = vadd.f32 %v2385, %v896
      %v2396 = vadd.f32 %v2386, %v896
      %v2397 = vadd.f32 %v2387, %v896
      %v2398 = vadd.f32 %v2388, %v896
      %v2399 = vtanh.pop %v2389
      %v2400 = vtanh.pop %v2390
      %v2401 = vtanh.pop %v2391
      %v2402 = vtanh.pop %v2392
      %v2403 = vtanh.pop %v2393
      %v2404 = vtanh.pop %v2394
      %v2405 = vtanh.pop %v2395
      %v2406 = vtanh.pop %v2396
      %v2407 = vtanh.pop %v2397
      %v2408 = vtanh.pop %v2398
      %s2409 = scalar_lea.vmem %s197, 160
      %2410 = vst.msk [vmem:[%s2409] sm:$0xff] %vm918, %v2399
      %2411 = vst.msk [vmem:[%s2409 + $0x8] sm:$0xff] %vm918, %v2400
      %2412 = vst.msk [vmem:[%s2409 + $0x10] sm:$0xff] %vm918, %v2401
      %2413 = vst.msk [vmem:[%s2409 + $0x18] sm:$0xff] %vm918, %v2402
      %2414 = vst.msk [vmem:[%s2409 + $0x20] sm:$0xff] %vm918, %v2403
      %2415 = vst.msk [vmem:[%s2409 + $0x28] sm:$0xff] %vm918, %v2404
      %2416 = vst.msk [vmem:[%s2409 + $0x30] sm:$0xff] %vm918, %v2405
      %2417 = vst.msk [vmem:[%s2409 + $0x38] sm:$0xff] %vm918, %v2406
      %2418 = vst.msk [vmem:[%s2409 + $0x40] sm:$0xff] %vm918, %v2407
      %2419 = vst.msk [vmem:[%s2409 + $0x48] sm:$0xff] %vm918, %v2408
      %v2420 = vld [vmem:[%s192 + $0x4] sm:$0xe]
      %v2421 = vld [vmem:[%s192 + $0x8] sm:$0xf]
      %v2422 = vld [vmem:[%s192 + $0xc] sm:$0xf]
      %v2423 = vld [vmem:[%s192 + $0x10] sm:$0xf]
      %v2424 = vld [vmem:[%s192 + $0x14] sm:$0xf]
      %v2425 = vld [vmem:[%s192 + $0x18] sm:$0xf]
      %v2426 = vld [vmem:[%s192 + $0x1c] sm:$0xf]
      %v2427 = vld [vmem:[%s192 + $0x20] sm:$0xf]
      %v2428 = vld [vmem:[%s192 + $0x24] sm:$0xf]
      %v2429 = vld [vmem:[%s192 + $0x28] sm:$0xf]
      %v2430 = vld [vmem:[%s192 + $0x2c] sm:$0x3]
      %s2431 = scalar_lea.vmem %s1, 384
      %v2432 = vld [vmem:[%s2431] sm:$0xf]
      %v2433 = vld [vmem:[%s2431 + $0x4] sm:$0xf]
      %v2434 = vld [vmem:[%s2431 + $0x8] sm:$0xf]
      %v2435 = vld [vmem:[%s2431 + $0xc] sm:$0xf]
      %v2436 = vld [vmem:[%s2431 + $0x10] sm:$0xf]
      %v2437 = vld [vmem:[%s2431 + $0x14] sm:$0xf]
      %v2438 = vld [vmem:[%s2431 + $0x18] sm:$0xf]
      %v2439 = vld [vmem:[%s2431 + $0x1c] sm:$0xf]
      %v2440 = vld [vmem:[%s192 + $0x4] sm:$0xc]
      %s2441 = scalar_lea.vmem %s1, 416
      %v2442 = vld [vmem:[%s2441] sm:$0xf]
      %v2443 = vld [vmem:[%s2441 + $0x4] sm:$0xf]
      %v2444 = vld [vmem:[%s2441 + $0x8] sm:$0xf]
      %v2445 = vld [vmem:[%s2441 + $0xc] sm:$0xf]
      %v2446 = vld [vmem:[%s2441 + $0x10] sm:$0xf]
      %v2447 = vld [vmem:[%s2441 + $0x14] sm:$0xf]
      %v2448 = vld [vmem:[%s2441 + $0x18] sm:$0xf]
      %v2449 = vld [vmem:[%s2441 + $0x1c] sm:$0xf]
      %v2461 = vunpack.c.l.b16 %v2440
      %v2462 = vunpack.c.l.b16 %v2421
      %v2463 = vunpack.c.l.b16 %v2422
      %v2464 = vunpack.c.l.b16 %v2423
      %v2465 = vunpack.c.l.b16 %v2424
      %v2466 = vunpack.c.l.b16 %v2425
      %v2467 = vunpack.c.l.b16 %v2426
      %v2468 = vunpack.c.l.b16 %v2427
      %v2469 = vunpack.c.l.b16 %v2428
      %v2470 = vunpack.c.l.b16 %v2429
      %v2471 = vunpack.c.l.b16 %v2430
      %v2472 = vpack.c.b16 %v2462, %v2461
      %v2473 = vpack.c.b16 %v2464, %v2463
      %v2474 = vpack.c.b16 %v2466, %v2465
      %v2475 = vpack.c.b16 %v2468, %v2467
      %v2476 = vpack.c.b16 %v2470, %v2469
      %v2477 = vpack.c.b16 %v2471, %v2471
      %v2478 = vrot.slane %v2472, 2
      %v2479 = vrot.slane %v2473, 2
      %v2480 = vsel %vm1505, %v2478, %v2479
      %v2481 = vrot.slane %v2474, 2
      %v2482 = vsel %vm1505, %v2479, %v2481
      %v2483 = vrot.slane %v2475, 2
      %v2484 = vsel %vm1505, %v2481, %v2483
      %v2485 = vrot.slane %v2476, 2
      %v2486 = vsel %vm1505, %v2483, %v2485
      %v2487 = vrot.slane %v2477, 2
      %v2488 = vsel %vm1505, %v2485, %v2487
      %v2497 = vunpack.c.l.b16 %v2442
      %v2498 = vunpack.c.l.b16 %v2443
      %v2499 = vunpack.c.l.b16 %v2444
      %v2500 = vunpack.c.l.b16 %v2445
      %v2501 = vunpack.c.l.b16 %v2446
      %v2502 = vunpack.c.l.b16 %v2447
      %v2503 = vunpack.c.l.b16 %v2448
      %v2504 = vunpack.c.l.b16 %v2449
      %v2505 = vpack.c.b16 %v2498, %v2497
      %v2506 = vpack.c.b16 %v2500, %v2499
      %v2507 = vpack.c.b16 %v2502, %v2501
      %v2508 = vpack.c.b16 %v2504, %v2503
      %v2514 = vsel %vm325, %v2480, 0
      %v2517 = vsel %vm325, %v2482, 0
      %v2520 = vsel %vm325, %v2484, 0
      %v2523 = vsel %vm325, %v2486, 0
      %v2526 = vsel %vm325, %v2488, 0
      %2528 = vmatprep.subr.bf16.mxu0 0
      %2529 = vmatpush1.bf16.msra.mxu0 0
      %2530 = vmatprep.subr.bf16.mxu0 0
      %2531 = vmatpush1.bf16.msra.mxu0 0
      %2532 = vmatprep.subr.bf16.mxu0 0
      %2533 = vmatpush1.bf16.msra.mxu0 0
      %2534 = vmatprep.subr.bf16.mxu0 0
      %2535 = vmatpush1.bf16.msra.mxu0 0
      %2536 = vmatprep.subr.bf16.mxu0 0
      %2537 = vmatpush1.bf16.msra.mxu0 %v2508
      %2538 = vmatprep.subr.bf16.mxu0 0
      %2539 = vmatpush1.bf16.msra.mxu0 %v2507
      %2540 = vmatprep.subr.bf16.mxu0 0
      %2541 = vmatpush1.bf16.msra.mxu0 %v2506
      %2542 = vmatprep.subr.bf16.mxu0 0
      %2543 = vmatpush1.bf16.msra.mxu0 %v2505
      %2544 = vmatprep.subr.bf16.mxu0 0
      %2545 = vmatpush2.bf16.msra.mxu0 0
      %2546 = vmatprep.subr.bf16.mxu0 0
      %2547 = vmatpush2.bf16.msra.mxu0 0
      %2548 = vmatprep.subr.bf16.mxu0 0
      %2549 = vmatpush2.bf16.msra.mxu0 0
      %2550 = vmatprep.subr.bf16.mxu0 0
      %2551 = vmatpush2.bf16.msra.mxu0 0
      %2552 = vmatprep.subr.bf16.mxu0 0
      %2553 = vmatpush2.bf16.msra.mxu0 0
      %2554 = vmatprep.subr.bf16.mxu0 0
      %2555 = vmatpush2.bf16.msra.mxu0 0
      %2556 = vmatprep.subr.bf16.mxu0 0
      %2557 = vmatpush2.bf16.msra.mxu0 0
      %2558 = vmatprep.subr.bf16.mxu0 0
      %2559 = vmatpush2.bf16.msra.mxu0 0
      %2560 = vmatprep.mubr.bf16.mxu0 0
      %2561 = vmatmul.mubr.bf16.gmra.mxu0 %v2514
      %v2562 = vpop.f32.mrf.mxu0
      %v2563 = vadd.f32 0.0, %v2562
      %v2564 = vpop.f32.mrf.mxu0
      %v2565 = vpop.f32.mrf.mxu0
      %v2566 = vadd.f32 0.0, %v2565
      %v2567 = vpop.f32.mrf.mxu0
      %2568 = vmatprep.mubr.bf16.mxu0 0
      %2569 = vmatmul.mubr.bf16.gmra.mxu0 %v2517
      %v2570 = vpop.f32.mrf.mxu0
      %v2571 = vadd.f32 0.0, %v2570
      %v2572 = vpop.f32.mrf.mxu0
      %v2573 = vpop.f32.mrf.mxu0
      %v2574 = vadd.f32 0.0, %v2573
      %v2575 = vpop.f32.mrf.mxu0
      %2576 = vmatprep.mubr.bf16.mxu0 0
      %2577 = vmatmul.mubr.bf16.gmra.mxu0 %v2520
      %v2578 = vpop.f32.mrf.mxu0
      %v2579 = vadd.f32 0.0, %v2578
      %v2580 = vpop.f32.mrf.mxu0
      %v2581 = vpop.f32.mrf.mxu0
      %v2582 = vadd.f32 0.0, %v2581
      %v2583 = vpop.f32.mrf.mxu0
      %2584 = vmatprep.mubr.bf16.mxu0 0
      %2585 = vmatmul.mubr.bf16.gmra.mxu0 %v2523
      %v2586 = vpop.f32.mrf.mxu0
      %v2587 = vadd.f32 0.0, %v2586
      %v2588 = vpop.f32.mrf.mxu0
      %v2589 = vpop.f32.mrf.mxu0
      %v2590 = vadd.f32 0.0, %v2589
      %v2591 = vpop.f32.mrf.mxu0
      %2592 = vmatprep.mubr.bf16.mxu0 0
      %2593 = vmatmul.mubr.bf16.gmra.mxu0 %v2526
      %v2594 = vpop.f32.mrf.mxu0
      %v2595 = vadd.f32 0.0, %v2594
      %v2596 = vpop.f32.mrf.mxu0
      %v2597 = vpop.f32.mrf.mxu0
      %v2598 = vadd.f32 0.0, %v2597
      %v2599 = vpop.f32.mrf.mxu0
      %2600 = vdwg.mxu0
      %v2602 = vunpack.c.l.b16 %v2420
      %v2603 = vpack.c.b16 %v2462, %v2602
      %v2605 = vshrl.u32 %v2603, 16
      %v2607 = vrot.slane %v2605, 1
      %v2608 = vshll.u32 %v2603, 16
      %v2610 = vrot.slane %v2608, 2
      %v2611 = vor.u32 %v2607, %v2610
      %v2613 = vshrl.u32 %v2473, 16
      %v2615 = vrot.slane %v2613, 1
      %v2616 = vshll.u32 %v2473, 16
      %v2618 = vrot.slane %v2616, 2
      %v2619 = vor.u32 %v2615, %v2618
      %v2620 = vsel %vm716, %v2611, %v2619
      %v2622 = vshrl.u32 %v2474, 16
      %v2624 = vrot.slane %v2622, 1
      %v2625 = vshll.u32 %v2474, 16
      %v2627 = vrot.slane %v2625, 2
      %v2628 = vor.u32 %v2624, %v2627
      %v2629 = vsel %vm716, %v2619, %v2628
      %v2631 = vshrl.u32 %v2475, 16
      %v2633 = vrot.slane %v2631, 1
      %v2634 = vshll.u32 %v2475, 16
      %v2636 = vrot.slane %v2634, 2
      %v2637 = vor.u32 %v2633, %v2636
      %v2638 = vsel %vm716, %v2628, %v2637
      %v2640 = vshrl.u32 %v2476, 16
      %v2642 = vrot.slane %v2640, 1
      %v2643 = vshll.u32 %v2476, 16
      %v2645 = vrot.slane %v2643, 2
      %v2646 = vor.u32 %v2642, %v2645
      %v2647 = vsel %vm716, %v2637, %v2646
      %v2649 = vshrl.u32 %v2477, 16
      %v2651 = vrot.slane %v2649, 1
      %v2652 = vshll.u32 %v2477, 16
      %v2654 = vrot.slane %v2652, 2
      %v2655 = vor.u32 %v2651, %v2654
      %v2656 = vsel %vm716, %v2646, %v2655
      %v2665 = vunpack.c.l.b16 %v2432
      %v2666 = vunpack.c.l.b16 %v2433
      %v2667 = vunpack.c.l.b16 %v2434
      %v2668 = vunpack.c.l.b16 %v2435
      %v2669 = vunpack.c.l.b16 %v2436
      %v2670 = vunpack.c.l.b16 %v2437
      %v2671 = vunpack.c.l.b16 %v2438
      %v2672 = vunpack.c.l.b16 %v2439
      %v2673 = vpack.c.b16 %v2666, %v2665
      %v2674 = vpack.c.b16 %v2668, %v2667
      %v2675 = vpack.c.b16 %v2670, %v2669
      %v2676 = vpack.c.b16 %v2672, %v2671
      %v2682 = vsel %vm325, %v2620, 0
      %v2685 = vsel %vm325, %v2629, 0
      %v2688 = vsel %vm325, %v2638, 0
      %v2691 = vsel %vm325, %v2647, 0
      %v2694 = vsel %vm325, %v2656, 0
      %2696 = vmatprep.subr.bf16.mxu0 0
      %2697 = vmatpush1.bf16.msra.mxu0 0
      %2698 = vmatprep.subr.bf16.mxu0 0
      %2699 = vmatpush1.bf16.msra.mxu0 0
      %2700 = vmatprep.subr.bf16.mxu0 0
      %2701 = vmatpush1.bf16.msra.mxu0 0
      %2702 = vmatprep.subr.bf16.mxu0 0
      %2703 = vmatpush1.bf16.msra.mxu0 0
      %2704 = vmatprep.subr.bf16.mxu0 0
      %2705 = vmatpush1.bf16.msra.mxu0 %v2676
      %2706 = vmatprep.subr.bf16.mxu0 0
      %2707 = vmatpush1.bf16.msra.mxu0 %v2675
      %2708 = vmatprep.subr.bf16.mxu0 0
      %2709 = vmatpush1.bf16.msra.mxu0 %v2674
      %2710 = vmatprep.subr.bf16.mxu0 0
      %2711 = vmatpush1.bf16.msra.mxu0 %v2673
      %2712 = vmatprep.subr.bf16.mxu0 0
      %2713 = vmatpush2.bf16.msra.mxu0 0
      %2714 = vmatprep.subr.bf16.mxu0 0
      %2715 = vmatpush2.bf16.msra.mxu0 0
      %2716 = vmatprep.subr.bf16.mxu0 0
      %2717 = vmatpush2.bf16.msra.mxu0 0
      %2718 = vmatprep.subr.bf16.mxu0 0
      %2719 = vmatpush2.bf16.msra.mxu0 0
      %2720 = vmatprep.subr.bf16.mxu0 0
      %2721 = vmatpush2.bf16.msra.mxu0 0
      %2722 = vmatprep.subr.bf16.mxu0 0
      %2723 = vmatpush2.bf16.msra.mxu0 0
      %2724 = vmatprep.subr.bf16.mxu0 0
      %2725 = vmatpush2.bf16.msra.mxu0 0
      %2726 = vmatprep.subr.bf16.mxu0 0
      %2727 = vmatpush2.bf16.msra.mxu0 0
      %2728 = vmatprep.mubr.bf16.mxu0 0
      %2729 = vmatmul.mubr.bf16.gmra.mxu0 %v2682
      %v2730 = vpop.f32.mrf.mxu0
      %v2731 = vadd.f32 %v2563, %v2730
      %v2732 = vpop.f32.mrf.mxu0
      %v2733 = vpop.f32.mrf.mxu0
      %v2734 = vadd.f32 %v2566, %v2733
      %v2735 = vpop.f32.mrf.mxu0
      %2736 = vmatprep.mubr.bf16.mxu0 0
      %2737 = vmatmul.mubr.bf16.gmra.mxu0 %v2685
      %v2738 = vpop.f32.mrf.mxu0
      %v2739 = vadd.f32 %v2571, %v2738
      %v2740 = vpop.f32.mrf.mxu0
      %v2741 = vpop.f32.mrf.mxu0
      %v2742 = vadd.f32 %v2574, %v2741
      %v2743 = vpop.f32.mrf.mxu0
      %2744 = vmatprep.mubr.bf16.mxu0 0
      %2745 = vmatmul.mubr.bf16.gmra.mxu0 %v2688
      %v2746 = vpop.f32.mrf.mxu0
      %v2747 = vadd.f32 %v2579, %v2746
      %v2748 = vpop.f32.mrf.mxu0
      %v2749 = vpop.f32.mrf.mxu0
      %v2750 = vadd.f32 %v2582, %v2749
      %v2751 = vpop.f32.mrf.mxu0
      %2752 = vmatprep.mubr.bf16.mxu0 0
      %2753 = vmatmul.mubr.bf16.gmra.mxu0 %v2691
      %v2754 = vpop.f32.mrf.mxu0
      %v2755 = vadd.f32 %v2587, %v2754
      %v2756 = vpop.f32.mrf.mxu0
      %v2757 = vpop.f32.mrf.mxu0
      %v2758 = vadd.f32 %v2590, %v2757
      %v2759 = vpop.f32.mrf.mxu0
      %2760 = vmatprep.mubr.bf16.mxu0 0
      %2761 = vmatmul.mubr.bf16.gmra.mxu0 %v2694
      %v2762 = vpop.f32.mrf.mxu0
      %v2763 = vadd.f32 %v2595, %v2762
      %v2764 = vpop.f32.mrf.mxu0
      %v2765 = vpop.f32.mrf.mxu0
      %v2766 = vadd.f32 %v2598, %v2765
      %v2767 = vpop.f32.mrf.mxu0
      %2768 = vdwg.mxu0
      %v2769 = vld [vmem:[%s192 + $0x8] sm:$0xc]
      %v2770 = vld [vmem:[%s192 + $0xc] sm:$0xf]
      %v2771 = vld [vmem:[%s192 + $0x10] sm:$0xf]
      %v2772 = vld [vmem:[%s192 + $0x14] sm:$0xf]
      %v2773 = vld [vmem:[%s192 + $0x18] sm:$0xf]
      %v2774 = vld [vmem:[%s192 + $0x1c] sm:$0xf]
      %v2775 = vld [vmem:[%s192 + $0x20] sm:$0xf]
      %v2776 = vld [vmem:[%s192 + $0x24] sm:$0xf]
      %v2777 = vld [vmem:[%s192 + $0x28] sm:$0xf]
      %v2778 = vld [vmem:[%s192 + $0x2c] sm:$0xf]
      %v2779 = vld [vmem:[%s192 + $0x30] sm:$0x7]
      %s2780 = scalar_lea.vmem %s1, 448
      %v2781 = vld [vmem:[%s2780] sm:$0xf]
      %v2782 = vld [vmem:[%s2780 + $0x4] sm:$0xf]
      %v2783 = vld [vmem:[%s2780 + $0x8] sm:$0xf]
      %v2784 = vld [vmem:[%s2780 + $0xc] sm:$0xf]
      %v2785 = vld [vmem:[%s2780 + $0x10] sm:$0xf]
      %v2786 = vld [vmem:[%s2780 + $0x14] sm:$0xf]
      %v2787 = vld [vmem:[%s2780 + $0x18] sm:$0xf]
      %v2788 = vld [vmem:[%s2780 + $0x1c] sm:$0xf]
      %v2800 = vunpack.c.l.b16 %v2769
      %v2801 = vunpack.c.l.b16 %v2770
      %v2802 = vunpack.c.l.b16 %v2771
      %v2803 = vunpack.c.l.b16 %v2772
      %v2804 = vunpack.c.l.b16 %v2773
      %v2805 = vunpack.c.l.b16 %v2774
      %v2806 = vunpack.c.l.b16 %v2775
      %v2807 = vunpack.c.l.b16 %v2776
      %v2808 = vunpack.c.l.b16 %v2777
      %v2809 = vunpack.c.l.b16 %v2778
      %v2810 = vunpack.c.l.b16 %v2779
      %v2811 = vpack.c.b16 %v2801, %v2800
      %v2812 = vpack.c.b16 %v2803, %v2802
      %v2813 = vpack.c.b16 %v2805, %v2804
      %v2814 = vpack.c.b16 %v2807, %v2806
      %v2815 = vpack.c.b16 %v2809, %v2808
      %v2816 = vpack.c.b16 %v2810, %v2810
      %v2818 = vshrl.u32 %v2811, 16
      %v2820 = vrot.slane %v2818, 2
      %v2821 = vshll.u32 %v2811, 16
      %v2823 = vrot.slane %v2821, 3
      %v2824 = vor.u32 %v2820, %v2823
      %v2826 = vshrl.u32 %v2812, 16
      %v2828 = vrot.slane %v2826, 2
      %v2829 = vshll.u32 %v2812, 16
      %v2831 = vrot.slane %v2829, 3
      %v2832 = vor.u32 %v2828, %v2831
      %v2833 = vsel %vm2213, %v2824, %v2832
      %v2835 = vshrl.u32 %v2813, 16
      %v2837 = vrot.slane %v2835, 2
      %v2838 = vshll.u32 %v2813, 16
      %v2840 = vrot.slane %v2838, 3
      %v2841 = vor.u32 %v2837, %v2840
      %v2842 = vsel %vm2213, %v2832, %v2841
      %v2844 = vshrl.u32 %v2814, 16
      %v2846 = vrot.slane %v2844, 2
      %v2847 = vshll.u32 %v2814, 16
      %v2849 = vrot.slane %v2847, 3
      %v2850 = vor.u32 %v2846, %v2849
      %v2851 = vsel %vm2213, %v2841, %v2850
      %v2853 = vshrl.u32 %v2815, 16
      %v2855 = vrot.slane %v2853, 2
      %v2856 = vshll.u32 %v2815, 16
      %v2858 = vrot.slane %v2856, 3
      %v2859 = vor.u32 %v2855, %v2858
      %v2860 = vsel %vm2213, %v2850, %v2859
      %v2862 = vshrl.u32 %v2816, 16
      %v2864 = vrot.slane %v2862, 2
      %v2865 = vshll.u32 %v2816, 16
      %v2867 = vrot.slane %v2865, 3
      %v2868 = vor.u32 %v2864, %v2867
      %v2869 = vsel %vm2213, %v2859, %v2868
      %v2878 = vunpack.c.l.b16 %v2781
      %v2879 = vunpack.c.l.b16 %v2782
      %v2880 = vunpack.c.l.b16 %v2783
      %v2881 = vunpack.c.l.b16 %v2784
      %v2882 = vunpack.c.l.b16 %v2785
      %v2883 = vunpack.c.l.b16 %v2786
      %v2884 = vunpack.c.l.b16 %v2787
      %v2885 = vunpack.c.l.b16 %v2788
      %v2886 = vpack.c.b16 %v2879, %v2878
      %v2887 = vpack.c.b16 %v2881, %v2880
      %v2888 = vpack.c.b16 %v2883, %v2882
      %v2889 = vpack.c.b16 %v2885, %v2884
      %v2895 = vsel %vm325, %v2833, 0
      %v2898 = vsel %vm325, %v2842, 0
      %v2901 = vsel %vm325, %v2851, 0
      %v2904 = vsel %vm325, %v2860, 0
      %v2907 = vsel %vm325, %v2869, 0
      %2909 = vmatprep.subr.bf16.mxu0 0
      %2910 = vmatpush1.bf16.msra.mxu0 0
      %2911 = vmatprep.subr.bf16.mxu0 0
      %2912 = vmatpush1.bf16.msra.mxu0 0
      %2913 = vmatprep.subr.bf16.mxu0 0
      %2914 = vmatpush1.bf16.msra.mxu0 0
      %2915 = vmatprep.subr.bf16.mxu0 0
      %2916 = vmatpush1.bf16.msra.mxu0 0
      %2917 = vmatprep.subr.bf16.mxu0 0
      %2918 = vmatpush1.bf16.msra.mxu0 %v2889
      %2919 = vmatprep.subr.bf16.mxu0 0
      %2920 = vmatpush1.bf16.msra.mxu0 %v2888
      %2921 = vmatprep.subr.bf16.mxu0 0
      %2922 = vmatpush1.bf16.msra.mxu0 %v2887
      %2923 = vmatprep.subr.bf16.mxu0 0
      %2924 = vmatpush1.bf16.msra.mxu0 %v2886
      %2925 = vmatprep.subr.bf16.mxu0 0
      %2926 = vmatpush2.bf16.msra.mxu0 0
      %2927 = vmatprep.subr.bf16.mxu0 0
      %2928 = vmatpush2.bf16.msra.mxu0 0
      %2929 = vmatprep.subr.bf16.mxu0 0
      %2930 = vmatpush2.bf16.msra.mxu0 0
      %2931 = vmatprep.subr.bf16.mxu0 0
      %2932 = vmatpush2.bf16.msra.mxu0 0
      %2933 = vmatprep.subr.bf16.mxu0 0
      %2934 = vmatpush2.bf16.msra.mxu0 0
      %2935 = vmatprep.subr.bf16.mxu0 0
      %2936 = vmatpush2.bf16.msra.mxu0 0
      %2937 = vmatprep.subr.bf16.mxu0 0
      %2938 = vmatpush2.bf16.msra.mxu0 0
      %2939 = vmatprep.subr.bf16.mxu0 0
      %2940 = vmatpush2.bf16.msra.mxu0 0
      %2941 = vmatprep.mubr.bf16.mxu0 0
      %2942 = vmatmul.mubr.bf16.gmra.mxu0 %v2895
      %v2943 = vpop.f32.mrf.mxu0
      %v2944 = vadd.f32 0.0, %v2943
      %v2945 = vpop.f32.mrf.mxu0
      %v2946 = vpop.f32.mrf.mxu0
      %v2947 = vadd.f32 0.0, %v2946
      %v2948 = vpop.f32.mrf.mxu0
      %2949 = vmatprep.mubr.bf16.mxu0 0
      %2950 = vmatmul.mubr.bf16.gmra.mxu0 %v2898
      %v2951 = vpop.f32.mrf.mxu0
      %v2952 = vadd.f32 0.0, %v2951
      %v2953 = vpop.f32.mrf.mxu0
      %v2954 = vpop.f32.mrf.mxu0
      %v2955 = vadd.f32 0.0, %v2954
      %v2956 = vpop.f32.mrf.mxu0
      %2957 = vmatprep.mubr.bf16.mxu0 0
      %2958 = vmatmul.mubr.bf16.gmra.mxu0 %v2901
      %v2959 = vpop.f32.mrf.mxu0
      %v2960 = vadd.f32 0.0, %v2959
      %v2961 = vpop.f32.mrf.mxu0
      %v2962 = vpop.f32.mrf.mxu0
      %v2963 = vadd.f32 0.0, %v2962
      %v2964 = vpop.f32.mrf.mxu0
      %2965 = vmatprep.mubr.bf16.mxu0 0
      %2966 = vmatmul.mubr.bf16.gmra.mxu0 %v2904
      %v2967 = vpop.f32.mrf.mxu0
      %v2968 = vadd.f32 0.0, %v2967
      %v2969 = vpop.f32.mrf.mxu0
      %v2970 = vpop.f32.mrf.mxu0
      %v2971 = vadd.f32 0.0, %v2970
      %v2972 = vpop.f32.mrf.mxu0
      %2973 = vmatprep.mubr.bf16.mxu0 0
      %2974 = vmatmul.mubr.bf16.gmra.mxu0 %v2907
      %v2975 = vpop.f32.mrf.mxu0
      %v2976 = vadd.f32 0.0, %v2975
      %v2977 = vpop.f32.mrf.mxu0
      %v2978 = vpop.f32.mrf.mxu0
      %v2979 = vadd.f32 0.0, %v2978
      %v2980 = vpop.f32.mrf.mxu0
      %2981 = vdwg.mxu0
      %v2982 = vadd.f32 %v2731, %v2944
      %v2983 = vadd.f32 %v2734, %v2947
      %v2984 = vadd.f32 %v2739, %v2952
      %v2985 = vadd.f32 %v2742, %v2955
      %v2986 = vadd.f32 %v2747, %v2960
      %v2987 = vadd.f32 %v2750, %v2963
      %v2988 = vadd.f32 %v2755, %v2968
      %v2989 = vadd.f32 %v2758, %v2971
      %v2990 = vadd.f32 %v2763, %v2976
      %v2991 = vadd.f32 %v2766, %v2979
      %v2992 = vld [vmem:[%s192 + $0x8] sm:$0x8]
      %s2993 = scalar_lea.vmem %s1, 480
      %v2994 = vld [vmem:[%s2993] sm:$0xf]
      %v2995 = vld [vmem:[%s2993 + $0x4] sm:$0xf]
      %v2996 = vld [vmem:[%s2993 + $0x8] sm:$0xf]
      %v2997 = vld [vmem:[%s2993 + $0xc] sm:$0xf]
      %v2998 = vld [vmem:[%s2993 + $0x10] sm:$0xf]
      %v2999 = vld [vmem:[%s2993 + $0x14] sm:$0xf]
      %v3000 = vld [vmem:[%s2993 + $0x18] sm:$0xf]
      %v3001 = vld [vmem:[%s2993 + $0x1c] sm:$0xf]
      %v3003 = vunpack.c.l.b16 %v2992
      %v3004 = vpack.c.b16 %v2801, %v3003
      %vm3005 = vcmask 1044480
      %v3006 = vrot.slane %v3004, 3
      %v3007 = vrot.slane %v2812, 3
      %v3008 = vsel %vm3005, %v3006, %v3007
      %v3009 = vrot.slane %v2813, 3
      %v3010 = vsel %vm3005, %v3007, %v3009
      %v3011 = vrot.slane %v2814, 3
      %v3012 = vsel %vm3005, %v3009, %v3011
      %v3013 = vrot.slane %v2815, 3
      %v3014 = vsel %vm3005, %v3011, %v3013
      %v3015 = vrot.slane %v2816, 3
      %v3016 = vsel %vm3005, %v3013, %v3015
      %v3025 = vunpack.c.l.b16 %v2994
      %v3026 = vunpack.c.l.b16 %v2995
      %v3027 = vunpack.c.l.b16 %v2996
      %v3028 = vunpack.c.l.b16 %v2997
      %v3029 = vunpack.c.l.b16 %v2998
      %v3030 = vunpack.c.l.b16 %v2999
      %v3031 = vunpack.c.l.b16 %v3000
      %v3032 = vunpack.c.l.b16 %v3001
      %v3033 = vpack.c.b16 %v3026, %v3025
      %v3034 = vpack.c.b16 %v3028, %v3027
      %v3035 = vpack.c.b16 %v3030, %v3029
      %v3036 = vpack.c.b16 %v3032, %v3031
      %v3042 = vsel %vm325, %v3008, 0
      %v3045 = vsel %vm325, %v3010, 0
      %v3048 = vsel %vm325, %v3012, 0
      %v3051 = vsel %vm325, %v3014, 0
      %v3054 = vsel %vm325, %v3016, 0
      %3056 = vmatprep.subr.bf16.mxu0 0
      %3057 = vmatpush1.bf16.msra.mxu0 0
      %3058 = vmatprep.subr.bf16.mxu0 0
      %3059 = vmatpush1.bf16.msra.mxu0 0
      %3060 = vmatprep.subr.bf16.mxu0 0
      %3061 = vmatpush1.bf16.msra.mxu0 0
      %3062 = vmatprep.subr.bf16.mxu0 0
      %3063 = vmatpush1.bf16.msra.mxu0 0
      %3064 = vmatprep.subr.bf16.mxu0 0
      %3065 = vmatpush1.bf16.msra.mxu0 %v3036
      %3066 = vmatprep.subr.bf16.mxu0 0
      %3067 = vmatpush1.bf16.msra.mxu0 %v3035
      %3068 = vmatprep.subr.bf16.mxu0 0
      %3069 = vmatpush1.bf16.msra.mxu0 %v3034
      %3070 = vmatprep.subr.bf16.mxu0 0
      %3071 = vmatpush1.bf16.msra.mxu0 %v3033
      %3072 = vmatprep.subr.bf16.mxu0 0
      %3073 = vmatpush2.bf16.msra.mxu0 0
      %3074 = vmatprep.subr.bf16.mxu0 0
      %3075 = vmatpush2.bf16.msra.mxu0 0
      %3076 = vmatprep.subr.bf16.mxu0 0
      %3077 = vmatpush2.bf16.msra.mxu0 0
      %3078 = vmatprep.subr.bf16.mxu0 0
      %3079 = vmatpush2.bf16.msra.mxu0 0
      %3080 = vmatprep.subr.bf16.mxu0 0
      %3081 = vmatpush2.bf16.msra.mxu0 0
      %3082 = vmatprep.subr.bf16.mxu0 0
      %3083 = vmatpush2.bf16.msra.mxu0 0
      %3084 = vmatprep.subr.bf16.mxu0 0
      %3085 = vmatpush2.bf16.msra.mxu0 0
      %3086 = vmatprep.subr.bf16.mxu0 0
      %3087 = vmatpush2.bf16.msra.mxu0 0
      %3088 = vmatprep.mubr.bf16.mxu0 0
      %3089 = vmatmul.mubr.bf16.gmra.mxu0 %v3042
      %v3090 = vpop.f32.mrf.mxu0
      %v3091 = vadd.f32 0.0, %v3090
      %v3092 = vpop.f32.mrf.mxu0
      %v3093 = vpop.f32.mrf.mxu0
      %v3094 = vadd.f32 0.0, %v3093
      %v3095 = vpop.f32.mrf.mxu0
      %3096 = vmatprep.mubr.bf16.mxu0 0
      %3097 = vmatmul.mubr.bf16.gmra.mxu0 %v3045
      %v3098 = vpop.f32.mrf.mxu0
      %v3099 = vadd.f32 0.0, %v3098
      %v3100 = vpop.f32.mrf.mxu0
      %v3101 = vpop.f32.mrf.mxu0
      %v3102 = vadd.f32 0.0, %v3101
      %v3103 = vpop.f32.mrf.mxu0
      %3104 = vmatprep.mubr.bf16.mxu0 0
      %3105 = vmatmul.mubr.bf16.gmra.mxu0 %v3048
      %v3106 = vpop.f32.mrf.mxu0
      %v3107 = vadd.f32 0.0, %v3106
      %v3108 = vpop.f32.mrf.mxu0
      %v3109 = vpop.f32.mrf.mxu0
      %v3110 = vadd.f32 0.0, %v3109
      %v3111 = vpop.f32.mrf.mxu0
      %3112 = vmatprep.mubr.bf16.mxu0 0
      %3113 = vmatmul.mubr.bf16.gmra.mxu0 %v3051
      %v3114 = vpop.f32.mrf.mxu0
      %v3115 = vadd.f32 0.0, %v3114
      %v3116 = vpop.f32.mrf.mxu0
      %v3117 = vpop.f32.mrf.mxu0
      %v3118 = vadd.f32 0.0, %v3117
      %v3119 = vpop.f32.mrf.mxu0
      %3120 = vmatprep.mubr.bf16.mxu0 0
      %3121 = vmatmul.mubr.bf16.gmra.mxu0 %v3054
      %v3122 = vpop.f32.mrf.mxu0
      %v3123 = vadd.f32 0.0, %v3122
      %v3124 = vpop.f32.mrf.mxu0
      %v3125 = vpop.f32.mrf.mxu0
      %v3126 = vadd.f32 0.0, %v3125
      %v3127 = vpop.f32.mrf.mxu0
      %3128 = vdwg.mxu0
      %v3129 = vadd.f32 %v2982, %v3091
      %v3130 = vadd.f32 %v2983, %v3094
      %v3131 = vadd.f32 %v2984, %v3099
      %v3132 = vadd.f32 %v2985, %v3102
      %v3133 = vadd.f32 %v2986, %v3107
      %v3134 = vadd.f32 %v2987, %v3110
      %v3135 = vadd.f32 %v2988, %v3115
      %v3136 = vadd.f32 %v2989, %v3118
      %v3137 = vadd.f32 %v2990, %v3123
      %v3138 = vadd.f32 %v2991, %v3126
      %v3139 = vadd.f32 %v3129, %v896
      %v3140 = vadd.f32 %v3130, %v896
      %v3141 = vadd.f32 %v3131, %v896
      %v3142 = vadd.f32 %v3132, %v896
      %v3143 = vadd.f32 %v3133, %v896
      %v3144 = vadd.f32 %v3134, %v896
      %v3145 = vadd.f32 %v3135, %v896
      %v3146 = vadd.f32 %v3136, %v896
      %v3147 = vadd.f32 %v3137, %v896
      %v3148 = vadd.f32 %v3138, %v896
      %v3149 = vtanh.pop %v3139
      %v3150 = vtanh.pop %v3140
      %v3151 = vtanh.pop %v3141
      %v3152 = vtanh.pop %v3142
      %v3153 = vtanh.pop %v3143
      %v3154 = vtanh.pop %v3144
      %v3155 = vtanh.pop %v3145
      %v3156 = vtanh.pop %v3146
      %v3157 = vtanh.pop %v3147
      %v3158 = vtanh.pop %v3148
      %s3159 = scalar_lea.vmem %s197, 240
      %3160 = vst.msk [vmem:[%s3159] sm:$0xff] %vm918, %v3149
      %3161 = vst.msk [vmem:[%s3159 + $0x8] sm:$0xff] %vm918, %v3150
      %3162 = vst.msk [vmem:[%s3159 + $0x10] sm:$0xff] %vm918, %v3151
      %3163 = vst.msk [vmem:[%s3159 + $0x18] sm:$0xff] %vm918, %v3152
      %3164 = vst.msk [vmem:[%s3159 + $0x20] sm:$0xff] %vm918, %v3153
      %3165 = vst.msk [vmem:[%s3159 + $0x28] sm:$0xff] %vm918, %v3154
      %3166 = vst.msk [vmem:[%s3159 + $0x30] sm:$0xff] %vm918, %v3155
      %3167 = vst.msk [vmem:[%s3159 + $0x38] sm:$0xff] %vm918, %v3156
      %3168 = vst.msk [vmem:[%s3159 + $0x40] sm:$0xff] %vm918, %v3157
      %3169 = vst.msk [vmem:[%s3159 + $0x48] sm:$0xff] %vm918, %v3158
      %p3170 = scmp.lt.s32.totalorder %s15, 1
      %s3171 = scalar_select %p3170, %s15, 1
      %s3172 = smul.addr %s3171, 40
      %s3173 = smul.addr %s3172, 8
      %s3174 = scalar_lea.vmem %s4, %s3173
      // Predicated region
      $region37: #{generator_forward.13} parent=35 // pred_check
        %p3175 = pneg %p122
      $region38: #{generator_forward.13} parent=35 // pred_check_branch
        %3177 = sbr.rel (%p3175) target = $region40
      $region39: #{generator_forward.13} parent=35 // pred_region
        _
      $region40: #{generator_forward.13} parent=35 // pred_fallthru
        _
    $region36: #{generator_forward.13} parent=5 // pred_fallthru
      _
    %p3178 = scmp.le.s32.totalorder 2, %s10
    // Predicated region
    $region41: #{generator_forward.13} parent=5 // pred_check
      %p3179 = pneg %p3178
    $region42: #{generator_forward.13} parent=5 // pred_check_branch
      %3181 = sbr.rel (%p3179) target = $region44
    $region43: #{generator_forward.13} parent=5 // pred_region
      %s3182 = ssub.s32 %s10, 2
      // Predicated region
      $region45: #{generator_forward.13} parent=43 // pred_check
        %p3183 = pneg %p128
      $region46: #{generator_forward.13} parent=43 // pred_check_branch
        %3185 = sbr.rel (%p3183) target = $region48
      $region47: #{generator_forward.13} parent=43 // pred_region
        %p3186 = scmp.lt.s32.totalorder %s16, 1
        %s3187 = scalar_select %p3186, %s16, 1
        %s3188 = smul.addr %s3187, 40
        %s3189 = smul.addr %s3188, 8
        %s3190 = scalar_lea.vmem %s4, %s3189
      $region48: #{generator_forward.13} parent=43 // pred_fallthru
        _
    $region44: #{generator_forward.13} parent=5 // pred_fallthru
      _
  $region6: #{generator_forward.13} parent=0 // loop_footer
    %s14 = sadd.s32 1, %s10
  $region7: #{generator_forward.13} parent=0 // loop_footer_branch
    %9 = sbr.rel target = $region3
  $region8: #{generator_forward.13} parent=0 // loop_exit
    _

</llo_original>
